<compile_context>
chip_gen: v7x
topology: tpu7x:2x2x1
jax: 0.10.0
libtpu: 0.0.40
codegen_flags: <defaults>
</compile_context>

<pallas_src>
import math
import jax
import jax.numpy as jnp
from jax.experimental import pallas as pl
from jax.experimental.pallas import tpu as pltpu


def _fused_lstm_stack_kernel(xg0_ref, wih_ref, whh_ref, b_ref, out_ref,
                             h_scr, c_scr, buf_scr, gx_scr):
    """One grid step = one chunk of Tc timesteps through ALL stacked layers.

    xg0_ref : (Tc, Bp, 4*nh)  precomputed layer-0 gate pre-activations
                              (x @ W_ih0 + b0), gate order (i, f, g, o)
    wih_ref : (max(L-1,1), nh, 4*nh)  input->gate weights for layers 1..L-1
    whh_ref : (L, nh, 4*nh)           hidden->gate weights for all layers
    b_ref   : (max(L-1,1), 1, 4*nh)   combined biases for layers 1..L-1
    out_ref : (Tc, Bp, nh)            last layer's hidden states for the chunk
    h_scr   : (L, Bp, nh)   carried hidden states (VMEM, persists across grid)
    c_scr   : (L, Bp, nh)   carried cell states
    buf_scr : (Tc, Bp, nh)  current layer's chunk outputs (fed to next layer)
    gx_scr  : (Tc, Bp, 4*nh) per-layer precomputed input-gate pre-activations
    """
    ci = pl.program_id(0)

    @pl.when(ci == 0)
    def _init():
        h_scr[...] = jnp.zeros_like(h_scr)
        c_scr[...] = jnp.zeros_like(c_scr)

    n_layers = whh_ref.shape[0]
    nh = h_scr.shape[-1]
    tc = buf_scr.shape[0]
    bp = buf_scr.shape[1]
    w_dt = whh_ref.dtype
    unroll = True if tc <= 32 else 8

    for l in range(n_layers):
        if l == 0:
            gx = xg0_ref  # bias already folded in by the hoisted projection
        else:
            # Hoisted per-layer input projection: one big MXU matmul over the
            # whole chunk instead of Tc tiny matmuls inside the recurrence.
            x_flat = buf_scr[...].reshape(tc * bp, nh).astype(w_dt)
            proj = jnp.dot(x_flat, wih_ref[l - 1],
                           preferred_element_type=jnp.float32)
            gx_scr[...] = proj.reshape(tc, bp, 4 * nh) + b_ref[l - 1][None]
            gx = gx_scr

        w_hh = whh_ref[l]  # (nh, 4*nh), loaded once per layer (out of t-loop)

        def step(t, carry):
            h_prev = h_scr[l]
            c_prev = c_scr[l]
            gates = gx[t] + jnp.dot(h_prev.astype(w_dt), w_hh,
                                    preferred_element_type=jnp.float32)
            i_g = jax.nn.sigmoid(gates[:, 0 * nh:1 * nh])
            f_g = jax.nn.sigmoid(gates[:, 1 * nh:2 * nh])
            g_g = jnp.tanh(gates[:, 2 * nh:3 * nh])
            o_g = jax.nn.sigmoid(gates[:, 3 * nh:4 * nh])
            c_new = f_g * c_prev + i_g * g_g
            h_new = o_g * jnp.tanh(c_new)
            c_scr[l] = c_new
            h_scr[l] = h_new
            # Overwrite slot t in place: only slots > t (still layer l-1's
            # outputs) are read later within this layer.
            buf_scr[t] = h_new
            return carry

        jax.lax.fori_loop(0, tc, step, None, unroll=unroll)

    # Single lane/chunk-amortized writeback per grid step.
    out_ref[...] = buf_scr[...]


def init_lstm_backbone_params(key, input_channels, nh, nlayers, depth):
    """PyTorch-style uniform(-1/sqrt(nh), 1/sqrt(nh)) init for every layer.

    params[d][l] = (w_ih_t, w_hh_t, bias) with
      w_ih_t: (ni_l, 4*nh), w_hh_t: (nh, 4*nh), bias: (1, 4*nh)
    Gate order along the 4*nh axis is (i, f, g, o), matching nn.LSTM.
    """
    k = 1.0 / math.sqrt(nh)
    params = []
    for d in range(depth):
        block = []
        for l in range(nlayers):
            ni = (input_channels if d == 0 else nh) if l == 0 else nh
            key, k1, k2, k3, k4 = jax.random.split(key, 5)
            w_ih = jax.random.uniform(k1, (4 * nh, ni), jnp.float32, -k, k)
            w_hh = jax.random.uniform(k2, (4 * nh, nh), jnp.float32, -k, k)
            b_ih = jax.random.uniform(k3, (4 * nh,), jnp.float32, -k, k)
            b_hh = jax.random.uniform(k4, (4 * nh,), jnp.float32, -k, k)
            block.append((
                jnp.transpose(w_ih),                  # (ni, 4*nh)
                jnp.transpose(w_hh),                  # (nh, 4*nh)
                (b_ih + b_hh).reshape(1, 4 * nh),     # combined bias
            ))
        params.append(block)
    return params


def lstm_backbone_forward(x_bct, params, *, time_chunk=128,
                          weights_dtype=jnp.float32):
    """LSTMBackbone.forward: x (B, C, T) -> (B, nh, T)."""
    layers = [lp for block in params for lp in block]  # flatten depth*nlayers
    n_layers = len(layers)
    w_ih0_t = layers[0][0]            # (C, 4*nh)
    b0 = layers[0][2]                 # (1, 4*nh)
    nh = layers[0][1].shape[0]

    B, C, T = x_bct.shape
    x_tbc = jnp.transpose(x_bct, (2, 0, 1)).astype(jnp.float32)  # (T, B, C)

    # Pad batch to a multiple of 8 sublanes, time to a multiple of the chunk.
    bp = max(8, ((B + 7) // 8) * 8)
    tc = min(time_chunk, T)
    tp = ((T + tc - 1) // tc) * tc
    x_pad = jnp.zeros((tp, bp, C), jnp.float32).at[:T, :B].set(x_tbc)

    # Hoisted layer-0 input projection: one big matmul over the whole sequence
    # (bias folded in). Done in plain XLA; the recurrence kernel only does
    # h_prev @ W_hh per step for layer 0.
    xg0 = jnp.einsum('tbc,cg->tbg', x_pad, w_ih0_t,
                     precision=jax.lax.Precision.HIGHEST) + b0[None]

    # Stack remaining weights; dummy (unused) slot if the stack has one layer.
    if n_layers > 1:
        w_ih_rest = jnp.stack([layers[l][0] for l in range(1, n_layers)])
        b_rest = jnp.stack([layers[l][2] for l in range(1, n_layers)])
    else:
        w_ih_rest = jnp.zeros((1, nh, 4 * nh), jnp.float32)
        b_rest = jnp.zeros((1, 1, 4 * nh), jnp.float32)
    w_hh_all = jnp.stack([layers[l][1] for l in range(n_layers)])

    w_ih_rest = w_ih_rest.astype(weights_dtype)
    w_hh_all = w_hh_all.astype(weights_dtype)

    out = pl.pallas_call(
        _fused_lstm_stack_kernel,
        out_shape=jax.ShapeDtypeStruct((tp, bp, nh), jnp.float32),
        grid_spec=pltpu.PrefetchScalarGridSpec(
            num_scalar_prefetch=0,
            grid=(tp // tc,),
            in_specs=[
                pl.BlockSpec((tc, bp, 4 * nh), lambda ci: (ci, 0, 0)),
                pl.BlockSpec(w_ih_rest.shape, lambda ci: (0, 0, 0)),
                pl.BlockSpec(w_hh_all.shape, lambda ci: (0, 0, 0)),
                pl.BlockSpec(b_rest.shape, lambda ci: (0, 0, 0)),
            ],
            out_specs=pl.BlockSpec((tc, bp, nh), lambda ci: (ci, 0, 0)),
            scratch_shapes=[
                pltpu.VMEM((n_layers, bp, nh), jnp.float32),   # h carries
                pltpu.VMEM((n_layers, bp, nh), jnp.float32),   # c carries
                pltpu.VMEM((tc, bp, nh), jnp.float32),         # chunk buffer
                pltpu.VMEM((tc, bp, 4 * nh), jnp.float32),     # gate preacts
            ],
        ),
        compiler_params=pltpu.CompilerParams(
            dimension_semantics=("arbitrary",),  # recurrence -> sequential
        ),
    )(xg0, w_ih_rest, w_hh_all, b_rest)

    # (Tp, Bp, nh) -> drop padding -> (B, nh, T)
    return jnp.transpose(out[:T, :B], (1, 2, 0))


def _lstm_backbone_reference(x_bct, params):
    """Pure-JAX reference (lax.scan) matching nn.LSTM eval semantics."""
    h = jnp.transpose(x_bct, (2, 0, 1)).astype(jnp.float32)  # (T, B, C)
    for block in params:
        for (w_ih_t, w_hh_t, bias) in block:
            nh = w_hh_t.shape[0]
            bsz = h.shape[1]

            def step(carry, x_t, w_ih_t=w_ih_t, w_hh_t=w_hh_t, bias=bias, nh=nh):
                h_prev, c_prev = carry
                gates = (
                    jnp.dot(x_t, w_ih_t, precision=jax.lax.Precision.HIGHEST)
                    + jnp.dot(h_prev, w_hh_t, precision=jax.lax.Precision.HIGHEST)
                    + bias)
                i_g = jax.nn.sigmoid(gates[:, 0 * nh:1 * nh])
                f_g = jax.nn.sigmoid(gates[:, 1 * nh:2 * nh])
                g_g = jnp.tanh(gates[:, 2 * nh:3 * nh])
                o_g = jax.nn.sigmoid(gates[:, 3 * nh:4 * nh])
                c_new = f_g * c_prev + i_g * g_g
                h_new = o_g * jnp.tanh(c_new)
                return (h_new, c_new), h_new

            init = (jnp.zeros((bsz, nh), jnp.float32),
                    jnp.zeros((bsz, nh), jnp.float32))
            _, h = jax.lax.scan(step, init, h)
    return jnp.transpose(h, (1, 2, 0))  # (B, nh, T)


if __name__ == "__main__":
    # Small deterministic config.
    B, C, T = 2, 4, 8
    nh, nlayers, depth = 32, 2, 2

    key = jax.random.PRNGKey(0)
    key, xk, pk = jax.random.split(key, 3)

    x = jax.random.normal(xk, (B, C, T), dtype=jnp.float32)  # (B, C, T)
    params = init_lstm_backbone_params(pk, C, nh, nlayers, depth)

    out = lstm_backbone_forward(x, params)
    out = jax.block_until_ready(out)

    assert out.shape == (B, nh, T), out.shape
    assert bool(jnp.all(jnp.isfinite(out)))

    ref = _lstm_backbone_reference(x, params)
    max_err = float(jnp.max(jnp.abs(out - ref)))
    assert jnp.allclose(out, ref, rtol=5e-3, atol=5e-3), max_err

    print("KERNEL_OK")
</pallas_src>

<mosaic_0001>
module attributes {stable_mosaic.version = 11 : i64} {
  func.func @_fused_lstm_stack_kernel(%arg0: i32, %arg1: memref<8x8x128xf32, #tpu.memory_space<vmem>>, %arg2: memref<3x32x128xf32, #tpu.memory_space<vmem>>, %arg3: memref<4x32x128xf32, #tpu.memory_space<vmem>>, %arg4: memref<3x1x128xf32, #tpu.memory_space<vmem>>, %arg5: memref<8x8x32xf32, #tpu.memory_space<vmem>>, %arg6: memref<4x8x32xf32, #tpu.memory_space<vmem>>, %arg7: memref<4x8x32xf32, #tpu.memory_space<vmem>>, %arg8: memref<8x8x32xf32, #tpu.memory_space<vmem>>, %arg9: memref<8x8x128xf32, #tpu.memory_space<vmem>>) attributes {dimension_semantics = [#tpu.dimension_semantics<arbitrary>], iteration_bounds = array<i64: 1>, scalar_prefetch = 0 : i64, scratch_operands = 4 : i64, tpu.core_type = #tpu.core_type<tc>, window_params = [{transform_indices = @transform_0, window_bounds = array<i64: 8, 8, 128>}, {pipeline_mode = #tpu.pipeline_mode<synchronous>, transform_indices = @transform_1, window_bounds = array<i64: 3, 32, 128>}, {pipeline_mode = #tpu.pipeline_mode<synchronous>, transform_indices = @transform_2, window_bounds = array<i64: 4, 32, 128>}, {pipeline_mode = #tpu.pipeline_mode<synchronous>, transform_indices = @transform_3, window_bounds = array<i64: 3, 1, 128>}, {transform_indices = @transform_4, window_bounds = array<i64: 8, 8, 32>}]} {
    %c0_i32 = arith.constant 0 : i32
    %0 = arith.cmpi eq, %arg0, %c0_i32 : i32
    %1 = arith.extui %0 : i1 to i32
    %c0_i32_0 = arith.constant 0 : i32
    %2 = arith.cmpi ne, %1, %c0_i32_0 : i32
    scf.if %2 {
      %cst_721 = arith.constant 0.000000e+00 : f32
      %1457 = vector.broadcast %cst_721 : f32 to vector<4x8x32xf32>
      %c0_722 = arith.constant 0 : index
      %c0_723 = arith.constant 0 : index
      %c0_724 = arith.constant 0 : index
      %1458 = vector.load %arg6[%c0_722, %c0_723, %c0_724] : memref<4x8x32xf32, #tpu.memory_space<vmem>>, vector<4x8x32xf32>
      tpu.vector_store %arg6[%c0_722, %c0_723, %c0_724], %1457 {strides = array<i32>} : memref<4x8x32xf32, #tpu.memory_space<vmem>>, vector<4x8x32xf32>,
      %cst_725 = arith.constant 0.000000e+00 : f32
      %1459 = vector.broadcast %cst_725 : f32 to vector<4x8x32xf32>
      %c0_726 = arith.constant 0 : index
      %c0_727 = arith.constant 0 : index
      %c0_728 = arith.constant 0 : index
      %1460 = vector.load %arg7[%c0_726, %c0_727, %c0_728] : memref<4x8x32xf32, #tpu.memory_space<vmem>>, vector<4x8x32xf32>
      tpu.vector_store %arg7[%c0_726, %c0_727, %c0_728], %1459 {strides = array<i32>} : memref<4x8x32xf32, #tpu.memory_space<vmem>>, vector<4x8x32xf32>,
    } else {
    }
    %c0 = arith.constant 0 : index
    %c0_1 = arith.constant 0 : index
    %c0_2 = arith.constant 0 : index
    %3 = vector.load %arg3[%c0, %c0_1, %c0_2] : memref<4x32x128xf32, #tpu.memory_space<vmem>>, vector<1x32x128xf32>
    %4 = vector.shape_cast %3 : vector<1x32x128xf32> to vector<32x128xf32>
    %c0_i32_3 = arith.constant 0 : i32
    %c0_4 = arith.constant 0 : index
    %c0_5 = arith.constant 0 : index
    %c0_6 = arith.constant 0 : index
    %5 = vector.load %arg6[%c0_4, %c0_5, %c0_6] : memref<4x8x32xf32, #tpu.memory_space<vmem>>, vector<1x8x32xf32>
    %6 = vector.shape_cast %5 : vector<1x8x32xf32> to vector<8x32xf32>
    %c0_7 = arith.constant 0 : index
    %c0_8 = arith.constant 0 : index
    %c0_9 = arith.constant 0 : index
    %7 = vector.load %arg7[%c0_7, %c0_8, %c0_9] : memref<4x8x32xf32, #tpu.memory_space<vmem>>, vector<1x8x32xf32>
    %8 = vector.shape_cast %7 : vector<1x8x32xf32> to vector<8x32xf32>
    %9 = arith.index_cast %c0_i32_3 : i32 to index
    %c0_10 = arith.constant 0 : index
    %c0_11 = arith.constant 0 : index
    %10 = vector.load %arg1[%9, %c0_10, %c0_11] : memref<8x8x128xf32, #tpu.memory_space<vmem>>, vector<1x8x128xf32>
    %11 = vector.shape_cast %10 : vector<1x8x128xf32> to vector<8x128xf32>
    %cst = arith.constant dense<0.000000e+00> : vector<8x128xf32>
    %12 = tpu.matmul %6, %4, %cst {dimension_numbers = #tpu.dot_dimension_numbers<[1], [0], [0], [1], [0, 0, 1, 1], [], []>} : vector<8x32xf32>, vector<32x128xf32>, vector<8x128xf32> -> vector<8x128xf32>
    %13 = arith.addf %11, %12 : vector<8x128xf32>
    %14 = vector.extract_strided_slice %13 {offsets = [0, 0], sizes = [8, 32], strides = [1, 1]} : vector<8x128xf32> to vector<8x32xf32>
    %15 = arith.negf %14 : vector<8x32xf32>
    %16 = math.exp %15 : vector<8x32xf32>
    %cst_12 = arith.constant 1.000000e+00 : f32
    %17 = vector.broadcast %cst_12 : f32 to vector<8x32xf32>
    %18 = arith.addf %17, %16 : vector<8x32xf32>
    %19 = arith.divf %17, %18 : vector<8x32xf32>
    %20 = vector.extract_strided_slice %13 {offsets = [0, 32], sizes = [8, 32], strides = [1, 1]} : vector<8x128xf32> to vector<8x32xf32>
    %21 = arith.negf %20 : vector<8x32xf32>
    %22 = math.exp %21 : vector<8x32xf32>
    %cst_13 = arith.constant 1.000000e+00 : f32
    %23 = vector.broadcast %cst_13 : f32 to vector<8x32xf32>
    %24 = arith.addf %23, %22 : vector<8x32xf32>
    %25 = arith.divf %23, %24 : vector<8x32xf32>
    %26 = vector.extract_strided_slice %13 {offsets = [0, 64], sizes = [8, 32], strides = [1, 1]} : vector<8x128xf32> to vector<8x32xf32>
    %27 = math.tanh %26 : vector<8x32xf32>
    %28 = vector.extract_strided_slice %13 {offsets = [0, 96], sizes = [8, 32], strides = [1, 1]} : vector<8x128xf32> to vector<8x32xf32>
    %29 = arith.negf %28 : vector<8x32xf32>
    %30 = math.exp %29 : vector<8x32xf32>
    %cst_14 = arith.constant 1.000000e+00 : f32
    %31 = vector.broadcast %cst_14 : f32 to vector<8x32xf32>
    %32 = arith.addf %31, %30 : vector<8x32xf32>
    %33 = arith.divf %31, %32 : vector<8x32xf32>
    %34 = arith.mulf %25, %8 : vector<8x32xf32>
    %35 = arith.mulf %19, %27 : vector<8x32xf32>
    %36 = arith.addf %34, %35 : vector<8x32xf32>
    %37 = math.tanh %36 : vector<8x32xf32>
    %38 = arith.mulf %33, %37 : vector<8x32xf32>
    %c0_15 = arith.constant 0 : index
    %c0_16 = arith.constant 0 : index
    %c0_17 = arith.constant 0 : index
    %39 = vector.load %arg7[%c0_15, %c0_16, %c0_17] : memref<4x8x32xf32, #tpu.memory_space<vmem>>, vector<1x8x32xf32>
    %40 = vector.shape_cast %39 : vector<1x8x32xf32> to vector<8x32xf32>
    %41 = vector.shape_cast %36 : vector<8x32xf32> to vector<1x8x32xf32>
    tpu.vector_store %arg7[%c0_15, %c0_16, %c0_17], %41 {strides = array<i32>} : memref<4x8x32xf32, #tpu.memory_space<vmem>>, vector<1x8x32xf32>,
    %c0_18 = arith.constant 0 : index
    %c0_19 = arith.constant 0 : index
    %c0_20 = arith.constant 0 : index
    %42 = vector.load %arg6[%c0_18, %c0_19, %c0_20] : memref<4x8x32xf32, #tpu.memory_space<vmem>>, vector<1x8x32xf32>
    %43 = vector.shape_cast %42 : vector<1x8x32xf32> to vector<8x32xf32>
    %44 = vector.shape_cast %38 : vector<8x32xf32> to vector<1x8x32xf32>
    tpu.vector_store %arg6[%c0_18, %c0_19, %c0_20], %44 {strides = array<i32>} : memref<4x8x32xf32, #tpu.memory_space<vmem>>, vector<1x8x32xf32>,
    %45 = arith.index_cast %c0_i32_3 : i32 to index
    %c0_21 = arith.constant 0 : index
    %c0_22 = arith.constant 0 : index
    %46 = vector.load %arg8[%45, %c0_21, %c0_22] : memref<8x8x32xf32, #tpu.memory_space<vmem>>, vector<1x8x32xf32>
    %47 = vector.shape_cast %46 : vector<1x8x32xf32> to vector<8x32xf32>
    %48 = vector.shape_cast %38 : vector<8x32xf32> to vector<1x8x32xf32>
    tpu.vector_store %arg8[%45, %c0_21, %c0_22], %48 {strides = array<i32>} : memref<8x8x32xf32, #tpu.memory_space<vmem>>, vector<1x8x32xf32>,
    %c1_i32 = arith.constant 1 : i32
    %c0_23 = arith.constant 0 : index
    %c0_24 = arith.constant 0 : index
    %c0_25 = arith.constant 0 : index
    %49 = vector.load %arg6[%c0_23, %c0_24, %c0_25] : memref<4x8x32xf32, #tpu.memory_space<vmem>>, vector<1x8x32xf32>
    %50 = vector.shape_cast %49 : vector<1x8x32xf32> to vector<8x32xf32>
    %c0_26 = arith.constant 0 : index
    %c0_27 = arith.constant 0 : index
    %c0_28 = arith.constant 0 : index
    %51 = vector.load %arg7[%c0_26, %c0_27, %c0_28] : memref<4x8x32xf32, #tpu.memory_space<vmem>>, vector<1x8x32xf32>
    %52 = vector.shape_cast %51 : vector<1x8x32xf32> to vector<8x32xf32>
    %53 = arith.index_cast %c1_i32 : i32 to index
    %c0_29 = arith.constant 0 : index
    %c0_30 = arith.constant 0 : index
    %54 = vector.load %arg1[%53, %c0_29, %c0_30] : memref<8x8x128xf32, #tpu.memory_space<vmem>>, vector<1x8x128xf32>
    %55 = vector.shape_cast %54 : vector<1x8x128xf32> to vector<8x128xf32>
    %cst_31 = arith.constant dense<0.000000e+00> : vector<8x128xf32>
    %56 = tpu.matmul %50, %4, %cst_31 {dimension_numbers = #tpu.dot_dimension_numbers<[1], [0], [0], [1], [0, 0, 1, 1], [], []>} : vector<8x32xf32>, vector<32x128xf32>, vector<8x128xf32> -> vector<8x128xf32>
    %57 = arith.addf %55, %56 : vector<8x128xf32>
    %58 = vector.extract_strided_slice %57 {offsets = [0, 0], sizes = [8, 32], strides = [1, 1]} : vector<8x128xf32> to vector<8x32xf32>
    %59 = arith.negf %58 : vector<8x32xf32>
    %60 = math.exp %59 : vector<8x32xf32>
    %cst_32 = arith.constant 1.000000e+00 : f32
    %61 = vector.broadcast %cst_32 : f32 to vector<8x32xf32>
    %62 = arith.addf %61, %60 : vector<8x32xf32>
    %63 = arith.divf %61, %62 : vector<8x32xf32>
    %64 = vector.extract_strided_slice %57 {offsets = [0, 32], sizes = [8, 32], strides = [1, 1]} : vector<8x128xf32> to vector<8x32xf32>
    %65 = arith.negf %64 : vector<8x32xf32>
    %66 = math.exp %65 : vector<8x32xf32>
    %cst_33 = arith.constant 1.000000e+00 : f32
    %67 = vector.broadcast %cst_33 : f32 to vector<8x32xf32>
    %68 = arith.addf %67, %66 : vector<8x32xf32>
    %69 = arith.divf %67, %68 : vector<8x32xf32>
    %70 = vector.extract_strided_slice %57 {offsets = [0, 64], sizes = [8, 32], strides = [1, 1]} : vector<8x128xf32> to vector<8x32xf32>
    %71 = math.tanh %70 : vector<8x32xf32>
    %72 = vector.extract_strided_slice %57 {offsets = [0, 96], sizes = [8, 32], strides = [1, 1]} : vector<8x128xf32> to vector<8x32xf32>
    %73 = arith.negf %72 : vector<8x32xf32>
    %74 = math.exp %73 : vector<8x32xf32>
    %cst_34 = arith.constant 1.000000e+00 : f32
    %75 = vector.broadcast %cst_34 : f32 to vector<8x32xf32>
    %76 = arith.addf %75, %74 : vector<8x32xf32>
    %77 = arith.divf %75, %76 : vector<8x32xf32>
    %78 = arith.mulf %69, %52 : vector<8x32xf32>
    %79 = arith.mulf %63, %71 : vector<8x32xf32>
    %80 = arith.addf %78, %79 : vector<8x32xf32>
    %81 = math.tanh %80 : vector<8x32xf32>
    %82 = arith.mulf %77, %81 : vector<8x32xf32>
    %c0_35 = arith.constant 0 : index
    %c0_36 = arith.constant 0 : index
    %c0_37 = arith.constant 0 : index
    %83 = vector.load %arg7[%c0_35, %c0_36, %c0_37] : memref<4x8x32xf32, #tpu.memory_space<vmem>>, vector<1x8x32xf32>
    %84 = vector.shape_cast %83 : vector<1x8x32xf32> to vector<8x32xf32>
    %85 = vector.shape_cast %80 : vector<8x32xf32> to vector<1x8x32xf32>
    tpu.vector_store %arg7[%c0_35, %c0_36, %c0_37], %85 {strides = array<i32>} : memref<4x8x32xf32, #tpu.memory_space<vmem>>, vector<1x8x32xf32>,
    %c0_38 = arith.constant 0 : index
    %c0_39 = arith.constant 0 : index
    %c0_40 = arith.constant 0 : index
    %86 = vector.load %arg6[%c0_38, %c0_39, %c0_40] : memref<4x8x32xf32, #tpu.memory_space<vmem>>, vector<1x8x32xf32>
    %87 = vector.shape_cast %86 : vector<1x8x32xf32> to vector<8x32xf32>
    %88 = vector.shape_cast %82 : vector<8x32xf32> to vector<1x8x32xf32>
    tpu.vector_store %arg6[%c0_38, %c0_39, %c0_40], %88 {strides = array<i32>} : memref<4x8x32xf32, #tpu.memory_space<vmem>>, vector<1x8x32xf32>,
    %89 = arith.index_cast %c1_i32 : i32 to index
    %c0_41 = arith.constant 0 : index
    %c0_42 = arith.constant 0 : index
    %90 = vector.load %arg8[%89, %c0_41, %c0_42] : memref<8x8x32xf32, #tpu.memory_space<vmem>>, vector<1x8x32xf32>
    %91 = vector.shape_cast %90 : vector<1x8x32xf32> to vector<8x32xf32>
    %92 = vector.shape_cast %82 : vector<8x32xf32> to vector<1x8x32xf32>
    tpu.vector_store %arg8[%89, %c0_41, %c0_42], %92 {strides = array<i32>} : memref<8x8x32xf32, #tpu.memory_space<vmem>>, vector<1x8x32xf32>,
    %c2_i32 = arith.constant 2 : i32
    %c0_43 = arith.constant 0 : index
    %c0_44 = arith.constant 0 : index
    %c0_45 = arith.constant 0 : index
    %93 = vector.load %arg6[%c0_43, %c0_44, %c0_45] : memref<4x8x32xf32, #tpu.memory_space<vmem>>, vector<1x8x32xf32>
    %94 = vector.shape_cast %93 : vector<1x8x32xf32> to vector<8x32xf32>
    %c0_46 = arith.constant 0 : index
    %c0_47 = arith.constant 0 : index
    %c0_48 = arith.constant 0 : index
    %95 = vector.load %arg7[%c0_46, %c0_47, %c0_48] : memref<4x8x32xf32, #tpu.memory_space<vmem>>, vector<1x8x32xf32>
    %96 = vector.shape_cast %95 : vector<1x8x32xf32> to vector<8x32xf32>
    %97 = arith.index_cast %c2_i32 : i32 to index
    %c0_49 = arith.constant 0 : index
    %c0_50 = arith.constant 0 : index
    %98 = vector.load %arg1[%97, %c0_49, %c0_50] : memref<8x8x128xf32, #tpu.memory_space<vmem>>, vector<1x8x128xf32>
    %99 = vector.shape_cast %98 : vector<1x8x128xf32> to vector<8x128xf32>
    %cst_51 = arith.constant dense<0.000000e+00> : vector<8x128xf32>
    %100 = tpu.matmul %94, %4, %cst_51 {dimension_numbers = #tpu.dot_dimension_numbers<[1], [0], [0], [1], [0, 0, 1, 1], [], []>} : vector<8x32xf32>, vector<32x128xf32>, vector<8x128xf32> -> vector<8x128xf32>
    %101 = arith.addf %99, %100 : vector<8x128xf32>
    %102 = vector.extract_strided_slice %101 {offsets = [0, 0], sizes = [8, 32], strides = [1, 1]} : vector<8x128xf32> to vector<8x32xf32>
    %103 = arith.negf %102 : vector<8x32xf32>
    %104 = math.exp %103 : vector<8x32xf32>
    %cst_52 = arith.constant 1.000000e+00 : f32
    %105 = vector.broadcast %cst_52 : f32 to vector<8x32xf32>
    %106 = arith.addf %105, %104 : vector<8x32xf32>
    %107 = arith.divf %105, %106 : vector<8x32xf32>
    %108 = vector.extract_strided_slice %101 {offsets = [0, 32], sizes = [8, 32], strides = [1, 1]} : vector<8x128xf32> to vector<8x32xf32>
    %109 = arith.negf %108 : vector<8x32xf32>
    %110 = math.exp %109 : vector<8x32xf32>
    %cst_53 = arith.constant 1.000000e+00 : f32
    %111 = vector.broadcast %cst_53 : f32 to vector<8x32xf32>
    %112 = arith.addf %111, %110 : vector<8x32xf32>
    %113 = arith.divf %111, %112 : vector<8x32xf32>
    %114 = vector.extract_strided_slice %101 {offsets = [0, 64], sizes = [8, 32], strides = [1, 1]} : vector<8x128xf32> to vector<8x32xf32>
    %115 = math.tanh %114 : vector<8x32xf32>
    %116 = vector.extract_strided_slice %101 {offsets = [0, 96], sizes = [8, 32], strides = [1, 1]} : vector<8x128xf32> to vector<8x32xf32>
    %117 = arith.negf %116 : vector<8x32xf32>
    %118 = math.exp %117 : vector<8x32xf32>
    %cst_54 = arith.constant 1.000000e+00 : f32
    %119 = vector.broadcast %cst_54 : f32 to vector<8x32xf32>
    %120 = arith.addf %119, %118 : vector<8x32xf32>
    %121 = arith.divf %119, %120 : vector<8x32xf32>
    %122 = arith.mulf %113, %96 : vector<8x32xf32>
    %123 = arith.mulf %107, %115 : vector<8x32xf32>
    %124 = arith.addf %122, %123 : vector<8x32xf32>
    %125 = math.tanh %124 : vector<8x32xf32>
    %126 = arith.mulf %121, %125 : vector<8x32xf32>
    %c0_55 = arith.constant 0 : index
    %c0_56 = arith.constant 0 : index
    %c0_57 = arith.constant 0 : index
    %127 = vector.load %arg7[%c0_55, %c0_56, %c0_57] : memref<4x8x32xf32, #tpu.memory_space<vmem>>, vector<1x8x32xf32>
    %128 = vector.shape_cast %127 : vector<1x8x32xf32> to vector<8x32xf32>
    %129 = vector.shape_cast %124 : vector<8x32xf32> to vector<1x8x32xf32>
    tpu.vector_store %arg7[%c0_55, %c0_56, %c0_57], %129 {strides = array<i32>} : memref<4x8x32xf32, #tpu.memory_space<vmem>>, vector<1x8x32xf32>,
    %c0_58 = arith.constant 0 : index
    %c0_59 = arith.constant 0 : index
    %c0_60 = arith.constant 0 : index
    %130 = vector.load %arg6[%c0_58, %c0_59, %c0_60] : memref<4x8x32xf32, #tpu.memory_space<vmem>>, vector<1x8x32xf32>
    %131 = vector.shape_cast %130 : vector<1x8x32xf32> to vector<8x32xf32>
    %132 = vector.shape_cast %126 : vector<8x32xf32> to vector<1x8x32xf32>
    tpu.vector_store %arg6[%c0_58, %c0_59, %c0_60], %132 {strides = array<i32>} : memref<4x8x32xf32, #tpu.memory_space<vmem>>, vector<1x8x32xf32>,
    %133 = arith.index_cast %c2_i32 : i32 to index
    %c0_61 = arith.constant 0 : index
    %c0_62 = arith.constant 0 : index
    %134 = vector.load %arg8[%133, %c0_61, %c0_62] : memref<8x8x32xf32, #tpu.memory_space<vmem>>, vector<1x8x32xf32>
    %135 = vector.shape_cast %134 : vector<1x8x32xf32> to vector<8x32xf32>
    %136 = vector.shape_cast %126 : vector<8x32xf32> to vector<1x8x32xf32>
    tpu.vector_store %arg8[%133, %c0_61, %c0_62], %136 {strides = array<i32>} : memref<8x8x32xf32, #tpu.memory_space<vmem>>, vector<1x8x32xf32>,
    %c3_i32 = arith.constant 3 : i32
    %c0_63 = arith.constant 0 : index
    %c0_64 = arith.constant 0 : index
    %c0_65 = arith.constant 0 : index
    %137 = vector.load %arg6[%c0_63, %c0_64, %c0_65] : memref<4x8x32xf32, #tpu.memory_space<vmem>>, vector<1x8x32xf32>
    %138 = vector.shape_cast %137 : vector<1x8x32xf32> to vector<8x32xf32>
    %c0_66 = arith.constant 0 : index
    %c0_67 = arith.constant 0 : index
    %c0_68 = arith.constant 0 : index
    %139 = vector.load %arg7[%c0_66, %c0_67, %c0_68] : memref<4x8x32xf32, #tpu.memory_space<vmem>>, vector<1x8x32xf32>
    %140 = vector.shape_cast %139 : vector<1x8x32xf32> to vector<8x32xf32>
    %141 = arith.index_cast %c3_i32 : i32 to index
    %c0_69 = arith.constant 0 : index
    %c0_70 = arith.constant 0 : index
    %142 = vector.load %arg1[%141, %c0_69, %c0_70] : memref<8x8x128xf32, #tpu.memory_space<vmem>>, vector<1x8x128xf32>
    %143 = vector.shape_cast %142 : vector<1x8x128xf32> to vector<8x128xf32>
    %cst_71 = arith.constant dense<0.000000e+00> : vector<8x128xf32>
    %144 = tpu.matmul %138, %4, %cst_71 {dimension_numbers = #tpu.dot_dimension_numbers<[1], [0], [0], [1], [0, 0, 1, 1], [], []>} : vector<8x32xf32>, vector<32x128xf32>, vector<8x128xf32> -> vector<8x128xf32>
    %145 = arith.addf %143, %144 : vector<8x128xf32>
    %146 = vector.extract_strided_slice %145 {offsets = [0, 0], sizes = [8, 32], strides = [1, 1]} : vector<8x128xf32> to vector<8x32xf32>
    %147 = arith.negf %146 : vector<8x32xf32>
    %148 = math.exp %147 : vector<8x32xf32>
    %cst_72 = arith.constant 1.000000e+00 : f32
    %149 = vector.broadcast %cst_72 : f32 to vector<8x32xf32>
    %150 = arith.addf %149, %148 : vector<8x32xf32>
    %151 = arith.divf %149, %150 : vector<8x32xf32>
    %152 = vector.extract_strided_slice %145 {offsets = [0, 32], sizes = [8, 32], strides = [1, 1]} : vector<8x128xf32> to vector<8x32xf32>
    %153 = arith.negf %152 : vector<8x32xf32>
    %154 = math.exp %153 : vector<8x32xf32>
    %cst_73 = arith.constant 1.000000e+00 : f32
    %155 = vector.broadcast %cst_73 : f32 to vector<8x32xf32>
    %156 = arith.addf %155, %154 : vector<8x32xf32>
    %157 = arith.divf %155, %156 : vector<8x32xf32>
    %158 = vector.extract_strided_slice %145 {offsets = [0, 64], sizes = [8, 32], strides = [1, 1]} : vector<8x128xf32> to vector<8x32xf32>
    %159 = math.tanh %158 : vector<8x32xf32>
    %160 = vector.extract_strided_slice %145 {offsets = [0, 96], sizes = [8, 32], strides = [1, 1]} : vector<8x128xf32> to vector<8x32xf32>
    %161 = arith.negf %160 : vector<8x32xf32>
    %162 = math.exp %161 : vector<8x32xf32>
    %cst_74 = arith.constant 1.000000e+00 : f32
    %163 = vector.broadcast %cst_74 : f32 to vector<8x32xf32>
    %164 = arith.addf %163, %162 : vector<8x32xf32>
    %165 = arith.divf %163, %164 : vector<8x32xf32>
    %166 = arith.mulf %157, %140 : vector<8x32xf32>
    %167 = arith.mulf %151, %159 : vector<8x32xf32>
    %168 = arith.addf %166, %167 : vector<8x32xf32>
    %169 = math.tanh %168 : vector<8x32xf32>
    %170 = arith.mulf %165, %169 : vector<8x32xf32>
    %c0_75 = arith.constant 0 : index
    %c0_76 = arith.constant 0 : index
    %c0_77 = arith.constant 0 : index
    %171 = vector.load %arg7[%c0_75, %c0_76, %c0_77] : memref<4x8x32xf32, #tpu.memory_space<vmem>>, vector<1x8x32xf32>
    %172 = vector.shape_cast %171 : vector<1x8x32xf32> to vector<8x32xf32>
    %173 = vector.shape_cast %168 : vector<8x32xf32> to vector<1x8x32xf32>
    tpu.vector_store %arg7[%c0_75, %c0_76, %c0_77], %173 {strides = array<i32>} : memref<4x8x32xf32, #tpu.memory_space<vmem>>, vector<1x8x32xf32>,
    %c0_78 = arith.constant 0 : index
    %c0_79 = arith.constant 0 : index
    %c0_80 = arith.constant 0 : index
    %174 = vector.load %arg6[%c0_78, %c0_79, %c0_80] : memref<4x8x32xf32, #tpu.memory_space<vmem>>, vector<1x8x32xf32>
    %175 = vector.shape_cast %174 : vector<1x8x32xf32> to vector<8x32xf32>
    %176 = vector.shape_cast %170 : vector<8x32xf32> to vector<1x8x32xf32>
    tpu.vector_store %arg6[%c0_78, %c0_79, %c0_80], %176 {strides = array<i32>} : memref<4x8x32xf32, #tpu.memory_space<vmem>>, vector<1x8x32xf32>,
    %177 = arith.index_cast %c3_i32 : i32 to index
    %c0_81 = arith.constant 0 : index
    %c0_82 = arith.constant 0 : index
    %178 = vector.load %arg8[%177, %c0_81, %c0_82] : memref<8x8x32xf32, #tpu.memory_space<vmem>>, vector<1x8x32xf32>
    %179 = vector.shape_cast %178 : vector<1x8x32xf32> to vector<8x32xf32>
    %180 = vector.shape_cast %170 : vector<8x32xf32> to vector<1x8x32xf32>
    tpu.vector_store %arg8[%177, %c0_81, %c0_82], %180 {strides = array<i32>} : memref<8x8x32xf32, #tpu.memory_space<vmem>>, vector<1x8x32xf32>,
    %c4_i32 = arith.constant 4 : i32
    %c0_83 = arith.constant 0 : index
    %c0_84 = arith.constant 0 : index
    %c0_85 = arith.constant 0 : index
    %181 = vector.load %arg6[%c0_83, %c0_84, %c0_85] : memref<4x8x32xf32, #tpu.memory_space<vmem>>, vector<1x8x32xf32>
    %182 = vector.shape_cast %181 : vector<1x8x32xf32> to vector<8x32xf32>
    %c0_86 = arith.constant 0 : index
    %c0_87 = arith.constant 0 : index
    %c0_88 = arith.constant 0 : index
    %183 = vector.load %arg7[%c0_86, %c0_87, %c0_88] : memref<4x8x32xf32, #tpu.memory_space<vmem>>, vector<1x8x32xf32>
    %184 = vector.shape_cast %183 : vector<1x8x32xf32> to vector<8x32xf32>
    %185 = arith.index_cast %c4_i32 : i32 to index
    %c0_89 = arith.constant 0 : index
    %c0_90 = arith.constant 0 : index
    %186 = vector.load %arg1[%185, %c0_89, %c0_90] : memref<8x8x128xf32, #tpu.memory_space<vmem>>, vector<1x8x128xf32>
    %187 = vector.shape_cast %186 : vector<1x8x128xf32> to vector<8x128xf32>
    %cst_91 = arith.constant dense<0.000000e+00> : vector<8x128xf32>
    %188 = tpu.matmul %182, %4, %cst_91 {dimension_numbers = #tpu.dot_dimension_numbers<[1], [0], [0], [1], [0, 0, 1, 1], [], []>} : vector<8x32xf32>, vector<32x128xf32>, vector<8x128xf32> -> vector<8x128xf32>
    %189 = arith.addf %187, %188 : vector<8x128xf32>
    %190 = vector.extract_strided_slice %189 {offsets = [0, 0], sizes = [8, 32], strides = [1, 1]} : vector<8x128xf32> to vector<8x32xf32>
    %191 = arith.negf %190 : vector<8x32xf32>
    %192 = math.exp %191 : vector<8x32xf32>
    %cst_92 = arith.constant 1.000000e+00 : f32
    %193 = vector.broadcast %cst_92 : f32 to vector<8x32xf32>
    %194 = arith.addf %193, %192 : vector<8x32xf32>
    %195 = arith.divf %193, %194 : vector<8x32xf32>
    %196 = vector.extract_strided_slice %189 {offsets = [0, 32], sizes = [8, 32], strides = [1, 1]} : vector<8x128xf32> to vector<8x32xf32>
    %197 = arith.negf %196 : vector<8x32xf32>
    %198 = math.exp %197 : vector<8x32xf32>
    %cst_93 = arith.constant 1.000000e+00 : f32
    %199 = vector.broadcast %cst_93 : f32 to vector<8x32xf32>
    %200 = arith.addf %199, %198 : vector<8x32xf32>
    %201 = arith.divf %199, %200 : vector<8x32xf32>
    %202 = vector.extract_strided_slice %189 {offsets = [0, 64], sizes = [8, 32], strides = [1, 1]} : vector<8x128xf32> to vector<8x32xf32>
    %203 = math.tanh %202 : vector<8x32xf32>
    %204 = vector.extract_strided_slice %189 {offsets = [0, 96], sizes = [8, 32], strides = [1, 1]} : vector<8x128xf32> to vector<8x32xf32>
    %205 = arith.negf %204 : vector<8x32xf32>
    %206 = math.exp %205 : vector<8x32xf32>
    %cst_94 = arith.constant 1.000000e+00 : f32
    %207 = vector.broadcast %cst_94 : f32 to vector<8x32xf32>
    %208 = arith.addf %207, %206 : vector<8x32xf32>
    %209 = arith.divf %207, %208 : vector<8x32xf32>
    %210 = arith.mulf %201, %184 : vector<8x32xf32>
    %211 = arith.mulf %195, %203 : vector<8x32xf32>
    %212 = arith.addf %210, %211 : vector<8x32xf32>
    %213 = math.tanh %212 : vector<8x32xf32>
    %214 = arith.mulf %209, %213 : vector<8x32xf32>
    %c0_95 = arith.constant 0 : index
    %c0_96 = arith.constant 0 : index
    %c0_97 = arith.constant 0 : index
    %215 = vector.load %arg7[%c0_95, %c0_96, %c0_97] : memref<4x8x32xf32, #tpu.memory_space<vmem>>, vector<1x8x32xf32>
    %216 = vector.shape_cast %215 : vector<1x8x32xf32> to vector<8x32xf32>
    %217 = vector.shape_cast %212 : vector<8x32xf32> to vector<1x8x32xf32>
    tpu.vector_store %arg7[%c0_95, %c0_96, %c0_97], %217 {strides = array<i32>} : memref<4x8x32xf32, #tpu.memory_space<vmem>>, vector<1x8x32xf32>,
    %c0_98 = arith.constant 0 : index
    %c0_99 = arith.constant 0 : index
    %c0_100 = arith.constant 0 : index
    %218 = vector.load %arg6[%c0_98, %c0_99, %c0_100] : memref<4x8x32xf32, #tpu.memory_space<vmem>>, vector<1x8x32xf32>
    %219 = vector.shape_cast %218 : vector<1x8x32xf32> to vector<8x32xf32>
    %220 = vector.shape_cast %214 : vector<8x32xf32> to vector<1x8x32xf32>
    tpu.vector_store %arg6[%c0_98, %c0_99, %c0_100], %220 {strides = array<i32>} : memref<4x8x32xf32, #tpu.memory_space<vmem>>, vector<1x8x32xf32>,
    %221 = arith.index_cast %c4_i32 : i32 to index
    %c0_101 = arith.constant 0 : index
    %c0_102 = arith.constant 0 : index
    %222 = vector.load %arg8[%221, %c0_101, %c0_102] : memref<8x8x32xf32, #tpu.memory_space<vmem>>, vector<1x8x32xf32>
    %223 = vector.shape_cast %222 : vector<1x8x32xf32> to vector<8x32xf32>
    %224 = vector.shape_cast %214 : vector<8x32xf32> to vector<1x8x32xf32>
    tpu.vector_store %arg8[%221, %c0_101, %c0_102], %224 {strides = array<i32>} : memref<8x8x32xf32, #tpu.memory_space<vmem>>, vector<1x8x32xf32>,
    %c5_i32 = arith.constant 5 : i32
    %c0_103 = arith.constant 0 : index
    %c0_104 = arith.constant 0 : index
    %c0_105 = arith.constant 0 : index
    %225 = vector.load %arg6[%c0_103, %c0_104, %c0_105] : memref<4x8x32xf32, #tpu.memory_space<vmem>>, vector<1x8x32xf32>
    %226 = vector.shape_cast %225 : vector<1x8x32xf32> to vector<8x32xf32>
    %c0_106 = arith.constant 0 : index
    %c0_107 = arith.constant 0 : index
    %c0_108 = arith.constant 0 : index
    %227 = vector.load %arg7[%c0_106, %c0_107, %c0_108] : memref<4x8x32xf32, #tpu.memory_space<vmem>>, vector<1x8x32xf32>
    %228 = vector.shape_cast %227 : vector<1x8x32xf32> to vector<8x32xf32>
    %229 = arith.index_cast %c5_i32 : i32 to index
    %c0_109 = arith.constant 0 : index
    %c0_110 = arith.constant 0 : index
    %230 = vector.load %arg1[%229, %c0_109, %c0_110] : memref<8x8x128xf32, #tpu.memory_space<vmem>>, vector<1x8x128xf32>
    %231 = vector.shape_cast %230 : vector<1x8x128xf32> to vector<8x128xf32>
    %cst_111 = arith.constant dense<0.000000e+00> : vector<8x128xf32>
    %232 = tpu.matmul %226, %4, %cst_111 {dimension_numbers = #tpu.dot_dimension_numbers<[1], [0], [0], [1], [0, 0, 1, 1], [], []>} : vector<8x32xf32>, vector<32x128xf32>, vector<8x128xf32> -> vector<8x128xf32>
    %233 = arith.addf %231, %232 : vector<8x128xf32>
    %234 = vector.extract_strided_slice %233 {offsets = [0, 0], sizes = [8, 32], strides = [1, 1]} : vector<8x128xf32> to vector<8x32xf32>
    %235 = arith.negf %234 : vector<8x32xf32>
    %236 = math.exp %235 : vector<8x32xf32>
    %cst_112 = arith.constant 1.000000e+00 : f32
    %237 = vector.broadcast %cst_112 : f32 to vector<8x32xf32>
    %238 = arith.addf %237, %236 : vector<8x32xf32>
    %239 = arith.divf %237, %238 : vector<8x32xf32>
    %240 = vector.extract_strided_slice %233 {offsets = [0, 32], sizes = [8, 32], strides = [1, 1]} : vector<8x128xf32> to vector<8x32xf32>
    %241 = arith.negf %240 : vector<8x32xf32>
    %242 = math.exp %241 : vector<8x32xf32>
    %cst_113 = arith.constant 1.000000e+00 : f32
    %243 = vector.broadcast %cst_113 : f32 to vector<8x32xf32>
    %244 = arith.addf %243, %242 : vector<8x32xf32>
    %245 = arith.divf %243, %244 : vector<8x32xf32>
    %246 = vector.extract_strided_slice %233 {offsets = [0, 64], sizes = [8, 32], strides = [1, 1]} : vector<8x128xf32> to vector<8x32xf32>
    %247 = math.tanh %246 : vector<8x32xf32>
    %248 = vector.extract_strided_slice %233 {offsets = [0, 96], sizes = [8, 32], strides = [1, 1]} : vector<8x128xf32> to vector<8x32xf32>
    %249 = arith.negf %248 : vector<8x32xf32>
    %250 = math.exp %249 : vector<8x32xf32>
    %cst_114 = arith.constant 1.000000e+00 : f32
    %251 = vector.broadcast %cst_114 : f32 to vector<8x32xf32>
    %252 = arith.addf %251, %250 : vector<8x32xf32>
    %253 = arith.divf %251, %252 : vector<8x32xf32>
    %254 = arith.mulf %245, %228 : vector<8x32xf32>
    %255 = arith.mulf %239, %247 : vector<8x32xf32>
    %256 = arith.addf %254, %255 : vector<8x32xf32>
    %257 = math.tanh %256 : vector<8x32xf32>
    %258 = arith.mulf %253, %257 : vector<8x32xf32>
    %c0_115 = arith.constant 0 : index
    %c0_116 = arith.constant 0 : index
    %c0_117 = arith.constant 0 : index
    %259 = vector.load %arg7[%c0_115, %c0_116, %c0_117] : memref<4x8x32xf32, #tpu.memory_space<vmem>>, vector<1x8x32xf32>
    %260 = vector.shape_cast %259 : vector<1x8x32xf32> to vector<8x32xf32>
    %261 = vector.shape_cast %256 : vector<8x32xf32> to vector<1x8x32xf32>
    tpu.vector_store %arg7[%c0_115, %c0_116, %c0_117], %261 {strides = array<i32>} : memref<4x8x32xf32, #tpu.memory_space<vmem>>, vector<1x8x32xf32>,
    %c0_118 = arith.constant 0 : index
    %c0_119 = arith.constant 0 : index
    %c0_120 = arith.constant 0 : index
    %262 = vector.load %arg6[%c0_118, %c0_119, %c0_120] : memref<4x8x32xf32, #tpu.memory_space<vmem>>, vector<1x8x32xf32>
    %263 = vector.shape_cast %262 : vector<1x8x32xf32> to vector<8x32xf32>
    %264 = vector.shape_cast %258 : vector<8x32xf32> to vector<1x8x32xf32>
    tpu.vector_store %arg6[%c0_118, %c0_119, %c0_120], %264 {strides = array<i32>} : memref<4x8x32xf32, #tpu.memory_space<vmem>>, vector<1x8x32xf32>,
    %265 = arith.index_cast %c5_i32 : i32 to index
    %c0_121 = arith.constant 0 : index
    %c0_122 = arith.constant 0 : index
    %266 = vector.load %arg8[%265, %c0_121, %c0_122] : memref<8x8x32xf32, #tpu.memory_space<vmem>>, vector<1x8x32xf32>
    %267 = vector.shape_cast %266 : vector<1x8x32xf32> to vector<8x32xf32>
    %268 = vector.shape_cast %258 : vector<8x32xf32> to vector<1x8x32xf32>
    tpu.vector_store %arg8[%265, %c0_121, %c0_122], %268 {strides = array<i32>} : memref<8x8x32xf32, #tpu.memory_space<vmem>>, vector<1x8x32xf32>,
    %c6_i32 = arith.constant 6 : i32
    %c0_123 = arith.constant 0 : index
    %c0_124 = arith.constant 0 : index
    %c0_125 = arith.constant 0 : index
    %269 = vector.load %arg6[%c0_123, %c0_124, %c0_125] : memref<4x8x32xf32, #tpu.memory_space<vmem>>, vector<1x8x32xf32>
    %270 = vector.shape_cast %269 : vector<1x8x32xf32> to vector<8x32xf32>
    %c0_126 = arith.constant 0 : index
    %c0_127 = arith.constant 0 : index
    %c0_128 = arith.constant 0 : index
    %271 = vector.load %arg7[%c0_126, %c0_127, %c0_128] : memref<4x8x32xf32, #tpu.memory_space<vmem>>, vector<1x8x32xf32>
    %272 = vector.shape_cast %271 : vector<1x8x32xf32> to vector<8x32xf32>
    %273 = arith.index_cast %c6_i32 : i32 to index
    %c0_129 = arith.constant 0 : index
    %c0_130 = arith.constant 0 : index
    %274 = vector.load %arg1[%273, %c0_129, %c0_130] : memref<8x8x128xf32, #tpu.memory_space<vmem>>, vector<1x8x128xf32>
    %275 = vector.shape_cast %274 : vector<1x8x128xf32> to vector<8x128xf32>
    %cst_131 = arith.constant dense<0.000000e+00> : vector<8x128xf32>
    %276 = tpu.matmul %270, %4, %cst_131 {dimension_numbers = #tpu.dot_dimension_numbers<[1], [0], [0], [1], [0, 0, 1, 1], [], []>} : vector<8x32xf32>, vector<32x128xf32>, vector<8x128xf32> -> vector<8x128xf32>
    %277 = arith.addf %275, %276 : vector<8x128xf32>
    %278 = vector.extract_strided_slice %277 {offsets = [0, 0], sizes = [8, 32], strides = [1, 1]} : vector<8x128xf32> to vector<8x32xf32>
    %279 = arith.negf %278 : vector<8x32xf32>
    %280 = math.exp %279 : vector<8x32xf32>
    %cst_132 = arith.constant 1.000000e+00 : f32
    %281 = vector.broadcast %cst_132 : f32 to vector<8x32xf32>
    %282 = arith.addf %281, %280 : vector<8x32xf32>
    %283 = arith.divf %281, %282 : vector<8x32xf32>
    %284 = vector.extract_strided_slice %277 {offsets = [0, 32], sizes = [8, 32], strides = [1, 1]} : vector<8x128xf32> to vector<8x32xf32>
    %285 = arith.negf %284 : vector<8x32xf32>
    %286 = math.exp %285 : vector<8x32xf32>
    %cst_133 = arith.constant 1.000000e+00 : f32
    %287 = vector.broadcast %cst_133 : f32 to vector<8x32xf32>
    %288 = arith.addf %287, %286 : vector<8x32xf32>
    %289 = arith.divf %287, %288 : vector<8x32xf32>
    %290 = vector.extract_strided_slice %277 {offsets = [0, 64], sizes = [8, 32], strides = [1, 1]} : vector<8x128xf32> to vector<8x32xf32>
    %291 = math.tanh %290 : vector<8x32xf32>
    %292 = vector.extract_strided_slice %277 {offsets = [0, 96], sizes = [8, 32], strides = [1, 1]} : vector<8x128xf32> to vector<8x32xf32>
    %293 = arith.negf %292 : vector<8x32xf32>
    %294 = math.exp %293 : vector<8x32xf32>
    %cst_134 = arith.constant 1.000000e+00 : f32
    %295 = vector.broadcast %cst_134 : f32 to vector<8x32xf32>
    %296 = arith.addf %295, %294 : vector<8x32xf32>
    %297 = arith.divf %295, %296 : vector<8x32xf32>
    %298 = arith.mulf %289, %272 : vector<8x32xf32>
    %299 = arith.mulf %283, %291 : vector<8x32xf32>
    %300 = arith.addf %298, %299 : vector<8x32xf32>
    %301 = math.tanh %300 : vector<8x32xf32>
    %302 = arith.mulf %297, %301 : vector<8x32xf32>
    %c0_135 = arith.constant 0 : index
    %c0_136 = arith.constant 0 : index
    %c0_137 = arith.constant 0 : index
    %303 = vector.load %arg7[%c0_135, %c0_136, %c0_137] : memref<4x8x32xf32, #tpu.memory_space<vmem>>, vector<1x8x32xf32>
    %304 = vector.shape_cast %303 : vector<1x8x32xf32> to vector<8x32xf32>
    %305 = vector.shape_cast %300 : vector<8x32xf32> to vector<1x8x32xf32>
    tpu.vector_store %arg7[%c0_135, %c0_136, %c0_137], %305 {strides = array<i32>} : memref<4x8x32xf32, #tpu.memory_space<vmem>>, vector<1x8x32xf32>,
    %c0_138 = arith.constant 0 : index
    %c0_139 = arith.constant 0 : index
    %c0_140 = arith.constant 0 : index
    %306 = vector.load %arg6[%c0_138, %c0_139, %c0_140] : memref<4x8x32xf32, #tpu.memory_space<vmem>>, vector<1x8x32xf32>
    %307 = vector.shape_cast %306 : vector<1x8x32xf32> to vector<8x32xf32>
    %308 = vector.shape_cast %302 : vector<8x32xf32> to vector<1x8x32xf32>
    tpu.vector_store %arg6[%c0_138, %c0_139, %c0_140], %308 {strides = array<i32>} : memref<4x8x32xf32, #tpu.memory_space<vmem>>, vector<1x8x32xf32>,
    %309 = arith.index_cast %c6_i32 : i32 to index
    %c0_141 = arith.constant 0 : index
    %c0_142 = arith.constant 0 : index
    %310 = vector.load %arg8[%309, %c0_141, %c0_142] : memref<8x8x32xf32, #tpu.memory_space<vmem>>, vector<1x8x32xf32>
    %311 = vector.shape_cast %310 : vector<1x8x32xf32> to vector<8x32xf32>
    %312 = vector.shape_cast %302 : vector<8x32xf32> to vector<1x8x32xf32>
    tpu.vector_store %arg8[%309, %c0_141, %c0_142], %312 {strides = array<i32>} : memref<8x8x32xf32, #tpu.memory_space<vmem>>, vector<1x8x32xf32>,
    %c7_i32 = arith.constant 7 : i32
    %c0_143 = arith.constant 0 : index
    %c0_144 = arith.constant 0 : index
    %c0_145 = arith.constant 0 : index
    %313 = vector.load %arg6[%c0_143, %c0_144, %c0_145] : memref<4x8x32xf32, #tpu.memory_space<vmem>>, vector<1x8x32xf32>
    %314 = vector.shape_cast %313 : vector<1x8x32xf32> to vector<8x32xf32>
    %c0_146 = arith.constant 0 : index
    %c0_147 = arith.constant 0 : index
    %c0_148 = arith.constant 0 : index
    %315 = vector.load %arg7[%c0_146, %c0_147, %c0_148] : memref<4x8x32xf32, #tpu.memory_space<vmem>>, vector<1x8x32xf32>
    %316 = vector.shape_cast %315 : vector<1x8x32xf32> to vector<8x32xf32>
    %317 = arith.index_cast %c7_i32 : i32 to index
    %c0_149 = arith.constant 0 : index
    %c0_150 = arith.constant 0 : index
    %318 = vector.load %arg1[%317, %c0_149, %c0_150] : memref<8x8x128xf32, #tpu.memory_space<vmem>>, vector<1x8x128xf32>
    %319 = vector.shape_cast %318 : vector<1x8x128xf32> to vector<8x128xf32>
    %cst_151 = arith.constant dense<0.000000e+00> : vector<8x128xf32>
    %320 = tpu.matmul %314, %4, %cst_151 {dimension_numbers = #tpu.dot_dimension_numbers<[1], [0], [0], [1], [0, 0, 1, 1], [], []>} : vector<8x32xf32>, vector<32x128xf32>, vector<8x128xf32> -> vector<8x128xf32>
    %321 = arith.addf %319, %320 : vector<8x128xf32>
    %322 = vector.extract_strided_slice %321 {offsets = [0, 0], sizes = [8, 32], strides = [1, 1]} : vector<8x128xf32> to vector<8x32xf32>
    %323 = arith.negf %322 : vector<8x32xf32>
    %324 = math.exp %323 : vector<8x32xf32>
    %cst_152 = arith.constant 1.000000e+00 : f32
    %325 = vector.broadcast %cst_152 : f32 to vector<8x32xf32>
    %326 = arith.addf %325, %324 : vector<8x32xf32>
    %327 = arith.divf %325, %326 : vector<8x32xf32>
    %328 = vector.extract_strided_slice %321 {offsets = [0, 32], sizes = [8, 32], strides = [1, 1]} : vector<8x128xf32> to vector<8x32xf32>
    %329 = arith.negf %328 : vector<8x32xf32>
    %330 = math.exp %329 : vector<8x32xf32>
    %cst_153 = arith.constant 1.000000e+00 : f32
    %331 = vector.broadcast %cst_153 : f32 to vector<8x32xf32>
    %332 = arith.addf %331, %330 : vector<8x32xf32>
    %333 = arith.divf %331, %332 : vector<8x32xf32>
    %334 = vector.extract_strided_slice %321 {offsets = [0, 64], sizes = [8, 32], strides = [1, 1]} : vector<8x128xf32> to vector<8x32xf32>
    %335 = math.tanh %334 : vector<8x32xf32>
    %336 = vector.extract_strided_slice %321 {offsets = [0, 96], sizes = [8, 32], strides = [1, 1]} : vector<8x128xf32> to vector<8x32xf32>
    %337 = arith.negf %336 : vector<8x32xf32>
    %338 = math.exp %337 : vector<8x32xf32>
    %cst_154 = arith.constant 1.000000e+00 : f32
    %339 = vector.broadcast %cst_154 : f32 to vector<8x32xf32>
    %340 = arith.addf %339, %338 : vector<8x32xf32>
    %341 = arith.divf %339, %340 : vector<8x32xf32>
    %342 = arith.mulf %333, %316 : vector<8x32xf32>
    %343 = arith.mulf %327, %335 : vector<8x32xf32>
    %344 = arith.addf %342, %343 : vector<8x32xf32>
    %345 = math.tanh %344 : vector<8x32xf32>
    %346 = arith.mulf %341, %345 : vector<8x32xf32>
    %c0_155 = arith.constant 0 : index
    %c0_156 = arith.constant 0 : index
    %c0_157 = arith.constant 0 : index
    %347 = vector.load %arg7[%c0_155, %c0_156, %c0_157] : memref<4x8x32xf32, #tpu.memory_space<vmem>>, vector<1x8x32xf32>
    %348 = vector.shape_cast %347 : vector<1x8x32xf32> to vector<8x32xf32>
    %349 = vector.shape_cast %344 : vector<8x32xf32> to vector<1x8x32xf32>
    tpu.vector_store %arg7[%c0_155, %c0_156, %c0_157], %349 {strides = array<i32>} : memref<4x8x32xf32, #tpu.memory_space<vmem>>, vector<1x8x32xf32>,
    %c0_158 = arith.constant 0 : index
    %c0_159 = arith.constant 0 : index
    %c0_160 = arith.constant 0 : index
    %350 = vector.load %arg6[%c0_158, %c0_159, %c0_160] : memref<4x8x32xf32, #tpu.memory_space<vmem>>, vector<1x8x32xf32>
    %351 = vector.shape_cast %350 : vector<1x8x32xf32> to vector<8x32xf32>
    %352 = vector.shape_cast %346 : vector<8x32xf32> to vector<1x8x32xf32>
    tpu.vector_store %arg6[%c0_158, %c0_159, %c0_160], %352 {strides = array<i32>} : memref<4x8x32xf32, #tpu.memory_space<vmem>>, vector<1x8x32xf32>,
    %353 = arith.index_cast %c7_i32 : i32 to index
    %c0_161 = arith.constant 0 : index
    %c0_162 = arith.constant 0 : index
    %354 = vector.load %arg8[%353, %c0_161, %c0_162] : memref<8x8x32xf32, #tpu.memory_space<vmem>>, vector<1x8x32xf32>
    %355 = vector.shape_cast %354 : vector<1x8x32xf32> to vector<8x32xf32>
    %356 = vector.shape_cast %346 : vector<8x32xf32> to vector<1x8x32xf32>
    tpu.vector_store %arg8[%353, %c0_161, %c0_162], %356 {strides = array<i32>} : memref<8x8x32xf32, #tpu.memory_space<vmem>>, vector<1x8x32xf32>,
    %c8_i32 = arith.constant 8 : i32
    %c0_163 = arith.constant 0 : index
    %c0_164 = arith.constant 0 : index
    %c0_165 = arith.constant 0 : index
    %357 = vector.load %arg8[%c0_163, %c0_164, %c0_165] : memref<8x8x32xf32, #tpu.memory_space<vmem>>, vector<8x8x32xf32>
    %358 = vector.shape_cast %357 : vector<8x8x32xf32> to vector<64x32xf32>
    %c0_166 = arith.constant 0 : index
    %c0_167 = arith.constant 0 : index
    %c0_168 = arith.constant 0 : index
    %359 = vector.load %arg2[%c0_166, %c0_167, %c0_168] : memref<3x32x128xf32, #tpu.memory_space<vmem>>, vector<1x32x128xf32>
    %360 = vector.shape_cast %359 : vector<1x32x128xf32> to vector<32x128xf32>
    %cst_169 = arith.constant dense<0.000000e+00> : vector<64x128xf32>
    %361 = tpu.matmul %358, %360, %cst_169 {dimension_numbers = #tpu.dot_dimension_numbers<[1], [0], [0], [1], [0, 0, 1, 1], [], []>} : vector<64x32xf32>, vector<32x128xf32>, vector<64x128xf32> -> vector<64x128xf32>
    %362 = vector.shape_cast %361 : vector<64x128xf32> to vector<8x8x128xf32>
    %c0_170 = arith.constant 0 : index
    %c0_171 = arith.constant 0 : index
    %c0_172 = arith.constant 0 : index
    %363 = vector.load %arg4[%c0_170, %c0_171, %c0_172] : memref<3x1x128xf32, #tpu.memory_space<vmem>>, vector<1x1x128xf32>
    %364 = vector.shape_cast %363 : vector<1x1x128xf32> to vector<1x128xf32>
    %365 = vector.shape_cast %364 : vector<1x128xf32> to vector<1x1x128xf32>
    %366 = vector.broadcast %365 : vector<1x1x128xf32> to vector<8x8x128xf32>
    %367 = arith.addf %362, %366 : vector<8x8x128xf32>
    %c0_173 = arith.constant 0 : index
    %c0_174 = arith.constant 0 : index
    %c0_175 = arith.constant 0 : index
    %368 = vector.load %arg9[%c0_173, %c0_174, %c0_175] : memref<8x8x128xf32, #tpu.memory_space<vmem>>, vector<8x8x128xf32>
    tpu.vector_store %arg9[%c0_173, %c0_174, %c0_175], %367 {strides = array<i32>} : memref<8x8x128xf32, #tpu.memory_space<vmem>>, vector<8x8x128xf32>,
    %c1 = arith.constant 1 : index
    %c0_176 = arith.constant 0 : index
    %c0_177 = arith.constant 0 : index
    %369 = vector.load %arg3[%c1, %c0_176, %c0_177] : memref<4x32x128xf32, #tpu.memory_space<vmem>>, vector<1x32x128xf32>
    %370 = vector.shape_cast %369 : vector<1x32x128xf32> to vector<32x128xf32>
    %c0_i32_178 = arith.constant 0 : i32
    %c1_179 = arith.constant 1 : index
    %c0_180 = arith.constant 0 : index
    %c0_181 = arith.constant 0 : index
    %371 = vector.load %arg6[%c1_179, %c0_180, %c0_181] : memref<4x8x32xf32, #tpu.memory_space<vmem>>, vector<1x8x32xf32>
    %372 = vector.shape_cast %371 : vector<1x8x32xf32> to vector<8x32xf32>
    %c1_182 = arith.constant 1 : index
    %c0_183 = arith.constant 0 : index
    %c0_184 = arith.constant 0 : index
    %373 = vector.load %arg7[%c1_182, %c0_183, %c0_184] : memref<4x8x32xf32, #tpu.memory_space<vmem>>, vector<1x8x32xf32>
    %374 = vector.shape_cast %373 : vector<1x8x32xf32> to vector<8x32xf32>
    %375 = arith.index_cast %c0_i32_178 : i32 to index
    %c0_185 = arith.constant 0 : index
    %c0_186 = arith.constant 0 : index
    %376 = vector.load %arg9[%375, %c0_185, %c0_186] : memref<8x8x128xf32, #tpu.memory_space<vmem>>, vector<1x8x128xf32>
    %377 = vector.shape_cast %376 : vector<1x8x128xf32> to vector<8x128xf32>
    %cst_187 = arith.constant dense<0.000000e+00> : vector<8x128xf32>
    %378 = tpu.matmul %372, %370, %cst_187 {dimension_numbers = #tpu.dot_dimension_numbers<[1], [0], [0], [1], [0, 0, 1, 1], [], []>} : vector<8x32xf32>, vector<32x128xf32>, vector<8x128xf32> -> vector<8x128xf32>
    %379 = arith.addf %377, %378 : vector<8x128xf32>
    %380 = vector.extract_strided_slice %379 {offsets = [0, 0], sizes = [8, 32], strides = [1, 1]} : vector<8x128xf32> to vector<8x32xf32>
    %381 = arith.negf %380 : vector<8x32xf32>
    %382 = math.exp %381 : vector<8x32xf32>
    %cst_188 = arith.constant 1.000000e+00 : f32
    %383 = vector.broadcast %cst_188 : f32 to vector<8x32xf32>
    %384 = arith.addf %383, %382 : vector<8x32xf32>
    %385 = arith.divf %383, %384 : vector<8x32xf32>
    %386 = vector.extract_strided_slice %379 {offsets = [0, 32], sizes = [8, 32], strides = [1, 1]} : vector<8x128xf32> to vector<8x32xf32>
    %387 = arith.negf %386 : vector<8x32xf32>
    %388 = math.exp %387 : vector<8x32xf32>
    %cst_189 = arith.constant 1.000000e+00 : f32
    %389 = vector.broadcast %cst_189 : f32 to vector<8x32xf32>
    %390 = arith.addf %389, %388 : vector<8x32xf32>
    %391 = arith.divf %389, %390 : vector<8x32xf32>
    %392 = vector.extract_strided_slice %379 {offsets = [0, 64], sizes = [8, 32], strides = [1, 1]} : vector<8x128xf32> to vector<8x32xf32>
    %393 = math.tanh %392 : vector<8x32xf32>
    %394 = vector.extract_strided_slice %379 {offsets = [0, 96], sizes = [8, 32], strides = [1, 1]} : vector<8x128xf32> to vector<8x32xf32>
    %395 = arith.negf %394 : vector<8x32xf32>
    %396 = math.exp %395 : vector<8x32xf32>
    %cst_190 = arith.constant 1.000000e+00 : f32
    %397 = vector.broadcast %cst_190 : f32 to vector<8x32xf32>
    %398 = arith.addf %397, %396 : vector<8x32xf32>
    %399 = arith.divf %397, %398 : vector<8x32xf32>
    %400 = arith.mulf %391, %374 : vector<8x32xf32>
    %401 = arith.mulf %385, %393 : vector<8x32xf32>
    %402 = arith.addf %400, %401 : vector<8x32xf32>
    %403 = math.tanh %402 : vector<8x32xf32>
    %404 = arith.mulf %399, %403 : vector<8x32xf32>
    %c1_191 = arith.constant 1 : index
    %c0_192 = arith.constant 0 : index
    %c0_193 = arith.constant 0 : index
    %405 = vector.load %arg7[%c1_191, %c0_192, %c0_193] : memref<4x8x32xf32, #tpu.memory_space<vmem>>, vector<1x8x32xf32>
    %406 = vector.shape_cast %405 : vector<1x8x32xf32> to vector<8x32xf32>
    %407 = vector.shape_cast %402 : vector<8x32xf32> to vector<1x8x32xf32>
    tpu.vector_store %arg7[%c1_191, %c0_192, %c0_193], %407 {strides = array<i32>} : memref<4x8x32xf32, #tpu.memory_space<vmem>>, vector<1x8x32xf32>,
    %c1_194 = arith.constant 1 : index
    %c0_195 = arith.constant 0 : index
    %c0_196 = arith.constant 0 : index
    %408 = vector.load %arg6[%c1_194, %c0_195, %c0_196] : memref<4x8x32xf32, #tpu.memory_space<vmem>>, vector<1x8x32xf32>
    %409 = vector.shape_cast %408 : vector<1x8x32xf32> to vector<8x32xf32>
    %410 = vector.shape_cast %404 : vector<8x32xf32> to vector<1x8x32xf32>
    tpu.vector_store %arg6[%c1_194, %c0_195, %c0_196], %410 {strides = array<i32>} : memref<4x8x32xf32, #tpu.memory_space<vmem>>, vector<1x8x32xf32>,
    %411 = arith.index_cast %c0_i32_178 : i32 to index
    %c0_197 = arith.constant 0 : index
    %c0_198 = arith.constant 0 : index
    %412 = vector.load %arg8[%411, %c0_197, %c0_198] : memref<8x8x32xf32, #tpu.memory_space<vmem>>, vector<1x8x32xf32>
    %413 = vector.shape_cast %412 : vector<1x8x32xf32> to vector<8x32xf32>
    %414 = vector.shape_cast %404 : vector<8x32xf32> to vector<1x8x32xf32>
    tpu.vector_store %arg8[%411, %c0_197, %c0_198], %414 {strides = array<i32>} : memref<8x8x32xf32, #tpu.memory_space<vmem>>, vector<1x8x32xf32>,
    %c1_i32_199 = arith.constant 1 : i32
    %c1_200 = arith.constant 1 : index
    %c0_201 = arith.constant 0 : index
    %c0_202 = arith.constant 0 : index
    %415 = vector.load %arg6[%c1_200, %c0_201, %c0_202] : memref<4x8x32xf32, #tpu.memory_space<vmem>>, vector<1x8x32xf32>
    %416 = vector.shape_cast %415 : vector<1x8x32xf32> to vector<8x32xf32>
    %c1_203 = arith.constant 1 : index
    %c0_204 = arith.constant 0 : index
    %c0_205 = arith.constant 0 : index
    %417 = vector.load %arg7[%c1_203, %c0_204, %c0_205] : memref<4x8x32xf32, #tpu.memory_space<vmem>>, vector<1x8x32xf32>
    %418 = vector.shape_cast %417 : vector<1x8x32xf32> to vector<8x32xf32>
    %419 = arith.index_cast %c1_i32_199 : i32 to index
    %c0_206 = arith.constant 0 : index
    %c0_207 = arith.constant 0 : index
    %420 = vector.load %arg9[%419, %c0_206, %c0_207] : memref<8x8x128xf32, #tpu.memory_space<vmem>>, vector<1x8x128xf32>
    %421 = vector.shape_cast %420 : vector<1x8x128xf32> to vector<8x128xf32>
    %cst_208 = arith.constant dense<0.000000e+00> : vector<8x128xf32>
    %422 = tpu.matmul %416, %370, %cst_208 {dimension_numbers = #tpu.dot_dimension_numbers<[1], [0], [0], [1], [0, 0, 1, 1], [], []>} : vector<8x32xf32>, vector<32x128xf32>, vector<8x128xf32> -> vector<8x128xf32>
    %423 = arith.addf %421, %422 : vector<8x128xf32>
    %424 = vector.extract_strided_slice %423 {offsets = [0, 0], sizes = [8, 32], strides = [1, 1]} : vector<8x128xf32> to vector<8x32xf32>
    %425 = arith.negf %424 : vector<8x32xf32>
    %426 = math.exp %425 : vector<8x32xf32>
    %cst_209 = arith.constant 1.000000e+00 : f32
    %427 = vector.broadcast %cst_209 : f32 to vector<8x32xf32>
    %428 = arith.addf %427, %426 : vector<8x32xf32>
    %429 = arith.divf %427, %428 : vector<8x32xf32>
    %430 = vector.extract_strided_slice %423 {offsets = [0, 32], sizes = [8, 32], strides = [1, 1]} : vector<8x128xf32> to vector<8x32xf32>
    %431 = arith.negf %430 : vector<8x32xf32>
    %432 = math.exp %431 : vector<8x32xf32>
    %cst_210 = arith.constant 1.000000e+00 : f32
    %433 = vector.broadcast %cst_210 : f32 to vector<8x32xf32>
    %434 = arith.addf %433, %432 : vector<8x32xf32>
    %435 = arith.divf %433, %434 : vector<8x32xf32>
    %436 = vector.extract_strided_slice %423 {offsets = [0, 64], sizes = [8, 32], strides = [1, 1]} : vector<8x128xf32> to vector<8x32xf32>
    %437 = math.tanh %436 : vector<8x32xf32>
    %438 = vector.extract_strided_slice %423 {offsets = [0, 96], sizes = [8, 32], strides = [1, 1]} : vector<8x128xf32> to vector<8x32xf32>
    %439 = arith.negf %438 : vector<8x32xf32>
    %440 = math.exp %439 : vector<8x32xf32>
    %cst_211 = arith.constant 1.000000e+00 : f32
    %441 = vector.broadcast %cst_211 : f32 to vector<8x32xf32>
    %442 = arith.addf %441, %440 : vector<8x32xf32>
    %443 = arith.divf %441, %442 : vector<8x32xf32>
    %444 = arith.mulf %435, %418 : vector<8x32xf32>
    %445 = arith.mulf %429, %437 : vector<8x32xf32>
    %446 = arith.addf %444, %445 : vector<8x32xf32>
    %447 = math.tanh %446 : vector<8x32xf32>
    %448 = arith.mulf %443, %447 : vector<8x32xf32>
    %c1_212 = arith.constant 1 : index
    %c0_213 = arith.constant 0 : index
    %c0_214 = arith.constant 0 : index
    %449 = vector.load %arg7[%c1_212, %c0_213, %c0_214] : memref<4x8x32xf32, #tpu.memory_space<vmem>>, vector<1x8x32xf32>
    %450 = vector.shape_cast %449 : vector<1x8x32xf32> to vector<8x32xf32>
    %451 = vector.shape_cast %446 : vector<8x32xf32> to vector<1x8x32xf32>
    tpu.vector_store %arg7[%c1_212, %c0_213, %c0_214], %451 {strides = array<i32>} : memref<4x8x32xf32, #tpu.memory_space<vmem>>, vector<1x8x32xf32>,
    %c1_215 = arith.constant 1 : index
    %c0_216 = arith.constant 0 : index
    %c0_217 = arith.constant 0 : index
    %452 = vector.load %arg6[%c1_215, %c0_216, %c0_217] : memref<4x8x32xf32, #tpu.memory_space<vmem>>, vector<1x8x32xf32>
    %453 = vector.shape_cast %452 : vector<1x8x32xf32> to vector<8x32xf32>
    %454 = vector.shape_cast %448 : vector<8x32xf32> to vector<1x8x32xf32>
    tpu.vector_store %arg6[%c1_215, %c0_216, %c0_217], %454 {strides = array<i32>} : memref<4x8x32xf32, #tpu.memory_space<vmem>>, vector<1x8x32xf32>,
    %455 = arith.index_cast %c1_i32_199 : i32 to index
    %c0_218 = arith.constant 0 : index
    %c0_219 = arith.constant 0 : index
    %456 = vector.load %arg8[%455, %c0_218, %c0_219] : memref<8x8x32xf32, #tpu.memory_space<vmem>>, vector<1x8x32xf32>
    %457 = vector.shape_cast %456 : vector<1x8x32xf32> to vector<8x32xf32>
    %458 = vector.shape_cast %448 : vector<8x32xf32> to vector<1x8x32xf32>
    tpu.vector_store %arg8[%455, %c0_218, %c0_219], %458 {strides = array<i32>} : memref<8x8x32xf32, #tpu.memory_space<vmem>>, vector<1x8x32xf32>,
    %c2_i32_220 = arith.constant 2 : i32
    %c1_221 = arith.constant 1 : index
    %c0_222 = arith.constant 0 : index
    %c0_223 = arith.constant 0 : index
    %459 = vector.load %arg6[%c1_221, %c0_222, %c0_223] : memref<4x8x32xf32, #tpu.memory_space<vmem>>, vector<1x8x32xf32>
    %460 = vector.shape_cast %459 : vector<1x8x32xf32> to vector<8x32xf32>
    %c1_224 = arith.constant 1 : index
    %c0_225 = arith.constant 0 : index
    %c0_226 = arith.constant 0 : index
    %461 = vector.load %arg7[%c1_224, %c0_225, %c0_226] : memref<4x8x32xf32, #tpu.memory_space<vmem>>, vector<1x8x32xf32>
    %462 = vector.shape_cast %461 : vector<1x8x32xf32> to vector<8x32xf32>
    %463 = arith.index_cast %c2_i32_220 : i32 to index
    %c0_227 = arith.constant 0 : index
    %c0_228 = arith.constant 0 : index
    %464 = vector.load %arg9[%463, %c0_227, %c0_228] : memref<8x8x128xf32, #tpu.memory_space<vmem>>, vector<1x8x128xf32>
    %465 = vector.shape_cast %464 : vector<1x8x128xf32> to vector<8x128xf32>
    %cst_229 = arith.constant dense<0.000000e+00> : vector<8x128xf32>
    %466 = tpu.matmul %460, %370, %cst_229 {dimension_numbers = #tpu.dot_dimension_numbers<[1], [0], [0], [1], [0, 0, 1, 1], [], []>} : vector<8x32xf32>, vector<32x128xf32>, vector<8x128xf32> -> vector<8x128xf32>
    %467 = arith.addf %465, %466 : vector<8x128xf32>
    %468 = vector.extract_strided_slice %467 {offsets = [0, 0], sizes = [8, 32], strides = [1, 1]} : vector<8x128xf32> to vector<8x32xf32>
    %469 = arith.negf %468 : vector<8x32xf32>
    %470 = math.exp %469 : vector<8x32xf32>
    %cst_230 = arith.constant 1.000000e+00 : f32
    %471 = vector.broadcast %cst_230 : f32 to vector<8x32xf32>
    %472 = arith.addf %471, %470 : vector<8x32xf32>
    %473 = arith.divf %471, %472 : vector<8x32xf32>
    %474 = vector.extract_strided_slice %467 {offsets = [0, 32], sizes = [8, 32], strides = [1, 1]} : vector<8x128xf32> to vector<8x32xf32>
    %475 = arith.negf %474 : vector<8x32xf32>
    %476 = math.exp %475 : vector<8x32xf32>
    %cst_231 = arith.constant 1.000000e+00 : f32
    %477 = vector.broadcast %cst_231 : f32 to vector<8x32xf32>
    %478 = arith.addf %477, %476 : vector<8x32xf32>
    %479 = arith.divf %477, %478 : vector<8x32xf32>
    %480 = vector.extract_strided_slice %467 {offsets = [0, 64], sizes = [8, 32], strides = [1, 1]} : vector<8x128xf32> to vector<8x32xf32>
    %481 = math.tanh %480 : vector<8x32xf32>
    %482 = vector.extract_strided_slice %467 {offsets = [0, 96], sizes = [8, 32], strides = [1, 1]} : vector<8x128xf32> to vector<8x32xf32>
    %483 = arith.negf %482 : vector<8x32xf32>
    %484 = math.exp %483 : vector<8x32xf32>
    %cst_232 = arith.constant 1.000000e+00 : f32
    %485 = vector.broadcast %cst_232 : f32 to vector<8x32xf32>
    %486 = arith.addf %485, %484 : vector<8x32xf32>
    %487 = arith.divf %485, %486 : vector<8x32xf32>
    %488 = arith.mulf %479, %462 : vector<8x32xf32>
    %489 = arith.mulf %473, %481 : vector<8x32xf32>
    %490 = arith.addf %488, %489 : vector<8x32xf32>
    %491 = math.tanh %490 : vector<8x32xf32>
    %492 = arith.mulf %487, %491 : vector<8x32xf32>
    %c1_233 = arith.constant 1 : index
    %c0_234 = arith.constant 0 : index
    %c0_235 = arith.constant 0 : index
    %493 = vector.load %arg7[%c1_233, %c0_234, %c0_235] : memref<4x8x32xf32, #tpu.memory_space<vmem>>, vector<1x8x32xf32>
    %494 = vector.shape_cast %493 : vector<1x8x32xf32> to vector<8x32xf32>
    %495 = vector.shape_cast %490 : vector<8x32xf32> to vector<1x8x32xf32>
    tpu.vector_store %arg7[%c1_233, %c0_234, %c0_235], %495 {strides = array<i32>} : memref<4x8x32xf32, #tpu.memory_space<vmem>>, vector<1x8x32xf32>,
    %c1_236 = arith.constant 1 : index
    %c0_237 = arith.constant 0 : index
    %c0_238 = arith.constant 0 : index
    %496 = vector.load %arg6[%c1_236, %c0_237, %c0_238] : memref<4x8x32xf32, #tpu.memory_space<vmem>>, vector<1x8x32xf32>
    %497 = vector.shape_cast %496 : vector<1x8x32xf32> to vector<8x32xf32>
    %498 = vector.shape_cast %492 : vector<8x32xf32> to vector<1x8x32xf32>
    tpu.vector_store %arg6[%c1_236, %c0_237, %c0_238], %498 {strides = array<i32>} : memref<4x8x32xf32, #tpu.memory_space<vmem>>, vector<1x8x32xf32>,
    %499 = arith.index_cast %c2_i32_220 : i32 to index
    %c0_239 = arith.constant 0 : index
    %c0_240 = arith.constant 0 : index
    %500 = vector.load %arg8[%499, %c0_239, %c0_240] : memref<8x8x32xf32, #tpu.memory_space<vmem>>, vector<1x8x32xf32>
    %501 = vector.shape_cast %500 : vector<1x8x32xf32> to vector<8x32xf32>
    %502 = vector.shape_cast %492 : vector<8x32xf32> to vector<1x8x32xf32>
    tpu.vector_store %arg8[%499, %c0_239, %c0_240], %502 {strides = array<i32>} : memref<8x8x32xf32, #tpu.memory_space<vmem>>, vector<1x8x32xf32>,
    %c3_i32_241 = arith.constant 3 : i32
    %c1_242 = arith.constant 1 : index
    %c0_243 = arith.constant 0 : index
    %c0_244 = arith.constant 0 : index
    %503 = vector.load %arg6[%c1_242, %c0_243, %c0_244] : memref<4x8x32xf32, #tpu.memory_space<vmem>>, vector<1x8x32xf32>
    %504 = vector.shape_cast %503 : vector<1x8x32xf32> to vector<8x32xf32>
    %c1_245 = arith.constant 1 : index
    %c0_246 = arith.constant 0 : index
    %c0_247 = arith.constant 0 : index
    %505 = vector.load %arg7[%c1_245, %c0_246, %c0_247] : memref<4x8x32xf32, #tpu.memory_space<vmem>>, vector<1x8x32xf32>
    %506 = vector.shape_cast %505 : vector<1x8x32xf32> to vector<8x32xf32>
    %507 = arith.index_cast %c3_i32_241 : i32 to index
    %c0_248 = arith.constant 0 : index
    %c0_249 = arith.constant 0 : index
    %508 = vector.load %arg9[%507, %c0_248, %c0_249] : memref<8x8x128xf32, #tpu.memory_space<vmem>>, vector<1x8x128xf32>
    %509 = vector.shape_cast %508 : vector<1x8x128xf32> to vector<8x128xf32>
    %cst_250 = arith.constant dense<0.000000e+00> : vector<8x128xf32>
    %510 = tpu.matmul %504, %370, %cst_250 {dimension_numbers = #tpu.dot_dimension_numbers<[1], [0], [0], [1], [0, 0, 1, 1], [], []>} : vector<8x32xf32>, vector<32x128xf32>, vector<8x128xf32> -> vector<8x128xf32>
    %511 = arith.addf %509, %510 : vector<8x128xf32>
    %512 = vector.extract_strided_slice %511 {offsets = [0, 0], sizes = [8, 32], strides = [1, 1]} : vector<8x128xf32> to vector<8x32xf32>
    %513 = arith.negf %512 : vector<8x32xf32>
    %514 = math.exp %513 : vector<8x32xf32>
    %cst_251 = arith.constant 1.000000e+00 : f32
    %515 = vector.broadcast %cst_251 : f32 to vector<8x32xf32>
    %516 = arith.addf %515, %514 : vector<8x32xf32>
    %517 = arith.divf %515, %516 : vector<8x32xf32>
    %518 = vector.extract_strided_slice %511 {offsets = [0, 32], sizes = [8, 32], strides = [1, 1]} : vector<8x128xf32> to vector<8x32xf32>
    %519 = arith.negf %518 : vector<8x32xf32>
    %520 = math.exp %519 : vector<8x32xf32>
    %cst_252 = arith.constant 1.000000e+00 : f32
    %521 = vector.broadcast %cst_252 : f32 to vector<8x32xf32>
    %522 = arith.addf %521, %520 : vector<8x32xf32>
    %523 = arith.divf %521, %522 : vector<8x32xf32>
    %524 = vector.extract_strided_slice %511 {offsets = [0, 64], sizes = [8, 32], strides = [1, 1]} : vector<8x128xf32> to vector<8x32xf32>
    %525 = math.tanh %524 : vector<8x32xf32>
    %526 = vector.extract_strided_slice %511 {offsets = [0, 96], sizes = [8, 32], strides = [1, 1]} : vector<8x128xf32> to vector<8x32xf32>
    %527 = arith.negf %526 : vector<8x32xf32>
    %528 = math.exp %527 : vector<8x32xf32>
    %cst_253 = arith.constant 1.000000e+00 : f32
    %529 = vector.broadcast %cst_253 : f32 to vector<8x32xf32>
    %530 = arith.addf %529, %528 : vector<8x32xf32>
    %531 = arith.divf %529, %530 : vector<8x32xf32>
    %532 = arith.mulf %523, %506 : vector<8x32xf32>
    %533 = arith.mulf %517, %525 : vector<8x32xf32>
    %534 = arith.addf %532, %533 : vector<8x32xf32>
    %535 = math.tanh %534 : vector<8x32xf32>
    %536 = arith.mulf %531, %535 : vector<8x32xf32>
    %c1_254 = arith.constant 1 : index
    %c0_255 = arith.constant 0 : index
    %c0_256 = arith.constant 0 : index
    %537 = vector.load %arg7[%c1_254, %c0_255, %c0_256] : memref<4x8x32xf32, #tpu.memory_space<vmem>>, vector<1x8x32xf32>
    %538 = vector.shape_cast %537 : vector<1x8x32xf32> to vector<8x32xf32>
    %539 = vector.shape_cast %534 : vector<8x32xf32> to vector<1x8x32xf32>
    tpu.vector_store %arg7[%c1_254, %c0_255, %c0_256], %539 {strides = array<i32>} : memref<4x8x32xf32, #tpu.memory_space<vmem>>, vector<1x8x32xf32>,
    %c1_257 = arith.constant 1 : index
    %c0_258 = arith.constant 0 : index
    %c0_259 = arith.constant 0 : index
    %540 = vector.load %arg6[%c1_257, %c0_258, %c0_259] : memref<4x8x32xf32, #tpu.memory_space<vmem>>, vector<1x8x32xf32>
    %541 = vector.shape_cast %540 : vector<1x8x32xf32> to vector<8x32xf32>
    %542 = vector.shape_cast %536 : vector<8x32xf32> to vector<1x8x32xf32>
    tpu.vector_store %arg6[%c1_257, %c0_258, %c0_259], %542 {strides = array<i32>} : memref<4x8x32xf32, #tpu.memory_space<vmem>>, vector<1x8x32xf32>,
    %543 = arith.index_cast %c3_i32_241 : i32 to index
    %c0_260 = arith.constant 0 : index
    %c0_261 = arith.constant 0 : index
    %544 = vector.load %arg8[%543, %c0_260, %c0_261] : memref<8x8x32xf32, #tpu.memory_space<vmem>>, vector<1x8x32xf32>
    %545 = vector.shape_cast %544 : vector<1x8x32xf32> to vector<8x32xf32>
    %546 = vector.shape_cast %536 : vector<8x32xf32> to vector<1x8x32xf32>
    tpu.vector_store %arg8[%543, %c0_260, %c0_261], %546 {strides = array<i32>} : memref<8x8x32xf32, #tpu.memory_space<vmem>>, vector<1x8x32xf32>,
    %c4_i32_262 = arith.constant 4 : i32
    %c1_263 = arith.constant 1 : index
    %c0_264 = arith.constant 0 : index
    %c0_265 = arith.constant 0 : index
    %547 = vector.load %arg6[%c1_263, %c0_264, %c0_265] : memref<4x8x32xf32, #tpu.memory_space<vmem>>, vector<1x8x32xf32>
    %548 = vector.shape_cast %547 : vector<1x8x32xf32> to vector<8x32xf32>
    %c1_266 = arith.constant 1 : index
    %c0_267 = arith.constant 0 : index
    %c0_268 = arith.constant 0 : index
    %549 = vector.load %arg7[%c1_266, %c0_267, %c0_268] : memref<4x8x32xf32, #tpu.memory_space<vmem>>, vector<1x8x32xf32>
    %550 = vector.shape_cast %549 : vector<1x8x32xf32> to vector<8x32xf32>
    %551 = arith.index_cast %c4_i32_262 : i32 to index
    %c0_269 = arith.constant 0 : index
    %c0_270 = arith.constant 0 : index
    %552 = vector.load %arg9[%551, %c0_269, %c0_270] : memref<8x8x128xf32, #tpu.memory_space<vmem>>, vector<1x8x128xf32>
    %553 = vector.shape_cast %552 : vector<1x8x128xf32> to vector<8x128xf32>
    %cst_271 = arith.constant dense<0.000000e+00> : vector<8x128xf32>
    %554 = tpu.matmul %548, %370, %cst_271 {dimension_numbers = #tpu.dot_dimension_numbers<[1], [0], [0], [1], [0, 0, 1, 1], [], []>} : vector<8x32xf32>, vector<32x128xf32>, vector<8x128xf32> -> vector<8x128xf32>
    %555 = arith.addf %553, %554 : vector<8x128xf32>
    %556 = vector.extract_strided_slice %555 {offsets = [0, 0], sizes = [8, 32], strides = [1, 1]} : vector<8x128xf32> to vector<8x32xf32>
    %557 = arith.negf %556 : vector<8x32xf32>
    %558 = math.exp %557 : vector<8x32xf32>
    %cst_272 = arith.constant 1.000000e+00 : f32
    %559 = vector.broadcast %cst_272 : f32 to vector<8x32xf32>
    %560 = arith.addf %559, %558 : vector<8x32xf32>
    %561 = arith.divf %559, %560 : vector<8x32xf32>
    %562 = vector.extract_strided_slice %555 {offsets = [0, 32], sizes = [8, 32], strides = [1, 1]} : vector<8x128xf32> to vector<8x32xf32>
    %563 = arith.negf %562 : vector<8x32xf32>
    %564 = math.exp %563 : vector<8x32xf32>
    %cst_273 = arith.constant 1.000000e+00 : f32
    %565 = vector.broadcast %cst_273 : f32 to vector<8x32xf32>
    %566 = arith.addf %565, %564 : vector<8x32xf32>
    %567 = arith.divf %565, %566 : vector<8x32xf32>
    %568 = vector.extract_strided_slice %555 {offsets = [0, 64], sizes = [8, 32], strides = [1, 1]} : vector<8x128xf32> to vector<8x32xf32>
    %569 = math.tanh %568 : vector<8x32xf32>
    %570 = vector.extract_strided_slice %555 {offsets = [0, 96], sizes = [8, 32], strides = [1, 1]} : vector<8x128xf32> to vector<8x32xf32>
    %571 = arith.negf %570 : vector<8x32xf32>
    %572 = math.exp %571 : vector<8x32xf32>
    %cst_274 = arith.constant 1.000000e+00 : f32
    %573 = vector.broadcast %cst_274 : f32 to vector<8x32xf32>
    %574 = arith.addf %573, %572 : vector<8x32xf32>
    %575 = arith.divf %573, %574 : vector<8x32xf32>
    %576 = arith.mulf %567, %550 : vector<8x32xf32>
    %577 = arith.mulf %561, %569 : vector<8x32xf32>
    %578 = arith.addf %576, %577 : vector<8x32xf32>
    %579 = math.tanh %578 : vector<8x32xf32>
    %580 = arith.mulf %575, %579 : vector<8x32xf32>
    %c1_275 = arith.constant 1 : index
    %c0_276 = arith.constant 0 : index
    %c0_277 = arith.constant 0 : index
    %581 = vector.load %arg7[%c1_275, %c0_276, %c0_277] : memref<4x8x32xf32, #tpu.memory_space<vmem>>, vector<1x8x32xf32>
    %582 = vector.shape_cast %581 : vector<1x8x32xf32> to vector<8x32xf32>
    %583 = vector.shape_cast %578 : vector<8x32xf32> to vector<1x8x32xf32>
    tpu.vector_store %arg7[%c1_275, %c0_276, %c0_277], %583 {strides = array<i32>} : memref<4x8x32xf32, #tpu.memory_space<vmem>>, vector<1x8x32xf32>,
    %c1_278 = arith.constant 1 : index
    %c0_279 = arith.constant 0 : index
    %c0_280 = arith.constant 0 : index
    %584 = vector.load %arg6[%c1_278, %c0_279, %c0_280] : memref<4x8x32xf32, #tpu.memory_space<vmem>>, vector<1x8x32xf32>
    %585 = vector.shape_cast %584 : vector<1x8x32xf32> to vector<8x32xf32>
    %586 = vector.shape_cast %580 : vector<8x32xf32> to vector<1x8x32xf32>
    tpu.vector_store %arg6[%c1_278, %c0_279, %c0_280], %586 {strides = array<i32>} : memref<4x8x32xf32, #tpu.memory_space<vmem>>, vector<1x8x32xf32>,
    %587 = arith.index_cast %c4_i32_262 : i32 to index
    %c0_281 = arith.constant 0 : index
    %c0_282 = arith.constant 0 : index
    %588 = vector.load %arg8[%587, %c0_281, %c0_282] : memref<8x8x32xf32, #tpu.memory_space<vmem>>, vector<1x8x32xf32>
    %589 = vector.shape_cast %588 : vector<1x8x32xf32> to vector<8x32xf32>
    %590 = vector.shape_cast %580 : vector<8x32xf32> to vector<1x8x32xf32>
    tpu.vector_store %arg8[%587, %c0_281, %c0_282], %590 {strides = array<i32>} : memref<8x8x32xf32, #tpu.memory_space<vmem>>, vector<1x8x32xf32>,
    %c5_i32_283 = arith.constant 5 : i32
    %c1_284 = arith.constant 1 : index
    %c0_285 = arith.constant 0 : index
    %c0_286 = arith.constant 0 : index
    %591 = vector.load %arg6[%c1_284, %c0_285, %c0_286] : memref<4x8x32xf32, #tpu.memory_space<vmem>>, vector<1x8x32xf32>
    %592 = vector.shape_cast %591 : vector<1x8x32xf32> to vector<8x32xf32>
    %c1_287 = arith.constant 1 : index
    %c0_288 = arith.constant 0 : index
    %c0_289 = arith.constant 0 : index
    %593 = vector.load %arg7[%c1_287, %c0_288, %c0_289] : memref<4x8x32xf32, #tpu.memory_space<vmem>>, vector<1x8x32xf32>
    %594 = vector.shape_cast %593 : vector<1x8x32xf32> to vector<8x32xf32>
    %595 = arith.index_cast %c5_i32_283 : i32 to index
    %c0_290 = arith.constant 0 : index
    %c0_291 = arith.constant 0 : index
    %596 = vector.load %arg9[%595, %c0_290, %c0_291] : memref<8x8x128xf32, #tpu.memory_space<vmem>>, vector<1x8x128xf32>
    %597 = vector.shape_cast %596 : vector<1x8x128xf32> to vector<8x128xf32>
    %cst_292 = arith.constant dense<0.000000e+00> : vector<8x128xf32>
    %598 = tpu.matmul %592, %370, %cst_292 {dimension_numbers = #tpu.dot_dimension_numbers<[1], [0], [0], [1], [0, 0, 1, 1], [], []>} : vector<8x32xf32>, vector<32x128xf32>, vector<8x128xf32> -> vector<8x128xf32>
    %599 = arith.addf %597, %598 : vector<8x128xf32>
    %600 = vector.extract_strided_slice %599 {offsets = [0, 0], sizes = [8, 32], strides = [1, 1]} : vector<8x128xf32> to vector<8x32xf32>
    %601 = arith.negf %600 : vector<8x32xf32>
    %602 = math.exp %601 : vector<8x32xf32>
    %cst_293 = arith.constant 1.000000e+00 : f32
    %603 = vector.broadcast %cst_293 : f32 to vector<8x32xf32>
    %604 = arith.addf %603, %602 : vector<8x32xf32>
    %605 = arith.divf %603, %604 : vector<8x32xf32>
    %606 = vector.extract_strided_slice %599 {offsets = [0, 32], sizes = [8, 32], strides = [1, 1]} : vector<8x128xf32> to vector<8x32xf32>
    %607 = arith.negf %606 : vector<8x32xf32>
    %608 = math.exp %607 : vector<8x32xf32>
    %cst_294 = arith.constant 1.000000e+00 : f32
    %609 = vector.broadcast %cst_294 : f32 to vector<8x32xf32>
    %610 = arith.addf %609, %608 : vector<8x32xf32>
    %611 = arith.divf %609, %610 : vector<8x32xf32>
    %612 = vector.extract_strided_slice %599 {offsets = [0, 64], sizes = [8, 32], strides = [1, 1]} : vector<8x128xf32> to vector<8x32xf32>
    %613 = math.tanh %612 : vector<8x32xf32>
    %614 = vector.extract_strided_slice %599 {offsets = [0, 96], sizes = [8, 32], strides = [1, 1]} : vector<8x128xf32> to vector<8x32xf32>
    %615 = arith.negf %614 : vector<8x32xf32>
    %616 = math.exp %615 : vector<8x32xf32>
    %cst_295 = arith.constant 1.000000e+00 : f32
    %617 = vector.broadcast %cst_295 : f32 to vector<8x32xf32>
    %618 = arith.addf %617, %616 : vector<8x32xf32>
    %619 = arith.divf %617, %618 : vector<8x32xf32>
    %620 = arith.mulf %611, %594 : vector<8x32xf32>
    %621 = arith.mulf %605, %613 : vector<8x32xf32>
    %622 = arith.addf %620, %621 : vector<8x32xf32>
    %623 = math.tanh %622 : vector<8x32xf32>
    %624 = arith.mulf %619, %623 : vector<8x32xf32>
    %c1_296 = arith.constant 1 : index
    %c0_297 = arith.constant 0 : index
    %c0_298 = arith.constant 0 : index
    %625 = vector.load %arg7[%c1_296, %c0_297, %c0_298] : memref<4x8x32xf32, #tpu.memory_space<vmem>>, vector<1x8x32xf32>
    %626 = vector.shape_cast %625 : vector<1x8x32xf32> to vector<8x32xf32>
    %627 = vector.shape_cast %622 : vector<8x32xf32> to vector<1x8x32xf32>
    tpu.vector_store %arg7[%c1_296, %c0_297, %c0_298], %627 {strides = array<i32>} : memref<4x8x32xf32, #tpu.memory_space<vmem>>, vector<1x8x32xf32>,
    %c1_299 = arith.constant 1 : index
    %c0_300 = arith.constant 0 : index
    %c0_301 = arith.constant 0 : index
    %628 = vector.load %arg6[%c1_299, %c0_300, %c0_301] : memref<4x8x32xf32, #tpu.memory_space<vmem>>, vector<1x8x32xf32>
    %629 = vector.shape_cast %628 : vector<1x8x32xf32> to vector<8x32xf32>
    %630 = vector.shape_cast %624 : vector<8x32xf32> to vector<1x8x32xf32>
    tpu.vector_store %arg6[%c1_299, %c0_300, %c0_301], %630 {strides = array<i32>} : memref<4x8x32xf32, #tpu.memory_space<vmem>>, vector<1x8x32xf32>,
    %631 = arith.index_cast %c5_i32_283 : i32 to index
    %c0_302 = arith.constant 0 : index
    %c0_303 = arith.constant 0 : index
    %632 = vector.load %arg8[%631, %c0_302, %c0_303] : memref<8x8x32xf32, #tpu.memory_space<vmem>>, vector<1x8x32xf32>
    %633 = vector.shape_cast %632 : vector<1x8x32xf32> to vector<8x32xf32>
    %634 = vector.shape_cast %624 : vector<8x32xf32> to vector<1x8x32xf32>
    tpu.vector_store %arg8[%631, %c0_302, %c0_303], %634 {strides = array<i32>} : memref<8x8x32xf32, #tpu.memory_space<vmem>>, vector<1x8x32xf32>,
    %c6_i32_304 = arith.constant 6 : i32
    %c1_305 = arith.constant 1 : index
    %c0_306 = arith.constant 0 : index
    %c0_307 = arith.constant 0 : index
    %635 = vector.load %arg6[%c1_305, %c0_306, %c0_307] : memref<4x8x32xf32, #tpu.memory_space<vmem>>, vector<1x8x32xf32>
    %636 = vector.shape_cast %635 : vector<1x8x32xf32> to vector<8x32xf32>
    %c1_308 = arith.constant 1 : index
    %c0_309 = arith.constant 0 : index
    %c0_310 = arith.constant 0 : index
    %637 = vector.load %arg7[%c1_308, %c0_309, %c0_310] : memref<4x8x32xf32, #tpu.memory_space<vmem>>, vector<1x8x32xf32>
    %638 = vector.shape_cast %637 : vector<1x8x32xf32> to vector<8x32xf32>
    %639 = arith.index_cast %c6_i32_304 : i32 to index
    %c0_311 = arith.constant 0 : index
    %c0_312 = arith.constant 0 : index
    %640 = vector.load %arg9[%639, %c0_311, %c0_312] : memref<8x8x128xf32, #tpu.memory_space<vmem>>, vector<1x8x128xf32>
    %641 = vector.shape_cast %640 : vector<1x8x128xf32> to vector<8x128xf32>
    %cst_313 = arith.constant dense<0.000000e+00> : vector<8x128xf32>
    %642 = tpu.matmul %636, %370, %cst_313 {dimension_numbers = #tpu.dot_dimension_numbers<[1], [0], [0], [1], [0, 0, 1, 1], [], []>} : vector<8x32xf32>, vector<32x128xf32>, vector<8x128xf32> -> vector<8x128xf32>
    %643 = arith.addf %641, %642 : vector<8x128xf32>
    %644 = vector.extract_strided_slice %643 {offsets = [0, 0], sizes = [8, 32], strides = [1, 1]} : vector<8x128xf32> to vector<8x32xf32>
    %645 = arith.negf %644 : vector<8x32xf32>
    %646 = math.exp %645 : vector<8x32xf32>
    %cst_314 = arith.constant 1.000000e+00 : f32
    %647 = vector.broadcast %cst_314 : f32 to vector<8x32xf32>
    %648 = arith.addf %647, %646 : vector<8x32xf32>
    %649 = arith.divf %647, %648 : vector<8x32xf32>
    %650 = vector.extract_strided_slice %643 {offsets = [0, 32], sizes = [8, 32], strides = [1, 1]} : vector<8x128xf32> to vector<8x32xf32>
    %651 = arith.negf %650 : vector<8x32xf32>
    %652 = math.exp %651 : vector<8x32xf32>
    %cst_315 = arith.constant 1.000000e+00 : f32
    %653 = vector.broadcast %cst_315 : f32 to vector<8x32xf32>
    %654 = arith.addf %653, %652 : vector<8x32xf32>
    %655 = arith.divf %653, %654 : vector<8x32xf32>
    %656 = vector.extract_strided_slice %643 {offsets = [0, 64], sizes = [8, 32], strides = [1, 1]} : vector<8x128xf32> to vector<8x32xf32>
    %657 = math.tanh %656 : vector<8x32xf32>
    %658 = vector.extract_strided_slice %643 {offsets = [0, 96], sizes = [8, 32], strides = [1, 1]} : vector<8x128xf32> to vector<8x32xf32>
    %659 = arith.negf %658 : vector<8x32xf32>
    %660 = math.exp %659 : vector<8x32xf32>
    %cst_316 = arith.constant 1.000000e+00 : f32
    %661 = vector.broadcast %cst_316 : f32 to vector<8x32xf32>
    %662 = arith.addf %661, %660 : vector<8x32xf32>
    %663 = arith.divf %661, %662 : vector<8x32xf32>
    %664 = arith.mulf %655, %638 : vector<8x32xf32>
    %665 = arith.mulf %649, %657 : vector<8x32xf32>
    %666 = arith.addf %664, %665 : vector<8x32xf32>
    %667 = math.tanh %666 : vector<8x32xf32>
    %668 = arith.mulf %663, %667 : vector<8x32xf32>
    %c1_317 = arith.constant 1 : index
    %c0_318 = arith.constant 0 : index
    %c0_319 = arith.constant 0 : index
    %669 = vector.load %arg7[%c1_317, %c0_318, %c0_319] : memref<4x8x32xf32, #tpu.memory_space<vmem>>, vector<1x8x32xf32>
    %670 = vector.shape_cast %669 : vector<1x8x32xf32> to vector<8x32xf32>
    %671 = vector.shape_cast %666 : vector<8x32xf32> to vector<1x8x32xf32>
    tpu.vector_store %arg7[%c1_317, %c0_318, %c0_319], %671 {strides = array<i32>} : memref<4x8x32xf32, #tpu.memory_space<vmem>>, vector<1x8x32xf32>,
    %c1_320 = arith.constant 1 : index
    %c0_321 = arith.constant 0 : index
    %c0_322 = arith.constant 0 : index
    %672 = vector.load %arg6[%c1_320, %c0_321, %c0_322] : memref<4x8x32xf32, #tpu.memory_space<vmem>>, vector<1x8x32xf32>
    %673 = vector.shape_cast %672 : vector<1x8x32xf32> to vector<8x32xf32>
    %674 = vector.shape_cast %668 : vector<8x32xf32> to vector<1x8x32xf32>
    tpu.vector_store %arg6[%c1_320, %c0_321, %c0_322], %674 {strides = array<i32>} : memref<4x8x32xf32, #tpu.memory_space<vmem>>, vector<1x8x32xf32>,
    %675 = arith.index_cast %c6_i32_304 : i32 to index
    %c0_323 = arith.constant 0 : index
    %c0_324 = arith.constant 0 : index
    %676 = vector.load %arg8[%675, %c0_323, %c0_324] : memref<8x8x32xf32, #tpu.memory_space<vmem>>, vector<1x8x32xf32>
    %677 = vector.shape_cast %676 : vector<1x8x32xf32> to vector<8x32xf32>
    %678 = vector.shape_cast %668 : vector<8x32xf32> to vector<1x8x32xf32>
    tpu.vector_store %arg8[%675, %c0_323, %c0_324], %678 {strides = array<i32>} : memref<8x8x32xf32, #tpu.memory_space<vmem>>, vector<1x8x32xf32>,
    %c7_i32_325 = arith.constant 7 : i32
    %c1_326 = arith.constant 1 : index
    %c0_327 = arith.constant 0 : index
    %c0_328 = arith.constant 0 : index
    %679 = vector.load %arg6[%c1_326, %c0_327, %c0_328] : memref<4x8x32xf32, #tpu.memory_space<vmem>>, vector<1x8x32xf32>
    %680 = vector.shape_cast %679 : vector<1x8x32xf32> to vector<8x32xf32>
    %c1_329 = arith.constant 1 : index
    %c0_330 = arith.constant 0 : index
    %c0_331 = arith.constant 0 : index
    %681 = vector.load %arg7[%c1_329, %c0_330, %c0_331] : memref<4x8x32xf32, #tpu.memory_space<vmem>>, vector<1x8x32xf32>
    %682 = vector.shape_cast %681 : vector<1x8x32xf32> to vector<8x32xf32>
    %683 = arith.index_cast %c7_i32_325 : i32 to index
    %c0_332 = arith.constant 0 : index
    %c0_333 = arith.constant 0 : index
    %684 = vector.load %arg9[%683, %c0_332, %c0_333] : memref<8x8x128xf32, #tpu.memory_space<vmem>>, vector<1x8x128xf32>
    %685 = vector.shape_cast %684 : vector<1x8x128xf32> to vector<8x128xf32>
    %cst_334 = arith.constant dense<0.000000e+00> : vector<8x128xf32>
    %686 = tpu.matmul %680, %370, %cst_334 {dimension_numbers = #tpu.dot_dimension_numbers<[1], [0], [0], [1], [0, 0, 1, 1], [], []>} : vector<8x32xf32>, vector<32x128xf32>, vector<8x128xf32> -> vector<8x128xf32>
    %687 = arith.addf %685, %686 : vector<8x128xf32>
    %688 = vector.extract_strided_slice %687 {offsets = [0, 0], sizes = [8, 32], strides = [1, 1]} : vector<8x128xf32> to vector<8x32xf32>
    %689 = arith.negf %688 : vector<8x32xf32>
    %690 = math.exp %689 : vector<8x32xf32>
    %cst_335 = arith.constant 1.000000e+00 : f32
    %691 = vector.broadcast %cst_335 : f32 to vector<8x32xf32>
    %692 = arith.addf %691, %690 : vector<8x32xf32>
    %693 = arith.divf %691, %692 : vector<8x32xf32>
    %694 = vector.extract_strided_slice %687 {offsets = [0, 32], sizes = [8, 32], strides = [1, 1]} : vector<8x128xf32> to vector<8x32xf32>
    %695 = arith.negf %694 : vector<8x32xf32>
    %696 = math.exp %695 : vector<8x32xf32>
    %cst_336 = arith.constant 1.000000e+00 : f32
    %697 = vector.broadcast %cst_336 : f32 to vector<8x32xf32>
    %698 = arith.addf %697, %696 : vector<8x32xf32>
    %699 = arith.divf %697, %698 : vector<8x32xf32>
    %700 = vector.extract_strided_slice %687 {offsets = [0, 64], sizes = [8, 32], strides = [1, 1]} : vector<8x128xf32> to vector<8x32xf32>
    %701 = math.tanh %700 : vector<8x32xf32>
    %702 = vector.extract_strided_slice %687 {offsets = [0, 96], sizes = [8, 32], strides = [1, 1]} : vector<8x128xf32> to vector<8x32xf32>
    %703 = arith.negf %702 : vector<8x32xf32>
    %704 = math.exp %703 : vector<8x32xf32>
    %cst_337 = arith.constant 1.000000e+00 : f32
    %705 = vector.broadcast %cst_337 : f32 to vector<8x32xf32>
    %706 = arith.addf %705, %704 : vector<8x32xf32>
    %707 = arith.divf %705, %706 : vector<8x32xf32>
    %708 = arith.mulf %699, %682 : vector<8x32xf32>
    %709 = arith.mulf %693, %701 : vector<8x32xf32>
    %710 = arith.addf %708, %709 : vector<8x32xf32>
    %711 = math.tanh %710 : vector<8x32xf32>
    %712 = arith.mulf %707, %711 : vector<8x32xf32>
    %c1_338 = arith.constant 1 : index
    %c0_339 = arith.constant 0 : index
    %c0_340 = arith.constant 0 : index
    %713 = vector.load %arg7[%c1_338, %c0_339, %c0_340] : memref<4x8x32xf32, #tpu.memory_space<vmem>>, vector<1x8x32xf32>
    %714 = vector.shape_cast %713 : vector<1x8x32xf32> to vector<8x32xf32>
    %715 = vector.shape_cast %710 : vector<8x32xf32> to vector<1x8x32xf32>
    tpu.vector_store %arg7[%c1_338, %c0_339, %c0_340], %715 {strides = array<i32>} : memref<4x8x32xf32, #tpu.memory_space<vmem>>, vector<1x8x32xf32>,
    %c1_341 = arith.constant 1 : index
    %c0_342 = arith.constant 0 : index
    %c0_343 = arith.constant 0 : index
    %716 = vector.load %arg6[%c1_341, %c0_342, %c0_343] : memref<4x8x32xf32, #tpu.memory_space<vmem>>, vector<1x8x32xf32>
    %717 = vector.shape_cast %716 : vector<1x8x32xf32> to vector<8x32xf32>
    %718 = vector.shape_cast %712 : vector<8x32xf32> to vector<1x8x32xf32>
    tpu.vector_store %arg6[%c1_341, %c0_342, %c0_343], %718 {strides = array<i32>} : memref<4x8x32xf32, #tpu.memory_space<vmem>>, vector<1x8x32xf32>,
    %719 = arith.index_cast %c7_i32_325 : i32 to index
    %c0_344 = arith.constant 0 : index
    %c0_345 = arith.constant 0 : index
    %720 = vector.load %arg8[%719, %c0_344, %c0_345] : memref<8x8x32xf32, #tpu.memory_space<vmem>>, vector<1x8x32xf32>
    %721 = vector.shape_cast %720 : vector<1x8x32xf32> to vector<8x32xf32>
    %722 = vector.shape_cast %712 : vector<8x32xf32> to vector<1x8x32xf32>
    tpu.vector_store %arg8[%719, %c0_344, %c0_345], %722 {strides = array<i32>} : memref<8x8x32xf32, #tpu.memory_space<vmem>>, vector<1x8x32xf32>,
    %c8_i32_346 = arith.constant 8 : i32
    %c0_347 = arith.constant 0 : index
    %c0_348 = arith.constant 0 : index
    %c0_349 = arith.constant 0 : index
    %723 = vector.load %arg8[%c0_347, %c0_348, %c0_349] : memref<8x8x32xf32, #tpu.memory_space<vmem>>, vector<8x8x32xf32>
    %724 = vector.shape_cast %723 : vector<8x8x32xf32> to vector<64x32xf32>
    %c1_350 = arith.constant 1 : index
    %c0_351 = arith.constant 0 : index
    %c0_352 = arith.constant 0 : index
    %725 = vector.load %arg2[%c1_350, %c0_351, %c0_352] : memref<3x32x128xf32, #tpu.memory_space<vmem>>, vector<1x32x128xf32>
    %726 = vector.shape_cast %725 : vector<1x32x128xf32> to vector<32x128xf32>
    %cst_353 = arith.constant dense<0.000000e+00> : vector<64x128xf32>
    %727 = tpu.matmul %724, %726, %cst_353 {dimension_numbers = #tpu.dot_dimension_numbers<[1], [0], [0], [1], [0, 0, 1, 1], [], []>} : vector<64x32xf32>, vector<32x128xf32>, vector<64x128xf32> -> vector<64x128xf32>
    %728 = vector.shape_cast %727 : vector<64x128xf32> to vector<8x8x128xf32>
    %c1_354 = arith.constant 1 : index
    %c0_355 = arith.constant 0 : index
    %c0_356 = arith.constant 0 : index
    %729 = vector.load %arg4[%c1_354, %c0_355, %c0_356] : memref<3x1x128xf32, #tpu.memory_space<vmem>>, vector<1x1x128xf32>
    %730 = vector.shape_cast %729 : vector<1x1x128xf32> to vector<1x128xf32>
    %731 = vector.shape_cast %730 : vector<1x128xf32> to vector<1x1x128xf32>
    %732 = vector.broadcast %731 : vector<1x1x128xf32> to vector<8x8x128xf32>
    %733 = arith.addf %728, %732 : vector<8x8x128xf32>
    %c0_357 = arith.constant 0 : index
    %c0_358 = arith.constant 0 : index
    %c0_359 = arith.constant 0 : index
    %734 = vector.load %arg9[%c0_357, %c0_358, %c0_359] : memref<8x8x128xf32, #tpu.memory_space<vmem>>, vector<8x8x128xf32>
    tpu.vector_store %arg9[%c0_357, %c0_358, %c0_359], %733 {strides = array<i32>} : memref<8x8x128xf32, #tpu.memory_space<vmem>>, vector<8x8x128xf32>,
    %c2 = arith.constant 2 : index
    %c0_360 = arith.constant 0 : index
    %c0_361 = arith.constant 0 : index
    %735 = vector.load %arg3[%c2, %c0_360, %c0_361] : memref<4x32x128xf32, #tpu.memory_space<vmem>>, vector<1x32x128xf32>
    %736 = vector.shape_cast %735 : vector<1x32x128xf32> to vector<32x128xf32>
    %c0_i32_362 = arith.constant 0 : i32
    %c2_363 = arith.constant 2 : index
    %c0_364 = arith.constant 0 : index
    %c0_365 = arith.constant 0 : index
    %737 = vector.load %arg6[%c2_363, %c0_364, %c0_365] : memref<4x8x32xf32, #tpu.memory_space<vmem>>, vector<1x8x32xf32>
    %738 = vector.shape_cast %737 : vector<1x8x32xf32> to vector<8x32xf32>
    %c2_366 = arith.constant 2 : index
    %c0_367 = arith.constant 0 : index
    %c0_368 = arith.constant 0 : index
    %739 = vector.load %arg7[%c2_366, %c0_367, %c0_368] : memref<4x8x32xf32, #tpu.memory_space<vmem>>, vector<1x8x32xf32>
    %740 = vector.shape_cast %739 : vector<1x8x32xf32> to vector<8x32xf32>
    %741 = arith.index_cast %c0_i32_362 : i32 to index
    %c0_369 = arith.constant 0 : index
    %c0_370 = arith.constant 0 : index
    %742 = vector.load %arg9[%741, %c0_369, %c0_370] : memref<8x8x128xf32, #tpu.memory_space<vmem>>, vector<1x8x128xf32>
    %743 = vector.shape_cast %742 : vector<1x8x128xf32> to vector<8x128xf32>
    %cst_371 = arith.constant dense<0.000000e+00> : vector<8x128xf32>
    %744 = tpu.matmul %738, %736, %cst_371 {dimension_numbers = #tpu.dot_dimension_numbers<[1], [0], [0], [1], [0, 0, 1, 1], [], []>} : vector<8x32xf32>, vector<32x128xf32>, vector<8x128xf32> -> vector<8x128xf32>
    %745 = arith.addf %743, %744 : vector<8x128xf32>
    %746 = vector.extract_strided_slice %745 {offsets = [0, 0], sizes = [8, 32], strides = [1, 1]} : vector<8x128xf32> to vector<8x32xf32>
    %747 = arith.negf %746 : vector<8x32xf32>
    %748 = math.exp %747 : vector<8x32xf32>
    %cst_372 = arith.constant 1.000000e+00 : f32
    %749 = vector.broadcast %cst_372 : f32 to vector<8x32xf32>
    %750 = arith.addf %749, %748 : vector<8x32xf32>
    %751 = arith.divf %749, %750 : vector<8x32xf32>
    %752 = vector.extract_strided_slice %745 {offsets = [0, 32], sizes = [8, 32], strides = [1, 1]} : vector<8x128xf32> to vector<8x32xf32>
    %753 = arith.negf %752 : vector<8x32xf32>
    %754 = math.exp %753 : vector<8x32xf32>
    %cst_373 = arith.constant 1.000000e+00 : f32
    %755 = vector.broadcast %cst_373 : f32 to vector<8x32xf32>
    %756 = arith.addf %755, %754 : vector<8x32xf32>
    %757 = arith.divf %755, %756 : vector<8x32xf32>
    %758 = vector.extract_strided_slice %745 {offsets = [0, 64], sizes = [8, 32], strides = [1, 1]} : vector<8x128xf32> to vector<8x32xf32>
    %759 = math.tanh %758 : vector<8x32xf32>
    %760 = vector.extract_strided_slice %745 {offsets = [0, 96], sizes = [8, 32], strides = [1, 1]} : vector<8x128xf32> to vector<8x32xf32>
    %761 = arith.negf %760 : vector<8x32xf32>
    %762 = math.exp %761 : vector<8x32xf32>
    %cst_374 = arith.constant 1.000000e+00 : f32
    %763 = vector.broadcast %cst_374 : f32 to vector<8x32xf32>
    %764 = arith.addf %763, %762 : vector<8x32xf32>
    %765 = arith.divf %763, %764 : vector<8x32xf32>
    %766 = arith.mulf %757, %740 : vector<8x32xf32>
    %767 = arith.mulf %751, %759 : vector<8x32xf32>
    %768 = arith.addf %766, %767 : vector<8x32xf32>
    %769 = math.tanh %768 : vector<8x32xf32>
    %770 = arith.mulf %765, %769 : vector<8x32xf32>
    %c2_375 = arith.constant 2 : index
    %c0_376 = arith.constant 0 : index
    %c0_377 = arith.constant 0 : index
    %771 = vector.load %arg7[%c2_375, %c0_376, %c0_377] : memref<4x8x32xf32, #tpu.memory_space<vmem>>, vector<1x8x32xf32>
    %772 = vector.shape_cast %771 : vector<1x8x32xf32> to vector<8x32xf32>
    %773 = vector.shape_cast %768 : vector<8x32xf32> to vector<1x8x32xf32>
    tpu.vector_store %arg7[%c2_375, %c0_376, %c0_377], %773 {strides = array<i32>} : memref<4x8x32xf32, #tpu.memory_space<vmem>>, vector<1x8x32xf32>,
    %c2_378 = arith.constant 2 : index
    %c0_379 = arith.constant 0 : index
    %c0_380 = arith.constant 0 : index
    %774 = vector.load %arg6[%c2_378, %c0_379, %c0_380] : memref<4x8x32xf32, #tpu.memory_space<vmem>>, vector<1x8x32xf32>
    %775 = vector.shape_cast %774 : vector<1x8x32xf32> to vector<8x32xf32>
    %776 = vector.shape_cast %770 : vector<8x32xf32> to vector<1x8x32xf32>
    tpu.vector_store %arg6[%c2_378, %c0_379, %c0_380], %776 {strides = array<i32>} : memref<4x8x32xf32, #tpu.memory_space<vmem>>, vector<1x8x32xf32>,
    %777 = arith.index_cast %c0_i32_362 : i32 to index
    %c0_381 = arith.constant 0 : index
    %c0_382 = arith.constant 0 : index
    %778 = vector.load %arg8[%777, %c0_381, %c0_382] : memref<8x8x32xf32, #tpu.memory_space<vmem>>, vector<1x8x32xf32>
    %779 = vector.shape_cast %778 : vector<1x8x32xf32> to vector<8x32xf32>
    %780 = vector.shape_cast %770 : vector<8x32xf32> to vector<1x8x32xf32>
    tpu.vector_store %arg8[%777, %c0_381, %c0_382], %780 {strides = array<i32>} : memref<8x8x32xf32, #tpu.memory_space<vmem>>, vector<1x8x32xf32>,
    %c1_i32_383 = arith.constant 1 : i32
    %c2_384 = arith.constant 2 : index
    %c0_385 = arith.constant 0 : index
    %c0_386 = arith.constant 0 : index
    %781 = vector.load %arg6[%c2_384, %c0_385, %c0_386] : memref<4x8x32xf32, #tpu.memory_space<vmem>>, vector<1x8x32xf32>
    %782 = vector.shape_cast %781 : vector<1x8x32xf32> to vector<8x32xf32>
    %c2_387 = arith.constant 2 : index
    %c0_388 = arith.constant 0 : index
    %c0_389 = arith.constant 0 : index
    %783 = vector.load %arg7[%c2_387, %c0_388, %c0_389] : memref<4x8x32xf32, #tpu.memory_space<vmem>>, vector<1x8x32xf32>
    %784 = vector.shape_cast %783 : vector<1x8x32xf32> to vector<8x32xf32>
    %785 = arith.index_cast %c1_i32_383 : i32 to index
    %c0_390 = arith.constant 0 : index
    %c0_391 = arith.constant 0 : index
    %786 = vector.load %arg9[%785, %c0_390, %c0_391] : memref<8x8x128xf32, #tpu.memory_space<vmem>>, vector<1x8x128xf32>
    %787 = vector.shape_cast %786 : vector<1x8x128xf32> to vector<8x128xf32>
    %cst_392 = arith.constant dense<0.000000e+00> : vector<8x128xf32>
    %788 = tpu.matmul %782, %736, %cst_392 {dimension_numbers = #tpu.dot_dimension_numbers<[1], [0], [0], [1], [0, 0, 1, 1], [], []>} : vector<8x32xf32>, vector<32x128xf32>, vector<8x128xf32> -> vector<8x128xf32>
    %789 = arith.addf %787, %788 : vector<8x128xf32>
    %790 = vector.extract_strided_slice %789 {offsets = [0, 0], sizes = [8, 32], strides = [1, 1]} : vector<8x128xf32> to vector<8x32xf32>
    %791 = arith.negf %790 : vector<8x32xf32>
    %792 = math.exp %791 : vector<8x32xf32>
    %cst_393 = arith.constant 1.000000e+00 : f32
    %793 = vector.broadcast %cst_393 : f32 to vector<8x32xf32>
    %794 = arith.addf %793, %792 : vector<8x32xf32>
    %795 = arith.divf %793, %794 : vector<8x32xf32>
    %796 = vector.extract_strided_slice %789 {offsets = [0, 32], sizes = [8, 32], strides = [1, 1]} : vector<8x128xf32> to vector<8x32xf32>
    %797 = arith.negf %796 : vector<8x32xf32>
    %798 = math.exp %797 : vector<8x32xf32>
    %cst_394 = arith.constant 1.000000e+00 : f32
    %799 = vector.broadcast %cst_394 : f32 to vector<8x32xf32>
    %800 = arith.addf %799, %798 : vector<8x32xf32>
    %801 = arith.divf %799, %800 : vector<8x32xf32>
    %802 = vector.extract_strided_slice %789 {offsets = [0, 64], sizes = [8, 32], strides = [1, 1]} : vector<8x128xf32> to vector<8x32xf32>
    %803 = math.tanh %802 : vector<8x32xf32>
    %804 = vector.extract_strided_slice %789 {offsets = [0, 96], sizes = [8, 32], strides = [1, 1]} : vector<8x128xf32> to vector<8x32xf32>
    %805 = arith.negf %804 : vector<8x32xf32>
    %806 = math.exp %805 : vector<8x32xf32>
    %cst_395 = arith.constant 1.000000e+00 : f32
    %807 = vector.broadcast %cst_395 : f32 to vector<8x32xf32>
    %808 = arith.addf %807, %806 : vector<8x32xf32>
    %809 = arith.divf %807, %808 : vector<8x32xf32>
    %810 = arith.mulf %801, %784 : vector<8x32xf32>
    %811 = arith.mulf %795, %803 : vector<8x32xf32>
    %812 = arith.addf %810, %811 : vector<8x32xf32>
    %813 = math.tanh %812 : vector<8x32xf32>
    %814 = arith.mulf %809, %813 : vector<8x32xf32>
    %c2_396 = arith.constant 2 : index
    %c0_397 = arith.constant 0 : index
    %c0_398 = arith.constant 0 : index
    %815 = vector.load %arg7[%c2_396, %c0_397, %c0_398] : memref<4x8x32xf32, #tpu.memory_space<vmem>>, vector<1x8x32xf32>
    %816 = vector.shape_cast %815 : vector<1x8x32xf32> to vector<8x32xf32>
    %817 = vector.shape_cast %812 : vector<8x32xf32> to vector<1x8x32xf32>
    tpu.vector_store %arg7[%c2_396, %c0_397, %c0_398], %817 {strides = array<i32>} : memref<4x8x32xf32, #tpu.memory_space<vmem>>, vector<1x8x32xf32>,
    %c2_399 = arith.constant 2 : index
    %c0_400 = arith.constant 0 : index
    %c0_401 = arith.constant 0 : index
    %818 = vector.load %arg6[%c2_399, %c0_400, %c0_401] : memref<4x8x32xf32, #tpu.memory_space<vmem>>, vector<1x8x32xf32>
    %819 = vector.shape_cast %818 : vector<1x8x32xf32> to vector<8x32xf32>
    %820 = vector.shape_cast %814 : vector<8x32xf32> to vector<1x8x32xf32>
    tpu.vector_store %arg6[%c2_399, %c0_400, %c0_401], %820 {strides = array<i32>} : memref<4x8x32xf32, #tpu.memory_space<vmem>>, vector<1x8x32xf32>,
    %821 = arith.index_cast %c1_i32_383 : i32 to index
    %c0_402 = arith.constant 0 : index
    %c0_403 = arith.constant 0 : index
    %822 = vector.load %arg8[%821, %c0_402, %c0_403] : memref<8x8x32xf32, #tpu.memory_space<vmem>>, vector<1x8x32xf32>
    %823 = vector.shape_cast %822 : vector<1x8x32xf32> to vector<8x32xf32>
    %824 = vector.shape_cast %814 : vector<8x32xf32> to vector<1x8x32xf32>
    tpu.vector_store %arg8[%821, %c0_402, %c0_403], %824 {strides = array<i32>} : memref<8x8x32xf32, #tpu.memory_space<vmem>>, vector<1x8x32xf32>,
    %c2_i32_404 = arith.constant 2 : i32
    %c2_405 = arith.constant 2 : index
    %c0_406 = arith.constant 0 : index
    %c0_407 = arith.constant 0 : index
    %825 = vector.load %arg6[%c2_405, %c0_406, %c0_407] : memref<4x8x32xf32, #tpu.memory_space<vmem>>, vector<1x8x32xf32>
    %826 = vector.shape_cast %825 : vector<1x8x32xf32> to vector<8x32xf32>
    %c2_408 = arith.constant 2 : index
    %c0_409 = arith.constant 0 : index
    %c0_410 = arith.constant 0 : index
    %827 = vector.load %arg7[%c2_408, %c0_409, %c0_410] : memref<4x8x32xf32, #tpu.memory_space<vmem>>, vector<1x8x32xf32>
    %828 = vector.shape_cast %827 : vector<1x8x32xf32> to vector<8x32xf32>
    %829 = arith.index_cast %c2_i32_404 : i32 to index
    %c0_411 = arith.constant 0 : index
    %c0_412 = arith.constant 0 : index
    %830 = vector.load %arg9[%829, %c0_411, %c0_412] : memref<8x8x128xf32, #tpu.memory_space<vmem>>, vector<1x8x128xf32>
    %831 = vector.shape_cast %830 : vector<1x8x128xf32> to vector<8x128xf32>
    %cst_413 = arith.constant dense<0.000000e+00> : vector<8x128xf32>
    %832 = tpu.matmul %826, %736, %cst_413 {dimension_numbers = #tpu.dot_dimension_numbers<[1], [0], [0], [1], [0, 0, 1, 1], [], []>} : vector<8x32xf32>, vector<32x128xf32>, vector<8x128xf32> -> vector<8x128xf32>
    %833 = arith.addf %831, %832 : vector<8x128xf32>
    %834 = vector.extract_strided_slice %833 {offsets = [0, 0], sizes = [8, 32], strides = [1, 1]} : vector<8x128xf32> to vector<8x32xf32>
    %835 = arith.negf %834 : vector<8x32xf32>
    %836 = math.exp %835 : vector<8x32xf32>
    %cst_414 = arith.constant 1.000000e+00 : f32
    %837 = vector.broadcast %cst_414 : f32 to vector<8x32xf32>
    %838 = arith.addf %837, %836 : vector<8x32xf32>
    %839 = arith.divf %837, %838 : vector<8x32xf32>
    %840 = vector.extract_strided_slice %833 {offsets = [0, 32], sizes = [8, 32], strides = [1, 1]} : vector<8x128xf32> to vector<8x32xf32>
    %841 = arith.negf %840 : vector<8x32xf32>
    %842 = math.exp %841 : vector<8x32xf32>
    %cst_415 = arith.constant 1.000000e+00 : f32
    %843 = vector.broadcast %cst_415 : f32 to vector<8x32xf32>
    %844 = arith.addf %843, %842 : vector<8x32xf32>
    %845 = arith.divf %843, %844 : vector<8x32xf32>
    %846 = vector.extract_strided_slice %833 {offsets = [0, 64], sizes = [8, 32], strides = [1, 1]} : vector<8x128xf32> to vector<8x32xf32>
    %847 = math.tanh %846 : vector<8x32xf32>
    %848 = vector.extract_strided_slice %833 {offsets = [0, 96], sizes = [8, 32], strides = [1, 1]} : vector<8x128xf32> to vector<8x32xf32>
    %849 = arith.negf %848 : vector<8x32xf32>
    %850 = math.exp %849 : vector<8x32xf32>
    %cst_416 = arith.constant 1.000000e+00 : f32
    %851 = vector.broadcast %cst_416 : f32 to vector<8x32xf32>
    %852 = arith.addf %851, %850 : vector<8x32xf32>
    %853 = arith.divf %851, %852 : vector<8x32xf32>
    %854 = arith.mulf %845, %828 : vector<8x32xf32>
    %855 = arith.mulf %839, %847 : vector<8x32xf32>
    %856 = arith.addf %854, %855 : vector<8x32xf32>
    %857 = math.tanh %856 : vector<8x32xf32>
    %858 = arith.mulf %853, %857 : vector<8x32xf32>
    %c2_417 = arith.constant 2 : index
    %c0_418 = arith.constant 0 : index
    %c0_419 = arith.constant 0 : index
    %859 = vector.load %arg7[%c2_417, %c0_418, %c0_419] : memref<4x8x32xf32, #tpu.memory_space<vmem>>, vector<1x8x32xf32>
    %860 = vector.shape_cast %859 : vector<1x8x32xf32> to vector<8x32xf32>
    %861 = vector.shape_cast %856 : vector<8x32xf32> to vector<1x8x32xf32>
    tpu.vector_store %arg7[%c2_417, %c0_418, %c0_419], %861 {strides = array<i32>} : memref<4x8x32xf32, #tpu.memory_space<vmem>>, vector<1x8x32xf32>,
    %c2_420 = arith.constant 2 : index
    %c0_421 = arith.constant 0 : index
    %c0_422 = arith.constant 0 : index
    %862 = vector.load %arg6[%c2_420, %c0_421, %c0_422] : memref<4x8x32xf32, #tpu.memory_space<vmem>>, vector<1x8x32xf32>
    %863 = vector.shape_cast %862 : vector<1x8x32xf32> to vector<8x32xf32>
    %864 = vector.shape_cast %858 : vector<8x32xf32> to vector<1x8x32xf32>
    tpu.vector_store %arg6[%c2_420, %c0_421, %c0_422], %864 {strides = array<i32>} : memref<4x8x32xf32, #tpu.memory_space<vmem>>, vector<1x8x32xf32>,
    %865 = arith.index_cast %c2_i32_404 : i32 to index
    %c0_423 = arith.constant 0 : index
    %c0_424 = arith.constant 0 : index
    %866 = vector.load %arg8[%865, %c0_423, %c0_424] : memref<8x8x32xf32, #tpu.memory_space<vmem>>, vector<1x8x32xf32>
    %867 = vector.shape_cast %866 : vector<1x8x32xf32> to vector<8x32xf32>
    %868 = vector.shape_cast %858 : vector<8x32xf32> to vector<1x8x32xf32>
    tpu.vector_store %arg8[%865, %c0_423, %c0_424], %868 {strides = array<i32>} : memref<8x8x32xf32, #tpu.memory_space<vmem>>, vector<1x8x32xf32>,
    %c3_i32_425 = arith.constant 3 : i32
    %c2_426 = arith.constant 2 : index
    %c0_427 = arith.constant 0 : index
    %c0_428 = arith.constant 0 : index
    %869 = vector.load %arg6[%c2_426, %c0_427, %c0_428] : memref<4x8x32xf32, #tpu.memory_space<vmem>>, vector<1x8x32xf32>
    %870 = vector.shape_cast %869 : vector<1x8x32xf32> to vector<8x32xf32>
    %c2_429 = arith.constant 2 : index
    %c0_430 = arith.constant 0 : index
    %c0_431 = arith.constant 0 : index
    %871 = vector.load %arg7[%c2_429, %c0_430, %c0_431] : memref<4x8x32xf32, #tpu.memory_space<vmem>>, vector<1x8x32xf32>
    %872 = vector.shape_cast %871 : vector<1x8x32xf32> to vector<8x32xf32>
    %873 = arith.index_cast %c3_i32_425 : i32 to index
    %c0_432 = arith.constant 0 : index
    %c0_433 = arith.constant 0 : index
    %874 = vector.load %arg9[%873, %c0_432, %c0_433] : memref<8x8x128xf32, #tpu.memory_space<vmem>>, vector<1x8x128xf32>
    %875 = vector.shape_cast %874 : vector<1x8x128xf32> to vector<8x128xf32>
    %cst_434 = arith.constant dense<0.000000e+00> : vector<8x128xf32>
    %876 = tpu.matmul %870, %736, %cst_434 {dimension_numbers = #tpu.dot_dimension_numbers<[1], [0], [0], [1], [0, 0, 1, 1], [], []>} : vector<8x32xf32>, vector<32x128xf32>, vector<8x128xf32> -> vector<8x128xf32>
    %877 = arith.addf %875, %876 : vector<8x128xf32>
    %878 = vector.extract_strided_slice %877 {offsets = [0, 0], sizes = [8, 32], strides = [1, 1]} : vector<8x128xf32> to vector<8x32xf32>
    %879 = arith.negf %878 : vector<8x32xf32>
    %880 = math.exp %879 : vector<8x32xf32>
    %cst_435 = arith.constant 1.000000e+00 : f32
    %881 = vector.broadcast %cst_435 : f32 to vector<8x32xf32>
    %882 = arith.addf %881, %880 : vector<8x32xf32>
    %883 = arith.divf %881, %882 : vector<8x32xf32>
    %884 = vector.extract_strided_slice %877 {offsets = [0, 32], sizes = [8, 32], strides = [1, 1]} : vector<8x128xf32> to vector<8x32xf32>
    %885 = arith.negf %884 : vector<8x32xf32>
    %886 = math.exp %885 : vector<8x32xf32>
    %cst_436 = arith.constant 1.000000e+00 : f32
    %887 = vector.broadcast %cst_436 : f32 to vector<8x32xf32>
    %888 = arith.addf %887, %886 : vector<8x32xf32>
    %889 = arith.divf %887, %888 : vector<8x32xf32>
    %890 = vector.extract_strided_slice %877 {offsets = [0, 64], sizes = [8, 32], strides = [1, 1]} : vector<8x128xf32> to vector<8x32xf32>
    %891 = math.tanh %890 : vector<8x32xf32>
    %892 = vector.extract_strided_slice %877 {offsets = [0, 96], sizes = [8, 32], strides = [1, 1]} : vector<8x128xf32> to vector<8x32xf32>
    %893 = arith.negf %892 : vector<8x32xf32>
    %894 = math.exp %893 : vector<8x32xf32>
    %cst_437 = arith.constant 1.000000e+00 : f32
    %895 = vector.broadcast %cst_437 : f32 to vector<8x32xf32>
    %896 = arith.addf %895, %894 : vector<8x32xf32>
    %897 = arith.divf %895, %896 : vector<8x32xf32>
    %898 = arith.mulf %889, %872 : vector<8x32xf32>
    %899 = arith.mulf %883, %891 : vector<8x32xf32>
    %900 = arith.addf %898, %899 : vector<8x32xf32>
    %901 = math.tanh %900 : vector<8x32xf32>
    %902 = arith.mulf %897, %901 : vector<8x32xf32>
    %c2_438 = arith.constant 2 : index
    %c0_439 = arith.constant 0 : index
    %c0_440 = arith.constant 0 : index
    %903 = vector.load %arg7[%c2_438, %c0_439, %c0_440] : memref<4x8x32xf32, #tpu.memory_space<vmem>>, vector<1x8x32xf32>
    %904 = vector.shape_cast %903 : vector<1x8x32xf32> to vector<8x32xf32>
    %905 = vector.shape_cast %900 : vector<8x32xf32> to vector<1x8x32xf32>
    tpu.vector_store %arg7[%c2_438, %c0_439, %c0_440], %905 {strides = array<i32>} : memref<4x8x32xf32, #tpu.memory_space<vmem>>, vector<1x8x32xf32>,
    %c2_441 = arith.constant 2 : index
    %c0_442 = arith.constant 0 : index
    %c0_443 = arith.constant 0 : index
    %906 = vector.load %arg6[%c2_441, %c0_442, %c0_443] : memref<4x8x32xf32, #tpu.memory_space<vmem>>, vector<1x8x32xf32>
    %907 = vector.shape_cast %906 : vector<1x8x32xf32> to vector<8x32xf32>
    %908 = vector.shape_cast %902 : vector<8x32xf32> to vector<1x8x32xf32>
    tpu.vector_store %arg6[%c2_441, %c0_442, %c0_443], %908 {strides = array<i32>} : memref<4x8x32xf32, #tpu.memory_space<vmem>>, vector<1x8x32xf32>,
    %909 = arith.index_cast %c3_i32_425 : i32 to index
    %c0_444 = arith.constant 0 : index
    %c0_445 = arith.constant 0 : index
    %910 = vector.load %arg8[%909, %c0_444, %c0_445] : memref<8x8x32xf32, #tpu.memory_space<vmem>>, vector<1x8x32xf32>
    %911 = vector.shape_cast %910 : vector<1x8x32xf32> to vector<8x32xf32>
    %912 = vector.shape_cast %902 : vector<8x32xf32> to vector<1x8x32xf32>
    tpu.vector_store %arg8[%909, %c0_444, %c0_445], %912 {strides = array<i32>} : memref<8x8x32xf32, #tpu.memory_space<vmem>>, vector<1x8x32xf32>,
    %c4_i32_446 = arith.constant 4 : i32
    %c2_447 = arith.constant 2 : index
    %c0_448 = arith.constant 0 : index
    %c0_449 = arith.constant 0 : index
    %913 = vector.load %arg6[%c2_447, %c0_448, %c0_449] : memref<4x8x32xf32, #tpu.memory_space<vmem>>, vector<1x8x32xf32>
    %914 = vector.shape_cast %913 : vector<1x8x32xf32> to vector<8x32xf32>
    %c2_450 = arith.constant 2 : index
    %c0_451 = arith.constant 0 : index
    %c0_452 = arith.constant 0 : index
    %915 = vector.load %arg7[%c2_450, %c0_451, %c0_452] : memref<4x8x32xf32, #tpu.memory_space<vmem>>, vector<1x8x32xf32>
    %916 = vector.shape_cast %915 : vector<1x8x32xf32> to vector<8x32xf32>
    %917 = arith.index_cast %c4_i32_446 : i32 to index
    %c0_453 = arith.constant 0 : index
    %c0_454 = arith.constant 0 : index
    %918 = vector.load %arg9[%917, %c0_453, %c0_454] : memref<8x8x128xf32, #tpu.memory_space<vmem>>, vector<1x8x128xf32>
    %919 = vector.shape_cast %918 : vector<1x8x128xf32> to vector<8x128xf32>
    %cst_455 = arith.constant dense<0.000000e+00> : vector<8x128xf32>
    %920 = tpu.matmul %914, %736, %cst_455 {dimension_numbers = #tpu.dot_dimension_numbers<[1], [0], [0], [1], [0, 0, 1, 1], [], []>} : vector<8x32xf32>, vector<32x128xf32>, vector<8x128xf32> -> vector<8x128xf32>
    %921 = arith.addf %919, %920 : vector<8x128xf32>
    %922 = vector.extract_strided_slice %921 {offsets = [0, 0], sizes = [8, 32], strides = [1, 1]} : vector<8x128xf32> to vector<8x32xf32>
    %923 = arith.negf %922 : vector<8x32xf32>
    %924 = math.exp %923 : vector<8x32xf32>
    %cst_456 = arith.constant 1.000000e+00 : f32
    %925 = vector.broadcast %cst_456 : f32 to vector<8x32xf32>
    %926 = arith.addf %925, %924 : vector<8x32xf32>
    %927 = arith.divf %925, %926 : vector<8x32xf32>
    %928 = vector.extract_strided_slice %921 {offsets = [0, 32], sizes = [8, 32], strides = [1, 1]} : vector<8x128xf32> to vector<8x32xf32>
    %929 = arith.negf %928 : vector<8x32xf32>
    %930 = math.exp %929 : vector<8x32xf32>
    %cst_457 = arith.constant 1.000000e+00 : f32
    %931 = vector.broadcast %cst_457 : f32 to vector<8x32xf32>
    %932 = arith.addf %931, %930 : vector<8x32xf32>
    %933 = arith.divf %931, %932 : vector<8x32xf32>
    %934 = vector.extract_strided_slice %921 {offsets = [0, 64], sizes = [8, 32], strides = [1, 1]} : vector<8x128xf32> to vector<8x32xf32>
    %935 = math.tanh %934 : vector<8x32xf32>
    %936 = vector.extract_strided_slice %921 {offsets = [0, 96], sizes = [8, 32], strides = [1, 1]} : vector<8x128xf32> to vector<8x32xf32>
    %937 = arith.negf %936 : vector<8x32xf32>
    %938 = math.exp %937 : vector<8x32xf32>
    %cst_458 = arith.constant 1.000000e+00 : f32
    %939 = vector.broadcast %cst_458 : f32 to vector<8x32xf32>
    %940 = arith.addf %939, %938 : vector<8x32xf32>
    %941 = arith.divf %939, %940 : vector<8x32xf32>
    %942 = arith.mulf %933, %916 : vector<8x32xf32>
    %943 = arith.mulf %927, %935 : vector<8x32xf32>
    %944 = arith.addf %942, %943 : vector<8x32xf32>
    %945 = math.tanh %944 : vector<8x32xf32>
    %946 = arith.mulf %941, %945 : vector<8x32xf32>
    %c2_459 = arith.constant 2 : index
    %c0_460 = arith.constant 0 : index
    %c0_461 = arith.constant 0 : index
    %947 = vector.load %arg7[%c2_459, %c0_460, %c0_461] : memref<4x8x32xf32, #tpu.memory_space<vmem>>, vector<1x8x32xf32>
    %948 = vector.shape_cast %947 : vector<1x8x32xf32> to vector<8x32xf32>
    %949 = vector.shape_cast %944 : vector<8x32xf32> to vector<1x8x32xf32>
    tpu.vector_store %arg7[%c2_459, %c0_460, %c0_461], %949 {strides = array<i32>} : memref<4x8x32xf32, #tpu.memory_space<vmem>>, vector<1x8x32xf32>,
    %c2_462 = arith.constant 2 : index
    %c0_463 = arith.constant 0 : index
    %c0_464 = arith.constant 0 : index
    %950 = vector.load %arg6[%c2_462, %c0_463, %c0_464] : memref<4x8x32xf32, #tpu.memory_space<vmem>>, vector<1x8x32xf32>
    %951 = vector.shape_cast %950 : vector<1x8x32xf32> to vector<8x32xf32>
    %952 = vector.shape_cast %946 : vector<8x32xf32> to vector<1x8x32xf32>
    tpu.vector_store %arg6[%c2_462, %c0_463, %c0_464], %952 {strides = array<i32>} : memref<4x8x32xf32, #tpu.memory_space<vmem>>, vector<1x8x32xf32>,
    %953 = arith.index_cast %c4_i32_446 : i32 to index
    %c0_465 = arith.constant 0 : index
    %c0_466 = arith.constant 0 : index
    %954 = vector.load %arg8[%953, %c0_465, %c0_466] : memref<8x8x32xf32, #tpu.memory_space<vmem>>, vector<1x8x32xf32>
    %955 = vector.shape_cast %954 : vector<1x8x32xf32> to vector<8x32xf32>
    %956 = vector.shape_cast %946 : vector<8x32xf32> to vector<1x8x32xf32>
    tpu.vector_store %arg8[%953, %c0_465, %c0_466], %956 {strides = array<i32>} : memref<8x8x32xf32, #tpu.memory_space<vmem>>, vector<1x8x32xf32>,
    %c5_i32_467 = arith.constant 5 : i32
    %c2_468 = arith.constant 2 : index
    %c0_469 = arith.constant 0 : index
    %c0_470 = arith.constant 0 : index
    %957 = vector.load %arg6[%c2_468, %c0_469, %c0_470] : memref<4x8x32xf32, #tpu.memory_space<vmem>>, vector<1x8x32xf32>
    %958 = vector.shape_cast %957 : vector<1x8x32xf32> to vector<8x32xf32>
    %c2_471 = arith.constant 2 : index
    %c0_472 = arith.constant 0 : index
    %c0_473 = arith.constant 0 : index
    %959 = vector.load %arg7[%c2_471, %c0_472, %c0_473] : memref<4x8x32xf32, #tpu.memory_space<vmem>>, vector<1x8x32xf32>
    %960 = vector.shape_cast %959 : vector<1x8x32xf32> to vector<8x32xf32>
    %961 = arith.index_cast %c5_i32_467 : i32 to index
    %c0_474 = arith.constant 0 : index
    %c0_475 = arith.constant 0 : index
    %962 = vector.load %arg9[%961, %c0_474, %c0_475] : memref<8x8x128xf32, #tpu.memory_space<vmem>>, vector<1x8x128xf32>
    %963 = vector.shape_cast %962 : vector<1x8x128xf32> to vector<8x128xf32>
    %cst_476 = arith.constant dense<0.000000e+00> : vector<8x128xf32>
    %964 = tpu.matmul %958, %736, %cst_476 {dimension_numbers = #tpu.dot_dimension_numbers<[1], [0], [0], [1], [0, 0, 1, 1], [], []>} : vector<8x32xf32>, vector<32x128xf32>, vector<8x128xf32> -> vector<8x128xf32>
    %965 = arith.addf %963, %964 : vector<8x128xf32>
    %966 = vector.extract_strided_slice %965 {offsets = [0, 0], sizes = [8, 32], strides = [1, 1]} : vector<8x128xf32> to vector<8x32xf32>
    %967 = arith.negf %966 : vector<8x32xf32>
    %968 = math.exp %967 : vector<8x32xf32>
    %cst_477 = arith.constant 1.000000e+00 : f32
    %969 = vector.broadcast %cst_477 : f32 to vector<8x32xf32>
    %970 = arith.addf %969, %968 : vector<8x32xf32>
    %971 = arith.divf %969, %970 : vector<8x32xf32>
    %972 = vector.extract_strided_slice %965 {offsets = [0, 32], sizes = [8, 32], strides = [1, 1]} : vector<8x128xf32> to vector<8x32xf32>
    %973 = arith.negf %972 : vector<8x32xf32>
    %974 = math.exp %973 : vector<8x32xf32>
    %cst_478 = arith.constant 1.000000e+00 : f32
    %975 = vector.broadcast %cst_478 : f32 to vector<8x32xf32>
    %976 = arith.addf %975, %974 : vector<8x32xf32>
    %977 = arith.divf %975, %976 : vector<8x32xf32>
    %978 = vector.extract_strided_slice %965 {offsets = [0, 64], sizes = [8, 32], strides = [1, 1]} : vector<8x128xf32> to vector<8x32xf32>
    %979 = math.tanh %978 : vector<8x32xf32>
    %980 = vector.extract_strided_slice %965 {offsets = [0, 96], sizes = [8, 32], strides = [1, 1]} : vector<8x128xf32> to vector<8x32xf32>
    %981 = arith.negf %980 : vector<8x32xf32>
    %982 = math.exp %981 : vector<8x32xf32>
    %cst_479 = arith.constant 1.000000e+00 : f32
    %983 = vector.broadcast %cst_479 : f32 to vector<8x32xf32>
    %984 = arith.addf %983, %982 : vector<8x32xf32>
    %985 = arith.divf %983, %984 : vector<8x32xf32>
    %986 = arith.mulf %977, %960 : vector<8x32xf32>
    %987 = arith.mulf %971, %979 : vector<8x32xf32>
    %988 = arith.addf %986, %987 : vector<8x32xf32>
    %989 = math.tanh %988 : vector<8x32xf32>
    %990 = arith.mulf %985, %989 : vector<8x32xf32>
    %c2_480 = arith.constant 2 : index
    %c0_481 = arith.constant 0 : index
    %c0_482 = arith.constant 0 : index
    %991 = vector.load %arg7[%c2_480, %c0_481, %c0_482] : memref<4x8x32xf32, #tpu.memory_space<vmem>>, vector<1x8x32xf32>
    %992 = vector.shape_cast %991 : vector<1x8x32xf32> to vector<8x32xf32>
    %993 = vector.shape_cast %988 : vector<8x32xf32> to vector<1x8x32xf32>
    tpu.vector_store %arg7[%c2_480, %c0_481, %c0_482], %993 {strides = array<i32>} : memref<4x8x32xf32, #tpu.memory_space<vmem>>, vector<1x8x32xf32>,
    %c2_483 = arith.constant 2 : index
    %c0_484 = arith.constant 0 : index
    %c0_485 = arith.constant 0 : index
    %994 = vector.load %arg6[%c2_483, %c0_484, %c0_485] : memref<4x8x32xf32, #tpu.memory_space<vmem>>, vector<1x8x32xf32>
    %995 = vector.shape_cast %994 : vector<1x8x32xf32> to vector<8x32xf32>
    %996 = vector.shape_cast %990 : vector<8x32xf32> to vector<1x8x32xf32>
    tpu.vector_store %arg6[%c2_483, %c0_484, %c0_485], %996 {strides = array<i32>} : memref<4x8x32xf32, #tpu.memory_space<vmem>>, vector<1x8x32xf32>,
    %997 = arith.index_cast %c5_i32_467 : i32 to index
    %c0_486 = arith.constant 0 : index
    %c0_487 = arith.constant 0 : index
    %998 = vector.load %arg8[%997, %c0_486, %c0_487] : memref<8x8x32xf32, #tpu.memory_space<vmem>>, vector<1x8x32xf32>
    %999 = vector.shape_cast %998 : vector<1x8x32xf32> to vector<8x32xf32>
    %1000 = vector.shape_cast %990 : vector<8x32xf32> to vector<1x8x32xf32>
    tpu.vector_store %arg8[%997, %c0_486, %c0_487], %1000 {strides = array<i32>} : memref<8x8x32xf32, #tpu.memory_space<vmem>>, vector<1x8x32xf32>,
    %c6_i32_488 = arith.constant 6 : i32
    %c2_489 = arith.constant 2 : index
    %c0_490 = arith.constant 0 : index
    %c0_491 = arith.constant 0 : index
    %1001 = vector.load %arg6[%c2_489, %c0_490, %c0_491] : memref<4x8x32xf32, #tpu.memory_space<vmem>>, vector<1x8x32xf32>
    %1002 = vector.shape_cast %1001 : vector<1x8x32xf32> to vector<8x32xf32>
    %c2_492 = arith.constant 2 : index
    %c0_493 = arith.constant 0 : index
    %c0_494 = arith.constant 0 : index
    %1003 = vector.load %arg7[%c2_492, %c0_493, %c0_494] : memref<4x8x32xf32, #tpu.memory_space<vmem>>, vector<1x8x32xf32>
    %1004 = vector.shape_cast %1003 : vector<1x8x32xf32> to vector<8x32xf32>
    %1005 = arith.index_cast %c6_i32_488 : i32 to index
    %c0_495 = arith.constant 0 : index
    %c0_496 = arith.constant 0 : index
    %1006 = vector.load %arg9[%1005, %c0_495, %c0_496] : memref<8x8x128xf32, #tpu.memory_space<vmem>>, vector<1x8x128xf32>
    %1007 = vector.shape_cast %1006 : vector<1x8x128xf32> to vector<8x128xf32>
    %cst_497 = arith.constant dense<0.000000e+00> : vector<8x128xf32>
    %1008 = tpu.matmul %1002, %736, %cst_497 {dimension_numbers = #tpu.dot_dimension_numbers<[1], [0], [0], [1], [0, 0, 1, 1], [], []>} : vector<8x32xf32>, vector<32x128xf32>, vector<8x128xf32> -> vector<8x128xf32>
    %1009 = arith.addf %1007, %1008 : vector<8x128xf32>
    %1010 = vector.extract_strided_slice %1009 {offsets = [0, 0], sizes = [8, 32], strides = [1, 1]} : vector<8x128xf32> to vector<8x32xf32>
    %1011 = arith.negf %1010 : vector<8x32xf32>
    %1012 = math.exp %1011 : vector<8x32xf32>
    %cst_498 = arith.constant 1.000000e+00 : f32
    %1013 = vector.broadcast %cst_498 : f32 to vector<8x32xf32>
    %1014 = arith.addf %1013, %1012 : vector<8x32xf32>
    %1015 = arith.divf %1013, %1014 : vector<8x32xf32>
    %1016 = vector.extract_strided_slice %1009 {offsets = [0, 32], sizes = [8, 32], strides = [1, 1]} : vector<8x128xf32> to vector<8x32xf32>
    %1017 = arith.negf %1016 : vector<8x32xf32>
    %1018 = math.exp %1017 : vector<8x32xf32>
    %cst_499 = arith.constant 1.000000e+00 : f32
    %1019 = vector.broadcast %cst_499 : f32 to vector<8x32xf32>
    %1020 = arith.addf %1019, %1018 : vector<8x32xf32>
    %1021 = arith.divf %1019, %1020 : vector<8x32xf32>
    %1022 = vector.extract_strided_slice %1009 {offsets = [0, 64], sizes = [8, 32], strides = [1, 1]} : vector<8x128xf32> to vector<8x32xf32>
    %1023 = math.tanh %1022 : vector<8x32xf32>
    %1024 = vector.extract_strided_slice %1009 {offsets = [0, 96], sizes = [8, 32], strides = [1, 1]} : vector<8x128xf32> to vector<8x32xf32>
    %1025 = arith.negf %1024 : vector<8x32xf32>
    %1026 = math.exp %1025 : vector<8x32xf32>
    %cst_500 = arith.constant 1.000000e+00 : f32
    %1027 = vector.broadcast %cst_500 : f32 to vector<8x32xf32>
    %1028 = arith.addf %1027, %1026 : vector<8x32xf32>
    %1029 = arith.divf %1027, %1028 : vector<8x32xf32>
    %1030 = arith.mulf %1021, %1004 : vector<8x32xf32>
    %1031 = arith.mulf %1015, %1023 : vector<8x32xf32>
    %1032 = arith.addf %1030, %1031 : vector<8x32xf32>
    %1033 = math.tanh %1032 : vector<8x32xf32>
    %1034 = arith.mulf %1029, %1033 : vector<8x32xf32>
    %c2_501 = arith.constant 2 : index
    %c0_502 = arith.constant 0 : index
    %c0_503 = arith.constant 0 : index
    %1035 = vector.load %arg7[%c2_501, %c0_502, %c0_503] : memref<4x8x32xf32, #tpu.memory_space<vmem>>, vector<1x8x32xf32>
    %1036 = vector.shape_cast %1035 : vector<1x8x32xf32> to vector<8x32xf32>
    %1037 = vector.shape_cast %1032 : vector<8x32xf32> to vector<1x8x32xf32>
    tpu.vector_store %arg7[%c2_501, %c0_502, %c0_503], %1037 {strides = array<i32>} : memref<4x8x32xf32, #tpu.memory_space<vmem>>, vector<1x8x32xf32>,
    %c2_504 = arith.constant 2 : index
    %c0_505 = arith.constant 0 : index
    %c0_506 = arith.constant 0 : index
    %1038 = vector.load %arg6[%c2_504, %c0_505, %c0_506] : memref<4x8x32xf32, #tpu.memory_space<vmem>>, vector<1x8x32xf32>
    %1039 = vector.shape_cast %1038 : vector<1x8x32xf32> to vector<8x32xf32>
    %1040 = vector.shape_cast %1034 : vector<8x32xf32> to vector<1x8x32xf32>
    tpu.vector_store %arg6[%c2_504, %c0_505, %c0_506], %1040 {strides = array<i32>} : memref<4x8x32xf32, #tpu.memory_space<vmem>>, vector<1x8x32xf32>,
    %1041 = arith.index_cast %c6_i32_488 : i32 to index
    %c0_507 = arith.constant 0 : index
    %c0_508 = arith.constant 0 : index
    %1042 = vector.load %arg8[%1041, %c0_507, %c0_508] : memref<8x8x32xf32, #tpu.memory_space<vmem>>, vector<1x8x32xf32>
    %1043 = vector.shape_cast %1042 : vector<1x8x32xf32> to vector<8x32xf32>
    %1044 = vector.shape_cast %1034 : vector<8x32xf32> to vector<1x8x32xf32>
    tpu.vector_store %arg8[%1041, %c0_507, %c0_508], %1044 {strides = array<i32>} : memref<8x8x32xf32, #tpu.memory_space<vmem>>, vector<1x8x32xf32>,
    %c7_i32_509 = arith.constant 7 : i32
    %c2_510 = arith.constant 2 : index
    %c0_511 = arith.constant 0 : index
    %c0_512 = arith.constant 0 : index
    %1045 = vector.load %arg6[%c2_510, %c0_511, %c0_512] : memref<4x8x32xf32, #tpu.memory_space<vmem>>, vector<1x8x32xf32>
    %1046 = vector.shape_cast %1045 : vector<1x8x32xf32> to vector<8x32xf32>
    %c2_513 = arith.constant 2 : index
    %c0_514 = arith.constant 0 : index
    %c0_515 = arith.constant 0 : index
    %1047 = vector.load %arg7[%c2_513, %c0_514, %c0_515] : memref<4x8x32xf32, #tpu.memory_space<vmem>>, vector<1x8x32xf32>
    %1048 = vector.shape_cast %1047 : vector<1x8x32xf32> to vector<8x32xf32>
    %1049 = arith.index_cast %c7_i32_509 : i32 to index
    %c0_516 = arith.constant 0 : index
    %c0_517 = arith.constant 0 : index
    %1050 = vector.load %arg9[%1049, %c0_516, %c0_517] : memref<8x8x128xf32, #tpu.memory_space<vmem>>, vector<1x8x128xf32>
    %1051 = vector.shape_cast %1050 : vector<1x8x128xf32> to vector<8x128xf32>
    %cst_518 = arith.constant dense<0.000000e+00> : vector<8x128xf32>
    %1052 = tpu.matmul %1046, %736, %cst_518 {dimension_numbers = #tpu.dot_dimension_numbers<[1], [0], [0], [1], [0, 0, 1, 1], [], []>} : vector<8x32xf32>, vector<32x128xf32>, vector<8x128xf32> -> vector<8x128xf32>
    %1053 = arith.addf %1051, %1052 : vector<8x128xf32>
    %1054 = vector.extract_strided_slice %1053 {offsets = [0, 0], sizes = [8, 32], strides = [1, 1]} : vector<8x128xf32> to vector<8x32xf32>
    %1055 = arith.negf %1054 : vector<8x32xf32>
    %1056 = math.exp %1055 : vector<8x32xf32>
    %cst_519 = arith.constant 1.000000e+00 : f32
    %1057 = vector.broadcast %cst_519 : f32 to vector<8x32xf32>
    %1058 = arith.addf %1057, %1056 : vector<8x32xf32>
    %1059 = arith.divf %1057, %1058 : vector<8x32xf32>
    %1060 = vector.extract_strided_slice %1053 {offsets = [0, 32], sizes = [8, 32], strides = [1, 1]} : vector<8x128xf32> to vector<8x32xf32>
    %1061 = arith.negf %1060 : vector<8x32xf32>
    %1062 = math.exp %1061 : vector<8x32xf32>
    %cst_520 = arith.constant 1.000000e+00 : f32
    %1063 = vector.broadcast %cst_520 : f32 to vector<8x32xf32>
    %1064 = arith.addf %1063, %1062 : vector<8x32xf32>
    %1065 = arith.divf %1063, %1064 : vector<8x32xf32>
    %1066 = vector.extract_strided_slice %1053 {offsets = [0, 64], sizes = [8, 32], strides = [1, 1]} : vector<8x128xf32> to vector<8x32xf32>
    %1067 = math.tanh %1066 : vector<8x32xf32>
    %1068 = vector.extract_strided_slice %1053 {offsets = [0, 96], sizes = [8, 32], strides = [1, 1]} : vector<8x128xf32> to vector<8x32xf32>
    %1069 = arith.negf %1068 : vector<8x32xf32>
    %1070 = math.exp %1069 : vector<8x32xf32>
    %cst_521 = arith.constant 1.000000e+00 : f32
    %1071 = vector.broadcast %cst_521 : f32 to vector<8x32xf32>
    %1072 = arith.addf %1071, %1070 : vector<8x32xf32>
    %1073 = arith.divf %1071, %1072 : vector<8x32xf32>
    %1074 = arith.mulf %1065, %1048 : vector<8x32xf32>
    %1075 = arith.mulf %1059, %1067 : vector<8x32xf32>
    %1076 = arith.addf %1074, %1075 : vector<8x32xf32>
    %1077 = math.tanh %1076 : vector<8x32xf32>
    %1078 = arith.mulf %1073, %1077 : vector<8x32xf32>
    %c2_522 = arith.constant 2 : index
    %c0_523 = arith.constant 0 : index
    %c0_524 = arith.constant 0 : index
    %1079 = vector.load %arg7[%c2_522, %c0_523, %c0_524] : memref<4x8x32xf32, #tpu.memory_space<vmem>>, vector<1x8x32xf32>
    %1080 = vector.shape_cast %1079 : vector<1x8x32xf32> to vector<8x32xf32>
    %1081 = vector.shape_cast %1076 : vector<8x32xf32> to vector<1x8x32xf32>
    tpu.vector_store %arg7[%c2_522, %c0_523, %c0_524], %1081 {strides = array<i32>} : memref<4x8x32xf32, #tpu.memory_space<vmem>>, vector<1x8x32xf32>,
    %c2_525 = arith.constant 2 : index
    %c0_526 = arith.constant 0 : index
    %c0_527 = arith.constant 0 : index
    %1082 = vector.load %arg6[%c2_525, %c0_526, %c0_527] : memref<4x8x32xf32, #tpu.memory_space<vmem>>, vector<1x8x32xf32>
    %1083 = vector.shape_cast %1082 : vector<1x8x32xf32> to vector<8x32xf32>
    %1084 = vector.shape_cast %1078 : vector<8x32xf32> to vector<1x8x32xf32>
    tpu.vector_store %arg6[%c2_525, %c0_526, %c0_527], %1084 {strides = array<i32>} : memref<4x8x32xf32, #tpu.memory_space<vmem>>, vector<1x8x32xf32>,
    %1085 = arith.index_cast %c7_i32_509 : i32 to index
    %c0_528 = arith.constant 0 : index
    %c0_529 = arith.constant 0 : index
    %1086 = vector.load %arg8[%1085, %c0_528, %c0_529] : memref<8x8x32xf32, #tpu.memory_space<vmem>>, vector<1x8x32xf32>
    %1087 = vector.shape_cast %1086 : vector<1x8x32xf32> to vector<8x32xf32>
    %1088 = vector.shape_cast %1078 : vector<8x32xf32> to vector<1x8x32xf32>
    tpu.vector_store %arg8[%1085, %c0_528, %c0_529], %1088 {strides = array<i32>} : memref<8x8x32xf32, #tpu.memory_space<vmem>>, vector<1x8x32xf32>,
    %c8_i32_530 = arith.constant 8 : i32
    %c0_531 = arith.constant 0 : index
    %c0_532 = arith.constant 0 : index
    %c0_533 = arith.constant 0 : index
    %1089 = vector.load %arg8[%c0_531, %c0_532, %c0_533] : memref<8x8x32xf32, #tpu.memory_space<vmem>>, vector<8x8x32xf32>
    %1090 = vector.shape_cast %1089 : vector<8x8x32xf32> to vector<64x32xf32>
    %c2_534 = arith.constant 2 : index
    %c0_535 = arith.constant 0 : index
    %c0_536 = arith.constant 0 : index
    %1091 = vector.load %arg2[%c2_534, %c0_535, %c0_536] : memref<3x32x128xf32, #tpu.memory_space<vmem>>, vector<1x32x128xf32>
    %1092 = vector.shape_cast %1091 : vector<1x32x128xf32> to vector<32x128xf32>
    %cst_537 = arith.constant dense<0.000000e+00> : vector<64x128xf32>
    %1093 = tpu.matmul %1090, %1092, %cst_537 {dimension_numbers = #tpu.dot_dimension_numbers<[1], [0], [0], [1], [0, 0, 1, 1], [], []>} : vector<64x32xf32>, vector<32x128xf32>, vector<64x128xf32> -> vector<64x128xf32>
    %1094 = vector.shape_cast %1093 : vector<64x128xf32> to vector<8x8x128xf32>
    %c2_538 = arith.constant 2 : index
    %c0_539 = arith.constant 0 : index
    %c0_540 = arith.constant 0 : index
    %1095 = vector.load %arg4[%c2_538, %c0_539, %c0_540] : memref<3x1x128xf32, #tpu.memory_space<vmem>>, vector<1x1x128xf32>
    %1096 = vector.shape_cast %1095 : vector<1x1x128xf32> to vector<1x128xf32>
    %1097 = vector.shape_cast %1096 : vector<1x128xf32> to vector<1x1x128xf32>
    %1098 = vector.broadcast %1097 : vector<1x1x128xf32> to vector<8x8x128xf32>
    %1099 = arith.addf %1094, %1098 : vector<8x8x128xf32>
    %c0_541 = arith.constant 0 : index
    %c0_542 = arith.constant 0 : index
    %c0_543 = arith.constant 0 : index
    %1100 = vector.load %arg9[%c0_541, %c0_542, %c0_543] : memref<8x8x128xf32, #tpu.memory_space<vmem>>, vector<8x8x128xf32>
    tpu.vector_store %arg9[%c0_541, %c0_542, %c0_543], %1099 {strides = array<i32>} : memref<8x8x128xf32, #tpu.memory_space<vmem>>, vector<8x8x128xf32>,
    %c3 = arith.constant 3 : index
    %c0_544 = arith.constant 0 : index
    %c0_545 = arith.constant 0 : index
    %1101 = vector.load %arg3[%c3, %c0_544, %c0_545] : memref<4x32x128xf32, #tpu.memory_space<vmem>>, vector<1x32x128xf32>
    %1102 = vector.shape_cast %1101 : vector<1x32x128xf32> to vector<32x128xf32>
    %c0_i32_546 = arith.constant 0 : i32
    %c3_547 = arith.constant 3 : index
    %c0_548 = arith.constant 0 : index
    %c0_549 = arith.constant 0 : index
    %1103 = vector.load %arg6[%c3_547, %c0_548, %c0_549] : memref<4x8x32xf32, #tpu.memory_space<vmem>>, vector<1x8x32xf32>
    %1104 = vector.shape_cast %1103 : vector<1x8x32xf32> to vector<8x32xf32>
    %c3_550 = arith.constant 3 : index
    %c0_551 = arith.constant 0 : index
    %c0_552 = arith.constant 0 : index
    %1105 = vector.load %arg7[%c3_550, %c0_551, %c0_552] : memref<4x8x32xf32, #tpu.memory_space<vmem>>, vector<1x8x32xf32>
    %1106 = vector.shape_cast %1105 : vector<1x8x32xf32> to vector<8x32xf32>
    %1107 = arith.index_cast %c0_i32_546 : i32 to index
    %c0_553 = arith.constant 0 : index
    %c0_554 = arith.constant 0 : index
    %1108 = vector.load %arg9[%1107, %c0_553, %c0_554] : memref<8x8x128xf32, #tpu.memory_space<vmem>>, vector<1x8x128xf32>
    %1109 = vector.shape_cast %1108 : vector<1x8x128xf32> to vector<8x128xf32>
    %cst_555 = arith.constant dense<0.000000e+00> : vector<8x128xf32>
    %1110 = tpu.matmul %1104, %1102, %cst_555 {dimension_numbers = #tpu.dot_dimension_numbers<[1], [0], [0], [1], [0, 0, 1, 1], [], []>} : vector<8x32xf32>, vector<32x128xf32>, vector<8x128xf32> -> vector<8x128xf32>
    %1111 = arith.addf %1109, %1110 : vector<8x128xf32>
    %1112 = vector.extract_strided_slice %1111 {offsets = [0, 0], sizes = [8, 32], strides = [1, 1]} : vector<8x128xf32> to vector<8x32xf32>
    %1113 = arith.negf %1112 : vector<8x32xf32>
    %1114 = math.exp %1113 : vector<8x32xf32>
    %cst_556 = arith.constant 1.000000e+00 : f32
    %1115 = vector.broadcast %cst_556 : f32 to vector<8x32xf32>
    %1116 = arith.addf %1115, %1114 : vector<8x32xf32>
    %1117 = arith.divf %1115, %1116 : vector<8x32xf32>
    %1118 = vector.extract_strided_slice %1111 {offsets = [0, 32], sizes = [8, 32], strides = [1, 1]} : vector<8x128xf32> to vector<8x32xf32>
    %1119 = arith.negf %1118 : vector<8x32xf32>
    %1120 = math.exp %1119 : vector<8x32xf32>
    %cst_557 = arith.constant 1.000000e+00 : f32
    %1121 = vector.broadcast %cst_557 : f32 to vector<8x32xf32>
    %1122 = arith.addf %1121, %1120 : vector<8x32xf32>
    %1123 = arith.divf %1121, %1122 : vector<8x32xf32>
    %1124 = vector.extract_strided_slice %1111 {offsets = [0, 64], sizes = [8, 32], strides = [1, 1]} : vector<8x128xf32> to vector<8x32xf32>
    %1125 = math.tanh %1124 : vector<8x32xf32>
    %1126 = vector.extract_strided_slice %1111 {offsets = [0, 96], sizes = [8, 32], strides = [1, 1]} : vector<8x128xf32> to vector<8x32xf32>
    %1127 = arith.negf %1126 : vector<8x32xf32>
    %1128 = math.exp %1127 : vector<8x32xf32>
    %cst_558 = arith.constant 1.000000e+00 : f32
    %1129 = vector.broadcast %cst_558 : f32 to vector<8x32xf32>
    %1130 = arith.addf %1129, %1128 : vector<8x32xf32>
    %1131 = arith.divf %1129, %1130 : vector<8x32xf32>
    %1132 = arith.mulf %1123, %1106 : vector<8x32xf32>
    %1133 = arith.mulf %1117, %1125 : vector<8x32xf32>
    %1134 = arith.addf %1132, %1133 : vector<8x32xf32>
    %1135 = math.tanh %1134 : vector<8x32xf32>
    %1136 = arith.mulf %1131, %1135 : vector<8x32xf32>
    %c3_559 = arith.constant 3 : index
    %c0_560 = arith.constant 0 : index
    %c0_561 = arith.constant 0 : index
    %1137 = vector.load %arg7[%c3_559, %c0_560, %c0_561] : memref<4x8x32xf32, #tpu.memory_space<vmem>>, vector<1x8x32xf32>
    %1138 = vector.shape_cast %1137 : vector<1x8x32xf32> to vector<8x32xf32>
    %1139 = vector.shape_cast %1134 : vector<8x32xf32> to vector<1x8x32xf32>
    tpu.vector_store %arg7[%c3_559, %c0_560, %c0_561], %1139 {strides = array<i32>} : memref<4x8x32xf32, #tpu.memory_space<vmem>>, vector<1x8x32xf32>,
    %c3_562 = arith.constant 3 : index
    %c0_563 = arith.constant 0 : index
    %c0_564 = arith.constant 0 : index
    %1140 = vector.load %arg6[%c3_562, %c0_563, %c0_564] : memref<4x8x32xf32, #tpu.memory_space<vmem>>, vector<1x8x32xf32>
    %1141 = vector.shape_cast %1140 : vector<1x8x32xf32> to vector<8x32xf32>
    %1142 = vector.shape_cast %1136 : vector<8x32xf32> to vector<1x8x32xf32>
    tpu.vector_store %arg6[%c3_562, %c0_563, %c0_564], %1142 {strides = array<i32>} : memref<4x8x32xf32, #tpu.memory_space<vmem>>, vector<1x8x32xf32>,
    %1143 = arith.index_cast %c0_i32_546 : i32 to index
    %c0_565 = arith.constant 0 : index
    %c0_566 = arith.constant 0 : index
    %1144 = vector.load %arg8[%1143, %c0_565, %c0_566] : memref<8x8x32xf32, #tpu.memory_space<vmem>>, vector<1x8x32xf32>
    %1145 = vector.shape_cast %1144 : vector<1x8x32xf32> to vector<8x32xf32>
    %1146 = vector.shape_cast %1136 : vector<8x32xf32> to vector<1x8x32xf32>
    tpu.vector_store %arg8[%1143, %c0_565, %c0_566], %1146 {strides = array<i32>} : memref<8x8x32xf32, #tpu.memory_space<vmem>>, vector<1x8x32xf32>,
    %c1_i32_567 = arith.constant 1 : i32
    %c3_568 = arith.constant 3 : index
    %c0_569 = arith.constant 0 : index
    %c0_570 = arith.constant 0 : index
    %1147 = vector.load %arg6[%c3_568, %c0_569, %c0_570] : memref<4x8x32xf32, #tpu.memory_space<vmem>>, vector<1x8x32xf32>
    %1148 = vector.shape_cast %1147 : vector<1x8x32xf32> to vector<8x32xf32>
    %c3_571 = arith.constant 3 : index
    %c0_572 = arith.constant 0 : index
    %c0_573 = arith.constant 0 : index
    %1149 = vector.load %arg7[%c3_571, %c0_572, %c0_573] : memref<4x8x32xf32, #tpu.memory_space<vmem>>, vector<1x8x32xf32>
    %1150 = vector.shape_cast %1149 : vector<1x8x32xf32> to vector<8x32xf32>
    %1151 = arith.index_cast %c1_i32_567 : i32 to index
    %c0_574 = arith.constant 0 : index
    %c0_575 = arith.constant 0 : index
    %1152 = vector.load %arg9[%1151, %c0_574, %c0_575] : memref<8x8x128xf32, #tpu.memory_space<vmem>>, vector<1x8x128xf32>
    %1153 = vector.shape_cast %1152 : vector<1x8x128xf32> to vector<8x128xf32>
    %cst_576 = arith.constant dense<0.000000e+00> : vector<8x128xf32>
    %1154 = tpu.matmul %1148, %1102, %cst_576 {dimension_numbers = #tpu.dot_dimension_numbers<[1], [0], [0], [1], [0, 0, 1, 1], [], []>} : vector<8x32xf32>, vector<32x128xf32>, vector<8x128xf32> -> vector<8x128xf32>
    %1155 = arith.addf %1153, %1154 : vector<8x128xf32>
    %1156 = vector.extract_strided_slice %1155 {offsets = [0, 0], sizes = [8, 32], strides = [1, 1]} : vector<8x128xf32> to vector<8x32xf32>
    %1157 = arith.negf %1156 : vector<8x32xf32>
    %1158 = math.exp %1157 : vector<8x32xf32>
    %cst_577 = arith.constant 1.000000e+00 : f32
    %1159 = vector.broadcast %cst_577 : f32 to vector<8x32xf32>
    %1160 = arith.addf %1159, %1158 : vector<8x32xf32>
    %1161 = arith.divf %1159, %1160 : vector<8x32xf32>
    %1162 = vector.extract_strided_slice %1155 {offsets = [0, 32], sizes = [8, 32], strides = [1, 1]} : vector<8x128xf32> to vector<8x32xf32>
    %1163 = arith.negf %1162 : vector<8x32xf32>
    %1164 = math.exp %1163 : vector<8x32xf32>
    %cst_578 = arith.constant 1.000000e+00 : f32
    %1165 = vector.broadcast %cst_578 : f32 to vector<8x32xf32>
    %1166 = arith.addf %1165, %1164 : vector<8x32xf32>
    %1167 = arith.divf %1165, %1166 : vector<8x32xf32>
    %1168 = vector.extract_strided_slice %1155 {offsets = [0, 64], sizes = [8, 32], strides = [1, 1]} : vector<8x128xf32> to vector<8x32xf32>
    %1169 = math.tanh %1168 : vector<8x32xf32>
    %1170 = vector.extract_strided_slice %1155 {offsets = [0, 96], sizes = [8, 32], strides = [1, 1]} : vector<8x128xf32> to vector<8x32xf32>
    %1171 = arith.negf %1170 : vector<8x32xf32>
    %1172 = math.exp %1171 : vector<8x32xf32>
    %cst_579 = arith.constant 1.000000e+00 : f32
    %1173 = vector.broadcast %cst_579 : f32 to vector<8x32xf32>
    %1174 = arith.addf %1173, %1172 : vector<8x32xf32>
    %1175 = arith.divf %1173, %1174 : vector<8x32xf32>
    %1176 = arith.mulf %1167, %1150 : vector<8x32xf32>
    %1177 = arith.mulf %1161, %1169 : vector<8x32xf32>
    %1178 = arith.addf %1176, %1177 : vector<8x32xf32>
    %1179 = math.tanh %1178 : vector<8x32xf32>
    %1180 = arith.mulf %1175, %1179 : vector<8x32xf32>
    %c3_580 = arith.constant 3 : index
    %c0_581 = arith.constant 0 : index
    %c0_582 = arith.constant 0 : index
    %1181 = vector.load %arg7[%c3_580, %c0_581, %c0_582] : memref<4x8x32xf32, #tpu.memory_space<vmem>>, vector<1x8x32xf32>
    %1182 = vector.shape_cast %1181 : vector<1x8x32xf32> to vector<8x32xf32>
    %1183 = vector.shape_cast %1178 : vector<8x32xf32> to vector<1x8x32xf32>
    tpu.vector_store %arg7[%c3_580, %c0_581, %c0_582], %1183 {strides = array<i32>} : memref<4x8x32xf32, #tpu.memory_space<vmem>>, vector<1x8x32xf32>,
    %c3_583 = arith.constant 3 : index
    %c0_584 = arith.constant 0 : index
    %c0_585 = arith.constant 0 : index
    %1184 = vector.load %arg6[%c3_583, %c0_584, %c0_585] : memref<4x8x32xf32, #tpu.memory_space<vmem>>, vector<1x8x32xf32>
    %1185 = vector.shape_cast %1184 : vector<1x8x32xf32> to vector<8x32xf32>
    %1186 = vector.shape_cast %1180 : vector<8x32xf32> to vector<1x8x32xf32>
    tpu.vector_store %arg6[%c3_583, %c0_584, %c0_585], %1186 {strides = array<i32>} : memref<4x8x32xf32, #tpu.memory_space<vmem>>, vector<1x8x32xf32>,
    %1187 = arith.index_cast %c1_i32_567 : i32 to index
    %c0_586 = arith.constant 0 : index
    %c0_587 = arith.constant 0 : index
    %1188 = vector.load %arg8[%1187, %c0_586, %c0_587] : memref<8x8x32xf32, #tpu.memory_space<vmem>>, vector<1x8x32xf32>
    %1189 = vector.shape_cast %1188 : vector<1x8x32xf32> to vector<8x32xf32>
    %1190 = vector.shape_cast %1180 : vector<8x32xf32> to vector<1x8x32xf32>
    tpu.vector_store %arg8[%1187, %c0_586, %c0_587], %1190 {strides = array<i32>} : memref<8x8x32xf32, #tpu.memory_space<vmem>>, vector<1x8x32xf32>,
    %c2_i32_588 = arith.constant 2 : i32
    %c3_589 = arith.constant 3 : index
    %c0_590 = arith.constant 0 : index
    %c0_591 = arith.constant 0 : index
    %1191 = vector.load %arg6[%c3_589, %c0_590, %c0_591] : memref<4x8x32xf32, #tpu.memory_space<vmem>>, vector<1x8x32xf32>
    %1192 = vector.shape_cast %1191 : vector<1x8x32xf32> to vector<8x32xf32>
    %c3_592 = arith.constant 3 : index
    %c0_593 = arith.constant 0 : index
    %c0_594 = arith.constant 0 : index
    %1193 = vector.load %arg7[%c3_592, %c0_593, %c0_594] : memref<4x8x32xf32, #tpu.memory_space<vmem>>, vector<1x8x32xf32>
    %1194 = vector.shape_cast %1193 : vector<1x8x32xf32> to vector<8x32xf32>
    %1195 = arith.index_cast %c2_i32_588 : i32 to index
    %c0_595 = arith.constant 0 : index
    %c0_596 = arith.constant 0 : index
    %1196 = vector.load %arg9[%1195, %c0_595, %c0_596] : memref<8x8x128xf32, #tpu.memory_space<vmem>>, vector<1x8x128xf32>
    %1197 = vector.shape_cast %1196 : vector<1x8x128xf32> to vector<8x128xf32>
    %cst_597 = arith.constant dense<0.000000e+00> : vector<8x128xf32>
    %1198 = tpu.matmul %1192, %1102, %cst_597 {dimension_numbers = #tpu.dot_dimension_numbers<[1], [0], [0], [1], [0, 0, 1, 1], [], []>} : vector<8x32xf32>, vector<32x128xf32>, vector<8x128xf32> -> vector<8x128xf32>
    %1199 = arith.addf %1197, %1198 : vector<8x128xf32>
    %1200 = vector.extract_strided_slice %1199 {offsets = [0, 0], sizes = [8, 32], strides = [1, 1]} : vector<8x128xf32> to vector<8x32xf32>
    %1201 = arith.negf %1200 : vector<8x32xf32>
    %1202 = math.exp %1201 : vector<8x32xf32>
    %cst_598 = arith.constant 1.000000e+00 : f32
    %1203 = vector.broadcast %cst_598 : f32 to vector<8x32xf32>
    %1204 = arith.addf %1203, %1202 : vector<8x32xf32>
    %1205 = arith.divf %1203, %1204 : vector<8x32xf32>
    %1206 = vector.extract_strided_slice %1199 {offsets = [0, 32], sizes = [8, 32], strides = [1, 1]} : vector<8x128xf32> to vector<8x32xf32>
    %1207 = arith.negf %1206 : vector<8x32xf32>
    %1208 = math.exp %1207 : vector<8x32xf32>
    %cst_599 = arith.constant 1.000000e+00 : f32
    %1209 = vector.broadcast %cst_599 : f32 to vector<8x32xf32>
    %1210 = arith.addf %1209, %1208 : vector<8x32xf32>
    %1211 = arith.divf %1209, %1210 : vector<8x32xf32>
    %1212 = vector.extract_strided_slice %1199 {offsets = [0, 64], sizes = [8, 32], strides = [1, 1]} : vector<8x128xf32> to vector<8x32xf32>
    %1213 = math.tanh %1212 : vector<8x32xf32>
    %1214 = vector.extract_strided_slice %1199 {offsets = [0, 96], sizes = [8, 32], strides = [1, 1]} : vector<8x128xf32> to vector<8x32xf32>
    %1215 = arith.negf %1214 : vector<8x32xf32>
    %1216 = math.exp %1215 : vector<8x32xf32>
    %cst_600 = arith.constant 1.000000e+00 : f32
    %1217 = vector.broadcast %cst_600 : f32 to vector<8x32xf32>
    %1218 = arith.addf %1217, %1216 : vector<8x32xf32>
    %1219 = arith.divf %1217, %1218 : vector<8x32xf32>
    %1220 = arith.mulf %1211, %1194 : vector<8x32xf32>
    %1221 = arith.mulf %1205, %1213 : vector<8x32xf32>
    %1222 = arith.addf %1220, %1221 : vector<8x32xf32>
    %1223 = math.tanh %1222 : vector<8x32xf32>
    %1224 = arith.mulf %1219, %1223 : vector<8x32xf32>
    %c3_601 = arith.constant 3 : index
    %c0_602 = arith.constant 0 : index
    %c0_603 = arith.constant 0 : index
    %1225 = vector.load %arg7[%c3_601, %c0_602, %c0_603] : memref<4x8x32xf32, #tpu.memory_space<vmem>>, vector<1x8x32xf32>
    %1226 = vector.shape_cast %1225 : vector<1x8x32xf32> to vector<8x32xf32>
    %1227 = vector.shape_cast %1222 : vector<8x32xf32> to vector<1x8x32xf32>
    tpu.vector_store %arg7[%c3_601, %c0_602, %c0_603], %1227 {strides = array<i32>} : memref<4x8x32xf32, #tpu.memory_space<vmem>>, vector<1x8x32xf32>,
    %c3_604 = arith.constant 3 : index
    %c0_605 = arith.constant 0 : index
    %c0_606 = arith.constant 0 : index
    %1228 = vector.load %arg6[%c3_604, %c0_605, %c0_606] : memref<4x8x32xf32, #tpu.memory_space<vmem>>, vector<1x8x32xf32>
    %1229 = vector.shape_cast %1228 : vector<1x8x32xf32> to vector<8x32xf32>
    %1230 = vector.shape_cast %1224 : vector<8x32xf32> to vector<1x8x32xf32>
    tpu.vector_store %arg6[%c3_604, %c0_605, %c0_606], %1230 {strides = array<i32>} : memref<4x8x32xf32, #tpu.memory_space<vmem>>, vector<1x8x32xf32>,
    %1231 = arith.index_cast %c2_i32_588 : i32 to index
    %c0_607 = arith.constant 0 : index
    %c0_608 = arith.constant 0 : index
    %1232 = vector.load %arg8[%1231, %c0_607, %c0_608] : memref<8x8x32xf32, #tpu.memory_space<vmem>>, vector<1x8x32xf32>
    %1233 = vector.shape_cast %1232 : vector<1x8x32xf32> to vector<8x32xf32>
    %1234 = vector.shape_cast %1224 : vector<8x32xf32> to vector<1x8x32xf32>
    tpu.vector_store %arg8[%1231, %c0_607, %c0_608], %1234 {strides = array<i32>} : memref<8x8x32xf32, #tpu.memory_space<vmem>>, vector<1x8x32xf32>,
    %c3_i32_609 = arith.constant 3 : i32
    %c3_610 = arith.constant 3 : index
    %c0_611 = arith.constant 0 : index
    %c0_612 = arith.constant 0 : index
    %1235 = vector.load %arg6[%c3_610, %c0_611, %c0_612] : memref<4x8x32xf32, #tpu.memory_space<vmem>>, vector<1x8x32xf32>
    %1236 = vector.shape_cast %1235 : vector<1x8x32xf32> to vector<8x32xf32>
    %c3_613 = arith.constant 3 : index
    %c0_614 = arith.constant 0 : index
    %c0_615 = arith.constant 0 : index
    %1237 = vector.load %arg7[%c3_613, %c0_614, %c0_615] : memref<4x8x32xf32, #tpu.memory_space<vmem>>, vector<1x8x32xf32>
    %1238 = vector.shape_cast %1237 : vector<1x8x32xf32> to vector<8x32xf32>
    %1239 = arith.index_cast %c3_i32_609 : i32 to index
    %c0_616 = arith.constant 0 : index
    %c0_617 = arith.constant 0 : index
    %1240 = vector.load %arg9[%1239, %c0_616, %c0_617] : memref<8x8x128xf32, #tpu.memory_space<vmem>>, vector<1x8x128xf32>
    %1241 = vector.shape_cast %1240 : vector<1x8x128xf32> to vector<8x128xf32>
    %cst_618 = arith.constant dense<0.000000e+00> : vector<8x128xf32>
    %1242 = tpu.matmul %1236, %1102, %cst_618 {dimension_numbers = #tpu.dot_dimension_numbers<[1], [0], [0], [1], [0, 0, 1, 1], [], []>} : vector<8x32xf32>, vector<32x128xf32>, vector<8x128xf32> -> vector<8x128xf32>
    %1243 = arith.addf %1241, %1242 : vector<8x128xf32>
    %1244 = vector.extract_strided_slice %1243 {offsets = [0, 0], sizes = [8, 32], strides = [1, 1]} : vector<8x128xf32> to vector<8x32xf32>
    %1245 = arith.negf %1244 : vector<8x32xf32>
    %1246 = math.exp %1245 : vector<8x32xf32>
    %cst_619 = arith.constant 1.000000e+00 : f32
    %1247 = vector.broadcast %cst_619 : f32 to vector<8x32xf32>
    %1248 = arith.addf %1247, %1246 : vector<8x32xf32>
    %1249 = arith.divf %1247, %1248 : vector<8x32xf32>
    %1250 = vector.extract_strided_slice %1243 {offsets = [0, 32], sizes = [8, 32], strides = [1, 1]} : vector<8x128xf32> to vector<8x32xf32>
    %1251 = arith.negf %1250 : vector<8x32xf32>
    %1252 = math.exp %1251 : vector<8x32xf32>
    %cst_620 = arith.constant 1.000000e+00 : f32
    %1253 = vector.broadcast %cst_620 : f32 to vector<8x32xf32>
    %1254 = arith.addf %1253, %1252 : vector<8x32xf32>
    %1255 = arith.divf %1253, %1254 : vector<8x32xf32>
    %1256 = vector.extract_strided_slice %1243 {offsets = [0, 64], sizes = [8, 32], strides = [1, 1]} : vector<8x128xf32> to vector<8x32xf32>
    %1257 = math.tanh %1256 : vector<8x32xf32>
    %1258 = vector.extract_strided_slice %1243 {offsets = [0, 96], sizes = [8, 32], strides = [1, 1]} : vector<8x128xf32> to vector<8x32xf32>
    %1259 = arith.negf %1258 : vector<8x32xf32>
    %1260 = math.exp %1259 : vector<8x32xf32>
    %cst_621 = arith.constant 1.000000e+00 : f32
    %1261 = vector.broadcast %cst_621 : f32 to vector<8x32xf32>
    %1262 = arith.addf %1261, %1260 : vector<8x32xf32>
    %1263 = arith.divf %1261, %1262 : vector<8x32xf32>
    %1264 = arith.mulf %1255, %1238 : vector<8x32xf32>
    %1265 = arith.mulf %1249, %1257 : vector<8x32xf32>
    %1266 = arith.addf %1264, %1265 : vector<8x32xf32>
    %1267 = math.tanh %1266 : vector<8x32xf32>
    %1268 = arith.mulf %1263, %1267 : vector<8x32xf32>
    %c3_622 = arith.constant 3 : index
    %c0_623 = arith.constant 0 : index
    %c0_624 = arith.constant 0 : index
    %1269 = vector.load %arg7[%c3_622, %c0_623, %c0_624] : memref<4x8x32xf32, #tpu.memory_space<vmem>>, vector<1x8x32xf32>
    %1270 = vector.shape_cast %1269 : vector<1x8x32xf32> to vector<8x32xf32>
    %1271 = vector.shape_cast %1266 : vector<8x32xf32> to vector<1x8x32xf32>
    tpu.vector_store %arg7[%c3_622, %c0_623, %c0_624], %1271 {strides = array<i32>} : memref<4x8x32xf32, #tpu.memory_space<vmem>>, vector<1x8x32xf32>,
    %c3_625 = arith.constant 3 : index
    %c0_626 = arith.constant 0 : index
    %c0_627 = arith.constant 0 : index
    %1272 = vector.load %arg6[%c3_625, %c0_626, %c0_627] : memref<4x8x32xf32, #tpu.memory_space<vmem>>, vector<1x8x32xf32>
    %1273 = vector.shape_cast %1272 : vector<1x8x32xf32> to vector<8x32xf32>
    %1274 = vector.shape_cast %1268 : vector<8x32xf32> to vector<1x8x32xf32>
    tpu.vector_store %arg6[%c3_625, %c0_626, %c0_627], %1274 {strides = array<i32>} : memref<4x8x32xf32, #tpu.memory_space<vmem>>, vector<1x8x32xf32>,
    %1275 = arith.index_cast %c3_i32_609 : i32 to index
    %c0_628 = arith.constant 0 : index
    %c0_629 = arith.constant 0 : index
    %1276 = vector.load %arg8[%1275, %c0_628, %c0_629] : memref<8x8x32xf32, #tpu.memory_space<vmem>>, vector<1x8x32xf32>
    %1277 = vector.shape_cast %1276 : vector<1x8x32xf32> to vector<8x32xf32>
    %1278 = vector.shape_cast %1268 : vector<8x32xf32> to vector<1x8x32xf32>
    tpu.vector_store %arg8[%1275, %c0_628, %c0_629], %1278 {strides = array<i32>} : memref<8x8x32xf32, #tpu.memory_space<vmem>>, vector<1x8x32xf32>,
    %c4_i32_630 = arith.constant 4 : i32
    %c3_631 = arith.constant 3 : index
    %c0_632 = arith.constant 0 : index
    %c0_633 = arith.constant 0 : index
    %1279 = vector.load %arg6[%c3_631, %c0_632, %c0_633] : memref<4x8x32xf32, #tpu.memory_space<vmem>>, vector<1x8x32xf32>
    %1280 = vector.shape_cast %1279 : vector<1x8x32xf32> to vector<8x32xf32>
    %c3_634 = arith.constant 3 : index
    %c0_635 = arith.constant 0 : index
    %c0_636 = arith.constant 0 : index
    %1281 = vector.load %arg7[%c3_634, %c0_635, %c0_636] : memref<4x8x32xf32, #tpu.memory_space<vmem>>, vector<1x8x32xf32>
    %1282 = vector.shape_cast %1281 : vector<1x8x32xf32> to vector<8x32xf32>
    %1283 = arith.index_cast %c4_i32_630 : i32 to index
    %c0_637 = arith.constant 0 : index
    %c0_638 = arith.constant 0 : index
    %1284 = vector.load %arg9[%1283, %c0_637, %c0_638] : memref<8x8x128xf32, #tpu.memory_space<vmem>>, vector<1x8x128xf32>
    %1285 = vector.shape_cast %1284 : vector<1x8x128xf32> to vector<8x128xf32>
    %cst_639 = arith.constant dense<0.000000e+00> : vector<8x128xf32>
    %1286 = tpu.matmul %1280, %1102, %cst_639 {dimension_numbers = #tpu.dot_dimension_numbers<[1], [0], [0], [1], [0, 0, 1, 1], [], []>} : vector<8x32xf32>, vector<32x128xf32>, vector<8x128xf32> -> vector<8x128xf32>
    %1287 = arith.addf %1285, %1286 : vector<8x128xf32>
    %1288 = vector.extract_strided_slice %1287 {offsets = [0, 0], sizes = [8, 32], strides = [1, 1]} : vector<8x128xf32> to vector<8x32xf32>
    %1289 = arith.negf %1288 : vector<8x32xf32>
    %1290 = math.exp %1289 : vector<8x32xf32>
    %cst_640 = arith.constant 1.000000e+00 : f32
    %1291 = vector.broadcast %cst_640 : f32 to vector<8x32xf32>
    %1292 = arith.addf %1291, %1290 : vector<8x32xf32>
    %1293 = arith.divf %1291, %1292 : vector<8x32xf32>
    %1294 = vector.extract_strided_slice %1287 {offsets = [0, 32], sizes = [8, 32], strides = [1, 1]} : vector<8x128xf32> to vector<8x32xf32>
    %1295 = arith.negf %1294 : vector<8x32xf32>
    %1296 = math.exp %1295 : vector<8x32xf32>
    %cst_641 = arith.constant 1.000000e+00 : f32
    %1297 = vector.broadcast %cst_641 : f32 to vector<8x32xf32>
    %1298 = arith.addf %1297, %1296 : vector<8x32xf32>
    %1299 = arith.divf %1297, %1298 : vector<8x32xf32>
    %1300 = vector.extract_strided_slice %1287 {offsets = [0, 64], sizes = [8, 32], strides = [1, 1]} : vector<8x128xf32> to vector<8x32xf32>
    %1301 = math.tanh %1300 : vector<8x32xf32>
    %1302 = vector.extract_strided_slice %1287 {offsets = [0, 96], sizes = [8, 32], strides = [1, 1]} : vector<8x128xf32> to vector<8x32xf32>
    %1303 = arith.negf %1302 : vector<8x32xf32>
    %1304 = math.exp %1303 : vector<8x32xf32>
    %cst_642 = arith.constant 1.000000e+00 : f32
    %1305 = vector.broadcast %cst_642 : f32 to vector<8x32xf32>
    %1306 = arith.addf %1305, %1304 : vector<8x32xf32>
    %1307 = arith.divf %1305, %1306 : vector<8x32xf32>
    %1308 = arith.mulf %1299, %1282 : vector<8x32xf32>
    %1309 = arith.mulf %1293, %1301 : vector<8x32xf32>
    %1310 = arith.addf %1308, %1309 : vector<8x32xf32>
    %1311 = math.tanh %1310 : vector<8x32xf32>
    %1312 = arith.mulf %1307, %1311 : vector<8x32xf32>
    %c3_643 = arith.constant 3 : index
    %c0_644 = arith.constant 0 : index
    %c0_645 = arith.constant 0 : index
    %1313 = vector.load %arg7[%c3_643, %c0_644, %c0_645] : memref<4x8x32xf32, #tpu.memory_space<vmem>>, vector<1x8x32xf32>
    %1314 = vector.shape_cast %1313 : vector<1x8x32xf32> to vector<8x32xf32>
    %1315 = vector.shape_cast %1310 : vector<8x32xf32> to vector<1x8x32xf32>
    tpu.vector_store %arg7[%c3_643, %c0_644, %c0_645], %1315 {strides = array<i32>} : memref<4x8x32xf32, #tpu.memory_space<vmem>>, vector<1x8x32xf32>,
    %c3_646 = arith.constant 3 : index
    %c0_647 = arith.constant 0 : index
    %c0_648 = arith.constant 0 : index
    %1316 = vector.load %arg6[%c3_646, %c0_647, %c0_648] : memref<4x8x32xf32, #tpu.memory_space<vmem>>, vector<1x8x32xf32>
    %1317 = vector.shape_cast %1316 : vector<1x8x32xf32> to vector<8x32xf32>
    %1318 = vector.shape_cast %1312 : vector<8x32xf32> to vector<1x8x32xf32>
    tpu.vector_store %arg6[%c3_646, %c0_647, %c0_648], %1318 {strides = array<i32>} : memref<4x8x32xf32, #tpu.memory_space<vmem>>, vector<1x8x32xf32>,
    %1319 = arith.index_cast %c4_i32_630 : i32 to index
    %c0_649 = arith.constant 0 : index
    %c0_650 = arith.constant 0 : index
    %1320 = vector.load %arg8[%1319, %c0_649, %c0_650] : memref<8x8x32xf32, #tpu.memory_space<vmem>>, vector<1x8x32xf32>
    %1321 = vector.shape_cast %1320 : vector<1x8x32xf32> to vector<8x32xf32>
    %1322 = vector.shape_cast %1312 : vector<8x32xf32> to vector<1x8x32xf32>
    tpu.vector_store %arg8[%1319, %c0_649, %c0_650], %1322 {strides = array<i32>} : memref<8x8x32xf32, #tpu.memory_space<vmem>>, vector<1x8x32xf32>,
    %c5_i32_651 = arith.constant 5 : i32
    %c3_652 = arith.constant 3 : index
    %c0_653 = arith.constant 0 : index
    %c0_654 = arith.constant 0 : index
    %1323 = vector.load %arg6[%c3_652, %c0_653, %c0_654] : memref<4x8x32xf32, #tpu.memory_space<vmem>>, vector<1x8x32xf32>
    %1324 = vector.shape_cast %1323 : vector<1x8x32xf32> to vector<8x32xf32>
    %c3_655 = arith.constant 3 : index
    %c0_656 = arith.constant 0 : index
    %c0_657 = arith.constant 0 : index
    %1325 = vector.load %arg7[%c3_655, %c0_656, %c0_657] : memref<4x8x32xf32, #tpu.memory_space<vmem>>, vector<1x8x32xf32>
    %1326 = vector.shape_cast %1325 : vector<1x8x32xf32> to vector<8x32xf32>
    %1327 = arith.index_cast %c5_i32_651 : i32 to index
    %c0_658 = arith.constant 0 : index
    %c0_659 = arith.constant 0 : index
    %1328 = vector.load %arg9[%1327, %c0_658, %c0_659] : memref<8x8x128xf32, #tpu.memory_space<vmem>>, vector<1x8x128xf32>
    %1329 = vector.shape_cast %1328 : vector<1x8x128xf32> to vector<8x128xf32>
    %cst_660 = arith.constant dense<0.000000e+00> : vector<8x128xf32>
    %1330 = tpu.matmul %1324, %1102, %cst_660 {dimension_numbers = #tpu.dot_dimension_numbers<[1], [0], [0], [1], [0, 0, 1, 1], [], []>} : vector<8x32xf32>, vector<32x128xf32>, vector<8x128xf32> -> vector<8x128xf32>
    %1331 = arith.addf %1329, %1330 : vector<8x128xf32>
    %1332 = vector.extract_strided_slice %1331 {offsets = [0, 0], sizes = [8, 32], strides = [1, 1]} : vector<8x128xf32> to vector<8x32xf32>
    %1333 = arith.negf %1332 : vector<8x32xf32>
    %1334 = math.exp %1333 : vector<8x32xf32>
    %cst_661 = arith.constant 1.000000e+00 : f32
    %1335 = vector.broadcast %cst_661 : f32 to vector<8x32xf32>
    %1336 = arith.addf %1335, %1334 : vector<8x32xf32>
    %1337 = arith.divf %1335, %1336 : vector<8x32xf32>
    %1338 = vector.extract_strided_slice %1331 {offsets = [0, 32], sizes = [8, 32], strides = [1, 1]} : vector<8x128xf32> to vector<8x32xf32>
    %1339 = arith.negf %1338 : vector<8x32xf32>
    %1340 = math.exp %1339 : vector<8x32xf32>
    %cst_662 = arith.constant 1.000000e+00 : f32
    %1341 = vector.broadcast %cst_662 : f32 to vector<8x32xf32>
    %1342 = arith.addf %1341, %1340 : vector<8x32xf32>
    %1343 = arith.divf %1341, %1342 : vector<8x32xf32>
    %1344 = vector.extract_strided_slice %1331 {offsets = [0, 64], sizes = [8, 32], strides = [1, 1]} : vector<8x128xf32> to vector<8x32xf32>
    %1345 = math.tanh %1344 : vector<8x32xf32>
    %1346 = vector.extract_strided_slice %1331 {offsets = [0, 96], sizes = [8, 32], strides = [1, 1]} : vector<8x128xf32> to vector<8x32xf32>
    %1347 = arith.negf %1346 : vector<8x32xf32>
    %1348 = math.exp %1347 : vector<8x32xf32>
    %cst_663 = arith.constant 1.000000e+00 : f32
    %1349 = vector.broadcast %cst_663 : f32 to vector<8x32xf32>
    %1350 = arith.addf %1349, %1348 : vector<8x32xf32>
    %1351 = arith.divf %1349, %1350 : vector<8x32xf32>
    %1352 = arith.mulf %1343, %1326 : vector<8x32xf32>
    %1353 = arith.mulf %1337, %1345 : vector<8x32xf32>
    %1354 = arith.addf %1352, %1353 : vector<8x32xf32>
    %1355 = math.tanh %1354 : vector<8x32xf32>
    %1356 = arith.mulf %1351, %1355 : vector<8x32xf32>
    %c3_664 = arith.constant 3 : index
    %c0_665 = arith.constant 0 : index
    %c0_666 = arith.constant 0 : index
    %1357 = vector.load %arg7[%c3_664, %c0_665, %c0_666] : memref<4x8x32xf32, #tpu.memory_space<vmem>>, vector<1x8x32xf32>
    %1358 = vector.shape_cast %1357 : vector<1x8x32xf32> to vector<8x32xf32>
    %1359 = vector.shape_cast %1354 : vector<8x32xf32> to vector<1x8x32xf32>
    tpu.vector_store %arg7[%c3_664, %c0_665, %c0_666], %1359 {strides = array<i32>} : memref<4x8x32xf32, #tpu.memory_space<vmem>>, vector<1x8x32xf32>,
    %c3_667 = arith.constant 3 : index
    %c0_668 = arith.constant 0 : index
    %c0_669 = arith.constant 0 : index
    %1360 = vector.load %arg6[%c3_667, %c0_668, %c0_669] : memref<4x8x32xf32, #tpu.memory_space<vmem>>, vector<1x8x32xf32>
    %1361 = vector.shape_cast %1360 : vector<1x8x32xf32> to vector<8x32xf32>
    %1362 = vector.shape_cast %1356 : vector<8x32xf32> to vector<1x8x32xf32>
    tpu.vector_store %arg6[%c3_667, %c0_668, %c0_669], %1362 {strides = array<i32>} : memref<4x8x32xf32, #tpu.memory_space<vmem>>, vector<1x8x32xf32>,
    %1363 = arith.index_cast %c5_i32_651 : i32 to index
    %c0_670 = arith.constant 0 : index
    %c0_671 = arith.constant 0 : index
    %1364 = vector.load %arg8[%1363, %c0_670, %c0_671] : memref<8x8x32xf32, #tpu.memory_space<vmem>>, vector<1x8x32xf32>
    %1365 = vector.shape_cast %1364 : vector<1x8x32xf32> to vector<8x32xf32>
    %1366 = vector.shape_cast %1356 : vector<8x32xf32> to vector<1x8x32xf32>
    tpu.vector_store %arg8[%1363, %c0_670, %c0_671], %1366 {strides = array<i32>} : memref<8x8x32xf32, #tpu.memory_space<vmem>>, vector<1x8x32xf32>,
    %c6_i32_672 = arith.constant 6 : i32
    %c3_673 = arith.constant 3 : index
    %c0_674 = arith.constant 0 : index
    %c0_675 = arith.constant 0 : index
    %1367 = vector.load %arg6[%c3_673, %c0_674, %c0_675] : memref<4x8x32xf32, #tpu.memory_space<vmem>>, vector<1x8x32xf32>
    %1368 = vector.shape_cast %1367 : vector<1x8x32xf32> to vector<8x32xf32>
    %c3_676 = arith.constant 3 : index
    %c0_677 = arith.constant 0 : index
    %c0_678 = arith.constant 0 : index
    %1369 = vector.load %arg7[%c3_676, %c0_677, %c0_678] : memref<4x8x32xf32, #tpu.memory_space<vmem>>, vector<1x8x32xf32>
    %1370 = vector.shape_cast %1369 : vector<1x8x32xf32> to vector<8x32xf32>
    %1371 = arith.index_cast %c6_i32_672 : i32 to index
    %c0_679 = arith.constant 0 : index
    %c0_680 = arith.constant 0 : index
    %1372 = vector.load %arg9[%1371, %c0_679, %c0_680] : memref<8x8x128xf32, #tpu.memory_space<vmem>>, vector<1x8x128xf32>
    %1373 = vector.shape_cast %1372 : vector<1x8x128xf32> to vector<8x128xf32>
    %cst_681 = arith.constant dense<0.000000e+00> : vector<8x128xf32>
    %1374 = tpu.matmul %1368, %1102, %cst_681 {dimension_numbers = #tpu.dot_dimension_numbers<[1], [0], [0], [1], [0, 0, 1, 1], [], []>} : vector<8x32xf32>, vector<32x128xf32>, vector<8x128xf32> -> vector<8x128xf32>
    %1375 = arith.addf %1373, %1374 : vector<8x128xf32>
    %1376 = vector.extract_strided_slice %1375 {offsets = [0, 0], sizes = [8, 32], strides = [1, 1]} : vector<8x128xf32> to vector<8x32xf32>
    %1377 = arith.negf %1376 : vector<8x32xf32>
    %1378 = math.exp %1377 : vector<8x32xf32>
    %cst_682 = arith.constant 1.000000e+00 : f32
    %1379 = vector.broadcast %cst_682 : f32 to vector<8x32xf32>
    %1380 = arith.addf %1379, %1378 : vector<8x32xf32>
    %1381 = arith.divf %1379, %1380 : vector<8x32xf32>
    %1382 = vector.extract_strided_slice %1375 {offsets = [0, 32], sizes = [8, 32], strides = [1, 1]} : vector<8x128xf32> to vector<8x32xf32>
    %1383 = arith.negf %1382 : vector<8x32xf32>
    %1384 = math.exp %1383 : vector<8x32xf32>
    %cst_683 = arith.constant 1.000000e+00 : f32
    %1385 = vector.broadcast %cst_683 : f32 to vector<8x32xf32>
    %1386 = arith.addf %1385, %1384 : vector<8x32xf32>
    %1387 = arith.divf %1385, %1386 : vector<8x32xf32>
    %1388 = vector.extract_strided_slice %1375 {offsets = [0, 64], sizes = [8, 32], strides = [1, 1]} : vector<8x128xf32> to vector<8x32xf32>
    %1389 = math.tanh %1388 : vector<8x32xf32>
    %1390 = vector.extract_strided_slice %1375 {offsets = [0, 96], sizes = [8, 32], strides = [1, 1]} : vector<8x128xf32> to vector<8x32xf32>
    %1391 = arith.negf %1390 : vector<8x32xf32>
    %1392 = math.exp %1391 : vector<8x32xf32>
    %cst_684 = arith.constant 1.000000e+00 : f32
    %1393 = vector.broadcast %cst_684 : f32 to vector<8x32xf32>
    %1394 = arith.addf %1393, %1392 : vector<8x32xf32>
    %1395 = arith.divf %1393, %1394 : vector<8x32xf32>
    %1396 = arith.mulf %1387, %1370 : vector<8x32xf32>
    %1397 = arith.mulf %1381, %1389 : vector<8x32xf32>
    %1398 = arith.addf %1396, %1397 : vector<8x32xf32>
    %1399 = math.tanh %1398 : vector<8x32xf32>
    %1400 = arith.mulf %1395, %1399 : vector<8x32xf32>
    %c3_685 = arith.constant 3 : index
    %c0_686 = arith.constant 0 : index
    %c0_687 = arith.constant 0 : index
    %1401 = vector.load %arg7[%c3_685, %c0_686, %c0_687] : memref<4x8x32xf32, #tpu.memory_space<vmem>>, vector<1x8x32xf32>
    %1402 = vector.shape_cast %1401 : vector<1x8x32xf32> to vector<8x32xf32>
    %1403 = vector.shape_cast %1398 : vector<8x32xf32> to vector<1x8x32xf32>
    tpu.vector_store %arg7[%c3_685, %c0_686, %c0_687], %1403 {strides = array<i32>} : memref<4x8x32xf32, #tpu.memory_space<vmem>>, vector<1x8x32xf32>,
    %c3_688 = arith.constant 3 : index
    %c0_689 = arith.constant 0 : index
    %c0_690 = arith.constant 0 : index
    %1404 = vector.load %arg6[%c3_688, %c0_689, %c0_690] : memref<4x8x32xf32, #tpu.memory_space<vmem>>, vector<1x8x32xf32>
    %1405 = vector.shape_cast %1404 : vector<1x8x32xf32> to vector<8x32xf32>
    %1406 = vector.shape_cast %1400 : vector<8x32xf32> to vector<1x8x32xf32>
    tpu.vector_store %arg6[%c3_688, %c0_689, %c0_690], %1406 {strides = array<i32>} : memref<4x8x32xf32, #tpu.memory_space<vmem>>, vector<1x8x32xf32>,
    %1407 = arith.index_cast %c6_i32_672 : i32 to index
    %c0_691 = arith.constant 0 : index
    %c0_692 = arith.constant 0 : index
    %1408 = vector.load %arg8[%1407, %c0_691, %c0_692] : memref<8x8x32xf32, #tpu.memory_space<vmem>>, vector<1x8x32xf32>
    %1409 = vector.shape_cast %1408 : vector<1x8x32xf32> to vector<8x32xf32>
    %1410 = vector.shape_cast %1400 : vector<8x32xf32> to vector<1x8x32xf32>
    tpu.vector_store %arg8[%1407, %c0_691, %c0_692], %1410 {strides = array<i32>} : memref<8x8x32xf32, #tpu.memory_space<vmem>>, vector<1x8x32xf32>,
    %c7_i32_693 = arith.constant 7 : i32
    %c3_694 = arith.constant 3 : index
    %c0_695 = arith.constant 0 : index
    %c0_696 = arith.constant 0 : index
    %1411 = vector.load %arg6[%c3_694, %c0_695, %c0_696] : memref<4x8x32xf32, #tpu.memory_space<vmem>>, vector<1x8x32xf32>
    %1412 = vector.shape_cast %1411 : vector<1x8x32xf32> to vector<8x32xf32>
    %c3_697 = arith.constant 3 : index
    %c0_698 = arith.constant 0 : index
    %c0_699 = arith.constant 0 : index
    %1413 = vector.load %arg7[%c3_697, %c0_698, %c0_699] : memref<4x8x32xf32, #tpu.memory_space<vmem>>, vector<1x8x32xf32>
    %1414 = vector.shape_cast %1413 : vector<1x8x32xf32> to vector<8x32xf32>
    %1415 = arith.index_cast %c7_i32_693 : i32 to index
    %c0_700 = arith.constant 0 : index
    %c0_701 = arith.constant 0 : index
    %1416 = vector.load %arg9[%1415, %c0_700, %c0_701] : memref<8x8x128xf32, #tpu.memory_space<vmem>>, vector<1x8x128xf32>
    %1417 = vector.shape_cast %1416 : vector<1x8x128xf32> to vector<8x128xf32>
    %cst_702 = arith.constant dense<0.000000e+00> : vector<8x128xf32>
    %1418 = tpu.matmul %1412, %1102, %cst_702 {dimension_numbers = #tpu.dot_dimension_numbers<[1], [0], [0], [1], [0, 0, 1, 1], [], []>} : vector<8x32xf32>, vector<32x128xf32>, vector<8x128xf32> -> vector<8x128xf32>
    %1419 = arith.addf %1417, %1418 : vector<8x128xf32>
    %1420 = vector.extract_strided_slice %1419 {offsets = [0, 0], sizes = [8, 32], strides = [1, 1]} : vector<8x128xf32> to vector<8x32xf32>
    %1421 = arith.negf %1420 : vector<8x32xf32>
    %1422 = math.exp %1421 : vector<8x32xf32>
    %cst_703 = arith.constant 1.000000e+00 : f32
    %1423 = vector.broadcast %cst_703 : f32 to vector<8x32xf32>
    %1424 = arith.addf %1423, %1422 : vector<8x32xf32>
    %1425 = arith.divf %1423, %1424 : vector<8x32xf32>
    %1426 = vector.extract_strided_slice %1419 {offsets = [0, 32], sizes = [8, 32], strides = [1, 1]} : vector<8x128xf32> to vector<8x32xf32>
    %1427 = arith.negf %1426 : vector<8x32xf32>
    %1428 = math.exp %1427 : vector<8x32xf32>
    %cst_704 = arith.constant 1.000000e+00 : f32
    %1429 = vector.broadcast %cst_704 : f32 to vector<8x32xf32>
    %1430 = arith.addf %1429, %1428 : vector<8x32xf32>
    %1431 = arith.divf %1429, %1430 : vector<8x32xf32>
    %1432 = vector.extract_strided_slice %1419 {offsets = [0, 64], sizes = [8, 32], strides = [1, 1]} : vector<8x128xf32> to vector<8x32xf32>
    %1433 = math.tanh %1432 : vector<8x32xf32>
    %1434 = vector.extract_strided_slice %1419 {offsets = [0, 96], sizes = [8, 32], strides = [1, 1]} : vector<8x128xf32> to vector<8x32xf32>
    %1435 = arith.negf %1434 : vector<8x32xf32>
    %1436 = math.exp %1435 : vector<8x32xf32>
    %cst_705 = arith.constant 1.000000e+00 : f32
    %1437 = vector.broadcast %cst_705 : f32 to vector<8x32xf32>
    %1438 = arith.addf %1437, %1436 : vector<8x32xf32>
    %1439 = arith.divf %1437, %1438 : vector<8x32xf32>
    %1440 = arith.mulf %1431, %1414 : vector<8x32xf32>
    %1441 = arith.mulf %1425, %1433 : vector<8x32xf32>
    %1442 = arith.addf %1440, %1441 : vector<8x32xf32>
    %1443 = math.tanh %1442 : vector<8x32xf32>
    %1444 = arith.mulf %1439, %1443 : vector<8x32xf32>
    %c3_706 = arith.constant 3 : index
    %c0_707 = arith.constant 0 : index
    %c0_708 = arith.constant 0 : index
    %1445 = vector.load %arg7[%c3_706, %c0_707, %c0_708] : memref<4x8x32xf32, #tpu.memory_space<vmem>>, vector<1x8x32xf32>
    %1446 = vector.shape_cast %1445 : vector<1x8x32xf32> to vector<8x32xf32>
    %1447 = vector.shape_cast %1442 : vector<8x32xf32> to vector<1x8x32xf32>
    tpu.vector_store %arg7[%c3_706, %c0_707, %c0_708], %1447 {strides = array<i32>} : memref<4x8x32xf32, #tpu.memory_space<vmem>>, vector<1x8x32xf32>,
    %c3_709 = arith.constant 3 : index
    %c0_710 = arith.constant 0 : index
    %c0_711 = arith.constant 0 : index
    %1448 = vector.load %arg6[%c3_709, %c0_710, %c0_711] : memref<4x8x32xf32, #tpu.memory_space<vmem>>, vector<1x8x32xf32>
    %1449 = vector.shape_cast %1448 : vector<1x8x32xf32> to vector<8x32xf32>
    %1450 = vector.shape_cast %1444 : vector<8x32xf32> to vector<1x8x32xf32>
    tpu.vector_store %arg6[%c3_709, %c0_710, %c0_711], %1450 {strides = array<i32>} : memref<4x8x32xf32, #tpu.memory_space<vmem>>, vector<1x8x32xf32>,
    %1451 = arith.index_cast %c7_i32_693 : i32 to index
    %c0_712 = arith.constant 0 : index
    %c0_713 = arith.constant 0 : index
    %1452 = vector.load %arg8[%1451, %c0_712, %c0_713] : memref<8x8x32xf32, #tpu.memory_space<vmem>>, vector<1x8x32xf32>
    %1453 = vector.shape_cast %1452 : vector<1x8x32xf32> to vector<8x32xf32>
    %1454 = vector.shape_cast %1444 : vector<8x32xf32> to vector<1x8x32xf32>
    tpu.vector_store %arg8[%1451, %c0_712, %c0_713], %1454 {strides = array<i32>} : memref<8x8x32xf32, #tpu.memory_space<vmem>>, vector<1x8x32xf32>,
    %c8_i32_714 = arith.constant 8 : i32
    %c0_715 = arith.constant 0 : index
    %c0_716 = arith.constant 0 : index
    %c0_717 = arith.constant 0 : index
    %1455 = vector.load %arg8[%c0_715, %c0_716, %c0_717] : memref<8x8x32xf32, #tpu.memory_space<vmem>>, vector<8x8x32xf32>
    %c0_718 = arith.constant 0 : index
    %c0_719 = arith.constant 0 : index
    %c0_720 = arith.constant 0 : index
    %1456 = vector.load %arg5[%c0_718, %c0_719, %c0_720] : memref<8x8x32xf32, #tpu.memory_space<vmem>>, vector<8x8x32xf32>
    tpu.vector_store %arg5[%c0_718, %c0_719, %c0_720], %1455 {strides = array<i32>} : memref<8x8x32xf32, #tpu.memory_space<vmem>>, vector<8x8x32xf32>,
    return
  }
  func.func @transform_0(%arg0: i32) -> (i32, i32, i32) {
    %c0_i32 = arith.constant 0 : i32
    %c0_i32_0 = arith.constant 0 : i32
    %c0_i32_1 = arith.constant 0 : i32
    return %arg0, %c0_i32, %c0_i32_0 : i32, i32, i32
  }
  func.func @transform_1(%arg0: i32) -> (i32, i32, i32) {
    %c0_i32 = arith.constant 0 : i32
    %c0_i32_0 = arith.constant 0 : i32
    %c0_i32_1 = arith.constant 0 : i32
    %c0_i32_2 = arith.constant 0 : i32
    return %c0_i32, %c0_i32_0, %c0_i32_1 : i32, i32, i32
  }
  func.func @transform_2(%arg0: i32) -> (i32, i32, i32) {
    %c0_i32 = arith.constant 0 : i32
    %c0_i32_0 = arith.constant 0 : i32
    %c0_i32_1 = arith.constant 0 : i32
    %c0_i32_2 = arith.constant 0 : i32
    return %c0_i32, %c0_i32_0, %c0_i32_1 : i32, i32, i32
  }
  func.func @transform_3(%arg0: i32) -> (i32, i32, i32) {
    %c0_i32 = arith.constant 0 : i32
    %c0_i32_0 = arith.constant 0 : i32
    %c0_i32_1 = arith.constant 0 : i32
    %c0_i32_2 = arith.constant 0 : i32
    return %c0_i32, %c0_i32_0, %c0_i32_1 : i32, i32, i32
  }
  func.func @transform_4(%arg0: i32) -> (i32, i32, i32) {
    %c0_i32 = arith.constant 0 : i32
    %c0_i32_0 = arith.constant 0 : i32
    %c0_i32_1 = arith.constant 0 : i32
    return %arg0, %c0_i32, %c0_i32_0 : i32, i32, i32
  }
}

</mosaic_0001>

<llo_original>
// kernel: tpu_custom_call.1
$region0: #{tpu_custom_call.1}
  #allocation0 [shape = 'u32[]', space=smem, size = 0x4, offset = 0x4, fixed_abs, tag = 'smem constant byte address 0x4 - core index']
  #allocation1 [shape = 'u32[144,128]{1,0:T(1,128)}', space=vmem, size = 0x12000, scoped, tag = 'internal scratch']
  #allocation2 [shape = 'f32[4,8,32]{2,1,0:T(8,128)}', space=vmem, size = 0x4000, scoped, tag = 'scratch operand']
  #allocation3 [shape = 'f32[4,8,32]{2,1,0:T(8,128)}', space=vmem, size = 0x4000, scoped, tag = 'scratch operand']
  #allocation4 [shape = 'f32[8,8,32]{2,1,0:T(8,128)}', space=vmem, size = 0x8000, scoped, tag = 'scratch operand']
  #allocation5 [shape = 'f32[8,8,128]{2,1,0:T(8,128)}', space=vmem, size = 0x8000, scoped, tag = 'scratch operand']
  %s0 = inlined_call_operand.hbm [shape: f32[8,8,128], index: 0, kind: input, shape index: {}]
  %s1 = inlined_call_operand.hbm [shape: f32[3,32,128], index: 1, kind: input, shape index: {}]
  %s2 = inlined_call_operand.hbm [shape: f32[4,32,128], index: 2, kind: input, shape index: {}]
  %s3 = inlined_call_operand.vmem [shape: f32[3,1,128], index: 3, kind: input, shape index: {}]
  %s4 = inlined_call_operand.hbm [shape: f32[8,8,32], index: 4, kind: output, shape index: {}]
  %s5 = sld [smem:[#allocation0]]
  $region42: #{tpu_custom_call.1} parent=0
    _
  %s7 = ssub.s32 1, %s5
  %s8 = scalar_select 0, %s7, %s5
  $region1: #{tpu_custom_call.1} parent=0
    #allocation6 [shape = 'u8[32768]{0}', space=vmem, size = 0x8000, scoped, tag = 'input window, operand 0, single buffered']
    #allocation7 [shape = 's32[1]{0}', space=sflag, size = 0x4, scoped, tag = 'scoped memory for tpu_custom_call.1']
    #allocation8 [shape = 's32[1]{0}', space=sflag, size = 0x4, scoped, tag = 'scoped memory for tpu_custom_call.1']
    #allocation9 [shape = 'u8[49152]{0}', space=vmem, size = 0xc000, scoped, tag = 'input window, operand 1, single buffered']
    #allocation10 [shape = 's32[1]{0}', space=sflag, size = 0x4, scoped, tag = 'scoped memory for tpu_custom_call.1']
    #allocation11 [shape = 'u8[65536]{0}', space=vmem, size = 0x10000, scoped, tag = 'input window, operand 2, single buffered']
    #allocation12 [shape = 'u8[32768]{0}', space=vmem, size = 0x8000, scoped, tag = 'output window, operand 0, single buffered']
    %9 = vsyncpa [#allocation7], 0
    %10 = vsyncpa [#allocation10], 0
    %11 = vsyncpa [#allocation8], 0
    // Predicated region
    $region2: #{tpu_custom_call.1} parent=1 // pred_check
      _
    $region3: #{tpu_custom_call.1} parent=1 // pred_check_branch
      %13 = sbr.rel (0) target = $region5
    $region4: #{tpu_custom_call.1} parent=1 // pred_region
      %s15 = ssub.s32 1024, 1024
      %16 = vsyncadd [#allocation7], %s15
      %s17 = sshll.u32 [#allocation6], 4
      %s18 = int_to_ptr.vmem [resolvable:$true] %s17
      %23 = dma.hbm_to_vmem [thread:$0]  %s0, 1024, %s18, [#allocation7], 128, 128, 8
    $region5: #{tpu_custom_call.1} parent=1 // pred_fallthru
      _
    // Predicated region
    $region6: #{tpu_custom_call.1} parent=1 // pred_check
      _
    $region7: #{tpu_custom_call.1} parent=1 // pred_check_branch
      %25 = sbr.rel (0) target = $region9
    $region8: #{tpu_custom_call.1} parent=1 // pred_region
      %s27 = ssub.s32 1536, 1536
      %28 = vsyncadd [#allocation10], %s27
      %s29 = sshll.u32 [#allocation9], 4
      %s30 = int_to_ptr.vmem [resolvable:$true] %s29
      %35 = dma.hbm_to_vmem [thread:$0]  %s1, 1536, %s30, [#allocation10], 128, 128, 8
    $region9: #{tpu_custom_call.1} parent=1 // pred_fallthru
      _
    // Predicated region
    $region10: #{tpu_custom_call.1} parent=1 // pred_check
      _
    $region11: #{tpu_custom_call.1} parent=1 // pred_check_branch
      %37 = sbr.rel (0) target = $region13
    $region12: #{tpu_custom_call.1} parent=1 // pred_region
      %s39 = ssub.s32 2048, 2048
      %40 = vsyncadd [#allocation10], %s39
      %s41 = sshll.u32 [#allocation11], 4
      %s42 = int_to_ptr.vmem [resolvable:$true] %s41
      %47 = dma.hbm_to_vmem [thread:$0]  %s2, 2048, %s42, [#allocation10], 128, 128, 8
    $region13: #{tpu_custom_call.1} parent=1 // pred_fallthru
      _
    // Predicated region
    $region14: #{tpu_custom_call.1} parent=1 // pred_check
      _
    $region15: #{tpu_custom_call.1} parent=1 // pred_check_branch
      %49 = sbr.rel (0) target = $region17
    $region16: #{tpu_custom_call.1} parent=1 // pred_region
      _
    $region17: #{tpu_custom_call.1} parent=1 // pred_fallthru
      _
    // Predicated region
    $region18: #{tpu_custom_call.1} parent=1 // pred_check
      _
    $region19: #{tpu_custom_call.1} parent=1 // pred_check_branch
      %51 = sbr.rel (0) target = $region21
    $region20: #{tpu_custom_call.1} parent=1 // pred_region
      %52 = dma.done [#allocation7], 1024
    $region21: #{tpu_custom_call.1} parent=1 // pred_fallthru
      _
    // Predicated region
    $region22: #{tpu_custom_call.1} parent=1 // pred_check
      _
    $region23: #{tpu_custom_call.1} parent=1 // pred_check_branch
      %54 = sbr.rel (0) target = $region25
    $region24: #{tpu_custom_call.1} parent=1 // pred_region
      %55 = dma.done [#allocation10], 1536
    $region25: #{tpu_custom_call.1} parent=1 // pred_fallthru
      _
    // Predicated region
    $region26: #{tpu_custom_call.1} parent=1 // pred_check
      _
    $region27: #{tpu_custom_call.1} parent=1 // pred_check_branch
      %57 = sbr.rel (0) target = $region29
    $region28: #{tpu_custom_call.1} parent=1 // pred_region
      %58 = dma.done [#allocation10], 2048
    $region29: #{tpu_custom_call.1} parent=1 // pred_fallthru
      _
    %p59 = scmp.eq.s32.totalorder 0, 0
    // Predicated region
    $region30: #{tpu_custom_call.1} parent=1 // pred_check
      %p60 = pneg %p59
    $region31: #{tpu_custom_call.1} parent=1 // pred_check_branch
      %62 = sbr.rel (%p60) target = $region33
    $region32: #{tpu_custom_call.1} parent=1 // pred_region
      %vm63 = vcmask 261120
      %64 = vst.msk [vmem:[#allocation2] sm:$0xff] %vm63, 0.0
      %65 = vst.msk [vmem:[#allocation2 + $0x8] sm:$0xff] %vm63, 0.0
      %66 = vst.msk [vmem:[#allocation2 + $0x10] sm:$0xff] %vm63, 0.0
      %67 = vst.msk [vmem:[#allocation2 + $0x18] sm:$0xff] %vm63, 0.0
      %68 = vst.msk [vmem:[#allocation3] sm:$0xff] %vm63, 0.0
      %69 = vst.msk [vmem:[#allocation3 + $0x8] sm:$0xff] %vm63, 0.0
      %70 = vst.msk [vmem:[#allocation3 + $0x10] sm:$0xff] %vm63, 0.0
      %71 = vst.msk [vmem:[#allocation3 + $0x18] sm:$0xff] %vm63, 0.0
    $region33: #{tpu_custom_call.1} parent=1 // pred_fallthru
      _
    %v72 = vld [vmem:[#allocation11] sm:$0xff]
    %v73 = vld [vmem:[#allocation11 + $0x8] sm:$0xff]
    %v74 = vld [vmem:[#allocation11 + $0x10] sm:$0xff]
    %v75 = vld [vmem:[#allocation11 + $0x18] sm:$0xff]
    %v76 = vld [vmem:[#allocation2] sm:$0xff]
    %v77 = vld [vmem:[#allocation3] sm:$0xff]
    %v78 = vld [vmem:[#allocation6] sm:$0xff]
    %vm79 = vcmask 261120
    %v81 = vsel %vm79, %v76, 0
    %83 = vmatprep.subr.mxu0 0.0
    %84 = vmatpush1.msra.mxu0 %v72
    %85 = vmatprep.subr.mxu0 0.0
    %86 = vmatpush1.msra.mxu0 %v73
    %87 = vmatprep.subr.mxu0 0.0
    %88 = vmatpush1.msra.mxu0 %v74
    %89 = vmatprep.subr.mxu0 0.0
    %90 = vmatpush1.msra.mxu0 %v75
    %91 = vmatprep.subr.mxu0 0.0
    %92 = vmatpush1.msra.mxu0 0.0
    %93 = vmatprep.subr.mxu0 0.0
    %94 = vmatpush1.msra.mxu0 0.0
    %95 = vmatprep.subr.mxu0 0.0
    %96 = vmatpush1.msra.mxu0 0.0
    %97 = vmatprep.subr.mxu0 0.0
    %98 = vmatpush1.msra.mxu0 0.0
    %99 = vmatprep.subr.mxu0 0.0
    %100 = vmatpush1.msra.mxu0 0.0
    %101 = vmatprep.subr.mxu0 0.0
    %102 = vmatpush1.msra.mxu0 0.0
    %103 = vmatprep.subr.mxu0 0.0
    %104 = vmatpush1.msra.mxu0 0.0
    %105 = vmatprep.subr.mxu0 0.0
    %106 = vmatpush1.msra.mxu0 0.0
    %107 = vmatprep.subr.mxu0 0.0
    %108 = vmatpush1.msra.mxu0 0.0
    %109 = vmatprep.subr.mxu0 0.0
    %110 = vmatpush1.msra.mxu0 0.0
    %111 = vmatprep.subr.mxu0 0.0
    %112 = vmatpush1.msra.mxu0 0.0
    %113 = vmatprep.subr.mxu0 0.0
    %114 = vmatpush1.msra.mxu0 0.0
    %115 = vmatprep.subr.mxu0 0.0
    %116 = vmatpush1.msra.mxu0 0.0
    %117 = vmatprep.subr.mxu0 0.0
    %118 = vmatpush1.msra.mxu0 0.0
    %119 = vmatprep.subr.mxu0 0.0
    %120 = vmatpush1.msra.mxu0 0.0
    %121 = vmatprep.subr.mxu0 0.0
    %122 = vmatpush1.msra.mxu0 0.0
    %123 = vmatprep.subr.mxu0 0.0
    %124 = vmatpush1.msra.mxu0 0.0
    %125 = vmatprep.subr.mxu0 0.0
    %126 = vmatpush1.msra.mxu0 0.0
    %127 = vmatprep.subr.mxu0 0.0
    %128 = vmatpush1.msra.mxu0 0.0
    %129 = vmatprep.subr.mxu0 0.0
    %130 = vmatpush1.msra.mxu0 0.0
    %131 = vmatprep.subr.mxu0 0.0
    %132 = vmatpush1.msra.mxu0 0.0
    %133 = vmatprep.subr.mxu0 0.0
    %134 = vmatpush1.msra.mxu0 0.0
    %135 = vmatprep.subr.mxu0 0.0
    %136 = vmatpush1.msra.mxu0 0.0
    %137 = vmatprep.subr.mxu0 0.0
    %138 = vmatpush1.msra.mxu0 0.0
    %139 = vmatprep.subr.mxu0 0.0
    %140 = vmatpush1.msra.mxu0 0.0
    %141 = vmatprep.subr.mxu0 0.0
    %142 = vmatpush1.msra.mxu0 0.0
    %143 = vmatprep.subr.mxu0 0.0
    %144 = vmatpush1.msra.mxu0 0.0
    %145 = vmatprep.subr.mxu0 0.0
    %146 = vmatpush1.msra.mxu0 0.0
    %147 = vmatprep.mubr.f32.mxu0 0.0
    %148 = vmatmul.mubr.f32.gmra.mrb[0].mxu0 %v81
    %v149 = vpop.f32.mrb[0].mxu0
    %v150 = vadd.f32 0.0, %v149
    %v151 = vpop.f32.mrb[0].mxu0
    %152 = vdwg.mxu0
    %v153 = vadd.f32 %v78, %v150
    %v154 = vxor.u32 %v153, 2147483648
    %v155 = vmul.f32 %v154, 1.442695
    %v156 = vpow.pop %v155
    %v157 = vadd.f32 %v156, 1.0
    %v158 = vrcp.pop %v157
    %v159 = vmul.f32 1.0, %v158
    %v160 = vtanh.pop %v153
    %162 = vrot.lane.b32.xlu0 %v77, 32
    %v163 = vpop.permute.xlu0 %162
    %v165 = vmul.f32 %v159, %v163
    %167 = vrot.lane.b32.xlu0 %v160, 64
    %v168 = vpop.permute.xlu0 %167
    %v170 = vmul.f32 %v159, %v168
    %172 = vrot.lane.b32.xlu0 %v170, 32
    %v173 = vpop.permute.xlu0 %172
    %v175 = vadd.f32 %v165, %v173
    %v176 = vtanh.pop %v175
    %178 = vrot.lane.b32.xlu0 %v176, 64
    %v179 = vpop.permute.xlu0 %178
    %v181 = vmul.f32 %v159, %v179
    %183 = vrot.lane.b32.xlu0 %v175, 96
    %v184 = vpop.permute.xlu0 %183
    %186 = vst.msk [vmem:[#allocation3] sm:$0xff] %vm79, %v184
    %188 = vrot.lane.b32.xlu0 %v181, 32
    %v189 = vpop.permute.xlu0 %188
    %191 = vst.msk [vmem:[#allocation2] sm:$0xff] %vm79, %v189
    %192 = vst.msk [vmem:[#allocation4] sm:$0xff] %vm79, %v189
    %v193 = vld [vmem:[#allocation2] sm:$0xff]
    %v194 = vld [vmem:[#allocation3] sm:$0xff]
    %s195 = scalar_lea.vmem [#allocation6], 8
    %v196 = vld [vmem:[%s195] sm:$0xff]
    %v198 = vsel %vm79, %v193, 0
    %200 = vmatprep.subr.mxu0 0.0
    %201 = vmatpush1.msra.mxu0 %v72
    %202 = vmatprep.subr.mxu0 0.0
    %203 = vmatpush1.msra.mxu0 %v73
    %204 = vmatprep.subr.mxu0 0.0
    %205 = vmatpush1.msra.mxu0 %v74
    %206 = vmatprep.subr.mxu0 0.0
    %207 = vmatpush1.msra.mxu0 %v75
    %208 = vmatprep.subr.mxu0 0.0
    %209 = vmatpush1.msra.mxu0 0.0
    %210 = vmatprep.subr.mxu0 0.0
    %211 = vmatpush1.msra.mxu0 0.0
    %212 = vmatprep.subr.mxu0 0.0
    %213 = vmatpush1.msra.mxu0 0.0
    %214 = vmatprep.subr.mxu0 0.0
    %215 = vmatpush1.msra.mxu0 0.0
    %216 = vmatprep.subr.mxu0 0.0
    %217 = vmatpush1.msra.mxu0 0.0
    %218 = vmatprep.subr.mxu0 0.0
    %219 = vmatpush1.msra.mxu0 0.0
    %220 = vmatprep.subr.mxu0 0.0
    %221 = vmatpush1.msra.mxu0 0.0
    %222 = vmatprep.subr.mxu0 0.0
    %223 = vmatpush1.msra.mxu0 0.0
    %224 = vmatprep.subr.mxu0 0.0
    %225 = vmatpush1.msra.mxu0 0.0
    %226 = vmatprep.subr.mxu0 0.0
    %227 = vmatpush1.msra.mxu0 0.0
    %228 = vmatprep.subr.mxu0 0.0
    %229 = vmatpush1.msra.mxu0 0.0
    %230 = vmatprep.subr.mxu0 0.0
    %231 = vmatpush1.msra.mxu0 0.0
    %232 = vmatprep.subr.mxu0 0.0
    %233 = vmatpush1.msra.mxu0 0.0
    %234 = vmatprep.subr.mxu0 0.0
    %235 = vmatpush1.msra.mxu0 0.0
    %236 = vmatprep.subr.mxu0 0.0
    %237 = vmatpush1.msra.mxu0 0.0
    %238 = vmatprep.subr.mxu0 0.0
    %239 = vmatpush1.msra.mxu0 0.0
    %240 = vmatprep.subr.mxu0 0.0
    %241 = vmatpush1.msra.mxu0 0.0
    %242 = vmatprep.subr.mxu0 0.0
    %243 = vmatpush1.msra.mxu0 0.0
    %244 = vmatprep.subr.mxu0 0.0
    %245 = vmatpush1.msra.mxu0 0.0
    %246 = vmatprep.subr.mxu0 0.0
    %247 = vmatpush1.msra.mxu0 0.0
    %248 = vmatprep.subr.mxu0 0.0
    %249 = vmatpush1.msra.mxu0 0.0
    %250 = vmatprep.subr.mxu0 0.0
    %251 = vmatpush1.msra.mxu0 0.0
    %252 = vmatprep.subr.mxu0 0.0
    %253 = vmatpush1.msra.mxu0 0.0
    %254 = vmatprep.subr.mxu0 0.0
    %255 = vmatpush1.msra.mxu0 0.0
    %256 = vmatprep.subr.mxu0 0.0
    %257 = vmatpush1.msra.mxu0 0.0
    %258 = vmatprep.subr.mxu0 0.0
    %259 = vmatpush1.msra.mxu0 0.0
    %260 = vmatprep.subr.mxu0 0.0
    %261 = vmatpush1.msra.mxu0 0.0
    %262 = vmatprep.subr.mxu0 0.0
    %263 = vmatpush1.msra.mxu0 0.0
    %264 = vmatprep.mubr.f32.mxu0 0.0
    %265 = vmatmul.mubr.f32.gmra.mrb[0].mxu0 %v198
    %v266 = vpop.f32.mrb[0].mxu0
    %v267 = vadd.f32 0.0, %v266
    %v268 = vpop.f32.mrb[0].mxu0
    %269 = vdwg.mxu0
    %v270 = vadd.f32 %v196, %v267
    %v271 = vxor.u32 %v270, 2147483648
    %v272 = vmul.f32 %v271, 1.442695
    %v273 = vpow.pop %v272
    %v274 = vadd.f32 %v273, 1.0
    %v275 = vrcp.pop %v274
    %v276 = vmul.f32 1.0, %v275
    %v277 = vtanh.pop %v270
    %279 = vrot.lane.b32.xlu0 %v194, 32
    %v280 = vpop.permute.xlu0 %279
    %v282 = vmul.f32 %v276, %v280
    %284 = vrot.lane.b32.xlu0 %v277, 64
    %v285 = vpop.permute.xlu0 %284
    %v287 = vmul.f32 %v276, %v285
    %289 = vrot.lane.b32.xlu0 %v287, 32
    %v290 = vpop.permute.xlu0 %289
    %v292 = vadd.f32 %v282, %v290
    %v293 = vtanh.pop %v292
    %295 = vrot.lane.b32.xlu0 %v293, 64
    %v296 = vpop.permute.xlu0 %295
    %v298 = vmul.f32 %v276, %v296
    %300 = vrot.lane.b32.xlu0 %v292, 96
    %v301 = vpop.permute.xlu0 %300
    %303 = vst.msk [vmem:[#allocation3] sm:$0xff] %vm79, %v301
    %305 = vrot.lane.b32.xlu0 %v298, 32
    %v306 = vpop.permute.xlu0 %305
    %308 = vst.msk [vmem:[#allocation2] sm:$0xff] %vm79, %v306
    %s309 = scalar_lea.vmem [#allocation4], 8
    %310 = vst.msk [vmem:[%s309] sm:$0xff] %vm79, %v306
    %v311 = vld [vmem:[#allocation2] sm:$0xff]
    %v312 = vld [vmem:[#allocation3] sm:$0xff]
    %s313 = scalar_lea.vmem [#allocation6], 16
    %v314 = vld [vmem:[%s313] sm:$0xff]
    %v316 = vsel %vm79, %v311, 0
    %318 = vmatprep.subr.mxu0 0.0
    %319 = vmatpush1.msra.mxu0 %v72
    %320 = vmatprep.subr.mxu0 0.0
    %321 = vmatpush1.msra.mxu0 %v73
    %322 = vmatprep.subr.mxu0 0.0
    %323 = vmatpush1.msra.mxu0 %v74
    %324 = vmatprep.subr.mxu0 0.0
    %325 = vmatpush1.msra.mxu0 %v75
    %326 = vmatprep.subr.mxu0 0.0
    %327 = vmatpush1.msra.mxu0 0.0
    %328 = vmatprep.subr.mxu0 0.0
    %329 = vmatpush1.msra.mxu0 0.0
    %330 = vmatprep.subr.mxu0 0.0
    %331 = vmatpush1.msra.mxu0 0.0
    %332 = vmatprep.subr.mxu0 0.0
    %333 = vmatpush1.msra.mxu0 0.0
    %334 = vmatprep.subr.mxu0 0.0
    %335 = vmatpush1.msra.mxu0 0.0
    %336 = vmatprep.subr.mxu0 0.0
    %337 = vmatpush1.msra.mxu0 0.0
    %338 = vmatprep.subr.mxu0 0.0
    %339 = vmatpush1.msra.mxu0 0.0
    %340 = vmatprep.subr.mxu0 0.0
    %341 = vmatpush1.msra.mxu0 0.0
    %342 = vmatprep.subr.mxu0 0.0
    %343 = vmatpush1.msra.mxu0 0.0
    %344 = vmatprep.subr.mxu0 0.0
    %345 = vmatpush1.msra.mxu0 0.0
    %346 = vmatprep.subr.mxu0 0.0
    %347 = vmatpush1.msra.mxu0 0.0
    %348 = vmatprep.subr.mxu0 0.0
    %349 = vmatpush1.msra.mxu0 0.0
    %350 = vmatprep.subr.mxu0 0.0
    %351 = vmatpush1.msra.mxu0 0.0
    %352 = vmatprep.subr.mxu0 0.0
    %353 = vmatpush1.msra.mxu0 0.0
    %354 = vmatprep.subr.mxu0 0.0
    %355 = vmatpush1.msra.mxu0 0.0
    %356 = vmatprep.subr.mxu0 0.0
    %357 = vmatpush1.msra.mxu0 0.0
    %358 = vmatprep.subr.mxu0 0.0
    %359 = vmatpush1.msra.mxu0 0.0
    %360 = vmatprep.subr.mxu0 0.0
    %361 = vmatpush1.msra.mxu0 0.0
    %362 = vmatprep.subr.mxu0 0.0
    %363 = vmatpush1.msra.mxu0 0.0
    %364 = vmatprep.subr.mxu0 0.0
    %365 = vmatpush1.msra.mxu0 0.0
    %366 = vmatprep.subr.mxu0 0.0
    %367 = vmatpush1.msra.mxu0 0.0
    %368 = vmatprep.subr.mxu0 0.0
    %369 = vmatpush1.msra.mxu0 0.0
    %370 = vmatprep.subr.mxu0 0.0
    %371 = vmatpush1.msra.mxu0 0.0
    %372 = vmatprep.subr.mxu0 0.0
    %373 = vmatpush1.msra.mxu0 0.0
    %374 = vmatprep.subr.mxu0 0.0
    %375 = vmatpush1.msra.mxu0 0.0
    %376 = vmatprep.subr.mxu0 0.0
    %377 = vmatpush1.msra.mxu0 0.0
    %378 = vmatprep.subr.mxu0 0.0
    %379 = vmatpush1.msra.mxu0 0.0
    %380 = vmatprep.subr.mxu0 0.0
    %381 = vmatpush1.msra.mxu0 0.0
    %382 = vmatprep.mubr.f32.mxu0 0.0
    %383 = vmatmul.mubr.f32.gmra.mrb[0].mxu0 %v316
    %v384 = vpop.f32.mrb[0].mxu0
    %v385 = vadd.f32 0.0, %v384
    %v386 = vpop.f32.mrb[0].mxu0
    %387 = vdwg.mxu0
    %v388 = vadd.f32 %v314, %v385
    %v389 = vxor.u32 %v388, 2147483648
    %v390 = vmul.f32 %v389, 1.442695
    %v391 = vpow.pop %v390
    %v392 = vadd.f32 %v391, 1.0
    %v393 = vrcp.pop %v392
    %v394 = vmul.f32 1.0, %v393
    %v395 = vtanh.pop %v388
    %397 = vrot.lane.b32.xlu0 %v312, 32
    %v398 = vpop.permute.xlu0 %397
    %v400 = vmul.f32 %v394, %v398
    %402 = vrot.lane.b32.xlu0 %v395, 64
    %v403 = vpop.permute.xlu0 %402
    %v405 = vmul.f32 %v394, %v403
    %407 = vrot.lane.b32.xlu0 %v405, 32
    %v408 = vpop.permute.xlu0 %407
    %v410 = vadd.f32 %v400, %v408
    %v411 = vtanh.pop %v410
    %413 = vrot.lane.b32.xlu0 %v411, 64
    %v414 = vpop.permute.xlu0 %413
    %v416 = vmul.f32 %v394, %v414
    %418 = vrot.lane.b32.xlu0 %v410, 96
    %v419 = vpop.permute.xlu0 %418
    %421 = vst.msk [vmem:[#allocation3] sm:$0xff] %vm79, %v419
    %423 = vrot.lane.b32.xlu0 %v416, 32
    %v424 = vpop.permute.xlu0 %423
    %426 = vst.msk [vmem:[#allocation2] sm:$0xff] %vm79, %v424
    %s427 = scalar_lea.vmem [#allocation4], 16
    %428 = vst.msk [vmem:[%s427] sm:$0xff] %vm79, %v424
    %v429 = vld [vmem:[#allocation2] sm:$0xff]
    %v430 = vld [vmem:[#allocation3] sm:$0xff]
    %s431 = scalar_lea.vmem [#allocation6], 24
    %v432 = vld [vmem:[%s431] sm:$0xff]
    %v434 = vsel %vm79, %v429, 0
    %436 = vmatprep.subr.mxu0 0.0
    %437 = vmatpush1.msra.mxu0 %v72
    %438 = vmatprep.subr.mxu0 0.0
    %439 = vmatpush1.msra.mxu0 %v73
    %440 = vmatprep.subr.mxu0 0.0
    %441 = vmatpush1.msra.mxu0 %v74
    %442 = vmatprep.subr.mxu0 0.0
    %443 = vmatpush1.msra.mxu0 %v75
    %444 = vmatprep.subr.mxu0 0.0
    %445 = vmatpush1.msra.mxu0 0.0
    %446 = vmatprep.subr.mxu0 0.0
    %447 = vmatpush1.msra.mxu0 0.0
    %448 = vmatprep.subr.mxu0 0.0
    %449 = vmatpush1.msra.mxu0 0.0
    %450 = vmatprep.subr.mxu0 0.0
    %451 = vmatpush1.msra.mxu0 0.0
    %452 = vmatprep.subr.mxu0 0.0
    %453 = vmatpush1.msra.mxu0 0.0
    %454 = vmatprep.subr.mxu0 0.0
    %455 = vmatpush1.msra.mxu0 0.0
    %456 = vmatprep.subr.mxu0 0.0
    %457 = vmatpush1.msra.mxu0 0.0
    %458 = vmatprep.subr.mxu0 0.0
    %459 = vmatpush1.msra.mxu0 0.0
    %460 = vmatprep.subr.mxu0 0.0
    %461 = vmatpush1.msra.mxu0 0.0
    %462 = vmatprep.subr.mxu0 0.0
    %463 = vmatpush1.msra.mxu0 0.0
    %464 = vmatprep.subr.mxu0 0.0
    %465 = vmatpush1.msra.mxu0 0.0
    %466 = vmatprep.subr.mxu0 0.0
    %467 = vmatpush1.msra.mxu0 0.0
    %468 = vmatprep.subr.mxu0 0.0
    %469 = vmatpush1.msra.mxu0 0.0
    %470 = vmatprep.subr.mxu0 0.0
    %471 = vmatpush1.msra.mxu0 0.0
    %472 = vmatprep.subr.mxu0 0.0
    %473 = vmatpush1.msra.mxu0 0.0
    %474 = vmatprep.subr.mxu0 0.0
    %475 = vmatpush1.msra.mxu0 0.0
    %476 = vmatprep.subr.mxu0 0.0
    %477 = vmatpush1.msra.mxu0 0.0
    %478 = vmatprep.subr.mxu0 0.0
    %479 = vmatpush1.msra.mxu0 0.0
    %480 = vmatprep.subr.mxu0 0.0
    %481 = vmatpush1.msra.mxu0 0.0
    %482 = vmatprep.subr.mxu0 0.0
    %483 = vmatpush1.msra.mxu0 0.0
    %484 = vmatprep.subr.mxu0 0.0
    %485 = vmatpush1.msra.mxu0 0.0
    %486 = vmatprep.subr.mxu0 0.0
    %487 = vmatpush1.msra.mxu0 0.0
    %488 = vmatprep.subr.mxu0 0.0
    %489 = vmatpush1.msra.mxu0 0.0
    %490 = vmatprep.subr.mxu0 0.0
    %491 = vmatpush1.msra.mxu0 0.0
    %492 = vmatprep.subr.mxu0 0.0
    %493 = vmatpush1.msra.mxu0 0.0
    %494 = vmatprep.subr.mxu0 0.0
    %495 = vmatpush1.msra.mxu0 0.0
    %496 = vmatprep.subr.mxu0 0.0
    %497 = vmatpush1.msra.mxu0 0.0
    %498 = vmatprep.subr.mxu0 0.0
    %499 = vmatpush1.msra.mxu0 0.0
    %500 = vmatprep.mubr.f32.mxu0 0.0
    %501 = vmatmul.mubr.f32.gmra.mrb[0].mxu0 %v434
    %v502 = vpop.f32.mrb[0].mxu0
    %v503 = vadd.f32 0.0, %v502
    %v504 = vpop.f32.mrb[0].mxu0
    %505 = vdwg.mxu0
    %v506 = vadd.f32 %v432, %v503
    %v507 = vxor.u32 %v506, 2147483648
    %v508 = vmul.f32 %v507, 1.442695
    %v509 = vpow.pop %v508
    %v510 = vadd.f32 %v509, 1.0
    %v511 = vrcp.pop %v510
    %v512 = vmul.f32 1.0, %v511
    %v513 = vtanh.pop %v506
    %515 = vrot.lane.b32.xlu0 %v430, 32
    %v516 = vpop.permute.xlu0 %515
    %v518 = vmul.f32 %v512, %v516
    %520 = vrot.lane.b32.xlu0 %v513, 64
    %v521 = vpop.permute.xlu0 %520
    %v523 = vmul.f32 %v512, %v521
    %525 = vrot.lane.b32.xlu0 %v523, 32
    %v526 = vpop.permute.xlu0 %525
    %v528 = vadd.f32 %v518, %v526
    %v529 = vtanh.pop %v528
    %531 = vrot.lane.b32.xlu0 %v529, 64
    %v532 = vpop.permute.xlu0 %531
    %v534 = vmul.f32 %v512, %v532
    %536 = vrot.lane.b32.xlu0 %v528, 96
    %v537 = vpop.permute.xlu0 %536
    %539 = vst.msk [vmem:[#allocation3] sm:$0xff] %vm79, %v537
    %541 = vrot.lane.b32.xlu0 %v534, 32
    %v542 = vpop.permute.xlu0 %541
    %544 = vst.msk [vmem:[#allocation2] sm:$0xff] %vm79, %v542
    %s545 = scalar_lea.vmem [#allocation4], 24
    %546 = vst.msk [vmem:[%s545] sm:$0xff] %vm79, %v542
    %v547 = vld [vmem:[#allocation2] sm:$0xff]
    %v548 = vld [vmem:[#allocation3] sm:$0xff]
    %s549 = scalar_lea.vmem [#allocation6], 32
    %v550 = vld [vmem:[%s549] sm:$0xff]
    %v552 = vsel %vm79, %v547, 0
    %554 = vmatprep.subr.mxu0 0.0
    %555 = vmatpush1.msra.mxu0 %v72
    %556 = vmatprep.subr.mxu0 0.0
    %557 = vmatpush1.msra.mxu0 %v73
    %558 = vmatprep.subr.mxu0 0.0
    %559 = vmatpush1.msra.mxu0 %v74
    %560 = vmatprep.subr.mxu0 0.0
    %561 = vmatpush1.msra.mxu0 %v75
    %562 = vmatprep.subr.mxu0 0.0
    %563 = vmatpush1.msra.mxu0 0.0
    %564 = vmatprep.subr.mxu0 0.0
    %565 = vmatpush1.msra.mxu0 0.0
    %566 = vmatprep.subr.mxu0 0.0
    %567 = vmatpush1.msra.mxu0 0.0
    %568 = vmatprep.subr.mxu0 0.0
    %569 = vmatpush1.msra.mxu0 0.0
    %570 = vmatprep.subr.mxu0 0.0
    %571 = vmatpush1.msra.mxu0 0.0
    %572 = vmatprep.subr.mxu0 0.0
    %573 = vmatpush1.msra.mxu0 0.0
    %574 = vmatprep.subr.mxu0 0.0
    %575 = vmatpush1.msra.mxu0 0.0
    %576 = vmatprep.subr.mxu0 0.0
    %577 = vmatpush1.msra.mxu0 0.0
    %578 = vmatprep.subr.mxu0 0.0
    %579 = vmatpush1.msra.mxu0 0.0
    %580 = vmatprep.subr.mxu0 0.0
    %581 = vmatpush1.msra.mxu0 0.0
    %582 = vmatprep.subr.mxu0 0.0
    %583 = vmatpush1.msra.mxu0 0.0
    %584 = vmatprep.subr.mxu0 0.0
    %585 = vmatpush1.msra.mxu0 0.0
    %586 = vmatprep.subr.mxu0 0.0
    %587 = vmatpush1.msra.mxu0 0.0
    %588 = vmatprep.subr.mxu0 0.0
    %589 = vmatpush1.msra.mxu0 0.0
    %590 = vmatprep.subr.mxu0 0.0
    %591 = vmatpush1.msra.mxu0 0.0
    %592 = vmatprep.subr.mxu0 0.0
    %593 = vmatpush1.msra.mxu0 0.0
    %594 = vmatprep.subr.mxu0 0.0
    %595 = vmatpush1.msra.mxu0 0.0
    %596 = vmatprep.subr.mxu0 0.0
    %597 = vmatpush1.msra.mxu0 0.0
    %598 = vmatprep.subr.mxu0 0.0
    %599 = vmatpush1.msra.mxu0 0.0
    %600 = vmatprep.subr.mxu0 0.0
    %601 = vmatpush1.msra.mxu0 0.0
    %602 = vmatprep.subr.mxu0 0.0
    %603 = vmatpush1.msra.mxu0 0.0
    %604 = vmatprep.subr.mxu0 0.0
    %605 = vmatpush1.msra.mxu0 0.0
    %606 = vmatprep.subr.mxu0 0.0
    %607 = vmatpush1.msra.mxu0 0.0
    %608 = vmatprep.subr.mxu0 0.0
    %609 = vmatpush1.msra.mxu0 0.0
    %610 = vmatprep.subr.mxu0 0.0
    %611 = vmatpush1.msra.mxu0 0.0
    %612 = vmatprep.subr.mxu0 0.0
    %613 = vmatpush1.msra.mxu0 0.0
    %614 = vmatprep.subr.mxu0 0.0
    %615 = vmatpush1.msra.mxu0 0.0
    %616 = vmatprep.subr.mxu0 0.0
    %617 = vmatpush1.msra.mxu0 0.0
    %618 = vmatprep.mubr.f32.mxu0 0.0
    %619 = vmatmul.mubr.f32.gmra.mrb[0].mxu0 %v552
    %v620 = vpop.f32.mrb[0].mxu0
    %v621 = vadd.f32 0.0, %v620
    %v622 = vpop.f32.mrb[0].mxu0
    %623 = vdwg.mxu0
    %v624 = vadd.f32 %v550, %v621
    %v625 = vxor.u32 %v624, 2147483648
    %v626 = vmul.f32 %v625, 1.442695
    %v627 = vpow.pop %v626
    %v628 = vadd.f32 %v627, 1.0
    %v629 = vrcp.pop %v628
    %v630 = vmul.f32 1.0, %v629
    %v631 = vtanh.pop %v624
    %633 = vrot.lane.b32.xlu0 %v548, 32
    %v634 = vpop.permute.xlu0 %633
    %v636 = vmul.f32 %v630, %v634
    %638 = vrot.lane.b32.xlu0 %v631, 64
    %v639 = vpop.permute.xlu0 %638
    %v641 = vmul.f32 %v630, %v639
    %643 = vrot.lane.b32.xlu0 %v641, 32
    %v644 = vpop.permute.xlu0 %643
    %v646 = vadd.f32 %v636, %v644
    %v647 = vtanh.pop %v646
    %649 = vrot.lane.b32.xlu0 %v647, 64
    %v650 = vpop.permute.xlu0 %649
    %v652 = vmul.f32 %v630, %v650
    %654 = vrot.lane.b32.xlu0 %v646, 96
    %v655 = vpop.permute.xlu0 %654
    %657 = vst.msk [vmem:[#allocation3] sm:$0xff] %vm79, %v655
    %659 = vrot.lane.b32.xlu0 %v652, 32
    %v660 = vpop.permute.xlu0 %659
    %662 = vst.msk [vmem:[#allocation2] sm:$0xff] %vm79, %v660
    %s663 = scalar_lea.vmem [#allocation4], 32
    %664 = vst.msk [vmem:[%s663] sm:$0xff] %vm79, %v660
    %v665 = vld [vmem:[#allocation2] sm:$0xff]
    %v666 = vld [vmem:[#allocation3] sm:$0xff]
    %s667 = scalar_lea.vmem [#allocation6], 40
    %v668 = vld [vmem:[%s667] sm:$0xff]
    %v670 = vsel %vm79, %v665, 0
    %672 = vmatprep.subr.mxu0 0.0
    %673 = vmatpush1.msra.mxu0 %v72
    %674 = vmatprep.subr.mxu0 0.0
    %675 = vmatpush1.msra.mxu0 %v73
    %676 = vmatprep.subr.mxu0 0.0
    %677 = vmatpush1.msra.mxu0 %v74
    %678 = vmatprep.subr.mxu0 0.0
    %679 = vmatpush1.msra.mxu0 %v75
    %680 = vmatprep.subr.mxu0 0.0
    %681 = vmatpush1.msra.mxu0 0.0
    %682 = vmatprep.subr.mxu0 0.0
    %683 = vmatpush1.msra.mxu0 0.0
    %684 = vmatprep.subr.mxu0 0.0
    %685 = vmatpush1.msra.mxu0 0.0
    %686 = vmatprep.subr.mxu0 0.0
    %687 = vmatpush1.msra.mxu0 0.0
    %688 = vmatprep.subr.mxu0 0.0
    %689 = vmatpush1.msra.mxu0 0.0
    %690 = vmatprep.subr.mxu0 0.0
    %691 = vmatpush1.msra.mxu0 0.0
    %692 = vmatprep.subr.mxu0 0.0
    %693 = vmatpush1.msra.mxu0 0.0
    %694 = vmatprep.subr.mxu0 0.0
    %695 = vmatpush1.msra.mxu0 0.0
    %696 = vmatprep.subr.mxu0 0.0
    %697 = vmatpush1.msra.mxu0 0.0
    %698 = vmatprep.subr.mxu0 0.0
    %699 = vmatpush1.msra.mxu0 0.0
    %700 = vmatprep.subr.mxu0 0.0
    %701 = vmatpush1.msra.mxu0 0.0
    %702 = vmatprep.subr.mxu0 0.0
    %703 = vmatpush1.msra.mxu0 0.0
    %704 = vmatprep.subr.mxu0 0.0
    %705 = vmatpush1.msra.mxu0 0.0
    %706 = vmatprep.subr.mxu0 0.0
    %707 = vmatpush1.msra.mxu0 0.0
    %708 = vmatprep.subr.mxu0 0.0
    %709 = vmatpush1.msra.mxu0 0.0
    %710 = vmatprep.subr.mxu0 0.0
    %711 = vmatpush1.msra.mxu0 0.0
    %712 = vmatprep.subr.mxu0 0.0
    %713 = vmatpush1.msra.mxu0 0.0
    %714 = vmatprep.subr.mxu0 0.0
    %715 = vmatpush1.msra.mxu0 0.0
    %716 = vmatprep.subr.mxu0 0.0
    %717 = vmatpush1.msra.mxu0 0.0
    %718 = vmatprep.subr.mxu0 0.0
    %719 = vmatpush1.msra.mxu0 0.0
    %720 = vmatprep.subr.mxu0 0.0
    %721 = vmatpush1.msra.mxu0 0.0
    %722 = vmatprep.subr.mxu0 0.0
    %723 = vmatpush1.msra.mxu0 0.0
    %724 = vmatprep.subr.mxu0 0.0
    %725 = vmatpush1.msra.mxu0 0.0
    %726 = vmatprep.subr.mxu0 0.0
    %727 = vmatpush1.msra.mxu0 0.0
    %728 = vmatprep.subr.mxu0 0.0
    %729 = vmatpush1.msra.mxu0 0.0
    %730 = vmatprep.subr.mxu0 0.0
    %731 = vmatpush1.msra.mxu0 0.0
    %732 = vmatprep.subr.mxu0 0.0
    %733 = vmatpush1.msra.mxu0 0.0
    %734 = vmatprep.subr.mxu0 0.0
    %735 = vmatpush1.msra.mxu0 0.0
    %736 = vmatprep.mubr.f32.mxu0 0.0
    %737 = vmatmul.mubr.f32.gmra.mrb[0].mxu0 %v670
    %v738 = vpop.f32.mrb[0].mxu0
    %v739 = vadd.f32 0.0, %v738
    %v740 = vpop.f32.mrb[0].mxu0
    %741 = vdwg.mxu0
    %v742 = vadd.f32 %v668, %v739
    %v743 = vxor.u32 %v742, 2147483648
    %v744 = vmul.f32 %v743, 1.442695
    %v745 = vpow.pop %v744
    %v746 = vadd.f32 %v745, 1.0
    %v747 = vrcp.pop %v746
    %v748 = vmul.f32 1.0, %v747
    %v749 = vtanh.pop %v742
    %751 = vrot.lane.b32.xlu0 %v666, 32
    %v752 = vpop.permute.xlu0 %751
    %v754 = vmul.f32 %v748, %v752
    %756 = vrot.lane.b32.xlu0 %v749, 64
    %v757 = vpop.permute.xlu0 %756
    %v759 = vmul.f32 %v748, %v757
    %761 = vrot.lane.b32.xlu0 %v759, 32
    %v762 = vpop.permute.xlu0 %761
    %v764 = vadd.f32 %v754, %v762
    %v765 = vtanh.pop %v764
    %767 = vrot.lane.b32.xlu0 %v765, 64
    %v768 = vpop.permute.xlu0 %767
    %v770 = vmul.f32 %v748, %v768
    %772 = vrot.lane.b32.xlu0 %v764, 96
    %v773 = vpop.permute.xlu0 %772
    %775 = vst.msk [vmem:[#allocation3] sm:$0xff] %vm79, %v773
    %777 = vrot.lane.b32.xlu0 %v770, 32
    %v778 = vpop.permute.xlu0 %777
    %780 = vst.msk [vmem:[#allocation2] sm:$0xff] %vm79, %v778
    %s781 = scalar_lea.vmem [#allocation4], 40
    %782 = vst.msk [vmem:[%s781] sm:$0xff] %vm79, %v778
    %v783 = vld [vmem:[#allocation2] sm:$0xff]
    %v784 = vld [vmem:[#allocation3] sm:$0xff]
    %s785 = scalar_lea.vmem [#allocation6], 48
    %v786 = vld [vmem:[%s785] sm:$0xff]
    %v788 = vsel %vm79, %v783, 0
    %790 = vmatprep.subr.mxu0 0.0
    %791 = vmatpush1.msra.mxu0 %v72
    %792 = vmatprep.subr.mxu0 0.0
    %793 = vmatpush1.msra.mxu0 %v73
    %794 = vmatprep.subr.mxu0 0.0
    %795 = vmatpush1.msra.mxu0 %v74
    %796 = vmatprep.subr.mxu0 0.0
    %797 = vmatpush1.msra.mxu0 %v75
    %798 = vmatprep.subr.mxu0 0.0
    %799 = vmatpush1.msra.mxu0 0.0
    %800 = vmatprep.subr.mxu0 0.0
    %801 = vmatpush1.msra.mxu0 0.0
    %802 = vmatprep.subr.mxu0 0.0
    %803 = vmatpush1.msra.mxu0 0.0
    %804 = vmatprep.subr.mxu0 0.0
    %805 = vmatpush1.msra.mxu0 0.0
    %806 = vmatprep.subr.mxu0 0.0
    %807 = vmatpush1.msra.mxu0 0.0
    %808 = vmatprep.subr.mxu0 0.0
    %809 = vmatpush1.msra.mxu0 0.0
    %810 = vmatprep.subr.mxu0 0.0
    %811 = vmatpush1.msra.mxu0 0.0
    %812 = vmatprep.subr.mxu0 0.0
    %813 = vmatpush1.msra.mxu0 0.0
    %814 = vmatprep.subr.mxu0 0.0
    %815 = vmatpush1.msra.mxu0 0.0
    %816 = vmatprep.subr.mxu0 0.0
    %817 = vmatpush1.msra.mxu0 0.0
    %818 = vmatprep.subr.mxu0 0.0
    %819 = vmatpush1.msra.mxu0 0.0
    %820 = vmatprep.subr.mxu0 0.0
    %821 = vmatpush1.msra.mxu0 0.0
    %822 = vmatprep.subr.mxu0 0.0
    %823 = vmatpush1.msra.mxu0 0.0
    %824 = vmatprep.subr.mxu0 0.0
    %825 = vmatpush1.msra.mxu0 0.0
    %826 = vmatprep.subr.mxu0 0.0
    %827 = vmatpush1.msra.mxu0 0.0
    %828 = vmatprep.subr.mxu0 0.0
    %829 = vmatpush1.msra.mxu0 0.0
    %830 = vmatprep.subr.mxu0 0.0
    %831 = vmatpush1.msra.mxu0 0.0
    %832 = vmatprep.subr.mxu0 0.0
    %833 = vmatpush1.msra.mxu0 0.0
    %834 = vmatprep.subr.mxu0 0.0
    %835 = vmatpush1.msra.mxu0 0.0
    %836 = vmatprep.subr.mxu0 0.0
    %837 = vmatpush1.msra.mxu0 0.0
    %838 = vmatprep.subr.mxu0 0.0
    %839 = vmatpush1.msra.mxu0 0.0
    %840 = vmatprep.subr.mxu0 0.0
    %841 = vmatpush1.msra.mxu0 0.0
    %842 = vmatprep.subr.mxu0 0.0
    %843 = vmatpush1.msra.mxu0 0.0
    %844 = vmatprep.subr.mxu0 0.0
    %845 = vmatpush1.msra.mxu0 0.0
    %846 = vmatprep.subr.mxu0 0.0
    %847 = vmatpush1.msra.mxu0 0.0
    %848 = vmatprep.subr.mxu0 0.0
    %849 = vmatpush1.msra.mxu0 0.0
    %850 = vmatprep.subr.mxu0 0.0
    %851 = vmatpush1.msra.mxu0 0.0
    %852 = vmatprep.subr.mxu0 0.0
    %853 = vmatpush1.msra.mxu0 0.0
    %854 = vmatprep.mubr.f32.mxu0 0.0
    %855 = vmatmul.mubr.f32.gmra.mrb[0].mxu0 %v788
    %v856 = vpop.f32.mrb[0].mxu0
    %v857 = vadd.f32 0.0, %v856
    %v858 = vpop.f32.mrb[0].mxu0
    %859 = vdwg.mxu0
    %v860 = vadd.f32 %v786, %v857
    %v861 = vxor.u32 %v860, 2147483648
    %v862 = vmul.f32 %v861, 1.442695
    %v863 = vpow.pop %v862
    %v864 = vadd.f32 %v863, 1.0
    %v865 = vrcp.pop %v864
    %v866 = vmul.f32 1.0, %v865
    %v867 = vtanh.pop %v860
    %869 = vrot.lane.b32.xlu0 %v784, 32
    %v870 = vpop.permute.xlu0 %869
    %v872 = vmul.f32 %v866, %v870
    %874 = vrot.lane.b32.xlu0 %v867, 64
    %v875 = vpop.permute.xlu0 %874
    %v877 = vmul.f32 %v866, %v875
    %879 = vrot.lane.b32.xlu0 %v877, 32
    %v880 = vpop.permute.xlu0 %879
    %v882 = vadd.f32 %v872, %v880
    %v883 = vtanh.pop %v882
    %885 = vrot.lane.b32.xlu0 %v883, 64
    %v886 = vpop.permute.xlu0 %885
    %v888 = vmul.f32 %v866, %v886
    %890 = vrot.lane.b32.xlu0 %v882, 96
    %v891 = vpop.permute.xlu0 %890
    %893 = vst.msk [vmem:[#allocation3] sm:$0xff] %vm79, %v891
    %895 = vrot.lane.b32.xlu0 %v888, 32
    %v896 = vpop.permute.xlu0 %895
    %898 = vst.msk [vmem:[#allocation2] sm:$0xff] %vm79, %v896
    %s899 = scalar_lea.vmem [#allocation4], 48
    %900 = vst.msk [vmem:[%s899] sm:$0xff] %vm79, %v896
    %v901 = vld [vmem:[#allocation2] sm:$0xff]
    %v902 = vld [vmem:[#allocation3] sm:$0xff]
    %s903 = scalar_lea.vmem [#allocation6], 56
    %v904 = vld [vmem:[%s903] sm:$0xff]
    %v906 = vsel %vm79, %v901, 0
    %908 = vmatprep.subr.mxu0 0.0
    %909 = vmatpush1.msra.mxu0 %v72
    %910 = vmatprep.subr.mxu0 0.0
    %911 = vmatpush1.msra.mxu0 %v73
    %912 = vmatprep.subr.mxu0 0.0
    %913 = vmatpush1.msra.mxu0 %v74
    %914 = vmatprep.subr.mxu0 0.0
    %915 = vmatpush1.msra.mxu0 %v75
    %916 = vmatprep.subr.mxu0 0.0
    %917 = vmatpush1.msra.mxu0 0.0
    %918 = vmatprep.subr.mxu0 0.0
    %919 = vmatpush1.msra.mxu0 0.0
    %920 = vmatprep.subr.mxu0 0.0
    %921 = vmatpush1.msra.mxu0 0.0
    %922 = vmatprep.subr.mxu0 0.0
    %923 = vmatpush1.msra.mxu0 0.0
    %924 = vmatprep.subr.mxu0 0.0
    %925 = vmatpush1.msra.mxu0 0.0
    %926 = vmatprep.subr.mxu0 0.0
    %927 = vmatpush1.msra.mxu0 0.0
    %928 = vmatprep.subr.mxu0 0.0
    %929 = vmatpush1.msra.mxu0 0.0
    %930 = vmatprep.subr.mxu0 0.0
    %931 = vmatpush1.msra.mxu0 0.0
    %932 = vmatprep.subr.mxu0 0.0
    %933 = vmatpush1.msra.mxu0 0.0
    %934 = vmatprep.subr.mxu0 0.0
    %935 = vmatpush1.msra.mxu0 0.0
    %936 = vmatprep.subr.mxu0 0.0
    %937 = vmatpush1.msra.mxu0 0.0
    %938 = vmatprep.subr.mxu0 0.0
    %939 = vmatpush1.msra.mxu0 0.0
    %940 = vmatprep.subr.mxu0 0.0
    %941 = vmatpush1.msra.mxu0 0.0
    %942 = vmatprep.subr.mxu0 0.0
    %943 = vmatpush1.msra.mxu0 0.0
    %944 = vmatprep.subr.mxu0 0.0
    %945 = vmatpush1.msra.mxu0 0.0
    %946 = vmatprep.subr.mxu0 0.0
    %947 = vmatpush1.msra.mxu0 0.0
    %948 = vmatprep.subr.mxu0 0.0
    %949 = vmatpush1.msra.mxu0 0.0
    %950 = vmatprep.subr.mxu0 0.0
    %951 = vmatpush1.msra.mxu0 0.0
    %952 = vmatprep.subr.mxu0 0.0
    %953 = vmatpush1.msra.mxu0 0.0
    %954 = vmatprep.subr.mxu0 0.0
    %955 = vmatpush1.msra.mxu0 0.0
    %956 = vmatprep.subr.mxu0 0.0
    %957 = vmatpush1.msra.mxu0 0.0
    %958 = vmatprep.subr.mxu0 0.0
    %959 = vmatpush1.msra.mxu0 0.0
    %960 = vmatprep.subr.mxu0 0.0
    %961 = vmatpush1.msra.mxu0 0.0
    %962 = vmatprep.subr.mxu0 0.0
    %963 = vmatpush1.msra.mxu0 0.0
    %964 = vmatprep.subr.mxu0 0.0
    %965 = vmatpush1.msra.mxu0 0.0
    %966 = vmatprep.subr.mxu0 0.0
    %967 = vmatpush1.msra.mxu0 0.0
    %968 = vmatprep.subr.mxu0 0.0
    %969 = vmatpush1.msra.mxu0 0.0
    %970 = vmatprep.subr.mxu0 0.0
    %971 = vmatpush1.msra.mxu0 0.0
    %972 = vmatprep.mubr.f32.mxu0 0.0
    %973 = vmatmul.mubr.f32.gmra.mrb[0].mxu0 %v906
    %v974 = vpop.f32.mrb[0].mxu0
    %v975 = vadd.f32 0.0, %v974
    %v976 = vpop.f32.mrb[0].mxu0
    %977 = vdwg.mxu0
    %v978 = vadd.f32 %v904, %v975
    %v979 = vxor.u32 %v978, 2147483648
    %v980 = vmul.f32 %v979, 1.442695
    %v981 = vpow.pop %v980
    %v982 = vadd.f32 %v981, 1.0
    %v983 = vrcp.pop %v982
    %v984 = vmul.f32 1.0, %v983
    %v985 = vtanh.pop %v978
    %987 = vrot.lane.b32.xlu0 %v902, 32
    %v988 = vpop.permute.xlu0 %987
    %v990 = vmul.f32 %v984, %v988
    %992 = vrot.lane.b32.xlu0 %v985, 64
    %v993 = vpop.permute.xlu0 %992
    %v995 = vmul.f32 %v984, %v993
    %997 = vrot.lane.b32.xlu0 %v995, 32
    %v998 = vpop.permute.xlu0 %997
    %v1000 = vadd.f32 %v990, %v998
    %v1001 = vtanh.pop %v1000
    %1003 = vrot.lane.b32.xlu0 %v1001, 64
    %v1004 = vpop.permute.xlu0 %1003
    %v1006 = vmul.f32 %v984, %v1004
    %1008 = vrot.lane.b32.xlu0 %v1000, 96
    %v1009 = vpop.permute.xlu0 %1008
    %1011 = vst.msk [vmem:[#allocation3] sm:$0xff] %vm79, %v1009
    %1013 = vrot.lane.b32.xlu0 %v1006, 32
    %v1014 = vpop.permute.xlu0 %1013
    %1016 = vst.msk [vmem:[#allocation2] sm:$0xff] %vm79, %v1014
    %s1017 = scalar_lea.vmem [#allocation4], 56
    %1018 = vst.msk [vmem:[%s1017] sm:$0xff] %vm79, %v1014
    %v1019 = vld [vmem:[#allocation4] sm:$0xff]
    %v1020 = vld [vmem:[#allocation4 + $0x8] sm:$0xff]
    %v1021 = vld [vmem:[#allocation4 + $0x10] sm:$0xff]
    %v1022 = vld [vmem:[#allocation4 + $0x18] sm:$0xff]
    %v1023 = vld [vmem:[#allocation4 + $0x20] sm:$0xff]
    %v1024 = vld [vmem:[#allocation4 + $0x28] sm:$0xff]
    %v1025 = vld [vmem:[#allocation4 + $0x30] sm:$0xff]
    %v1026 = vld [vmem:[#allocation4 + $0x38] sm:$0xff]
    %v1027 = vld [vmem:[#allocation9] sm:$0xff]
    %v1028 = vld [vmem:[#allocation9 + $0x8] sm:$0xff]
    %v1029 = vld [vmem:[#allocation9 + $0x10] sm:$0xff]
    %v1030 = vld [vmem:[#allocation9 + $0x18] sm:$0xff]
    %v1032 = vsel %vm79, %v1019, 0
    %v1035 = vsel %vm79, %v1020, 0
    %v1038 = vsel %vm79, %v1021, 0
    %v1041 = vsel %vm79, %v1022, 0
    %v1044 = vsel %vm79, %v1023, 0
    %v1047 = vsel %vm79, %v1024, 0
    %v1050 = vsel %vm79, %v1025, 0
    %v1053 = vsel %vm79, %v1026, 0
    %1055 = vmatprep.subr.mxu0 0.0
    %1056 = vmatpush1.msra.mxu0 %v1027
    %1057 = vmatprep.subr.mxu0 0.0
    %1058 = vmatpush1.msra.mxu0 %v1028
    %1059 = vmatprep.subr.mxu0 0.0
    %1060 = vmatpush1.msra.mxu0 %v1029
    %1061 = vmatprep.subr.mxu0 0.0
    %1062 = vmatpush1.msra.mxu0 %v1030
    %1063 = vmatprep.subr.mxu0 0.0
    %1064 = vmatpush1.msra.mxu0 0.0
    %1065 = vmatprep.subr.mxu0 0.0
    %1066 = vmatpush1.msra.mxu0 0.0
    %1067 = vmatprep.subr.mxu0 0.0
    %1068 = vmatpush1.msra.mxu0 0.0
    %1069 = vmatprep.subr.mxu0 0.0
    %1070 = vmatpush1.msra.mxu0 0.0
    %1071 = vmatprep.subr.mxu0 0.0
    %1072 = vmatpush1.msra.mxu0 0.0
    %1073 = vmatprep.subr.mxu0 0.0
    %1074 = vmatpush1.msra.mxu0 0.0
    %1075 = vmatprep.subr.mxu0 0.0
    %1076 = vmatpush1.msra.mxu0 0.0
    %1077 = vmatprep.subr.mxu0 0.0
    %1078 = vmatpush1.msra.mxu0 0.0
    %1079 = vmatprep.subr.mxu0 0.0
    %1080 = vmatpush1.msra.mxu0 0.0
    %1081 = vmatprep.subr.mxu0 0.0
    %1082 = vmatpush1.msra.mxu0 0.0
    %1083 = vmatprep.subr.mxu0 0.0
    %1084 = vmatpush1.msra.mxu0 0.0
    %1085 = vmatprep.subr.mxu0 0.0
    %1086 = vmatpush1.msra.mxu0 0.0
    %1087 = vmatprep.subr.mxu0 0.0
    %1088 = vmatpush1.msra.mxu0 0.0
    %1089 = vmatprep.subr.mxu0 0.0
    %1090 = vmatpush1.msra.mxu0 0.0
    %1091 = vmatprep.subr.mxu0 0.0
    %1092 = vmatpush1.msra.mxu0 0.0
    %1093 = vmatprep.subr.mxu0 0.0
    %1094 = vmatpush1.msra.mxu0 0.0
    %1095 = vmatprep.subr.mxu0 0.0
    %1096 = vmatpush1.msra.mxu0 0.0
    %1097 = vmatprep.subr.mxu0 0.0
    %1098 = vmatpush1.msra.mxu0 0.0
    %1099 = vmatprep.subr.mxu0 0.0
    %1100 = vmatpush1.msra.mxu0 0.0
    %1101 = vmatprep.subr.mxu0 0.0
    %1102 = vmatpush1.msra.mxu0 0.0
    %1103 = vmatprep.subr.mxu0 0.0
    %1104 = vmatpush1.msra.mxu0 0.0
    %1105 = vmatprep.subr.mxu0 0.0
    %1106 = vmatpush1.msra.mxu0 0.0
    %1107 = vmatprep.subr.mxu0 0.0
    %1108 = vmatpush1.msra.mxu0 0.0
    %1109 = vmatprep.subr.mxu0 0.0
    %1110 = vmatpush1.msra.mxu0 0.0
    %1111 = vmatprep.subr.mxu0 0.0
    %1112 = vmatpush1.msra.mxu0 0.0
    %1113 = vmatprep.subr.mxu0 0.0
    %1114 = vmatpush1.msra.mxu0 0.0
    %1115 = vmatprep.subr.mxu0 0.0
    %1116 = vmatpush1.msra.mxu0 0.0
    %1117 = vmatprep.subr.mxu0 0.0
    %1118 = vmatpush1.msra.mxu0 0.0
    %1119 = vmatprep.mubr.f32.mxu0 0.0
    %1120 = vmatmul.mubr.f32.gmra.mrb[0].mxu0 %v1032
    %v1121 = vpop.f32.mrb[0].mxu0
    %v1122 = vadd.f32 0.0, %v1121
    %v1123 = vpop.f32.mrb[0].mxu0
    %1124 = vmatprep.mubr.f32.mxu0 0.0
    %1125 = vmatmul.mubr.f32.gmra.mrb[0].mxu0 %v1035
    %v1126 = vpop.f32.mrb[0].mxu0
    %v1127 = vadd.f32 0.0, %v1126
    %v1128 = vpop.f32.mrb[0].mxu0
    %1129 = vmatprep.mubr.f32.mxu0 0.0
    %1130 = vmatmul.mubr.f32.gmra.mrb[0].mxu0 %v1038
    %v1131 = vpop.f32.mrb[0].mxu0
    %v1132 = vadd.f32 0.0, %v1131
    %v1133 = vpop.f32.mrb[0].mxu0
    %1134 = vmatprep.mubr.f32.mxu0 0.0
    %1135 = vmatmul.mubr.f32.gmra.mrb[0].mxu0 %v1041
    %v1136 = vpop.f32.mrb[0].mxu0
    %v1137 = vadd.f32 0.0, %v1136
    %v1138 = vpop.f32.mrb[0].mxu0
    %1139 = vmatprep.mubr.f32.mxu0 0.0
    %1140 = vmatmul.mubr.f32.gmra.mrb[0].mxu0 %v1044
    %v1141 = vpop.f32.mrb[0].mxu0
    %v1142 = vadd.f32 0.0, %v1141
    %v1143 = vpop.f32.mrb[0].mxu0
    %1144 = vmatprep.mubr.f32.mxu0 0.0
    %1145 = vmatmul.mubr.f32.gmra.mrb[0].mxu0 %v1047
    %v1146 = vpop.f32.mrb[0].mxu0
    %v1147 = vadd.f32 0.0, %v1146
    %v1148 = vpop.f32.mrb[0].mxu0
    %1149 = vmatprep.mubr.f32.mxu0 0.0
    %1150 = vmatmul.mubr.f32.gmra.mrb[0].mxu0 %v1050
    %v1151 = vpop.f32.mrb[0].mxu0
    %v1152 = vadd.f32 0.0, %v1151
    %v1153 = vpop.f32.mrb[0].mxu0
    %1154 = vmatprep.mubr.f32.mxu0 0.0
    %1155 = vmatmul.mubr.f32.gmra.mrb[0].mxu0 %v1053
    %v1156 = vpop.f32.mrb[0].mxu0
    %v1157 = vadd.f32 0.0, %v1156
    %v1158 = vpop.f32.mrb[0].mxu0
    %1159 = vdwg.mxu0
    %v1160 = vld [vmem:[%s3] sm:$0x1]
    %v1162 = vlaneseq
    %v1163 = vshrl.u32 %v1162, 7
    %v1164 = vsub.s32 0, %v1163
    %v1165 = vrot.slane %v1160, %v1164
    %v1167 = vadd.f32 %v1122, %v1165
    %v1168 = vadd.f32 %v1127, %v1165
    %v1169 = vadd.f32 %v1132, %v1165
    %v1170 = vadd.f32 %v1137, %v1165
    %v1171 = vadd.f32 %v1142, %v1165
    %v1172 = vadd.f32 %v1147, %v1165
    %v1173 = vadd.f32 %v1152, %v1165
    %v1174 = vadd.f32 %v1157, %v1165
    %1175 = vst [vmem:[#allocation5] sm:$0xff] %v1167
    %1176 = vst [vmem:[#allocation5 + $0x8] sm:$0xff] %v1168
    %1177 = vst [vmem:[#allocation5 + $0x10] sm:$0xff] %v1169
    %1178 = vst [vmem:[#allocation5 + $0x18] sm:$0xff] %v1170
    %1179 = vst [vmem:[#allocation5 + $0x20] sm:$0xff] %v1171
    %1180 = vst [vmem:[#allocation5 + $0x28] sm:$0xff] %v1172
    %1181 = vst [vmem:[#allocation5 + $0x30] sm:$0xff] %v1173
    %1182 = vst [vmem:[#allocation5 + $0x38] sm:$0xff] %v1174
    %s1183 = scalar_lea.vmem [#allocation11], 32
    %v1184 = vld [vmem:[%s1183] sm:$0xff]
    %v1185 = vld [vmem:[%s1183 + $0x8] sm:$0xff]
    %v1186 = vld [vmem:[%s1183 + $0x10] sm:$0xff]
    %v1187 = vld [vmem:[%s1183 + $0x18] sm:$0xff]
    %s1188 = scalar_lea.vmem [#allocation2], 8
    %v1189 = vld [vmem:[%s1188] sm:$0xff]
    %s1190 = scalar_lea.vmem [#allocation3], 8
    %v1191 = vld [vmem:[%s1190] sm:$0xff]
    %v1192 = vld [vmem:[#allocation5] sm:$0xff]
    %v1194 = vsel %vm79, %v1189, 0
    %1196 = vmatprep.subr.mxu0 0.0
    %1197 = vmatpush1.msra.mxu0 %v1184
    %1198 = vmatprep.subr.mxu0 0.0
    %1199 = vmatpush1.msra.mxu0 %v1185
    %1200 = vmatprep.subr.mxu0 0.0
    %1201 = vmatpush1.msra.mxu0 %v1186
    %1202 = vmatprep.subr.mxu0 0.0
    %1203 = vmatpush1.msra.mxu0 %v1187
    %1204 = vmatprep.subr.mxu0 0.0
    %1205 = vmatpush1.msra.mxu0 0.0
    %1206 = vmatprep.subr.mxu0 0.0
    %1207 = vmatpush1.msra.mxu0 0.0
    %1208 = vmatprep.subr.mxu0 0.0
    %1209 = vmatpush1.msra.mxu0 0.0
    %1210 = vmatprep.subr.mxu0 0.0
    %1211 = vmatpush1.msra.mxu0 0.0
    %1212 = vmatprep.subr.mxu0 0.0
    %1213 = vmatpush1.msra.mxu0 0.0
    %1214 = vmatprep.subr.mxu0 0.0
    %1215 = vmatpush1.msra.mxu0 0.0
    %1216 = vmatprep.subr.mxu0 0.0
    %1217 = vmatpush1.msra.mxu0 0.0
    %1218 = vmatprep.subr.mxu0 0.0
    %1219 = vmatpush1.msra.mxu0 0.0
    %1220 = vmatprep.subr.mxu0 0.0
    %1221 = vmatpush1.msra.mxu0 0.0
    %1222 = vmatprep.subr.mxu0 0.0
    %1223 = vmatpush1.msra.mxu0 0.0
    %1224 = vmatprep.subr.mxu0 0.0
    %1225 = vmatpush1.msra.mxu0 0.0
    %1226 = vmatprep.subr.mxu0 0.0
    %1227 = vmatpush1.msra.mxu0 0.0
    %1228 = vmatprep.subr.mxu0 0.0
    %1229 = vmatpush1.msra.mxu0 0.0
    %1230 = vmatprep.subr.mxu0 0.0
    %1231 = vmatpush1.msra.mxu0 0.0
    %1232 = vmatprep.subr.mxu0 0.0
    %1233 = vmatpush1.msra.mxu0 0.0
    %1234 = vmatprep.subr.mxu0 0.0
    %1235 = vmatpush1.msra.mxu0 0.0
    %1236 = vmatprep.subr.mxu0 0.0
    %1237 = vmatpush1.msra.mxu0 0.0
    %1238 = vmatprep.subr.mxu0 0.0
    %1239 = vmatpush1.msra.mxu0 0.0
    %1240 = vmatprep.subr.mxu0 0.0
    %1241 = vmatpush1.msra.mxu0 0.0
    %1242 = vmatprep.subr.mxu0 0.0
    %1243 = vmatpush1.msra.mxu0 0.0
    %1244 = vmatprep.subr.mxu0 0.0
    %1245 = vmatpush1.msra.mxu0 0.0
    %1246 = vmatprep.subr.mxu0 0.0
    %1247 = vmatpush1.msra.mxu0 0.0
    %1248 = vmatprep.subr.mxu0 0.0
    %1249 = vmatpush1.msra.mxu0 0.0
    %1250 = vmatprep.subr.mxu0 0.0
    %1251 = vmatpush1.msra.mxu0 0.0
    %1252 = vmatprep.subr.mxu0 0.0
    %1253 = vmatpush1.msra.mxu0 0.0
    %1254 = vmatprep.subr.mxu0 0.0
    %1255 = vmatpush1.msra.mxu0 0.0
    %1256 = vmatprep.subr.mxu0 0.0
    %1257 = vmatpush1.msra.mxu0 0.0
    %1258 = vmatprep.subr.mxu0 0.0
    %1259 = vmatpush1.msra.mxu0 0.0
    %1260 = vmatprep.mubr.f32.mxu0 0.0
    %1261 = vmatmul.mubr.f32.gmra.mrb[0].mxu0 %v1194
    %v1262 = vpop.f32.mrb[0].mxu0
    %v1263 = vadd.f32 0.0, %v1262
    %v1264 = vpop.f32.mrb[0].mxu0
    %1265 = vdwg.mxu0
    %v1266 = vadd.f32 %v1192, %v1263
    %v1267 = vxor.u32 %v1266, 2147483648
    %v1268 = vmul.f32 %v1267, 1.442695
    %v1269 = vpow.pop %v1268
    %v1270 = vadd.f32 %v1269, 1.0
    %v1271 = vrcp.pop %v1270
    %v1272 = vmul.f32 1.0, %v1271
    %v1273 = vtanh.pop %v1266
    %1275 = vrot.lane.b32.xlu0 %v1191, 32
    %v1276 = vpop.permute.xlu0 %1275
    %v1278 = vmul.f32 %v1272, %v1276
    %1280 = vrot.lane.b32.xlu0 %v1273, 64
    %v1281 = vpop.permute.xlu0 %1280
    %v1283 = vmul.f32 %v1272, %v1281
    %1285 = vrot.lane.b32.xlu0 %v1283, 32
    %v1286 = vpop.permute.xlu0 %1285
    %v1288 = vadd.f32 %v1278, %v1286
    %v1289 = vtanh.pop %v1288
    %1291 = vrot.lane.b32.xlu0 %v1289, 64
    %v1292 = vpop.permute.xlu0 %1291
    %v1294 = vmul.f32 %v1272, %v1292
    %1296 = vrot.lane.b32.xlu0 %v1288, 96
    %v1297 = vpop.permute.xlu0 %1296
    %1299 = vst.msk [vmem:[%s1190] sm:$0xff] %vm79, %v1297
    %1301 = vrot.lane.b32.xlu0 %v1294, 32
    %v1302 = vpop.permute.xlu0 %1301
    %1304 = vst.msk [vmem:[%s1188] sm:$0xff] %vm79, %v1302
    %1305 = vst.msk [vmem:[#allocation4] sm:$0xff] %vm79, %v1302
    %v1306 = vld [vmem:[%s1188] sm:$0xff]
    %v1307 = vld [vmem:[%s1190] sm:$0xff]
    %s1308 = scalar_lea.vmem [#allocation5], 8
    %v1309 = vld [vmem:[%s1308] sm:$0xff]
    %v1311 = vsel %vm79, %v1306, 0
    %1313 = vmatprep.subr.mxu0 0.0
    %1314 = vmatpush1.msra.mxu0 %v1184
    %1315 = vmatprep.subr.mxu0 0.0
    %1316 = vmatpush1.msra.mxu0 %v1185
    %1317 = vmatprep.subr.mxu0 0.0
    %1318 = vmatpush1.msra.mxu0 %v1186
    %1319 = vmatprep.subr.mxu0 0.0
    %1320 = vmatpush1.msra.mxu0 %v1187
    %1321 = vmatprep.subr.mxu0 0.0
    %1322 = vmatpush1.msra.mxu0 0.0
    %1323 = vmatprep.subr.mxu0 0.0
    %1324 = vmatpush1.msra.mxu0 0.0
    %1325 = vmatprep.subr.mxu0 0.0
    %1326 = vmatpush1.msra.mxu0 0.0
    %1327 = vmatprep.subr.mxu0 0.0
    %1328 = vmatpush1.msra.mxu0 0.0
    %1329 = vmatprep.subr.mxu0 0.0
    %1330 = vmatpush1.msra.mxu0 0.0
    %1331 = vmatprep.subr.mxu0 0.0
    %1332 = vmatpush1.msra.mxu0 0.0
    %1333 = vmatprep.subr.mxu0 0.0
    %1334 = vmatpush1.msra.mxu0 0.0
    %1335 = vmatprep.subr.mxu0 0.0
    %1336 = vmatpush1.msra.mxu0 0.0
    %1337 = vmatprep.subr.mxu0 0.0
    %1338 = vmatpush1.msra.mxu0 0.0
    %1339 = vmatprep.subr.mxu0 0.0
    %1340 = vmatpush1.msra.mxu0 0.0
    %1341 = vmatprep.subr.mxu0 0.0
    %1342 = vmatpush1.msra.mxu0 0.0
    %1343 = vmatprep.subr.mxu0 0.0
    %1344 = vmatpush1.msra.mxu0 0.0
    %1345 = vmatprep.subr.mxu0 0.0
    %1346 = vmatpush1.msra.mxu0 0.0
    %1347 = vmatprep.subr.mxu0 0.0
    %1348 = vmatpush1.msra.mxu0 0.0
    %1349 = vmatprep.subr.mxu0 0.0
    %1350 = vmatpush1.msra.mxu0 0.0
    %1351 = vmatprep.subr.mxu0 0.0
    %1352 = vmatpush1.msra.mxu0 0.0
    %1353 = vmatprep.subr.mxu0 0.0
    %1354 = vmatpush1.msra.mxu0 0.0
    %1355 = vmatprep.subr.mxu0 0.0
    %1356 = vmatpush1.msra.mxu0 0.0
    %1357 = vmatprep.subr.mxu0 0.0
    %1358 = vmatpush1.msra.mxu0 0.0
    %1359 = vmatprep.subr.mxu0 0.0
    %1360 = vmatpush1.msra.mxu0 0.0
    %1361 = vmatprep.subr.mxu0 0.0
    %1362 = vmatpush1.msra.mxu0 0.0
    %1363 = vmatprep.subr.mxu0 0.0
    %1364 = vmatpush1.msra.mxu0 0.0
    %1365 = vmatprep.subr.mxu0 0.0
    %1366 = vmatpush1.msra.mxu0 0.0
    %1367 = vmatprep.subr.mxu0 0.0
    %1368 = vmatpush1.msra.mxu0 0.0
    %1369 = vmatprep.subr.mxu0 0.0
    %1370 = vmatpush1.msra.mxu0 0.0
    %1371 = vmatprep.subr.mxu0 0.0
    %1372 = vmatpush1.msra.mxu0 0.0
    %1373 = vmatprep.subr.mxu0 0.0
    %1374 = vmatpush1.msra.mxu0 0.0
    %1375 = vmatprep.subr.mxu0 0.0
    %1376 = vmatpush1.msra.mxu0 0.0
    %1377 = vmatprep.mubr.f32.mxu0 0.0
    %1378 = vmatmul.mubr.f32.gmra.mrb[0].mxu0 %v1311
    %v1379 = vpop.f32.mrb[0].mxu0
    %v1380 = vadd.f32 0.0, %v1379
    %v1381 = vpop.f32.mrb[0].mxu0
    %1382 = vdwg.mxu0
    %v1383 = vadd.f32 %v1309, %v1380
    %v1384 = vxor.u32 %v1383, 2147483648
    %v1385 = vmul.f32 %v1384, 1.442695
    %v1386 = vpow.pop %v1385
    %v1387 = vadd.f32 %v1386, 1.0
    %v1388 = vrcp.pop %v1387
    %v1389 = vmul.f32 1.0, %v1388
    %v1390 = vtanh.pop %v1383
    %1392 = vrot.lane.b32.xlu0 %v1307, 32
    %v1393 = vpop.permute.xlu0 %1392
    %v1395 = vmul.f32 %v1389, %v1393
    %1397 = vrot.lane.b32.xlu0 %v1390, 64
    %v1398 = vpop.permute.xlu0 %1397
    %v1400 = vmul.f32 %v1389, %v1398
    %1402 = vrot.lane.b32.xlu0 %v1400, 32
    %v1403 = vpop.permute.xlu0 %1402
    %v1405 = vadd.f32 %v1395, %v1403
    %v1406 = vtanh.pop %v1405
    %1408 = vrot.lane.b32.xlu0 %v1406, 64
    %v1409 = vpop.permute.xlu0 %1408
    %v1411 = vmul.f32 %v1389, %v1409
    %1413 = vrot.lane.b32.xlu0 %v1405, 96
    %v1414 = vpop.permute.xlu0 %1413
    %1416 = vst.msk [vmem:[%s1190] sm:$0xff] %vm79, %v1414
    %1418 = vrot.lane.b32.xlu0 %v1411, 32
    %v1419 = vpop.permute.xlu0 %1418
    %1421 = vst.msk [vmem:[%s1188] sm:$0xff] %vm79, %v1419
    %1422 = vst.msk [vmem:[%s309] sm:$0xff] %vm79, %v1419
    %v1423 = vld [vmem:[%s1188] sm:$0xff]
    %v1424 = vld [vmem:[%s1190] sm:$0xff]
    %s1425 = scalar_lea.vmem [#allocation5], 16
    %v1426 = vld [vmem:[%s1425] sm:$0xff]
    %v1428 = vsel %vm79, %v1423, 0
    %1430 = vmatprep.subr.mxu0 0.0
    %1431 = vmatpush1.msra.mxu0 %v1184
    %1432 = vmatprep.subr.mxu0 0.0
    %1433 = vmatpush1.msra.mxu0 %v1185
    %1434 = vmatprep.subr.mxu0 0.0
    %1435 = vmatpush1.msra.mxu0 %v1186
    %1436 = vmatprep.subr.mxu0 0.0
    %1437 = vmatpush1.msra.mxu0 %v1187
    %1438 = vmatprep.subr.mxu0 0.0
    %1439 = vmatpush1.msra.mxu0 0.0
    %1440 = vmatprep.subr.mxu0 0.0
    %1441 = vmatpush1.msra.mxu0 0.0
    %1442 = vmatprep.subr.mxu0 0.0
    %1443 = vmatpush1.msra.mxu0 0.0
    %1444 = vmatprep.subr.mxu0 0.0
    %1445 = vmatpush1.msra.mxu0 0.0
    %1446 = vmatprep.subr.mxu0 0.0
    %1447 = vmatpush1.msra.mxu0 0.0
    %1448 = vmatprep.subr.mxu0 0.0
    %1449 = vmatpush1.msra.mxu0 0.0
    %1450 = vmatprep.subr.mxu0 0.0
    %1451 = vmatpush1.msra.mxu0 0.0
    %1452 = vmatprep.subr.mxu0 0.0
    %1453 = vmatpush1.msra.mxu0 0.0
    %1454 = vmatprep.subr.mxu0 0.0
    %1455 = vmatpush1.msra.mxu0 0.0
    %1456 = vmatprep.subr.mxu0 0.0
    %1457 = vmatpush1.msra.mxu0 0.0
    %1458 = vmatprep.subr.mxu0 0.0
    %1459 = vmatpush1.msra.mxu0 0.0
    %1460 = vmatprep.subr.mxu0 0.0
    %1461 = vmatpush1.msra.mxu0 0.0
    %1462 = vmatprep.subr.mxu0 0.0
    %1463 = vmatpush1.msra.mxu0 0.0
    %1464 = vmatprep.subr.mxu0 0.0
    %1465 = vmatpush1.msra.mxu0 0.0
    %1466 = vmatprep.subr.mxu0 0.0
    %1467 = vmatpush1.msra.mxu0 0.0
    %1468 = vmatprep.subr.mxu0 0.0
    %1469 = vmatpush1.msra.mxu0 0.0
    %1470 = vmatprep.subr.mxu0 0.0
    %1471 = vmatpush1.msra.mxu0 0.0
    %1472 = vmatprep.subr.mxu0 0.0
    %1473 = vmatpush1.msra.mxu0 0.0
    %1474 = vmatprep.subr.mxu0 0.0
    %1475 = vmatpush1.msra.mxu0 0.0
    %1476 = vmatprep.subr.mxu0 0.0
    %1477 = vmatpush1.msra.mxu0 0.0
    %1478 = vmatprep.subr.mxu0 0.0
    %1479 = vmatpush1.msra.mxu0 0.0
    %1480 = vmatprep.subr.mxu0 0.0
    %1481 = vmatpush1.msra.mxu0 0.0
    %1482 = vmatprep.subr.mxu0 0.0
    %1483 = vmatpush1.msra.mxu0 0.0
    %1484 = vmatprep.subr.mxu0 0.0
    %1485 = vmatpush1.msra.mxu0 0.0
    %1486 = vmatprep.subr.mxu0 0.0
    %1487 = vmatpush1.msra.mxu0 0.0
    %1488 = vmatprep.subr.mxu0 0.0
    %1489 = vmatpush1.msra.mxu0 0.0
    %1490 = vmatprep.subr.mxu0 0.0
    %1491 = vmatpush1.msra.mxu0 0.0
    %1492 = vmatprep.subr.mxu0 0.0
    %1493 = vmatpush1.msra.mxu0 0.0
    %1494 = vmatprep.mubr.f32.mxu0 0.0
    %1495 = vmatmul.mubr.f32.gmra.mrb[0].mxu0 %v1428
    %v1496 = vpop.f32.mrb[0].mxu0
    %v1497 = vadd.f32 0.0, %v1496
    %v1498 = vpop.f32.mrb[0].mxu0
    %1499 = vdwg.mxu0
    %v1500 = vadd.f32 %v1426, %v1497
    %v1501 = vxor.u32 %v1500, 2147483648
    %v1502 = vmul.f32 %v1501, 1.442695
    %v1503 = vpow.pop %v1502
    %v1504 = vadd.f32 %v1503, 1.0
    %v1505 = vrcp.pop %v1504
    %v1506 = vmul.f32 1.0, %v1505
    %v1507 = vtanh.pop %v1500
    %1509 = vrot.lane.b32.xlu0 %v1424, 32
    %v1510 = vpop.permute.xlu0 %1509
    %v1512 = vmul.f32 %v1506, %v1510
    %1514 = vrot.lane.b32.xlu0 %v1507, 64
    %v1515 = vpop.permute.xlu0 %1514
    %v1517 = vmul.f32 %v1506, %v1515
    %1519 = vrot.lane.b32.xlu0 %v1517, 32
    %v1520 = vpop.permute.xlu0 %1519
    %v1522 = vadd.f32 %v1512, %v1520
    %v1523 = vtanh.pop %v1522
    %1525 = vrot.lane.b32.xlu0 %v1523, 64
    %v1526 = vpop.permute.xlu0 %1525
    %v1528 = vmul.f32 %v1506, %v1526
    %1530 = vrot.lane.b32.xlu0 %v1522, 96
    %v1531 = vpop.permute.xlu0 %1530
    %1533 = vst.msk [vmem:[%s1190] sm:$0xff] %vm79, %v1531
    %1535 = vrot.lane.b32.xlu0 %v1528, 32
    %v1536 = vpop.permute.xlu0 %1535
    %1538 = vst.msk [vmem:[%s1188] sm:$0xff] %vm79, %v1536
    %1539 = vst.msk [vmem:[%s427] sm:$0xff] %vm79, %v1536
    %v1540 = vld [vmem:[%s1188] sm:$0xff]
    %v1541 = vld [vmem:[%s1190] sm:$0xff]
    %s1542 = scalar_lea.vmem [#allocation5], 24
    %v1543 = vld [vmem:[%s1542] sm:$0xff]
    %v1545 = vsel %vm79, %v1540, 0
    %1547 = vmatprep.subr.mxu0 0.0
    %1548 = vmatpush1.msra.mxu0 %v1184
    %1549 = vmatprep.subr.mxu0 0.0
    %1550 = vmatpush1.msra.mxu0 %v1185
    %1551 = vmatprep.subr.mxu0 0.0
    %1552 = vmatpush1.msra.mxu0 %v1186
    %1553 = vmatprep.subr.mxu0 0.0
    %1554 = vmatpush1.msra.mxu0 %v1187
    %1555 = vmatprep.subr.mxu0 0.0
    %1556 = vmatpush1.msra.mxu0 0.0
    %1557 = vmatprep.subr.mxu0 0.0
    %1558 = vmatpush1.msra.mxu0 0.0
    %1559 = vmatprep.subr.mxu0 0.0
    %1560 = vmatpush1.msra.mxu0 0.0
    %1561 = vmatprep.subr.mxu0 0.0
    %1562 = vmatpush1.msra.mxu0 0.0
    %1563 = vmatprep.subr.mxu0 0.0
    %1564 = vmatpush1.msra.mxu0 0.0
    %1565 = vmatprep.subr.mxu0 0.0
    %1566 = vmatpush1.msra.mxu0 0.0
    %1567 = vmatprep.subr.mxu0 0.0
    %1568 = vmatpush1.msra.mxu0 0.0
    %1569 = vmatprep.subr.mxu0 0.0
    %1570 = vmatpush1.msra.mxu0 0.0
    %1571 = vmatprep.subr.mxu0 0.0
    %1572 = vmatpush1.msra.mxu0 0.0
    %1573 = vmatprep.subr.mxu0 0.0
    %1574 = vmatpush1.msra.mxu0 0.0
    %1575 = vmatprep.subr.mxu0 0.0
    %1576 = vmatpush1.msra.mxu0 0.0
    %1577 = vmatprep.subr.mxu0 0.0
    %1578 = vmatpush1.msra.mxu0 0.0
    %1579 = vmatprep.subr.mxu0 0.0
    %1580 = vmatpush1.msra.mxu0 0.0
    %1581 = vmatprep.subr.mxu0 0.0
    %1582 = vmatpush1.msra.mxu0 0.0
    %1583 = vmatprep.subr.mxu0 0.0
    %1584 = vmatpush1.msra.mxu0 0.0
    %1585 = vmatprep.subr.mxu0 0.0
    %1586 = vmatpush1.msra.mxu0 0.0
    %1587 = vmatprep.subr.mxu0 0.0
    %1588 = vmatpush1.msra.mxu0 0.0
    %1589 = vmatprep.subr.mxu0 0.0
    %1590 = vmatpush1.msra.mxu0 0.0
    %1591 = vmatprep.subr.mxu0 0.0
    %1592 = vmatpush1.msra.mxu0 0.0
    %1593 = vmatprep.subr.mxu0 0.0
    %1594 = vmatpush1.msra.mxu0 0.0
    %1595 = vmatprep.subr.mxu0 0.0
    %1596 = vmatpush1.msra.mxu0 0.0
    %1597 = vmatprep.subr.mxu0 0.0
    %1598 = vmatpush1.msra.mxu0 0.0
    %1599 = vmatprep.subr.mxu0 0.0
    %1600 = vmatpush1.msra.mxu0 0.0
    %1601 = vmatprep.subr.mxu0 0.0
    %1602 = vmatpush1.msra.mxu0 0.0
    %1603 = vmatprep.subr.mxu0 0.0
    %1604 = vmatpush1.msra.mxu0 0.0
    %1605 = vmatprep.subr.mxu0 0.0
    %1606 = vmatpush1.msra.mxu0 0.0
    %1607 = vmatprep.subr.mxu0 0.0
    %1608 = vmatpush1.msra.mxu0 0.0
    %1609 = vmatprep.subr.mxu0 0.0
    %1610 = vmatpush1.msra.mxu0 0.0
    %1611 = vmatprep.mubr.f32.mxu0 0.0
    %1612 = vmatmul.mubr.f32.gmra.mrb[0].mxu0 %v1545
    %v1613 = vpop.f32.mrb[0].mxu0
    %v1614 = vadd.f32 0.0, %v1613
    %v1615 = vpop.f32.mrb[0].mxu0
    %1616 = vdwg.mxu0
    %v1617 = vadd.f32 %v1543, %v1614
    %v1618 = vxor.u32 %v1617, 2147483648
    %v1619 = vmul.f32 %v1618, 1.442695
    %v1620 = vpow.pop %v1619
    %v1621 = vadd.f32 %v1620, 1.0
    %v1622 = vrcp.pop %v1621
    %v1623 = vmul.f32 1.0, %v1622
    %v1624 = vtanh.pop %v1617
    %1626 = vrot.lane.b32.xlu0 %v1541, 32
    %v1627 = vpop.permute.xlu0 %1626
    %v1629 = vmul.f32 %v1623, %v1627
    %1631 = vrot.lane.b32.xlu0 %v1624, 64
    %v1632 = vpop.permute.xlu0 %1631
    %v1634 = vmul.f32 %v1623, %v1632
    %1636 = vrot.lane.b32.xlu0 %v1634, 32
    %v1637 = vpop.permute.xlu0 %1636
    %v1639 = vadd.f32 %v1629, %v1637
    %v1640 = vtanh.pop %v1639
    %1642 = vrot.lane.b32.xlu0 %v1640, 64
    %v1643 = vpop.permute.xlu0 %1642
    %v1645 = vmul.f32 %v1623, %v1643
    %1647 = vrot.lane.b32.xlu0 %v1639, 96
    %v1648 = vpop.permute.xlu0 %1647
    %1650 = vst.msk [vmem:[%s1190] sm:$0xff] %vm79, %v1648
    %1652 = vrot.lane.b32.xlu0 %v1645, 32
    %v1653 = vpop.permute.xlu0 %1652
    %1655 = vst.msk [vmem:[%s1188] sm:$0xff] %vm79, %v1653
    %1656 = vst.msk [vmem:[%s545] sm:$0xff] %vm79, %v1653
    %v1657 = vld [vmem:[%s1188] sm:$0xff]
    %v1658 = vld [vmem:[%s1190] sm:$0xff]
    %s1659 = scalar_lea.vmem [#allocation5], 32
    %v1660 = vld [vmem:[%s1659] sm:$0xff]
    %v1662 = vsel %vm79, %v1657, 0
    %1664 = vmatprep.subr.mxu0 0.0
    %1665 = vmatpush1.msra.mxu0 %v1184
    %1666 = vmatprep.subr.mxu0 0.0
    %1667 = vmatpush1.msra.mxu0 %v1185
    %1668 = vmatprep.subr.mxu0 0.0
    %1669 = vmatpush1.msra.mxu0 %v1186
    %1670 = vmatprep.subr.mxu0 0.0
    %1671 = vmatpush1.msra.mxu0 %v1187
    %1672 = vmatprep.subr.mxu0 0.0
    %1673 = vmatpush1.msra.mxu0 0.0
    %1674 = vmatprep.subr.mxu0 0.0
    %1675 = vmatpush1.msra.mxu0 0.0
    %1676 = vmatprep.subr.mxu0 0.0
    %1677 = vmatpush1.msra.mxu0 0.0
    %1678 = vmatprep.subr.mxu0 0.0
    %1679 = vmatpush1.msra.mxu0 0.0
    %1680 = vmatprep.subr.mxu0 0.0
    %1681 = vmatpush1.msra.mxu0 0.0
    %1682 = vmatprep.subr.mxu0 0.0
    %1683 = vmatpush1.msra.mxu0 0.0
    %1684 = vmatprep.subr.mxu0 0.0
    %1685 = vmatpush1.msra.mxu0 0.0
    %1686 = vmatprep.subr.mxu0 0.0
    %1687 = vmatpush1.msra.mxu0 0.0
    %1688 = vmatprep.subr.mxu0 0.0
    %1689 = vmatpush1.msra.mxu0 0.0
    %1690 = vmatprep.subr.mxu0 0.0
    %1691 = vmatpush1.msra.mxu0 0.0
    %1692 = vmatprep.subr.mxu0 0.0
    %1693 = vmatpush1.msra.mxu0 0.0
    %1694 = vmatprep.subr.mxu0 0.0
    %1695 = vmatpush1.msra.mxu0 0.0
    %1696 = vmatprep.subr.mxu0 0.0
    %1697 = vmatpush1.msra.mxu0 0.0
    %1698 = vmatprep.subr.mxu0 0.0
    %1699 = vmatpush1.msra.mxu0 0.0
    %1700 = vmatprep.subr.mxu0 0.0
    %1701 = vmatpush1.msra.mxu0 0.0
    %1702 = vmatprep.subr.mxu0 0.0
    %1703 = vmatpush1.msra.mxu0 0.0
    %1704 = vmatprep.subr.mxu0 0.0
    %1705 = vmatpush1.msra.mxu0 0.0
    %1706 = vmatprep.subr.mxu0 0.0
    %1707 = vmatpush1.msra.mxu0 0.0
    %1708 = vmatprep.subr.mxu0 0.0
    %1709 = vmatpush1.msra.mxu0 0.0
    %1710 = vmatprep.subr.mxu0 0.0
    %1711 = vmatpush1.msra.mxu0 0.0
    %1712 = vmatprep.subr.mxu0 0.0
    %1713 = vmatpush1.msra.mxu0 0.0
    %1714 = vmatprep.subr.mxu0 0.0
    %1715 = vmatpush1.msra.mxu0 0.0
    %1716 = vmatprep.subr.mxu0 0.0
    %1717 = vmatpush1.msra.mxu0 0.0
    %1718 = vmatprep.subr.mxu0 0.0
    %1719 = vmatpush1.msra.mxu0 0.0
    %1720 = vmatprep.subr.mxu0 0.0
    %1721 = vmatpush1.msra.mxu0 0.0
    %1722 = vmatprep.subr.mxu0 0.0
    %1723 = vmatpush1.msra.mxu0 0.0
    %1724 = vmatprep.subr.mxu0 0.0
    %1725 = vmatpush1.msra.mxu0 0.0
    %1726 = vmatprep.subr.mxu0 0.0
    %1727 = vmatpush1.msra.mxu0 0.0
    %1728 = vmatprep.mubr.f32.mxu0 0.0
    %1729 = vmatmul.mubr.f32.gmra.mrb[0].mxu0 %v1662
    %v1730 = vpop.f32.mrb[0].mxu0
    %v1731 = vadd.f32 0.0, %v1730
    %v1732 = vpop.f32.mrb[0].mxu0
    %1733 = vdwg.mxu0
    %v1734 = vadd.f32 %v1660, %v1731
    %v1735 = vxor.u32 %v1734, 2147483648
    %v1736 = vmul.f32 %v1735, 1.442695
    %v1737 = vpow.pop %v1736
    %v1738 = vadd.f32 %v1737, 1.0
    %v1739 = vrcp.pop %v1738
    %v1740 = vmul.f32 1.0, %v1739
    %v1741 = vtanh.pop %v1734
    %1743 = vrot.lane.b32.xlu0 %v1658, 32
    %v1744 = vpop.permute.xlu0 %1743
    %v1746 = vmul.f32 %v1740, %v1744
    %1748 = vrot.lane.b32.xlu0 %v1741, 64
    %v1749 = vpop.permute.xlu0 %1748
    %v1751 = vmul.f32 %v1740, %v1749
    %1753 = vrot.lane.b32.xlu0 %v1751, 32
    %v1754 = vpop.permute.xlu0 %1753
    %v1756 = vadd.f32 %v1746, %v1754
    %v1757 = vtanh.pop %v1756
    %1759 = vrot.lane.b32.xlu0 %v1757, 64
    %v1760 = vpop.permute.xlu0 %1759
    %v1762 = vmul.f32 %v1740, %v1760
    %1764 = vrot.lane.b32.xlu0 %v1756, 96
    %v1765 = vpop.permute.xlu0 %1764
    %1767 = vst.msk [vmem:[%s1190] sm:$0xff] %vm79, %v1765
    %1769 = vrot.lane.b32.xlu0 %v1762, 32
    %v1770 = vpop.permute.xlu0 %1769
    %1772 = vst.msk [vmem:[%s1188] sm:$0xff] %vm79, %v1770
    %1773 = vst.msk [vmem:[%s663] sm:$0xff] %vm79, %v1770
    %v1774 = vld [vmem:[%s1188] sm:$0xff]
    %v1775 = vld [vmem:[%s1190] sm:$0xff]
    %s1776 = scalar_lea.vmem [#allocation5], 40
    %v1777 = vld [vmem:[%s1776] sm:$0xff]
    %v1779 = vsel %vm79, %v1774, 0
    %1781 = vmatprep.subr.mxu0 0.0
    %1782 = vmatpush1.msra.mxu0 %v1184
    %1783 = vmatprep.subr.mxu0 0.0
    %1784 = vmatpush1.msra.mxu0 %v1185
    %1785 = vmatprep.subr.mxu0 0.0
    %1786 = vmatpush1.msra.mxu0 %v1186
    %1787 = vmatprep.subr.mxu0 0.0
    %1788 = vmatpush1.msra.mxu0 %v1187
    %1789 = vmatprep.subr.mxu0 0.0
    %1790 = vmatpush1.msra.mxu0 0.0
    %1791 = vmatprep.subr.mxu0 0.0
    %1792 = vmatpush1.msra.mxu0 0.0
    %1793 = vmatprep.subr.mxu0 0.0
    %1794 = vmatpush1.msra.mxu0 0.0
    %1795 = vmatprep.subr.mxu0 0.0
    %1796 = vmatpush1.msra.mxu0 0.0
    %1797 = vmatprep.subr.mxu0 0.0
    %1798 = vmatpush1.msra.mxu0 0.0
    %1799 = vmatprep.subr.mxu0 0.0
    %1800 = vmatpush1.msra.mxu0 0.0
    %1801 = vmatprep.subr.mxu0 0.0
    %1802 = vmatpush1.msra.mxu0 0.0
    %1803 = vmatprep.subr.mxu0 0.0
    %1804 = vmatpush1.msra.mxu0 0.0
    %1805 = vmatprep.subr.mxu0 0.0
    %1806 = vmatpush1.msra.mxu0 0.0
    %1807 = vmatprep.subr.mxu0 0.0
    %1808 = vmatpush1.msra.mxu0 0.0
    %1809 = vmatprep.subr.mxu0 0.0
    %1810 = vmatpush1.msra.mxu0 0.0
    %1811 = vmatprep.subr.mxu0 0.0
    %1812 = vmatpush1.msra.mxu0 0.0
    %1813 = vmatprep.subr.mxu0 0.0
    %1814 = vmatpush1.msra.mxu0 0.0
    %1815 = vmatprep.subr.mxu0 0.0
    %1816 = vmatpush1.msra.mxu0 0.0
    %1817 = vmatprep.subr.mxu0 0.0
    %1818 = vmatpush1.msra.mxu0 0.0
    %1819 = vmatprep.subr.mxu0 0.0
    %1820 = vmatpush1.msra.mxu0 0.0
    %1821 = vmatprep.subr.mxu0 0.0
    %1822 = vmatpush1.msra.mxu0 0.0
    %1823 = vmatprep.subr.mxu0 0.0
    %1824 = vmatpush1.msra.mxu0 0.0
    %1825 = vmatprep.subr.mxu0 0.0
    %1826 = vmatpush1.msra.mxu0 0.0
    %1827 = vmatprep.subr.mxu0 0.0
    %1828 = vmatpush1.msra.mxu0 0.0
    %1829 = vmatprep.subr.mxu0 0.0
    %1830 = vmatpush1.msra.mxu0 0.0
    %1831 = vmatprep.subr.mxu0 0.0
    %1832 = vmatpush1.msra.mxu0 0.0
    %1833 = vmatprep.subr.mxu0 0.0
    %1834 = vmatpush1.msra.mxu0 0.0
    %1835 = vmatprep.subr.mxu0 0.0
    %1836 = vmatpush1.msra.mxu0 0.0
    %1837 = vmatprep.subr.mxu0 0.0
    %1838 = vmatpush1.msra.mxu0 0.0
    %1839 = vmatprep.subr.mxu0 0.0
    %1840 = vmatpush1.msra.mxu0 0.0
    %1841 = vmatprep.subr.mxu0 0.0
    %1842 = vmatpush1.msra.mxu0 0.0
    %1843 = vmatprep.subr.mxu0 0.0
    %1844 = vmatpush1.msra.mxu0 0.0
    %1845 = vmatprep.mubr.f32.mxu0 0.0
    %1846 = vmatmul.mubr.f32.gmra.mrb[0].mxu0 %v1779
    %v1847 = vpop.f32.mrb[0].mxu0
    %v1848 = vadd.f32 0.0, %v1847
    %v1849 = vpop.f32.mrb[0].mxu0
    %1850 = vdwg.mxu0
    %v1851 = vadd.f32 %v1777, %v1848
    %v1852 = vxor.u32 %v1851, 2147483648
    %v1853 = vmul.f32 %v1852, 1.442695
    %v1854 = vpow.pop %v1853
    %v1855 = vadd.f32 %v1854, 1.0
    %v1856 = vrcp.pop %v1855
    %v1857 = vmul.f32 1.0, %v1856
    %v1858 = vtanh.pop %v1851
    %1860 = vrot.lane.b32.xlu0 %v1775, 32
    %v1861 = vpop.permute.xlu0 %1860
    %v1863 = vmul.f32 %v1857, %v1861
    %1865 = vrot.lane.b32.xlu0 %v1858, 64
    %v1866 = vpop.permute.xlu0 %1865
    %v1868 = vmul.f32 %v1857, %v1866
    %1870 = vrot.lane.b32.xlu0 %v1868, 32
    %v1871 = vpop.permute.xlu0 %1870
    %v1873 = vadd.f32 %v1863, %v1871
    %v1874 = vtanh.pop %v1873
    %1876 = vrot.lane.b32.xlu0 %v1874, 64
    %v1877 = vpop.permute.xlu0 %1876
    %v1879 = vmul.f32 %v1857, %v1877
    %1881 = vrot.lane.b32.xlu0 %v1873, 96
    %v1882 = vpop.permute.xlu0 %1881
    %1884 = vst.msk [vmem:[%s1190] sm:$0xff] %vm79, %v1882
    %1886 = vrot.lane.b32.xlu0 %v1879, 32
    %v1887 = vpop.permute.xlu0 %1886
    %1889 = vst.msk [vmem:[%s1188] sm:$0xff] %vm79, %v1887
    %1890 = vst.msk [vmem:[%s781] sm:$0xff] %vm79, %v1887
    %v1891 = vld [vmem:[%s1188] sm:$0xff]
    %v1892 = vld [vmem:[%s1190] sm:$0xff]
    %s1893 = scalar_lea.vmem [#allocation5], 48
    %v1894 = vld [vmem:[%s1893] sm:$0xff]
    %v1896 = vsel %vm79, %v1891, 0
    %1898 = vmatprep.subr.mxu0 0.0
    %1899 = vmatpush1.msra.mxu0 %v1184
    %1900 = vmatprep.subr.mxu0 0.0
    %1901 = vmatpush1.msra.mxu0 %v1185
    %1902 = vmatprep.subr.mxu0 0.0
    %1903 = vmatpush1.msra.mxu0 %v1186
    %1904 = vmatprep.subr.mxu0 0.0
    %1905 = vmatpush1.msra.mxu0 %v1187
    %1906 = vmatprep.subr.mxu0 0.0
    %1907 = vmatpush1.msra.mxu0 0.0
    %1908 = vmatprep.subr.mxu0 0.0
    %1909 = vmatpush1.msra.mxu0 0.0
    %1910 = vmatprep.subr.mxu0 0.0
    %1911 = vmatpush1.msra.mxu0 0.0
    %1912 = vmatprep.subr.mxu0 0.0
    %1913 = vmatpush1.msra.mxu0 0.0
    %1914 = vmatprep.subr.mxu0 0.0
    %1915 = vmatpush1.msra.mxu0 0.0
    %1916 = vmatprep.subr.mxu0 0.0
    %1917 = vmatpush1.msra.mxu0 0.0
    %1918 = vmatprep.subr.mxu0 0.0
    %1919 = vmatpush1.msra.mxu0 0.0
    %1920 = vmatprep.subr.mxu0 0.0
    %1921 = vmatpush1.msra.mxu0 0.0
    %1922 = vmatprep.subr.mxu0 0.0
    %1923 = vmatpush1.msra.mxu0 0.0
    %1924 = vmatprep.subr.mxu0 0.0
    %1925 = vmatpush1.msra.mxu0 0.0
    %1926 = vmatprep.subr.mxu0 0.0
    %1927 = vmatpush1.msra.mxu0 0.0
    %1928 = vmatprep.subr.mxu0 0.0
    %1929 = vmatpush1.msra.mxu0 0.0
    %1930 = vmatprep.subr.mxu0 0.0
    %1931 = vmatpush1.msra.mxu0 0.0
    %1932 = vmatprep.subr.mxu0 0.0
    %1933 = vmatpush1.msra.mxu0 0.0
    %1934 = vmatprep.subr.mxu0 0.0
    %1935 = vmatpush1.msra.mxu0 0.0
    %1936 = vmatprep.subr.mxu0 0.0
    %1937 = vmatpush1.msra.mxu0 0.0
    %1938 = vmatprep.subr.mxu0 0.0
    %1939 = vmatpush1.msra.mxu0 0.0
    %1940 = vmatprep.subr.mxu0 0.0
    %1941 = vmatpush1.msra.mxu0 0.0
    %1942 = vmatprep.subr.mxu0 0.0
    %1943 = vmatpush1.msra.mxu0 0.0
    %1944 = vmatprep.subr.mxu0 0.0
    %1945 = vmatpush1.msra.mxu0 0.0
    %1946 = vmatprep.subr.mxu0 0.0
    %1947 = vmatpush1.msra.mxu0 0.0
    %1948 = vmatprep.subr.mxu0 0.0
    %1949 = vmatpush1.msra.mxu0 0.0
    %1950 = vmatprep.subr.mxu0 0.0
    %1951 = vmatpush1.msra.mxu0 0.0
    %1952 = vmatprep.subr.mxu0 0.0
    %1953 = vmatpush1.msra.mxu0 0.0
    %1954 = vmatprep.subr.mxu0 0.0
    %1955 = vmatpush1.msra.mxu0 0.0
    %1956 = vmatprep.subr.mxu0 0.0
    %1957 = vmatpush1.msra.mxu0 0.0
    %1958 = vmatprep.subr.mxu0 0.0
    %1959 = vmatpush1.msra.mxu0 0.0
    %1960 = vmatprep.subr.mxu0 0.0
    %1961 = vmatpush1.msra.mxu0 0.0
    %1962 = vmatprep.mubr.f32.mxu0 0.0
    %1963 = vmatmul.mubr.f32.gmra.mrb[0].mxu0 %v1896
    %v1964 = vpop.f32.mrb[0].mxu0
    %v1965 = vadd.f32 0.0, %v1964
    %v1966 = vpop.f32.mrb[0].mxu0
    %1967 = vdwg.mxu0
    %v1968 = vadd.f32 %v1894, %v1965
    %v1969 = vxor.u32 %v1968, 2147483648
    %v1970 = vmul.f32 %v1969, 1.442695
    %v1971 = vpow.pop %v1970
    %v1972 = vadd.f32 %v1971, 1.0
    %v1973 = vrcp.pop %v1972
    %v1974 = vmul.f32 1.0, %v1973
    %v1975 = vtanh.pop %v1968
    %1977 = vrot.lane.b32.xlu0 %v1892, 32
    %v1978 = vpop.permute.xlu0 %1977
    %v1980 = vmul.f32 %v1974, %v1978
    %1982 = vrot.lane.b32.xlu0 %v1975, 64
    %v1983 = vpop.permute.xlu0 %1982
    %v1985 = vmul.f32 %v1974, %v1983
    %1987 = vrot.lane.b32.xlu0 %v1985, 32
    %v1988 = vpop.permute.xlu0 %1987
    %v1990 = vadd.f32 %v1980, %v1988
    %v1991 = vtanh.pop %v1990
    %1993 = vrot.lane.b32.xlu0 %v1991, 64
    %v1994 = vpop.permute.xlu0 %1993
    %v1996 = vmul.f32 %v1974, %v1994
    %1998 = vrot.lane.b32.xlu0 %v1990, 96
    %v1999 = vpop.permute.xlu0 %1998
    %2001 = vst.msk [vmem:[%s1190] sm:$0xff] %vm79, %v1999
    %2003 = vrot.lane.b32.xlu0 %v1996, 32
    %v2004 = vpop.permute.xlu0 %2003
    %2006 = vst.msk [vmem:[%s1188] sm:$0xff] %vm79, %v2004
    %2007 = vst.msk [vmem:[%s899] sm:$0xff] %vm79, %v2004
    %v2008 = vld [vmem:[%s1188] sm:$0xff]
    %v2009 = vld [vmem:[%s1190] sm:$0xff]
    %s2010 = scalar_lea.vmem [#allocation5], 56
    %v2011 = vld [vmem:[%s2010] sm:$0xff]
    %v2013 = vsel %vm79, %v2008, 0
    %2015 = vmatprep.subr.mxu0 0.0
    %2016 = vmatpush1.msra.mxu0 %v1184
    %2017 = vmatprep.subr.mxu0 0.0
    %2018 = vmatpush1.msra.mxu0 %v1185
    %2019 = vmatprep.subr.mxu0 0.0
    %2020 = vmatpush1.msra.mxu0 %v1186
    %2021 = vmatprep.subr.mxu0 0.0
    %2022 = vmatpush1.msra.mxu0 %v1187
    %2023 = vmatprep.subr.mxu0 0.0
    %2024 = vmatpush1.msra.mxu0 0.0
    %2025 = vmatprep.subr.mxu0 0.0
    %2026 = vmatpush1.msra.mxu0 0.0
    %2027 = vmatprep.subr.mxu0 0.0
    %2028 = vmatpush1.msra.mxu0 0.0
    %2029 = vmatprep.subr.mxu0 0.0
    %2030 = vmatpush1.msra.mxu0 0.0
    %2031 = vmatprep.subr.mxu0 0.0
    %2032 = vmatpush1.msra.mxu0 0.0
    %2033 = vmatprep.subr.mxu0 0.0
    %2034 = vmatpush1.msra.mxu0 0.0
    %2035 = vmatprep.subr.mxu0 0.0
    %2036 = vmatpush1.msra.mxu0 0.0
    %2037 = vmatprep.subr.mxu0 0.0
    %2038 = vmatpush1.msra.mxu0 0.0
    %2039 = vmatprep.subr.mxu0 0.0
    %2040 = vmatpush1.msra.mxu0 0.0
    %2041 = vmatprep.subr.mxu0 0.0
    %2042 = vmatpush1.msra.mxu0 0.0
    %2043 = vmatprep.subr.mxu0 0.0
    %2044 = vmatpush1.msra.mxu0 0.0
    %2045 = vmatprep.subr.mxu0 0.0
    %2046 = vmatpush1.msra.mxu0 0.0
    %2047 = vmatprep.subr.mxu0 0.0
    %2048 = vmatpush1.msra.mxu0 0.0
    %2049 = vmatprep.subr.mxu0 0.0
    %2050 = vmatpush1.msra.mxu0 0.0
    %2051 = vmatprep.subr.mxu0 0.0
    %2052 = vmatpush1.msra.mxu0 0.0
    %2053 = vmatprep.subr.mxu0 0.0
    %2054 = vmatpush1.msra.mxu0 0.0
    %2055 = vmatprep.subr.mxu0 0.0
    %2056 = vmatpush1.msra.mxu0 0.0
    %2057 = vmatprep.subr.mxu0 0.0
    %2058 = vmatpush1.msra.mxu0 0.0
    %2059 = vmatprep.subr.mxu0 0.0
    %2060 = vmatpush1.msra.mxu0 0.0
    %2061 = vmatprep.subr.mxu0 0.0
    %2062 = vmatpush1.msra.mxu0 0.0
    %2063 = vmatprep.subr.mxu0 0.0
    %2064 = vmatpush1.msra.mxu0 0.0
    %2065 = vmatprep.subr.mxu0 0.0
    %2066 = vmatpush1.msra.mxu0 0.0
    %2067 = vmatprep.subr.mxu0 0.0
    %2068 = vmatpush1.msra.mxu0 0.0
    %2069 = vmatprep.subr.mxu0 0.0
    %2070 = vmatpush1.msra.mxu0 0.0
    %2071 = vmatprep.subr.mxu0 0.0
    %2072 = vmatpush1.msra.mxu0 0.0
    %2073 = vmatprep.subr.mxu0 0.0
    %2074 = vmatpush1.msra.mxu0 0.0
    %2075 = vmatprep.subr.mxu0 0.0
    %2076 = vmatpush1.msra.mxu0 0.0
    %2077 = vmatprep.subr.mxu0 0.0
    %2078 = vmatpush1.msra.mxu0 0.0
    %2079 = vmatprep.mubr.f32.mxu0 0.0
    %2080 = vmatmul.mubr.f32.gmra.mrb[0].mxu0 %v2013
    %v2081 = vpop.f32.mrb[0].mxu0
    %v2082 = vadd.f32 0.0, %v2081
    %v2083 = vpop.f32.mrb[0].mxu0
    %2084 = vdwg.mxu0
    %v2085 = vadd.f32 %v2011, %v2082
    %v2086 = vxor.u32 %v2085, 2147483648
    %v2087 = vmul.f32 %v2086, 1.442695
    %v2088 = vpow.pop %v2087
    %v2089 = vadd.f32 %v2088, 1.0
    %v2090 = vrcp.pop %v2089
    %v2091 = vmul.f32 1.0, %v2090
    %v2092 = vtanh.pop %v2085
    %2094 = vrot.lane.b32.xlu0 %v2009, 32
    %v2095 = vpop.permute.xlu0 %2094
    %v2097 = vmul.f32 %v2091, %v2095
    %2099 = vrot.lane.b32.xlu0 %v2092, 64
    %v2100 = vpop.permute.xlu0 %2099
    %v2102 = vmul.f32 %v2091, %v2100
    %2104 = vrot.lane.b32.xlu0 %v2102, 32
    %v2105 = vpop.permute.xlu0 %2104
    %v2107 = vadd.f32 %v2097, %v2105
    %v2108 = vtanh.pop %v2107
    %2110 = vrot.lane.b32.xlu0 %v2108, 64
    %v2111 = vpop.permute.xlu0 %2110
    %v2113 = vmul.f32 %v2091, %v2111
    %2115 = vrot.lane.b32.xlu0 %v2107, 96
    %v2116 = vpop.permute.xlu0 %2115
    %2118 = vst.msk [vmem:[%s1190] sm:$0xff] %vm79, %v2116
    %2120 = vrot.lane.b32.xlu0 %v2113, 32
    %v2121 = vpop.permute.xlu0 %2120
    %2123 = vst.msk [vmem:[%s1188] sm:$0xff] %vm79, %v2121
    %2124 = vst.msk [vmem:[%s1017] sm:$0xff] %vm79, %v2121
    %v2125 = vld [vmem:[#allocation4] sm:$0xff]
    %v2126 = vld [vmem:[#allocation4 + $0x8] sm:$0xff]
    %v2127 = vld [vmem:[#allocation4 + $0x10] sm:$0xff]
    %v2128 = vld [vmem:[#allocation4 + $0x18] sm:$0xff]
    %v2129 = vld [vmem:[#allocation4 + $0x20] sm:$0xff]
    %v2130 = vld [vmem:[#allocation4 + $0x28] sm:$0xff]
    %v2131 = vld [vmem:[#allocation4 + $0x30] sm:$0xff]
    %v2132 = vld [vmem:[#allocation4 + $0x38] sm:$0xff]
    %s2133 = scalar_lea.vmem [#allocation9], 32
    %v2134 = vld [vmem:[%s2133] sm:$0xff]
    %v2135 = vld [vmem:[%s2133 + $0x8] sm:$0xff]
    %v2136 = vld [vmem:[%s2133 + $0x10] sm:$0xff]
    %v2137 = vld [vmem:[%s2133 + $0x18] sm:$0xff]
    %v2139 = vsel %vm79, %v2125, 0
    %v2142 = vsel %vm79, %v2126, 0
    %v2145 = vsel %vm79, %v2127, 0
    %v2148 = vsel %vm79, %v2128, 0
    %v2151 = vsel %vm79, %v2129, 0
    %v2154 = vsel %vm79, %v2130, 0
    %v2157 = vsel %vm79, %v2131, 0
    %v2160 = vsel %vm79, %v2132, 0
    %2162 = vmatprep.subr.mxu0 0.0
    %2163 = vmatpush1.msra.mxu0 %v2134
    %2164 = vmatprep.subr.mxu0 0.0
    %2165 = vmatpush1.msra.mxu0 %v2135
    %2166 = vmatprep.subr.mxu0 0.0
    %2167 = vmatpush1.msra.mxu0 %v2136
    %2168 = vmatprep.subr.mxu0 0.0
    %2169 = vmatpush1.msra.mxu0 %v2137
    %2170 = vmatprep.subr.mxu0 0.0
    %2171 = vmatpush1.msra.mxu0 0.0
    %2172 = vmatprep.subr.mxu0 0.0
    %2173 = vmatpush1.msra.mxu0 0.0
    %2174 = vmatprep.subr.mxu0 0.0
    %2175 = vmatpush1.msra.mxu0 0.0
    %2176 = vmatprep.subr.mxu0 0.0
    %2177 = vmatpush1.msra.mxu0 0.0
    %2178 = vmatprep.subr.mxu0 0.0
    %2179 = vmatpush1.msra.mxu0 0.0
    %2180 = vmatprep.subr.mxu0 0.0
    %2181 = vmatpush1.msra.mxu0 0.0
    %2182 = vmatprep.subr.mxu0 0.0
    %2183 = vmatpush1.msra.mxu0 0.0
    %2184 = vmatprep.subr.mxu0 0.0
    %2185 = vmatpush1.msra.mxu0 0.0
    %2186 = vmatprep.subr.mxu0 0.0
    %2187 = vmatpush1.msra.mxu0 0.0
    %2188 = vmatprep.subr.mxu0 0.0
    %2189 = vmatpush1.msra.mxu0 0.0
    %2190 = vmatprep.subr.mxu0 0.0
    %2191 = vmatpush1.msra.mxu0 0.0
    %2192 = vmatprep.subr.mxu0 0.0
    %2193 = vmatpush1.msra.mxu0 0.0
    %2194 = vmatprep.subr.mxu0 0.0
    %2195 = vmatpush1.msra.mxu0 0.0
    %2196 = vmatprep.subr.mxu0 0.0
    %2197 = vmatpush1.msra.mxu0 0.0
    %2198 = vmatprep.subr.mxu0 0.0
    %2199 = vmatpush1.msra.mxu0 0.0
    %2200 = vmatprep.subr.mxu0 0.0
    %2201 = vmatpush1.msra.mxu0 0.0
    %2202 = vmatprep.subr.mxu0 0.0
    %2203 = vmatpush1.msra.mxu0 0.0
    %2204 = vmatprep.subr.mxu0 0.0
    %2205 = vmatpush1.msra.mxu0 0.0
    %2206 = vmatprep.subr.mxu0 0.0
    %2207 = vmatpush1.msra.mxu0 0.0
    %2208 = vmatprep.subr.mxu0 0.0
    %2209 = vmatpush1.msra.mxu0 0.0
    %2210 = vmatprep.subr.mxu0 0.0
    %2211 = vmatpush1.msra.mxu0 0.0
    %2212 = vmatprep.subr.mxu0 0.0
    %2213 = vmatpush1.msra.mxu0 0.0
    %2214 = vmatprep.subr.mxu0 0.0
    %2215 = vmatpush1.msra.mxu0 0.0
    %2216 = vmatprep.subr.mxu0 0.0
    %2217 = vmatpush1.msra.mxu0 0.0
    %2218 = vmatprep.subr.mxu0 0.0
    %2219 = vmatpush1.msra.mxu0 0.0
    %2220 = vmatprep.subr.mxu0 0.0
    %2221 = vmatpush1.msra.mxu0 0.0
    %2222 = vmatprep.subr.mxu0 0.0
    %2223 = vmatpush1.msra.mxu0 0.0
    %2224 = vmatprep.subr.mxu0 0.0
    %2225 = vmatpush1.msra.mxu0 0.0
    %2226 = vmatprep.mubr.f32.mxu0 0.0
    %2227 = vmatmul.mubr.f32.gmra.mrb[0].mxu0 %v2139
    %v2228 = vpop.f32.mrb[0].mxu0
    %v2229 = vadd.f32 0.0, %v2228
    %v2230 = vpop.f32.mrb[0].mxu0
    %2231 = vmatprep.mubr.f32.mxu0 0.0
    %2232 = vmatmul.mubr.f32.gmra.mrb[0].mxu0 %v2142
    %v2233 = vpop.f32.mrb[0].mxu0
    %v2234 = vadd.f32 0.0, %v2233
    %v2235 = vpop.f32.mrb[0].mxu0
    %2236 = vmatprep.mubr.f32.mxu0 0.0
    %2237 = vmatmul.mubr.f32.gmra.mrb[0].mxu0 %v2145
    %v2238 = vpop.f32.mrb[0].mxu0
    %v2239 = vadd.f32 0.0, %v2238
    %v2240 = vpop.f32.mrb[0].mxu0
    %2241 = vmatprep.mubr.f32.mxu0 0.0
    %2242 = vmatmul.mubr.f32.gmra.mrb[0].mxu0 %v2148
    %v2243 = vpop.f32.mrb[0].mxu0
    %v2244 = vadd.f32 0.0, %v2243
    %v2245 = vpop.f32.mrb[0].mxu0
    %2246 = vmatprep.mubr.f32.mxu0 0.0
    %2247 = vmatmul.mubr.f32.gmra.mrb[0].mxu0 %v2151
    %v2248 = vpop.f32.mrb[0].mxu0
    %v2249 = vadd.f32 0.0, %v2248
    %v2250 = vpop.f32.mrb[0].mxu0
    %2251 = vmatprep.mubr.f32.mxu0 0.0
    %2252 = vmatmul.mubr.f32.gmra.mrb[0].mxu0 %v2154
    %v2253 = vpop.f32.mrb[0].mxu0
    %v2254 = vadd.f32 0.0, %v2253
    %v2255 = vpop.f32.mrb[0].mxu0
    %2256 = vmatprep.mubr.f32.mxu0 0.0
    %2257 = vmatmul.mubr.f32.gmra.mrb[0].mxu0 %v2157
    %v2258 = vpop.f32.mrb[0].mxu0
    %v2259 = vadd.f32 0.0, %v2258
    %v2260 = vpop.f32.mrb[0].mxu0
    %2261 = vmatprep.mubr.f32.mxu0 0.0
    %2262 = vmatmul.mubr.f32.gmra.mrb[0].mxu0 %v2160
    %v2263 = vpop.f32.mrb[0].mxu0
    %v2264 = vadd.f32 0.0, %v2263
    %v2265 = vpop.f32.mrb[0].mxu0
    %2266 = vdwg.mxu0
    %s2267 = scalar_lea.vmem %s3, 1
    %v2268 = vld [vmem:[%s2267] sm:$0x1]
    %v2270 = vlaneseq
    %v2271 = vshrl.u32 %v2270, 7
    %v2272 = vsub.s32 0, %v2271
    %v2273 = vrot.slane %v2268, %v2272
    %v2275 = vadd.f32 %v2229, %v2273
    %v2276 = vadd.f32 %v2234, %v2273
    %v2277 = vadd.f32 %v2239, %v2273
    %v2278 = vadd.f32 %v2244, %v2273
    %v2279 = vadd.f32 %v2249, %v2273
    %v2280 = vadd.f32 %v2254, %v2273
    %v2281 = vadd.f32 %v2259, %v2273
    %v2282 = vadd.f32 %v2264, %v2273
    %2283 = vst [vmem:[#allocation5] sm:$0xff] %v2275
    %2284 = vst [vmem:[#allocation5 + $0x8] sm:$0xff] %v2276
    %2285 = vst [vmem:[#allocation5 + $0x10] sm:$0xff] %v2277
    %2286 = vst [vmem:[#allocation5 + $0x18] sm:$0xff] %v2278
    %2287 = vst [vmem:[#allocation5 + $0x20] sm:$0xff] %v2279
    %2288 = vst [vmem:[#allocation5 + $0x28] sm:$0xff] %v2280
    %2289 = vst [vmem:[#allocation5 + $0x30] sm:$0xff] %v2281
    %2290 = vst [vmem:[#allocation5 + $0x38] sm:$0xff] %v2282
    %s2291 = scalar_lea.vmem [#allocation11], 64
    %v2292 = vld [vmem:[%s2291] sm:$0xff]
    %v2293 = vld [vmem:[%s2291 + $0x8] sm:$0xff]
    %v2294 = vld [vmem:[%s2291 + $0x10] sm:$0xff]
    %v2295 = vld [vmem:[%s2291 + $0x18] sm:$0xff]
    %s2296 = scalar_lea.vmem [#allocation2], 16
    %v2297 = vld [vmem:[%s2296] sm:$0xff]
    %s2298 = scalar_lea.vmem [#allocation3], 16
    %v2299 = vld [vmem:[%s2298] sm:$0xff]
    %v2300 = vld [vmem:[#allocation5] sm:$0xff]
    %v2302 = vsel %vm79, %v2297, 0
    %2304 = vmatprep.subr.mxu0 0.0
    %2305 = vmatpush1.msra.mxu0 %v2292
    %2306 = vmatprep.subr.mxu0 0.0
    %2307 = vmatpush1.msra.mxu0 %v2293
    %2308 = vmatprep.subr.mxu0 0.0
    %2309 = vmatpush1.msra.mxu0 %v2294
    %2310 = vmatprep.subr.mxu0 0.0
    %2311 = vmatpush1.msra.mxu0 %v2295
    %2312 = vmatprep.subr.mxu0 0.0
    %2313 = vmatpush1.msra.mxu0 0.0
    %2314 = vmatprep.subr.mxu0 0.0
    %2315 = vmatpush1.msra.mxu0 0.0
    %2316 = vmatprep.subr.mxu0 0.0
    %2317 = vmatpush1.msra.mxu0 0.0
    %2318 = vmatprep.subr.mxu0 0.0
    %2319 = vmatpush1.msra.mxu0 0.0
    %2320 = vmatprep.subr.mxu0 0.0
    %2321 = vmatpush1.msra.mxu0 0.0
    %2322 = vmatprep.subr.mxu0 0.0
    %2323 = vmatpush1.msra.mxu0 0.0
    %2324 = vmatprep.subr.mxu0 0.0
    %2325 = vmatpush1.msra.mxu0 0.0
    %2326 = vmatprep.subr.mxu0 0.0
    %2327 = vmatpush1.msra.mxu0 0.0
    %2328 = vmatprep.subr.mxu0 0.0
    %2329 = vmatpush1.msra.mxu0 0.0
    %2330 = vmatprep.subr.mxu0 0.0
    %2331 = vmatpush1.msra.mxu0 0.0
    %2332 = vmatprep.subr.mxu0 0.0
    %2333 = vmatpush1.msra.mxu0 0.0
    %2334 = vmatprep.subr.mxu0 0.0
    %2335 = vmatpush1.msra.mxu0 0.0
    %2336 = vmatprep.subr.mxu0 0.0
    %2337 = vmatpush1.msra.mxu0 0.0
    %2338 = vmatprep.subr.mxu0 0.0
    %2339 = vmatpush1.msra.mxu0 0.0
    %2340 = vmatprep.subr.mxu0 0.0
    %2341 = vmatpush1.msra.mxu0 0.0
    %2342 = vmatprep.subr.mxu0 0.0
    %2343 = vmatpush1.msra.mxu0 0.0
    %2344 = vmatprep.subr.mxu0 0.0
    %2345 = vmatpush1.msra.mxu0 0.0
    %2346 = vmatprep.subr.mxu0 0.0
    %2347 = vmatpush1.msra.mxu0 0.0
    %2348 = vmatprep.subr.mxu0 0.0
    %2349 = vmatpush1.msra.mxu0 0.0
    %2350 = vmatprep.subr.mxu0 0.0
    %2351 = vmatpush1.msra.mxu0 0.0
    %2352 = vmatprep.subr.mxu0 0.0
    %2353 = vmatpush1.msra.mxu0 0.0
    %2354 = vmatprep.subr.mxu0 0.0
    %2355 = vmatpush1.msra.mxu0 0.0
    %2356 = vmatprep.subr.mxu0 0.0
    %2357 = vmatpush1.msra.mxu0 0.0
    %2358 = vmatprep.subr.mxu0 0.0
    %2359 = vmatpush1.msra.mxu0 0.0
    %2360 = vmatprep.subr.mxu0 0.0
    %2361 = vmatpush1.msra.mxu0 0.0
    %2362 = vmatprep.subr.mxu0 0.0
    %2363 = vmatpush1.msra.mxu0 0.0
    %2364 = vmatprep.subr.mxu0 0.0
    %2365 = vmatpush1.msra.mxu0 0.0
    %2366 = vmatprep.subr.mxu0 0.0
    %2367 = vmatpush1.msra.mxu0 0.0
    %2368 = vmatprep.mubr.f32.mxu0 0.0
    %2369 = vmatmul.mubr.f32.gmra.mrb[0].mxu0 %v2302
    %v2370 = vpop.f32.mrb[0].mxu0
    %v2371 = vadd.f32 0.0, %v2370
    %v2372 = vpop.f32.mrb[0].mxu0
    %2373 = vdwg.mxu0
    %v2374 = vadd.f32 %v2300, %v2371
    %v2375 = vxor.u32 %v2374, 2147483648
    %v2376 = vmul.f32 %v2375, 1.442695
    %v2377 = vpow.pop %v2376
    %v2378 = vadd.f32 %v2377, 1.0
    %v2379 = vrcp.pop %v2378
    %v2380 = vmul.f32 1.0, %v2379
    %v2381 = vtanh.pop %v2374
    %2383 = vrot.lane.b32.xlu0 %v2299, 32
    %v2384 = vpop.permute.xlu0 %2383
    %v2386 = vmul.f32 %v2380, %v2384
    %2388 = vrot.lane.b32.xlu0 %v2381, 64
    %v2389 = vpop.permute.xlu0 %2388
    %v2391 = vmul.f32 %v2380, %v2389
    %2393 = vrot.lane.b32.xlu0 %v2391, 32
    %v2394 = vpop.permute.xlu0 %2393
    %v2396 = vadd.f32 %v2386, %v2394
    %v2397 = vtanh.pop %v2396
    %2399 = vrot.lane.b32.xlu0 %v2397, 64
    %v2400 = vpop.permute.xlu0 %2399
    %v2402 = vmul.f32 %v2380, %v2400
    %2404 = vrot.lane.b32.xlu0 %v2396, 96
    %v2405 = vpop.permute.xlu0 %2404
    %2407 = vst.msk [vmem:[%s2298] sm:$0xff] %vm79, %v2405
    %2409 = vrot.lane.b32.xlu0 %v2402, 32
    %v2410 = vpop.permute.xlu0 %2409
    %2412 = vst.msk [vmem:[%s2296] sm:$0xff] %vm79, %v2410
    %2413 = vst.msk [vmem:[#allocation4] sm:$0xff] %vm79, %v2410
    %v2414 = vld [vmem:[%s2296] sm:$0xff]
    %v2415 = vld [vmem:[%s2298] sm:$0xff]
    %v2416 = vld [vmem:[%s1308] sm:$0xff]
    %v2418 = vsel %vm79, %v2414, 0
    %2420 = vmatprep.subr.mxu0 0.0
    %2421 = vmatpush1.msra.mxu0 %v2292
    %2422 = vmatprep.subr.mxu0 0.0
    %2423 = vmatpush1.msra.mxu0 %v2293
    %2424 = vmatprep.subr.mxu0 0.0
    %2425 = vmatpush1.msra.mxu0 %v2294
    %2426 = vmatprep.subr.mxu0 0.0
    %2427 = vmatpush1.msra.mxu0 %v2295
    %2428 = vmatprep.subr.mxu0 0.0
    %2429 = vmatpush1.msra.mxu0 0.0
    %2430 = vmatprep.subr.mxu0 0.0
    %2431 = vmatpush1.msra.mxu0 0.0
    %2432 = vmatprep.subr.mxu0 0.0
    %2433 = vmatpush1.msra.mxu0 0.0
    %2434 = vmatprep.subr.mxu0 0.0
    %2435 = vmatpush1.msra.mxu0 0.0
    %2436 = vmatprep.subr.mxu0 0.0
    %2437 = vmatpush1.msra.mxu0 0.0
    %2438 = vmatprep.subr.mxu0 0.0
    %2439 = vmatpush1.msra.mxu0 0.0
    %2440 = vmatprep.subr.mxu0 0.0
    %2441 = vmatpush1.msra.mxu0 0.0
    %2442 = vmatprep.subr.mxu0 0.0
    %2443 = vmatpush1.msra.mxu0 0.0
    %2444 = vmatprep.subr.mxu0 0.0
    %2445 = vmatpush1.msra.mxu0 0.0
    %2446 = vmatprep.subr.mxu0 0.0
    %2447 = vmatpush1.msra.mxu0 0.0
    %2448 = vmatprep.subr.mxu0 0.0
    %2449 = vmatpush1.msra.mxu0 0.0
    %2450 = vmatprep.subr.mxu0 0.0
    %2451 = vmatpush1.msra.mxu0 0.0
    %2452 = vmatprep.subr.mxu0 0.0
    %2453 = vmatpush1.msra.mxu0 0.0
    %2454 = vmatprep.subr.mxu0 0.0
    %2455 = vmatpush1.msra.mxu0 0.0
    %2456 = vmatprep.subr.mxu0 0.0
    %2457 = vmatpush1.msra.mxu0 0.0
    %2458 = vmatprep.subr.mxu0 0.0
    %2459 = vmatpush1.msra.mxu0 0.0
    %2460 = vmatprep.subr.mxu0 0.0
    %2461 = vmatpush1.msra.mxu0 0.0
    %2462 = vmatprep.subr.mxu0 0.0
    %2463 = vmatpush1.msra.mxu0 0.0
    %2464 = vmatprep.subr.mxu0 0.0
    %2465 = vmatpush1.msra.mxu0 0.0
    %2466 = vmatprep.subr.mxu0 0.0
    %2467 = vmatpush1.msra.mxu0 0.0
    %2468 = vmatprep.subr.mxu0 0.0
    %2469 = vmatpush1.msra.mxu0 0.0
    %2470 = vmatprep.subr.mxu0 0.0
    %2471 = vmatpush1.msra.mxu0 0.0
    %2472 = vmatprep.subr.mxu0 0.0
    %2473 = vmatpush1.msra.mxu0 0.0
    %2474 = vmatprep.subr.mxu0 0.0
    %2475 = vmatpush1.msra.mxu0 0.0
    %2476 = vmatprep.subr.mxu0 0.0
    %2477 = vmatpush1.msra.mxu0 0.0
    %2478 = vmatprep.subr.mxu0 0.0
    %2479 = vmatpush1.msra.mxu0 0.0
    %2480 = vmatprep.subr.mxu0 0.0
    %2481 = vmatpush1.msra.mxu0 0.0
    %2482 = vmatprep.subr.mxu0 0.0
    %2483 = vmatpush1.msra.mxu0 0.0
    %2484 = vmatprep.mubr.f32.mxu0 0.0
    %2485 = vmatmul.mubr.f32.gmra.mrb[0].mxu0 %v2418
    %v2486 = vpop.f32.mrb[0].mxu0
    %v2487 = vadd.f32 0.0, %v2486
    %v2488 = vpop.f32.mrb[0].mxu0
    %2489 = vdwg.mxu0
    %v2490 = vadd.f32 %v2416, %v2487
    %v2491 = vxor.u32 %v2490, 2147483648
    %v2492 = vmul.f32 %v2491, 1.442695
    %v2493 = vpow.pop %v2492
    %v2494 = vadd.f32 %v2493, 1.0
    %v2495 = vrcp.pop %v2494
    %v2496 = vmul.f32 1.0, %v2495
    %v2497 = vtanh.pop %v2490
    %2499 = vrot.lane.b32.xlu0 %v2415, 32
    %v2500 = vpop.permute.xlu0 %2499
    %v2502 = vmul.f32 %v2496, %v2500
    %2504 = vrot.lane.b32.xlu0 %v2497, 64
    %v2505 = vpop.permute.xlu0 %2504
    %v2507 = vmul.f32 %v2496, %v2505
    %2509 = vrot.lane.b32.xlu0 %v2507, 32
    %v2510 = vpop.permute.xlu0 %2509
    %v2512 = vadd.f32 %v2502, %v2510
    %v2513 = vtanh.pop %v2512
    %2515 = vrot.lane.b32.xlu0 %v2513, 64
    %v2516 = vpop.permute.xlu0 %2515
    %v2518 = vmul.f32 %v2496, %v2516
    %2520 = vrot.lane.b32.xlu0 %v2512, 96
    %v2521 = vpop.permute.xlu0 %2520
    %2523 = vst.msk [vmem:[%s2298] sm:$0xff] %vm79, %v2521
    %2525 = vrot.lane.b32.xlu0 %v2518, 32
    %v2526 = vpop.permute.xlu0 %2525
    %2528 = vst.msk [vmem:[%s2296] sm:$0xff] %vm79, %v2526
    %2529 = vst.msk [vmem:[%s309] sm:$0xff] %vm79, %v2526
    %v2530 = vld [vmem:[%s2296] sm:$0xff]
    %v2531 = vld [vmem:[%s2298] sm:$0xff]
    %v2532 = vld [vmem:[%s1425] sm:$0xff]
    %v2534 = vsel %vm79, %v2530, 0
    %2536 = vmatprep.subr.mxu0 0.0
    %2537 = vmatpush1.msra.mxu0 %v2292
    %2538 = vmatprep.subr.mxu0 0.0
    %2539 = vmatpush1.msra.mxu0 %v2293
    %2540 = vmatprep.subr.mxu0 0.0
    %2541 = vmatpush1.msra.mxu0 %v2294
    %2542 = vmatprep.subr.mxu0 0.0
    %2543 = vmatpush1.msra.mxu0 %v2295
    %2544 = vmatprep.subr.mxu0 0.0
    %2545 = vmatpush1.msra.mxu0 0.0
    %2546 = vmatprep.subr.mxu0 0.0
    %2547 = vmatpush1.msra.mxu0 0.0
    %2548 = vmatprep.subr.mxu0 0.0
    %2549 = vmatpush1.msra.mxu0 0.0
    %2550 = vmatprep.subr.mxu0 0.0
    %2551 = vmatpush1.msra.mxu0 0.0
    %2552 = vmatprep.subr.mxu0 0.0
    %2553 = vmatpush1.msra.mxu0 0.0
    %2554 = vmatprep.subr.mxu0 0.0
    %2555 = vmatpush1.msra.mxu0 0.0
    %2556 = vmatprep.subr.mxu0 0.0
    %2557 = vmatpush1.msra.mxu0 0.0
    %2558 = vmatprep.subr.mxu0 0.0
    %2559 = vmatpush1.msra.mxu0 0.0
    %2560 = vmatprep.subr.mxu0 0.0
    %2561 = vmatpush1.msra.mxu0 0.0
    %2562 = vmatprep.subr.mxu0 0.0
    %2563 = vmatpush1.msra.mxu0 0.0
    %2564 = vmatprep.subr.mxu0 0.0
    %2565 = vmatpush1.msra.mxu0 0.0
    %2566 = vmatprep.subr.mxu0 0.0
    %2567 = vmatpush1.msra.mxu0 0.0
    %2568 = vmatprep.subr.mxu0 0.0
    %2569 = vmatpush1.msra.mxu0 0.0
    %2570 = vmatprep.subr.mxu0 0.0
    %2571 = vmatpush1.msra.mxu0 0.0
    %2572 = vmatprep.subr.mxu0 0.0
    %2573 = vmatpush1.msra.mxu0 0.0
    %2574 = vmatprep.subr.mxu0 0.0
    %2575 = vmatpush1.msra.mxu0 0.0
    %2576 = vmatprep.subr.mxu0 0.0
    %2577 = vmatpush1.msra.mxu0 0.0
    %2578 = vmatprep.subr.mxu0 0.0
    %2579 = vmatpush1.msra.mxu0 0.0
    %2580 = vmatprep.subr.mxu0 0.0
    %2581 = vmatpush1.msra.mxu0 0.0
    %2582 = vmatprep.subr.mxu0 0.0
    %2583 = vmatpush1.msra.mxu0 0.0
    %2584 = vmatprep.subr.mxu0 0.0
    %2585 = vmatpush1.msra.mxu0 0.0
    %2586 = vmatprep.subr.mxu0 0.0
    %2587 = vmatpush1.msra.mxu0 0.0
    %2588 = vmatprep.subr.mxu0 0.0
    %2589 = vmatpush1.msra.mxu0 0.0
    %2590 = vmatprep.subr.mxu0 0.0
    %2591 = vmatpush1.msra.mxu0 0.0
    %2592 = vmatprep.subr.mxu0 0.0
    %2593 = vmatpush1.msra.mxu0 0.0
    %2594 = vmatprep.subr.mxu0 0.0
    %2595 = vmatpush1.msra.mxu0 0.0
    %2596 = vmatprep.subr.mxu0 0.0
    %2597 = vmatpush1.msra.mxu0 0.0
    %2598 = vmatprep.subr.mxu0 0.0
    %2599 = vmatpush1.msra.mxu0 0.0
    %2600 = vmatprep.mubr.f32.mxu0 0.0
    %2601 = vmatmul.mubr.f32.gmra.mrb[0].mxu0 %v2534
    %v2602 = vpop.f32.mrb[0].mxu0
    %v2603 = vadd.f32 0.0, %v2602
    %v2604 = vpop.f32.mrb[0].mxu0
    %2605 = vdwg.mxu0
    %v2606 = vadd.f32 %v2532, %v2603
    %v2607 = vxor.u32 %v2606, 2147483648
    %v2608 = vmul.f32 %v2607, 1.442695
    %v2609 = vpow.pop %v2608
    %v2610 = vadd.f32 %v2609, 1.0
    %v2611 = vrcp.pop %v2610
    %v2612 = vmul.f32 1.0, %v2611
    %v2613 = vtanh.pop %v2606
    %2615 = vrot.lane.b32.xlu0 %v2531, 32
    %v2616 = vpop.permute.xlu0 %2615
    %v2618 = vmul.f32 %v2612, %v2616
    %2620 = vrot.lane.b32.xlu0 %v2613, 64
    %v2621 = vpop.permute.xlu0 %2620
    %v2623 = vmul.f32 %v2612, %v2621
    %2625 = vrot.lane.b32.xlu0 %v2623, 32
    %v2626 = vpop.permute.xlu0 %2625
    %v2628 = vadd.f32 %v2618, %v2626
    %v2629 = vtanh.pop %v2628
    %2631 = vrot.lane.b32.xlu0 %v2629, 64
    %v2632 = vpop.permute.xlu0 %2631
    %v2634 = vmul.f32 %v2612, %v2632
    %2636 = vrot.lane.b32.xlu0 %v2628, 96
    %v2637 = vpop.permute.xlu0 %2636
    %2639 = vst.msk [vmem:[%s2298] sm:$0xff] %vm79, %v2637
    %2641 = vrot.lane.b32.xlu0 %v2634, 32
    %v2642 = vpop.permute.xlu0 %2641
    %2644 = vst.msk [vmem:[%s2296] sm:$0xff] %vm79, %v2642
    %2645 = vst.msk [vmem:[%s427] sm:$0xff] %vm79, %v2642
    %v2646 = vld [vmem:[%s2296] sm:$0xff]
    %v2647 = vld [vmem:[%s2298] sm:$0xff]
    %v2648 = vld [vmem:[%s1542] sm:$0xff]
    %v2650 = vsel %vm79, %v2646, 0
    %2652 = vmatprep.subr.mxu0 0.0
    %2653 = vmatpush1.msra.mxu0 %v2292
    %2654 = vmatprep.subr.mxu0 0.0
    %2655 = vmatpush1.msra.mxu0 %v2293
    %2656 = vmatprep.subr.mxu0 0.0
    %2657 = vmatpush1.msra.mxu0 %v2294
    %2658 = vmatprep.subr.mxu0 0.0
    %2659 = vmatpush1.msra.mxu0 %v2295
    %2660 = vmatprep.subr.mxu0 0.0
    %2661 = vmatpush1.msra.mxu0 0.0
    %2662 = vmatprep.subr.mxu0 0.0
    %2663 = vmatpush1.msra.mxu0 0.0
    %2664 = vmatprep.subr.mxu0 0.0
    %2665 = vmatpush1.msra.mxu0 0.0
    %2666 = vmatprep.subr.mxu0 0.0
    %2667 = vmatpush1.msra.mxu0 0.0
    %2668 = vmatprep.subr.mxu0 0.0
    %2669 = vmatpush1.msra.mxu0 0.0
    %2670 = vmatprep.subr.mxu0 0.0
    %2671 = vmatpush1.msra.mxu0 0.0
    %2672 = vmatprep.subr.mxu0 0.0
    %2673 = vmatpush1.msra.mxu0 0.0
    %2674 = vmatprep.subr.mxu0 0.0
    %2675 = vmatpush1.msra.mxu0 0.0
    %2676 = vmatprep.subr.mxu0 0.0
    %2677 = vmatpush1.msra.mxu0 0.0
    %2678 = vmatprep.subr.mxu0 0.0
    %2679 = vmatpush1.msra.mxu0 0.0
    %2680 = vmatprep.subr.mxu0 0.0
    %2681 = vmatpush1.msra.mxu0 0.0
    %2682 = vmatprep.subr.mxu0 0.0
    %2683 = vmatpush1.msra.mxu0 0.0
    %2684 = vmatprep.subr.mxu0 0.0
    %2685 = vmatpush1.msra.mxu0 0.0
    %2686 = vmatprep.subr.mxu0 0.0
    %2687 = vmatpush1.msra.mxu0 0.0
    %2688 = vmatprep.subr.mxu0 0.0
    %2689 = vmatpush1.msra.mxu0 0.0
    %2690 = vmatprep.subr.mxu0 0.0
    %2691 = vmatpush1.msra.mxu0 0.0
    %2692 = vmatprep.subr.mxu0 0.0
    %2693 = vmatpush1.msra.mxu0 0.0
    %2694 = vmatprep.subr.mxu0 0.0
    %2695 = vmatpush1.msra.mxu0 0.0
    %2696 = vmatprep.subr.mxu0 0.0
    %2697 = vmatpush1.msra.mxu0 0.0
    %2698 = vmatprep.subr.mxu0 0.0
    %2699 = vmatpush1.msra.mxu0 0.0
    %2700 = vmatprep.subr.mxu0 0.0
    %2701 = vmatpush1.msra.mxu0 0.0
    %2702 = vmatprep.subr.mxu0 0.0
    %2703 = vmatpush1.msra.mxu0 0.0
    %2704 = vmatprep.subr.mxu0 0.0
    %2705 = vmatpush1.msra.mxu0 0.0
    %2706 = vmatprep.subr.mxu0 0.0
    %2707 = vmatpush1.msra.mxu0 0.0
    %2708 = vmatprep.subr.mxu0 0.0
    %2709 = vmatpush1.msra.mxu0 0.0
    %2710 = vmatprep.subr.mxu0 0.0
    %2711 = vmatpush1.msra.mxu0 0.0
    %2712 = vmatprep.subr.mxu0 0.0
    %2713 = vmatpush1.msra.mxu0 0.0
    %2714 = vmatprep.subr.mxu0 0.0
    %2715 = vmatpush1.msra.mxu0 0.0
    %2716 = vmatprep.mubr.f32.mxu0 0.0
    %2717 = vmatmul.mubr.f32.gmra.mrb[0].mxu0 %v2650
    %v2718 = vpop.f32.mrb[0].mxu0
    %v2719 = vadd.f32 0.0, %v2718
    %v2720 = vpop.f32.mrb[0].mxu0
    %2721 = vdwg.mxu0
    %v2722 = vadd.f32 %v2648, %v2719
    %v2723 = vxor.u32 %v2722, 2147483648
    %v2724 = vmul.f32 %v2723, 1.442695
    %v2725 = vpow.pop %v2724
    %v2726 = vadd.f32 %v2725, 1.0
    %v2727 = vrcp.pop %v2726
    %v2728 = vmul.f32 1.0, %v2727
    %v2729 = vtanh.pop %v2722
    %2731 = vrot.lane.b32.xlu0 %v2647, 32
    %v2732 = vpop.permute.xlu0 %2731
    %v2734 = vmul.f32 %v2728, %v2732
    %2736 = vrot.lane.b32.xlu0 %v2729, 64
    %v2737 = vpop.permute.xlu0 %2736
    %v2739 = vmul.f32 %v2728, %v2737
    %2741 = vrot.lane.b32.xlu0 %v2739, 32
    %v2742 = vpop.permute.xlu0 %2741
    %v2744 = vadd.f32 %v2734, %v2742
    %v2745 = vtanh.pop %v2744
    %2747 = vrot.lane.b32.xlu0 %v2745, 64
    %v2748 = vpop.permute.xlu0 %2747
    %v2750 = vmul.f32 %v2728, %v2748
    %2752 = vrot.lane.b32.xlu0 %v2744, 96
    %v2753 = vpop.permute.xlu0 %2752
    %2755 = vst.msk [vmem:[%s2298] sm:$0xff] %vm79, %v2753
    %2757 = vrot.lane.b32.xlu0 %v2750, 32
    %v2758 = vpop.permute.xlu0 %2757
    %2760 = vst.msk [vmem:[%s2296] sm:$0xff] %vm79, %v2758
    %2761 = vst.msk [vmem:[%s545] sm:$0xff] %vm79, %v2758
    %v2762 = vld [vmem:[%s2296] sm:$0xff]
    %v2763 = vld [vmem:[%s2298] sm:$0xff]
    %v2764 = vld [vmem:[%s1659] sm:$0xff]
    %v2766 = vsel %vm79, %v2762, 0
    %2768 = vmatprep.subr.mxu0 0.0
    %2769 = vmatpush1.msra.mxu0 %v2292
    %2770 = vmatprep.subr.mxu0 0.0
    %2771 = vmatpush1.msra.mxu0 %v2293
    %2772 = vmatprep.subr.mxu0 0.0
    %2773 = vmatpush1.msra.mxu0 %v2294
    %2774 = vmatprep.subr.mxu0 0.0
    %2775 = vmatpush1.msra.mxu0 %v2295
    %2776 = vmatprep.subr.mxu0 0.0
    %2777 = vmatpush1.msra.mxu0 0.0
    %2778 = vmatprep.subr.mxu0 0.0
    %2779 = vmatpush1.msra.mxu0 0.0
    %2780 = vmatprep.subr.mxu0 0.0
    %2781 = vmatpush1.msra.mxu0 0.0
    %2782 = vmatprep.subr.mxu0 0.0
    %2783 = vmatpush1.msra.mxu0 0.0
    %2784 = vmatprep.subr.mxu0 0.0
    %2785 = vmatpush1.msra.mxu0 0.0
    %2786 = vmatprep.subr.mxu0 0.0
    %2787 = vmatpush1.msra.mxu0 0.0
    %2788 = vmatprep.subr.mxu0 0.0
    %2789 = vmatpush1.msra.mxu0 0.0
    %2790 = vmatprep.subr.mxu0 0.0
    %2791 = vmatpush1.msra.mxu0 0.0
    %2792 = vmatprep.subr.mxu0 0.0
    %2793 = vmatpush1.msra.mxu0 0.0
    %2794 = vmatprep.subr.mxu0 0.0
    %2795 = vmatpush1.msra.mxu0 0.0
    %2796 = vmatprep.subr.mxu0 0.0
    %2797 = vmatpush1.msra.mxu0 0.0
    %2798 = vmatprep.subr.mxu0 0.0
    %2799 = vmatpush1.msra.mxu0 0.0
    %2800 = vmatprep.subr.mxu0 0.0
    %2801 = vmatpush1.msra.mxu0 0.0
    %2802 = vmatprep.subr.mxu0 0.0
    %2803 = vmatpush1.msra.mxu0 0.0
    %2804 = vmatprep.subr.mxu0 0.0
    %2805 = vmatpush1.msra.mxu0 0.0
    %2806 = vmatprep.subr.mxu0 0.0
    %2807 = vmatpush1.msra.mxu0 0.0
    %2808 = vmatprep.subr.mxu0 0.0
    %2809 = vmatpush1.msra.mxu0 0.0
    %2810 = vmatprep.subr.mxu0 0.0
    %2811 = vmatpush1.msra.mxu0 0.0
    %2812 = vmatprep.subr.mxu0 0.0
    %2813 = vmatpush1.msra.mxu0 0.0
    %2814 = vmatprep.subr.mxu0 0.0
    %2815 = vmatpush1.msra.mxu0 0.0
    %2816 = vmatprep.subr.mxu0 0.0
    %2817 = vmatpush1.msra.mxu0 0.0
    %2818 = vmatprep.subr.mxu0 0.0
    %2819 = vmatpush1.msra.mxu0 0.0
    %2820 = vmatprep.subr.mxu0 0.0
    %2821 = vmatpush1.msra.mxu0 0.0
    %2822 = vmatprep.subr.mxu0 0.0
    %2823 = vmatpush1.msra.mxu0 0.0
    %2824 = vmatprep.subr.mxu0 0.0
    %2825 = vmatpush1.msra.mxu0 0.0
    %2826 = vmatprep.subr.mxu0 0.0
    %2827 = vmatpush1.msra.mxu0 0.0
    %2828 = vmatprep.subr.mxu0 0.0
    %2829 = vmatpush1.msra.mxu0 0.0
    %2830 = vmatprep.subr.mxu0 0.0
    %2831 = vmatpush1.msra.mxu0 0.0
    %2832 = vmatprep.mubr.f32.mxu0 0.0
    %2833 = vmatmul.mubr.f32.gmra.mrb[0].mxu0 %v2766
    %v2834 = vpop.f32.mrb[0].mxu0
    %v2835 = vadd.f32 0.0, %v2834
    %v2836 = vpop.f32.mrb[0].mxu0
    %2837 = vdwg.mxu0
    %v2838 = vadd.f32 %v2764, %v2835
    %v2839 = vxor.u32 %v2838, 2147483648
    %v2840 = vmul.f32 %v2839, 1.442695
    %v2841 = vpow.pop %v2840
    %v2842 = vadd.f32 %v2841, 1.0
    %v2843 = vrcp.pop %v2842
    %v2844 = vmul.f32 1.0, %v2843
    %v2845 = vtanh.pop %v2838
    %2847 = vrot.lane.b32.xlu0 %v2763, 32
    %v2848 = vpop.permute.xlu0 %2847
    %v2850 = vmul.f32 %v2844, %v2848
    %2852 = vrot.lane.b32.xlu0 %v2845, 64
    %v2853 = vpop.permute.xlu0 %2852
    %v2855 = vmul.f32 %v2844, %v2853
    %2857 = vrot.lane.b32.xlu0 %v2855, 32
    %v2858 = vpop.permute.xlu0 %2857
    %v2860 = vadd.f32 %v2850, %v2858
    %v2861 = vtanh.pop %v2860
    %2863 = vrot.lane.b32.xlu0 %v2861, 64
    %v2864 = vpop.permute.xlu0 %2863
    %v2866 = vmul.f32 %v2844, %v2864
    %2868 = vrot.lane.b32.xlu0 %v2860, 96
    %v2869 = vpop.permute.xlu0 %2868
    %2871 = vst.msk [vmem:[%s2298] sm:$0xff] %vm79, %v2869
    %2873 = vrot.lane.b32.xlu0 %v2866, 32
    %v2874 = vpop.permute.xlu0 %2873
    %2876 = vst.msk [vmem:[%s2296] sm:$0xff] %vm79, %v2874
    %2877 = vst.msk [vmem:[%s663] sm:$0xff] %vm79, %v2874
    %v2878 = vld [vmem:[%s2296] sm:$0xff]
    %v2879 = vld [vmem:[%s2298] sm:$0xff]
    %v2880 = vld [vmem:[%s1776] sm:$0xff]
    %v2882 = vsel %vm79, %v2878, 0
    %2884 = vmatprep.subr.mxu0 0.0
    %2885 = vmatpush1.msra.mxu0 %v2292
    %2886 = vmatprep.subr.mxu0 0.0
    %2887 = vmatpush1.msra.mxu0 %v2293
    %2888 = vmatprep.subr.mxu0 0.0
    %2889 = vmatpush1.msra.mxu0 %v2294
    %2890 = vmatprep.subr.mxu0 0.0
    %2891 = vmatpush1.msra.mxu0 %v2295
    %2892 = vmatprep.subr.mxu0 0.0
    %2893 = vmatpush1.msra.mxu0 0.0
    %2894 = vmatprep.subr.mxu0 0.0
    %2895 = vmatpush1.msra.mxu0 0.0
    %2896 = vmatprep.subr.mxu0 0.0
    %2897 = vmatpush1.msra.mxu0 0.0
    %2898 = vmatprep.subr.mxu0 0.0
    %2899 = vmatpush1.msra.mxu0 0.0
    %2900 = vmatprep.subr.mxu0 0.0
    %2901 = vmatpush1.msra.mxu0 0.0
    %2902 = vmatprep.subr.mxu0 0.0
    %2903 = vmatpush1.msra.mxu0 0.0
    %2904 = vmatprep.subr.mxu0 0.0
    %2905 = vmatpush1.msra.mxu0 0.0
    %2906 = vmatprep.subr.mxu0 0.0
    %2907 = vmatpush1.msra.mxu0 0.0
    %2908 = vmatprep.subr.mxu0 0.0
    %2909 = vmatpush1.msra.mxu0 0.0
    %2910 = vmatprep.subr.mxu0 0.0
    %2911 = vmatpush1.msra.mxu0 0.0
    %2912 = vmatprep.subr.mxu0 0.0
    %2913 = vmatpush1.msra.mxu0 0.0
    %2914 = vmatprep.subr.mxu0 0.0
    %2915 = vmatpush1.msra.mxu0 0.0
    %2916 = vmatprep.subr.mxu0 0.0
    %2917 = vmatpush1.msra.mxu0 0.0
    %2918 = vmatprep.subr.mxu0 0.0
    %2919 = vmatpush1.msra.mxu0 0.0
    %2920 = vmatprep.subr.mxu0 0.0
    %2921 = vmatpush1.msra.mxu0 0.0
    %2922 = vmatprep.subr.mxu0 0.0
    %2923 = vmatpush1.msra.mxu0 0.0
    %2924 = vmatprep.subr.mxu0 0.0
    %2925 = vmatpush1.msra.mxu0 0.0
    %2926 = vmatprep.subr.mxu0 0.0
    %2927 = vmatpush1.msra.mxu0 0.0
    %2928 = vmatprep.subr.mxu0 0.0
    %2929 = vmatpush1.msra.mxu0 0.0
    %2930 = vmatprep.subr.mxu0 0.0
    %2931 = vmatpush1.msra.mxu0 0.0
    %2932 = vmatprep.subr.mxu0 0.0
    %2933 = vmatpush1.msra.mxu0 0.0
    %2934 = vmatprep.subr.mxu0 0.0
    %2935 = vmatpush1.msra.mxu0 0.0
    %2936 = vmatprep.subr.mxu0 0.0
    %2937 = vmatpush1.msra.mxu0 0.0
    %2938 = vmatprep.subr.mxu0 0.0
    %2939 = vmatpush1.msra.mxu0 0.0
    %2940 = vmatprep.subr.mxu0 0.0
    %2941 = vmatpush1.msra.mxu0 0.0
    %2942 = vmatprep.subr.mxu0 0.0
    %2943 = vmatpush1.msra.mxu0 0.0
    %2944 = vmatprep.subr.mxu0 0.0
    %2945 = vmatpush1.msra.mxu0 0.0
    %2946 = vmatprep.subr.mxu0 0.0
    %2947 = vmatpush1.msra.mxu0 0.0
    %2948 = vmatprep.mubr.f32.mxu0 0.0
    %2949 = vmatmul.mubr.f32.gmra.mrb[0].mxu0 %v2882
    %v2950 = vpop.f32.mrb[0].mxu0
    %v2951 = vadd.f32 0.0, %v2950
    %v2952 = vpop.f32.mrb[0].mxu0
    %2953 = vdwg.mxu0
    %v2954 = vadd.f32 %v2880, %v2951
    %v2955 = vxor.u32 %v2954, 2147483648
    %v2956 = vmul.f32 %v2955, 1.442695
    %v2957 = vpow.pop %v2956
    %v2958 = vadd.f32 %v2957, 1.0
    %v2959 = vrcp.pop %v2958
    %v2960 = vmul.f32 1.0, %v2959
    %v2961 = vtanh.pop %v2954
    %2963 = vrot.lane.b32.xlu0 %v2879, 32
    %v2964 = vpop.permute.xlu0 %2963
    %v2966 = vmul.f32 %v2960, %v2964
    %2968 = vrot.lane.b32.xlu0 %v2961, 64
    %v2969 = vpop.permute.xlu0 %2968
    %v2971 = vmul.f32 %v2960, %v2969
    %2973 = vrot.lane.b32.xlu0 %v2971, 32
    %v2974 = vpop.permute.xlu0 %2973
    %v2976 = vadd.f32 %v2966, %v2974
    %v2977 = vtanh.pop %v2976
    %2979 = vrot.lane.b32.xlu0 %v2977, 64
    %v2980 = vpop.permute.xlu0 %2979
    %v2982 = vmul.f32 %v2960, %v2980
    %2984 = vrot.lane.b32.xlu0 %v2976, 96
    %v2985 = vpop.permute.xlu0 %2984
    %2987 = vst.msk [vmem:[%s2298] sm:$0xff] %vm79, %v2985
    %2989 = vrot.lane.b32.xlu0 %v2982, 32
    %v2990 = vpop.permute.xlu0 %2989
    %2992 = vst.msk [vmem:[%s2296] sm:$0xff] %vm79, %v2990
    %2993 = vst.msk [vmem:[%s781] sm:$0xff] %vm79, %v2990
    %v2994 = vld [vmem:[%s2296] sm:$0xff]
    %v2995 = vld [vmem:[%s2298] sm:$0xff]
    %v2996 = vld [vmem:[%s1893] sm:$0xff]
    %v2998 = vsel %vm79, %v2994, 0
    %3000 = vmatprep.subr.mxu0 0.0
    %3001 = vmatpush1.msra.mxu0 %v2292
    %3002 = vmatprep.subr.mxu0 0.0
    %3003 = vmatpush1.msra.mxu0 %v2293
    %3004 = vmatprep.subr.mxu0 0.0
    %3005 = vmatpush1.msra.mxu0 %v2294
    %3006 = vmatprep.subr.mxu0 0.0
    %3007 = vmatpush1.msra.mxu0 %v2295
    %3008 = vmatprep.subr.mxu0 0.0
    %3009 = vmatpush1.msra.mxu0 0.0
    %3010 = vmatprep.subr.mxu0 0.0
    %3011 = vmatpush1.msra.mxu0 0.0
    %3012 = vmatprep.subr.mxu0 0.0
    %3013 = vmatpush1.msra.mxu0 0.0
    %3014 = vmatprep.subr.mxu0 0.0
    %3015 = vmatpush1.msra.mxu0 0.0
    %3016 = vmatprep.subr.mxu0 0.0
    %3017 = vmatpush1.msra.mxu0 0.0
    %3018 = vmatprep.subr.mxu0 0.0
    %3019 = vmatpush1.msra.mxu0 0.0
    %3020 = vmatprep.subr.mxu0 0.0
    %3021 = vmatpush1.msra.mxu0 0.0
    %3022 = vmatprep.subr.mxu0 0.0
    %3023 = vmatpush1.msra.mxu0 0.0
    %3024 = vmatprep.subr.mxu0 0.0
    %3025 = vmatpush1.msra.mxu0 0.0
    %3026 = vmatprep.subr.mxu0 0.0
    %3027 = vmatpush1.msra.mxu0 0.0
    %3028 = vmatprep.subr.mxu0 0.0
    %3029 = vmatpush1.msra.mxu0 0.0
    %3030 = vmatprep.subr.mxu0 0.0
    %3031 = vmatpush1.msra.mxu0 0.0
    %3032 = vmatprep.subr.mxu0 0.0
    %3033 = vmatpush1.msra.mxu0 0.0
    %3034 = vmatprep.subr.mxu0 0.0
    %3035 = vmatpush1.msra.mxu0 0.0
    %3036 = vmatprep.subr.mxu0 0.0
    %3037 = vmatpush1.msra.mxu0 0.0
    %3038 = vmatprep.subr.mxu0 0.0
    %3039 = vmatpush1.msra.mxu0 0.0
    %3040 = vmatprep.subr.mxu0 0.0
    %3041 = vmatpush1.msra.mxu0 0.0
    %3042 = vmatprep.subr.mxu0 0.0
    %3043 = vmatpush1.msra.mxu0 0.0
    %3044 = vmatprep.subr.mxu0 0.0
    %3045 = vmatpush1.msra.mxu0 0.0
    %3046 = vmatprep.subr.mxu0 0.0
    %3047 = vmatpush1.msra.mxu0 0.0
    %3048 = vmatprep.subr.mxu0 0.0
    %3049 = vmatpush1.msra.mxu0 0.0
    %3050 = vmatprep.subr.mxu0 0.0
    %3051 = vmatpush1.msra.mxu0 0.0
    %3052 = vmatprep.subr.mxu0 0.0
    %3053 = vmatpush1.msra.mxu0 0.0
    %3054 = vmatprep.subr.mxu0 0.0
    %3055 = vmatpush1.msra.mxu0 0.0
    %3056 = vmatprep.subr.mxu0 0.0
    %3057 = vmatpush1.msra.mxu0 0.0
    %3058 = vmatprep.subr.mxu0 0.0
    %3059 = vmatpush1.msra.mxu0 0.0
    %3060 = vmatprep.subr.mxu0 0.0
    %3061 = vmatpush1.msra.mxu0 0.0
    %3062 = vmatprep.subr.mxu0 0.0
    %3063 = vmatpush1.msra.mxu0 0.0
    %3064 = vmatprep.mubr.f32.mxu0 0.0
    %3065 = vmatmul.mubr.f32.gmra.mrb[0].mxu0 %v2998
    %v3066 = vpop.f32.mrb[0].mxu0
    %v3067 = vadd.f32 0.0, %v3066
    %v3068 = vpop.f32.mrb[0].mxu0
    %3069 = vdwg.mxu0
    %v3070 = vadd.f32 %v2996, %v3067
    %v3071 = vxor.u32 %v3070, 2147483648
    %v3072 = vmul.f32 %v3071, 1.442695
    %v3073 = vpow.pop %v3072
    %v3074 = vadd.f32 %v3073, 1.0
    %v3075 = vrcp.pop %v3074
    %v3076 = vmul.f32 1.0, %v3075
    %v3077 = vtanh.pop %v3070
    %3079 = vrot.lane.b32.xlu0 %v2995, 32
    %v3080 = vpop.permute.xlu0 %3079
    %v3082 = vmul.f32 %v3076, %v3080
    %3084 = vrot.lane.b32.xlu0 %v3077, 64
    %v3085 = vpop.permute.xlu0 %3084
    %v3087 = vmul.f32 %v3076, %v3085
    %3089 = vrot.lane.b32.xlu0 %v3087, 32
    %v3090 = vpop.permute.xlu0 %3089
    %v3092 = vadd.f32 %v3082, %v3090
    %v3093 = vtanh.pop %v3092
    %3095 = vrot.lane.b32.xlu0 %v3093, 64
    %v3096 = vpop.permute.xlu0 %3095
    %v3098 = vmul.f32 %v3076, %v3096
    %3100 = vrot.lane.b32.xlu0 %v3092, 96
    %v3101 = vpop.permute.xlu0 %3100
    %3103 = vst.msk [vmem:[%s2298] sm:$0xff] %vm79, %v3101
    %3105 = vrot.lane.b32.xlu0 %v3098, 32
    %v3106 = vpop.permute.xlu0 %3105
    %3108 = vst.msk [vmem:[%s2296] sm:$0xff] %vm79, %v3106
    %3109 = vst.msk [vmem:[%s899] sm:$0xff] %vm79, %v3106
    %v3110 = vld [vmem:[%s2296] sm:$0xff]
    %v3111 = vld [vmem:[%s2298] sm:$0xff]
    %v3112 = vld [vmem:[%s2010] sm:$0xff]
    %v3114 = vsel %vm79, %v3110, 0
    %3116 = vmatprep.subr.mxu0 0.0
    %3117 = vmatpush1.msra.mxu0 %v2292
    %3118 = vmatprep.subr.mxu0 0.0
    %3119 = vmatpush1.msra.mxu0 %v2293
    %3120 = vmatprep.subr.mxu0 0.0
    %3121 = vmatpush1.msra.mxu0 %v2294
    %3122 = vmatprep.subr.mxu0 0.0
    %3123 = vmatpush1.msra.mxu0 %v2295
    %3124 = vmatprep.subr.mxu0 0.0
    %3125 = vmatpush1.msra.mxu0 0.0
    %3126 = vmatprep.subr.mxu0 0.0
    %3127 = vmatpush1.msra.mxu0 0.0
    %3128 = vmatprep.subr.mxu0 0.0
    %3129 = vmatpush1.msra.mxu0 0.0
    %3130 = vmatprep.subr.mxu0 0.0
    %3131 = vmatpush1.msra.mxu0 0.0
    %3132 = vmatprep.subr.mxu0 0.0
    %3133 = vmatpush1.msra.mxu0 0.0
    %3134 = vmatprep.subr.mxu0 0.0
    %3135 = vmatpush1.msra.mxu0 0.0
    %3136 = vmatprep.subr.mxu0 0.0
    %3137 = vmatpush1.msra.mxu0 0.0
    %3138 = vmatprep.subr.mxu0 0.0
    %3139 = vmatpush1.msra.mxu0 0.0
    %3140 = vmatprep.subr.mxu0 0.0
    %3141 = vmatpush1.msra.mxu0 0.0
    %3142 = vmatprep.subr.mxu0 0.0
    %3143 = vmatpush1.msra.mxu0 0.0
    %3144 = vmatprep.subr.mxu0 0.0
    %3145 = vmatpush1.msra.mxu0 0.0
    %3146 = vmatprep.subr.mxu0 0.0
    %3147 = vmatpush1.msra.mxu0 0.0
    %3148 = vmatprep.subr.mxu0 0.0
    %3149 = vmatpush1.msra.mxu0 0.0
    %3150 = vmatprep.subr.mxu0 0.0
    %3151 = vmatpush1.msra.mxu0 0.0
    %3152 = vmatprep.subr.mxu0 0.0
    %3153 = vmatpush1.msra.mxu0 0.0
    %3154 = vmatprep.subr.mxu0 0.0
    %3155 = vmatpush1.msra.mxu0 0.0
    %3156 = vmatprep.subr.mxu0 0.0
    %3157 = vmatpush1.msra.mxu0 0.0
    %3158 = vmatprep.subr.mxu0 0.0
    %3159 = vmatpush1.msra.mxu0 0.0
    %3160 = vmatprep.subr.mxu0 0.0
    %3161 = vmatpush1.msra.mxu0 0.0
    %3162 = vmatprep.subr.mxu0 0.0
    %3163 = vmatpush1.msra.mxu0 0.0
    %3164 = vmatprep.subr.mxu0 0.0
    %3165 = vmatpush1.msra.mxu0 0.0
    %3166 = vmatprep.subr.mxu0 0.0
    %3167 = vmatpush1.msra.mxu0 0.0
    %3168 = vmatprep.subr.mxu0 0.0
    %3169 = vmatpush1.msra.mxu0 0.0
    %3170 = vmatprep.subr.mxu0 0.0
    %3171 = vmatpush1.msra.mxu0 0.0
    %3172 = vmatprep.subr.mxu0 0.0
    %3173 = vmatpush1.msra.mxu0 0.0
    %3174 = vmatprep.subr.mxu0 0.0
    %3175 = vmatpush1.msra.mxu0 0.0
    %3176 = vmatprep.subr.mxu0 0.0
    %3177 = vmatpush1.msra.mxu0 0.0
    %3178 = vmatprep.subr.mxu0 0.0
    %3179 = vmatpush1.msra.mxu0 0.0
    %3180 = vmatprep.mubr.f32.mxu0 0.0
    %3181 = vmatmul.mubr.f32.gmra.mrb[0].mxu0 %v3114
    %v3182 = vpop.f32.mrb[0].mxu0
    %v3183 = vadd.f32 0.0, %v3182
    %v3184 = vpop.f32.mrb[0].mxu0
    %3185 = vdwg.mxu0
    %v3186 = vadd.f32 %v3112, %v3183
    %v3187 = vxor.u32 %v3186, 2147483648
    %v3188 = vmul.f32 %v3187, 1.442695
    %v3189 = vpow.pop %v3188
    %v3190 = vadd.f32 %v3189, 1.0
    %v3191 = vrcp.pop %v3190
    %v3192 = vmul.f32 1.0, %v3191
    %v3193 = vtanh.pop %v3186
    %3195 = vrot.lane.b32.xlu0 %v3111, 32
    %v3196 = vpop.permute.xlu0 %3195
    %v3198 = vmul.f32 %v3192, %v3196
    %3200 = vrot.lane.b32.xlu0 %v3193, 64
    %v3201 = vpop.permute.xlu0 %3200
    %v3203 = vmul.f32 %v3192, %v3201
    %3205 = vrot.lane.b32.xlu0 %v3203, 32
    %v3206 = vpop.permute.xlu0 %3205
    %v3208 = vadd.f32 %v3198, %v3206
    %v3209 = vtanh.pop %v3208
    %3211 = vrot.lane.b32.xlu0 %v3209, 64
    %v3212 = vpop.permute.xlu0 %3211
    %v3214 = vmul.f32 %v3192, %v3212
    %3216 = vrot.lane.b32.xlu0 %v3208, 96
    %v3217 = vpop.permute.xlu0 %3216
    %3219 = vst.msk [vmem:[%s2298] sm:$0xff] %vm79, %v3217
    %3221 = vrot.lane.b32.xlu0 %v3214, 32
    %v3222 = vpop.permute.xlu0 %3221
    %3224 = vst.msk [vmem:[%s2296] sm:$0xff] %vm79, %v3222
    %3225 = vst.msk [vmem:[%s1017] sm:$0xff] %vm79, %v3222
    %v3226 = vld [vmem:[#allocation4] sm:$0xff]
    %v3227 = vld [vmem:[#allocation4 + $0x8] sm:$0xff]
    %v3228 = vld [vmem:[#allocation4 + $0x10] sm:$0xff]
    %v3229 = vld [vmem:[#allocation4 + $0x18] sm:$0xff]
    %v3230 = vld [vmem:[#allocation4 + $0x20] sm:$0xff]
    %v3231 = vld [vmem:[#allocation4 + $0x28] sm:$0xff]
    %v3232 = vld [vmem:[#allocation4 + $0x30] sm:$0xff]
    %v3233 = vld [vmem:[#allocation4 + $0x38] sm:$0xff]
    %s3234 = scalar_lea.vmem [#allocation9], 64
    %v3235 = vld [vmem:[%s3234] sm:$0xff]
    %v3236 = vld [vmem:[%s3234 + $0x8] sm:$0xff]
    %v3237 = vld [vmem:[%s3234 + $0x10] sm:$0xff]
    %v3238 = vld [vmem:[%s3234 + $0x18] sm:$0xff]
    %v3240 = vsel %vm79, %v3226, 0
    %v3243 = vsel %vm79, %v3227, 0
    %v3246 = vsel %vm79, %v3228, 0
    %v3249 = vsel %vm79, %v3229, 0
    %v3252 = vsel %vm79, %v3230, 0
    %v3255 = vsel %vm79, %v3231, 0
    %v3258 = vsel %vm79, %v3232, 0
    %v3261 = vsel %vm79, %v3233, 0
    %3263 = vmatprep.subr.mxu0 0.0
    %3264 = vmatpush1.msra.mxu0 %v3235
    %3265 = vmatprep.subr.mxu0 0.0
    %3266 = vmatpush1.msra.mxu0 %v3236
    %3267 = vmatprep.subr.mxu0 0.0
    %3268 = vmatpush1.msra.mxu0 %v3237
    %3269 = vmatprep.subr.mxu0 0.0
    %3270 = vmatpush1.msra.mxu0 %v3238
    %3271 = vmatprep.subr.mxu0 0.0
    %3272 = vmatpush1.msra.mxu0 0.0
    %3273 = vmatprep.subr.mxu0 0.0
    %3274 = vmatpush1.msra.mxu0 0.0
    %3275 = vmatprep.subr.mxu0 0.0
    %3276 = vmatpush1.msra.mxu0 0.0
    %3277 = vmatprep.subr.mxu0 0.0
    %3278 = vmatpush1.msra.mxu0 0.0
    %3279 = vmatprep.subr.mxu0 0.0
    %3280 = vmatpush1.msra.mxu0 0.0
    %3281 = vmatprep.subr.mxu0 0.0
    %3282 = vmatpush1.msra.mxu0 0.0
    %3283 = vmatprep.subr.mxu0 0.0
    %3284 = vmatpush1.msra.mxu0 0.0
    %3285 = vmatprep.subr.mxu0 0.0
    %3286 = vmatpush1.msra.mxu0 0.0
    %3287 = vmatprep.subr.mxu0 0.0
    %3288 = vmatpush1.msra.mxu0 0.0
    %3289 = vmatprep.subr.mxu0 0.0
    %3290 = vmatpush1.msra.mxu0 0.0
    %3291 = vmatprep.subr.mxu0 0.0
    %3292 = vmatpush1.msra.mxu0 0.0
    %3293 = vmatprep.subr.mxu0 0.0
    %3294 = vmatpush1.msra.mxu0 0.0
    %3295 = vmatprep.subr.mxu0 0.0
    %3296 = vmatpush1.msra.mxu0 0.0
    %3297 = vmatprep.subr.mxu0 0.0
    %3298 = vmatpush1.msra.mxu0 0.0
    %3299 = vmatprep.subr.mxu0 0.0
    %3300 = vmatpush1.msra.mxu0 0.0
    %3301 = vmatprep.subr.mxu0 0.0
    %3302 = vmatpush1.msra.mxu0 0.0
    %3303 = vmatprep.subr.mxu0 0.0
    %3304 = vmatpush1.msra.mxu0 0.0
    %3305 = vmatprep.subr.mxu0 0.0
    %3306 = vmatpush1.msra.mxu0 0.0
    %3307 = vmatprep.subr.mxu0 0.0
    %3308 = vmatpush1.msra.mxu0 0.0
    %3309 = vmatprep.subr.mxu0 0.0
    %3310 = vmatpush1.msra.mxu0 0.0
    %3311 = vmatprep.subr.mxu0 0.0
    %3312 = vmatpush1.msra.mxu0 0.0
    %3313 = vmatprep.subr.mxu0 0.0
    %3314 = vmatpush1.msra.mxu0 0.0
    %3315 = vmatprep.subr.mxu0 0.0
    %3316 = vmatpush1.msra.mxu0 0.0
    %3317 = vmatprep.subr.mxu0 0.0
    %3318 = vmatpush1.msra.mxu0 0.0
    %3319 = vmatprep.subr.mxu0 0.0
    %3320 = vmatpush1.msra.mxu0 0.0
    %3321 = vmatprep.subr.mxu0 0.0
    %3322 = vmatpush1.msra.mxu0 0.0
    %3323 = vmatprep.subr.mxu0 0.0
    %3324 = vmatpush1.msra.mxu0 0.0
    %3325 = vmatprep.subr.mxu0 0.0
    %3326 = vmatpush1.msra.mxu0 0.0
    %3327 = vmatprep.mubr.f32.mxu0 0.0
    %3328 = vmatmul.mubr.f32.gmra.mrb[0].mxu0 %v3240
    %v3329 = vpop.f32.mrb[0].mxu0
    %v3330 = vadd.f32 0.0, %v3329
    %v3331 = vpop.f32.mrb[0].mxu0
    %3332 = vmatprep.mubr.f32.mxu0 0.0
    %3333 = vmatmul.mubr.f32.gmra.mrb[0].mxu0 %v3243
    %v3334 = vpop.f32.mrb[0].mxu0
    %v3335 = vadd.f32 0.0, %v3334
    %v3336 = vpop.f32.mrb[0].mxu0
    %3337 = vmatprep.mubr.f32.mxu0 0.0
    %3338 = vmatmul.mubr.f32.gmra.mrb[0].mxu0 %v3246
    %v3339 = vpop.f32.mrb[0].mxu0
    %v3340 = vadd.f32 0.0, %v3339
    %v3341 = vpop.f32.mrb[0].mxu0
    %3342 = vmatprep.mubr.f32.mxu0 0.0
    %3343 = vmatmul.mubr.f32.gmra.mrb[0].mxu0 %v3249
    %v3344 = vpop.f32.mrb[0].mxu0
    %v3345 = vadd.f32 0.0, %v3344
    %v3346 = vpop.f32.mrb[0].mxu0
    %3347 = vmatprep.mubr.f32.mxu0 0.0
    %3348 = vmatmul.mubr.f32.gmra.mrb[0].mxu0 %v3252
    %v3349 = vpop.f32.mrb[0].mxu0
    %v3350 = vadd.f32 0.0, %v3349
    %v3351 = vpop.f32.mrb[0].mxu0
    %3352 = vmatprep.mubr.f32.mxu0 0.0
    %3353 = vmatmul.mubr.f32.gmra.mrb[0].mxu0 %v3255
    %v3354 = vpop.f32.mrb[0].mxu0
    %v3355 = vadd.f32 0.0, %v3354
    %v3356 = vpop.f32.mrb[0].mxu0
    %3357 = vmatprep.mubr.f32.mxu0 0.0
    %3358 = vmatmul.mubr.f32.gmra.mrb[0].mxu0 %v3258
    %v3359 = vpop.f32.mrb[0].mxu0
    %v3360 = vadd.f32 0.0, %v3359
    %v3361 = vpop.f32.mrb[0].mxu0
    %3362 = vmatprep.mubr.f32.mxu0 0.0
    %3363 = vmatmul.mubr.f32.gmra.mrb[0].mxu0 %v3261
    %v3364 = vpop.f32.mrb[0].mxu0
    %v3365 = vadd.f32 0.0, %v3364
    %v3366 = vpop.f32.mrb[0].mxu0
    %3367 = vdwg.mxu0
    %s3368 = scalar_lea.vmem %s3, 2
    %v3369 = vld [vmem:[%s3368] sm:$0x1]
    %v3371 = vlaneseq
    %v3372 = vshrl.u32 %v3371, 7
    %v3373 = vsub.s32 0, %v3372
    %v3374 = vrot.slane %v3369, %v3373
    %v3376 = vadd.f32 %v3330, %v3374
    %v3377 = vadd.f32 %v3335, %v3374
    %v3378 = vadd.f32 %v3340, %v3374
    %v3379 = vadd.f32 %v3345, %v3374
    %v3380 = vadd.f32 %v3350, %v3374
    %v3381 = vadd.f32 %v3355, %v3374
    %v3382 = vadd.f32 %v3360, %v3374
    %v3383 = vadd.f32 %v3365, %v3374
    %3384 = vst [vmem:[#allocation5] sm:$0xff] %v3376
    %3385 = vst [vmem:[#allocation5 + $0x8] sm:$0xff] %v3377
    %3386 = vst [vmem:[#allocation5 + $0x10] sm:$0xff] %v3378
    %3387 = vst [vmem:[#allocation5 + $0x18] sm:$0xff] %v3379
    %3388 = vst [vmem:[#allocation5 + $0x20] sm:$0xff] %v3380
    %3389 = vst [vmem:[#allocation5 + $0x28] sm:$0xff] %v3381
    %3390 = vst [vmem:[#allocation5 + $0x30] sm:$0xff] %v3382
    %3391 = vst [vmem:[#allocation5 + $0x38] sm:$0xff] %v3383
    %s3392 = scalar_lea.vmem [#allocation11], 96
    %v3393 = vld [vmem:[%s3392] sm:$0xff]
    %v3394 = vld [vmem:[%s3392 + $0x8] sm:$0xff]
    %v3395 = vld [vmem:[%s3392 + $0x10] sm:$0xff]
    %v3396 = vld [vmem:[%s3392 + $0x18] sm:$0xff]
    %s3397 = scalar_lea.vmem [#allocation2], 24
    %v3398 = vld [vmem:[%s3397] sm:$0xff]
    %s3399 = scalar_lea.vmem [#allocation3], 24
    %v3400 = vld [vmem:[%s3399] sm:$0xff]
    %v3401 = vld [vmem:[#allocation5] sm:$0xff]
    %v3403 = vsel %vm79, %v3398, 0
    %3405 = vmatprep.subr.mxu0 0.0
    %3406 = vmatpush1.msra.mxu0 %v3393
    %3407 = vmatprep.subr.mxu0 0.0
    %3408 = vmatpush1.msra.mxu0 %v3394
    %3409 = vmatprep.subr.mxu0 0.0
    %3410 = vmatpush1.msra.mxu0 %v3395
    %3411 = vmatprep.subr.mxu0 0.0
    %3412 = vmatpush1.msra.mxu0 %v3396
    %3413 = vmatprep.subr.mxu0 0.0
    %3414 = vmatpush1.msra.mxu0 0.0
    %3415 = vmatprep.subr.mxu0 0.0
    %3416 = vmatpush1.msra.mxu0 0.0
    %3417 = vmatprep.subr.mxu0 0.0
    %3418 = vmatpush1.msra.mxu0 0.0
    %3419 = vmatprep.subr.mxu0 0.0
    %3420 = vmatpush1.msra.mxu0 0.0
    %3421 = vmatprep.subr.mxu0 0.0
    %3422 = vmatpush1.msra.mxu0 0.0
    %3423 = vmatprep.subr.mxu0 0.0
    %3424 = vmatpush1.msra.mxu0 0.0
    %3425 = vmatprep.subr.mxu0 0.0
    %3426 = vmatpush1.msra.mxu0 0.0
    %3427 = vmatprep.subr.mxu0 0.0
    %3428 = vmatpush1.msra.mxu0 0.0
    %3429 = vmatprep.subr.mxu0 0.0
    %3430 = vmatpush1.msra.mxu0 0.0
    %3431 = vmatprep.subr.mxu0 0.0
    %3432 = vmatpush1.msra.mxu0 0.0
    %3433 = vmatprep.subr.mxu0 0.0
    %3434 = vmatpush1.msra.mxu0 0.0
    %3435 = vmatprep.subr.mxu0 0.0
    %3436 = vmatpush1.msra.mxu0 0.0
    %3437 = vmatprep.subr.mxu0 0.0
    %3438 = vmatpush1.msra.mxu0 0.0
    %3439 = vmatprep.subr.mxu0 0.0
    %3440 = vmatpush1.msra.mxu0 0.0
    %3441 = vmatprep.subr.mxu0 0.0
    %3442 = vmatpush1.msra.mxu0 0.0
    %3443 = vmatprep.subr.mxu0 0.0
    %3444 = vmatpush1.msra.mxu0 0.0
    %3445 = vmatprep.subr.mxu0 0.0
    %3446 = vmatpush1.msra.mxu0 0.0
    %3447 = vmatprep.subr.mxu0 0.0
    %3448 = vmatpush1.msra.mxu0 0.0
    %3449 = vmatprep.subr.mxu0 0.0
    %3450 = vmatpush1.msra.mxu0 0.0
    %3451 = vmatprep.subr.mxu0 0.0
    %3452 = vmatpush1.msra.mxu0 0.0
    %3453 = vmatprep.subr.mxu0 0.0
    %3454 = vmatpush1.msra.mxu0 0.0
    %3455 = vmatprep.subr.mxu0 0.0
    %3456 = vmatpush1.msra.mxu0 0.0
    %3457 = vmatprep.subr.mxu0 0.0
    %3458 = vmatpush1.msra.mxu0 0.0
    %3459 = vmatprep.subr.mxu0 0.0
    %3460 = vmatpush1.msra.mxu0 0.0
    %3461 = vmatprep.subr.mxu0 0.0
    %3462 = vmatpush1.msra.mxu0 0.0
    %3463 = vmatprep.subr.mxu0 0.0
    %3464 = vmatpush1.msra.mxu0 0.0
    %3465 = vmatprep.subr.mxu0 0.0
    %3466 = vmatpush1.msra.mxu0 0.0
    %3467 = vmatprep.subr.mxu0 0.0
    %3468 = vmatpush1.msra.mxu0 0.0
    %3469 = vmatprep.mubr.f32.mxu0 0.0
    %3470 = vmatmul.mubr.f32.gmra.mrb[0].mxu0 %v3403
    %v3471 = vpop.f32.mrb[0].mxu0
    %v3472 = vadd.f32 0.0, %v3471
    %v3473 = vpop.f32.mrb[0].mxu0
    %3474 = vdwg.mxu0
    %v3475 = vadd.f32 %v3401, %v3472
    %v3476 = vxor.u32 %v3475, 2147483648
    %v3477 = vmul.f32 %v3476, 1.442695
    %v3478 = vpow.pop %v3477
    %v3479 = vadd.f32 %v3478, 1.0
    %v3480 = vrcp.pop %v3479
    %v3481 = vmul.f32 1.0, %v3480
    %v3482 = vtanh.pop %v3475
    %3484 = vrot.lane.b32.xlu0 %v3400, 32
    %v3485 = vpop.permute.xlu0 %3484
    %v3487 = vmul.f32 %v3481, %v3485
    %3489 = vrot.lane.b32.xlu0 %v3482, 64
    %v3490 = vpop.permute.xlu0 %3489
    %v3492 = vmul.f32 %v3481, %v3490
    %3494 = vrot.lane.b32.xlu0 %v3492, 32
    %v3495 = vpop.permute.xlu0 %3494
    %v3497 = vadd.f32 %v3487, %v3495
    %v3498 = vtanh.pop %v3497
    %3500 = vrot.lane.b32.xlu0 %v3498, 64
    %v3501 = vpop.permute.xlu0 %3500
    %v3503 = vmul.f32 %v3481, %v3501
    %3505 = vrot.lane.b32.xlu0 %v3497, 96
    %v3506 = vpop.permute.xlu0 %3505
    %3508 = vst.msk [vmem:[%s3399] sm:$0xff] %vm79, %v3506
    %3510 = vrot.lane.b32.xlu0 %v3503, 32
    %v3511 = vpop.permute.xlu0 %3510
    %3513 = vst.msk [vmem:[%s3397] sm:$0xff] %vm79, %v3511
    %3514 = vst.msk [vmem:[#allocation4] sm:$0xff] %vm79, %v3511
    %v3515 = vld [vmem:[%s3397] sm:$0xff]
    %v3516 = vld [vmem:[%s3399] sm:$0xff]
    %v3517 = vld [vmem:[%s1308] sm:$0xff]
    %v3519 = vsel %vm79, %v3515, 0
    %3521 = vmatprep.subr.mxu0 0.0
    %3522 = vmatpush1.msra.mxu0 %v3393
    %3523 = vmatprep.subr.mxu0 0.0
    %3524 = vmatpush1.msra.mxu0 %v3394
    %3525 = vmatprep.subr.mxu0 0.0
    %3526 = vmatpush1.msra.mxu0 %v3395
    %3527 = vmatprep.subr.mxu0 0.0
    %3528 = vmatpush1.msra.mxu0 %v3396
    %3529 = vmatprep.subr.mxu0 0.0
    %3530 = vmatpush1.msra.mxu0 0.0
    %3531 = vmatprep.subr.mxu0 0.0
    %3532 = vmatpush1.msra.mxu0 0.0
    %3533 = vmatprep.subr.mxu0 0.0
    %3534 = vmatpush1.msra.mxu0 0.0
    %3535 = vmatprep.subr.mxu0 0.0
    %3536 = vmatpush1.msra.mxu0 0.0
    %3537 = vmatprep.subr.mxu0 0.0
    %3538 = vmatpush1.msra.mxu0 0.0
    %3539 = vmatprep.subr.mxu0 0.0
    %3540 = vmatpush1.msra.mxu0 0.0
    %3541 = vmatprep.subr.mxu0 0.0
    %3542 = vmatpush1.msra.mxu0 0.0
    %3543 = vmatprep.subr.mxu0 0.0
    %3544 = vmatpush1.msra.mxu0 0.0
    %3545 = vmatprep.subr.mxu0 0.0
    %3546 = vmatpush1.msra.mxu0 0.0
    %3547 = vmatprep.subr.mxu0 0.0
    %3548 = vmatpush1.msra.mxu0 0.0
    %3549 = vmatprep.subr.mxu0 0.0
    %3550 = vmatpush1.msra.mxu0 0.0
    %3551 = vmatprep.subr.mxu0 0.0
    %3552 = vmatpush1.msra.mxu0 0.0
    %3553 = vmatprep.subr.mxu0 0.0
    %3554 = vmatpush1.msra.mxu0 0.0
    %3555 = vmatprep.subr.mxu0 0.0
    %3556 = vmatpush1.msra.mxu0 0.0
    %3557 = vmatprep.subr.mxu0 0.0
    %3558 = vmatpush1.msra.mxu0 0.0
    %3559 = vmatprep.subr.mxu0 0.0
    %3560 = vmatpush1.msra.mxu0 0.0
    %3561 = vmatprep.subr.mxu0 0.0
    %3562 = vmatpush1.msra.mxu0 0.0
    %3563 = vmatprep.subr.mxu0 0.0
    %3564 = vmatpush1.msra.mxu0 0.0
    %3565 = vmatprep.subr.mxu0 0.0
    %3566 = vmatpush1.msra.mxu0 0.0
    %3567 = vmatprep.subr.mxu0 0.0
    %3568 = vmatpush1.msra.mxu0 0.0
    %3569 = vmatprep.subr.mxu0 0.0
    %3570 = vmatpush1.msra.mxu0 0.0
    %3571 = vmatprep.subr.mxu0 0.0
    %3572 = vmatpush1.msra.mxu0 0.0
    %3573 = vmatprep.subr.mxu0 0.0
    %3574 = vmatpush1.msra.mxu0 0.0
    %3575 = vmatprep.subr.mxu0 0.0
    %3576 = vmatpush1.msra.mxu0 0.0
    %3577 = vmatprep.subr.mxu0 0.0
    %3578 = vmatpush1.msra.mxu0 0.0
    %3579 = vmatprep.subr.mxu0 0.0
    %3580 = vmatpush1.msra.mxu0 0.0
    %3581 = vmatprep.subr.mxu0 0.0
    %3582 = vmatpush1.msra.mxu0 0.0
    %3583 = vmatprep.subr.mxu0 0.0
    %3584 = vmatpush1.msra.mxu0 0.0
    %3585 = vmatprep.mubr.f32.mxu0 0.0
    %3586 = vmatmul.mubr.f32.gmra.mrb[0].mxu0 %v3519
    %v3587 = vpop.f32.mrb[0].mxu0
    %v3588 = vadd.f32 0.0, %v3587
    %v3589 = vpop.f32.mrb[0].mxu0
    %3590 = vdwg.mxu0
    %v3591 = vadd.f32 %v3517, %v3588
    %v3592 = vxor.u32 %v3591, 2147483648
    %v3593 = vmul.f32 %v3592, 1.442695
    %v3594 = vpow.pop %v3593
    %v3595 = vadd.f32 %v3594, 1.0
    %v3596 = vrcp.pop %v3595
    %v3597 = vmul.f32 1.0, %v3596
    %v3598 = vtanh.pop %v3591
    %3600 = vrot.lane.b32.xlu0 %v3516, 32
    %v3601 = vpop.permute.xlu0 %3600
    %v3603 = vmul.f32 %v3597, %v3601
    %3605 = vrot.lane.b32.xlu0 %v3598, 64
    %v3606 = vpop.permute.xlu0 %3605
    %v3608 = vmul.f32 %v3597, %v3606
    %3610 = vrot.lane.b32.xlu0 %v3608, 32
    %v3611 = vpop.permute.xlu0 %3610
    %v3613 = vadd.f32 %v3603, %v3611
    %v3614 = vtanh.pop %v3613
    %3616 = vrot.lane.b32.xlu0 %v3614, 64
    %v3617 = vpop.permute.xlu0 %3616
    %v3619 = vmul.f32 %v3597, %v3617
    %3621 = vrot.lane.b32.xlu0 %v3613, 96
    %v3622 = vpop.permute.xlu0 %3621
    %3624 = vst.msk [vmem:[%s3399] sm:$0xff] %vm79, %v3622
    %3626 = vrot.lane.b32.xlu0 %v3619, 32
    %v3627 = vpop.permute.xlu0 %3626
    %3629 = vst.msk [vmem:[%s3397] sm:$0xff] %vm79, %v3627
    %3630 = vst.msk [vmem:[%s309] sm:$0xff] %vm79, %v3627
    %v3631 = vld [vmem:[%s3397] sm:$0xff]
    %v3632 = vld [vmem:[%s3399] sm:$0xff]
    %v3633 = vld [vmem:[%s1425] sm:$0xff]
    %v3635 = vsel %vm79, %v3631, 0
    %3637 = vmatprep.subr.mxu0 0.0
    %3638 = vmatpush1.msra.mxu0 %v3393
    %3639 = vmatprep.subr.mxu0 0.0
    %3640 = vmatpush1.msra.mxu0 %v3394
    %3641 = vmatprep.subr.mxu0 0.0
    %3642 = vmatpush1.msra.mxu0 %v3395
    %3643 = vmatprep.subr.mxu0 0.0
    %3644 = vmatpush1.msra.mxu0 %v3396
    %3645 = vmatprep.subr.mxu0 0.0
    %3646 = vmatpush1.msra.mxu0 0.0
    %3647 = vmatprep.subr.mxu0 0.0
    %3648 = vmatpush1.msra.mxu0 0.0
    %3649 = vmatprep.subr.mxu0 0.0
    %3650 = vmatpush1.msra.mxu0 0.0
    %3651 = vmatprep.subr.mxu0 0.0
    %3652 = vmatpush1.msra.mxu0 0.0
    %3653 = vmatprep.subr.mxu0 0.0
    %3654 = vmatpush1.msra.mxu0 0.0
    %3655 = vmatprep.subr.mxu0 0.0
    %3656 = vmatpush1.msra.mxu0 0.0
    %3657 = vmatprep.subr.mxu0 0.0
    %3658 = vmatpush1.msra.mxu0 0.0
    %3659 = vmatprep.subr.mxu0 0.0
    %3660 = vmatpush1.msra.mxu0 0.0
    %3661 = vmatprep.subr.mxu0 0.0
    %3662 = vmatpush1.msra.mxu0 0.0
    %3663 = vmatprep.subr.mxu0 0.0
    %3664 = vmatpush1.msra.mxu0 0.0
    %3665 = vmatprep.subr.mxu0 0.0
    %3666 = vmatpush1.msra.mxu0 0.0
    %3667 = vmatprep.subr.mxu0 0.0
    %3668 = vmatpush1.msra.mxu0 0.0
    %3669 = vmatprep.subr.mxu0 0.0
    %3670 = vmatpush1.msra.mxu0 0.0
    %3671 = vmatprep.subr.mxu0 0.0
    %3672 = vmatpush1.msra.mxu0 0.0
    %3673 = vmatprep.subr.mxu0 0.0
    %3674 = vmatpush1.msra.mxu0 0.0
    %3675 = vmatprep.subr.mxu0 0.0
    %3676 = vmatpush1.msra.mxu0 0.0
    %3677 = vmatprep.subr.mxu0 0.0
    %3678 = vmatpush1.msra.mxu0 0.0
    %3679 = vmatprep.subr.mxu0 0.0
    %3680 = vmatpush1.msra.mxu0 0.0
    %3681 = vmatprep.subr.mxu0 0.0
    %3682 = vmatpush1.msra.mxu0 0.0
    %3683 = vmatprep.subr.mxu0 0.0
    %3684 = vmatpush1.msra.mxu0 0.0
    %3685 = vmatprep.subr.mxu0 0.0
    %3686 = vmatpush1.msra.mxu0 0.0
    %3687 = vmatprep.subr.mxu0 0.0
    %3688 = vmatpush1.msra.mxu0 0.0
    %3689 = vmatprep.subr.mxu0 0.0
    %3690 = vmatpush1.msra.mxu0 0.0
    %3691 = vmatprep.subr.mxu0 0.0
    %3692 = vmatpush1.msra.mxu0 0.0
    %3693 = vmatprep.subr.mxu0 0.0
    %3694 = vmatpush1.msra.mxu0 0.0
    %3695 = vmatprep.subr.mxu0 0.0
    %3696 = vmatpush1.msra.mxu0 0.0
    %3697 = vmatprep.subr.mxu0 0.0
    %3698 = vmatpush1.msra.mxu0 0.0
    %3699 = vmatprep.subr.mxu0 0.0
    %3700 = vmatpush1.msra.mxu0 0.0
    %3701 = vmatprep.mubr.f32.mxu0 0.0
    %3702 = vmatmul.mubr.f32.gmra.mrb[0].mxu0 %v3635
    %v3703 = vpop.f32.mrb[0].mxu0
    %v3704 = vadd.f32 0.0, %v3703
    %v3705 = vpop.f32.mrb[0].mxu0
    %3706 = vdwg.mxu0
    %v3707 = vadd.f32 %v3633, %v3704
    %v3708 = vxor.u32 %v3707, 2147483648
    %v3709 = vmul.f32 %v3708, 1.442695
    %v3710 = vpow.pop %v3709
    %v3711 = vadd.f32 %v3710, 1.0
    %v3712 = vrcp.pop %v3711
    %v3713 = vmul.f32 1.0, %v3712
    %v3714 = vtanh.pop %v3707
    %3716 = vrot.lane.b32.xlu0 %v3632, 32
    %v3717 = vpop.permute.xlu0 %3716
    %v3719 = vmul.f32 %v3713, %v3717
    %3721 = vrot.lane.b32.xlu0 %v3714, 64
    %v3722 = vpop.permute.xlu0 %3721
    %v3724 = vmul.f32 %v3713, %v3722
    %3726 = vrot.lane.b32.xlu0 %v3724, 32
    %v3727 = vpop.permute.xlu0 %3726
    %v3729 = vadd.f32 %v3719, %v3727
    %v3730 = vtanh.pop %v3729
    %3732 = vrot.lane.b32.xlu0 %v3730, 64
    %v3733 = vpop.permute.xlu0 %3732
    %v3735 = vmul.f32 %v3713, %v3733
    %3737 = vrot.lane.b32.xlu0 %v3729, 96
    %v3738 = vpop.permute.xlu0 %3737
    %3740 = vst.msk [vmem:[%s3399] sm:$0xff] %vm79, %v3738
    %3742 = vrot.lane.b32.xlu0 %v3735, 32
    %v3743 = vpop.permute.xlu0 %3742
    %3745 = vst.msk [vmem:[%s3397] sm:$0xff] %vm79, %v3743
    %3746 = vst.msk [vmem:[%s427] sm:$0xff] %vm79, %v3743
    %v3747 = vld [vmem:[%s3397] sm:$0xff]
    %v3748 = vld [vmem:[%s3399] sm:$0xff]
    %v3749 = vld [vmem:[%s1542] sm:$0xff]
    %v3751 = vsel %vm79, %v3747, 0
    %3753 = vmatprep.subr.mxu0 0.0
    %3754 = vmatpush1.msra.mxu0 %v3393
    %3755 = vmatprep.subr.mxu0 0.0
    %3756 = vmatpush1.msra.mxu0 %v3394
    %3757 = vmatprep.subr.mxu0 0.0
    %3758 = vmatpush1.msra.mxu0 %v3395
    %3759 = vmatprep.subr.mxu0 0.0
    %3760 = vmatpush1.msra.mxu0 %v3396
    %3761 = vmatprep.subr.mxu0 0.0
    %3762 = vmatpush1.msra.mxu0 0.0
    %3763 = vmatprep.subr.mxu0 0.0
    %3764 = vmatpush1.msra.mxu0 0.0
    %3765 = vmatprep.subr.mxu0 0.0
    %3766 = vmatpush1.msra.mxu0 0.0
    %3767 = vmatprep.subr.mxu0 0.0
    %3768 = vmatpush1.msra.mxu0 0.0
    %3769 = vmatprep.subr.mxu0 0.0
    %3770 = vmatpush1.msra.mxu0 0.0
    %3771 = vmatprep.subr.mxu0 0.0
    %3772 = vmatpush1.msra.mxu0 0.0
    %3773 = vmatprep.subr.mxu0 0.0
    %3774 = vmatpush1.msra.mxu0 0.0
    %3775 = vmatprep.subr.mxu0 0.0
    %3776 = vmatpush1.msra.mxu0 0.0
    %3777 = vmatprep.subr.mxu0 0.0
    %3778 = vmatpush1.msra.mxu0 0.0
    %3779 = vmatprep.subr.mxu0 0.0
    %3780 = vmatpush1.msra.mxu0 0.0
    %3781 = vmatprep.subr.mxu0 0.0
    %3782 = vmatpush1.msra.mxu0 0.0
    %3783 = vmatprep.subr.mxu0 0.0
    %3784 = vmatpush1.msra.mxu0 0.0
    %3785 = vmatprep.subr.mxu0 0.0
    %3786 = vmatpush1.msra.mxu0 0.0
    %3787 = vmatprep.subr.mxu0 0.0
    %3788 = vmatpush1.msra.mxu0 0.0
    %3789 = vmatprep.subr.mxu0 0.0
    %3790 = vmatpush1.msra.mxu0 0.0
    %3791 = vmatprep.subr.mxu0 0.0
    %3792 = vmatpush1.msra.mxu0 0.0
    %3793 = vmatprep.subr.mxu0 0.0
    %3794 = vmatpush1.msra.mxu0 0.0
    %3795 = vmatprep.subr.mxu0 0.0
    %3796 = vmatpush1.msra.mxu0 0.0
    %3797 = vmatprep.subr.mxu0 0.0
    %3798 = vmatpush1.msra.mxu0 0.0
    %3799 = vmatprep.subr.mxu0 0.0
    %3800 = vmatpush1.msra.mxu0 0.0
    %3801 = vmatprep.subr.mxu0 0.0
    %3802 = vmatpush1.msra.mxu0 0.0
    %3803 = vmatprep.subr.mxu0 0.0
    %3804 = vmatpush1.msra.mxu0 0.0
    %3805 = vmatprep.subr.mxu0 0.0
    %3806 = vmatpush1.msra.mxu0 0.0
    %3807 = vmatprep.subr.mxu0 0.0
    %3808 = vmatpush1.msra.mxu0 0.0
    %3809 = vmatprep.subr.mxu0 0.0
    %3810 = vmatpush1.msra.mxu0 0.0
    %3811 = vmatprep.subr.mxu0 0.0
    %3812 = vmatpush1.msra.mxu0 0.0
    %3813 = vmatprep.subr.mxu0 0.0
    %3814 = vmatpush1.msra.mxu0 0.0
    %3815 = vmatprep.subr.mxu0 0.0
    %3816 = vmatpush1.msra.mxu0 0.0
    %3817 = vmatprep.mubr.f32.mxu0 0.0
    %3818 = vmatmul.mubr.f32.gmra.mrb[0].mxu0 %v3751
    %v3819 = vpop.f32.mrb[0].mxu0
    %v3820 = vadd.f32 0.0, %v3819
    %v3821 = vpop.f32.mrb[0].mxu0
    %3822 = vdwg.mxu0
    %v3823 = vadd.f32 %v3749, %v3820
    %v3824 = vxor.u32 %v3823, 2147483648
    %v3825 = vmul.f32 %v3824, 1.442695
    %v3826 = vpow.pop %v3825
    %v3827 = vadd.f32 %v3826, 1.0
    %v3828 = vrcp.pop %v3827
    %v3829 = vmul.f32 1.0, %v3828
    %v3830 = vtanh.pop %v3823
    %3832 = vrot.lane.b32.xlu0 %v3748, 32
    %v3833 = vpop.permute.xlu0 %3832
    %v3835 = vmul.f32 %v3829, %v3833
    %3837 = vrot.lane.b32.xlu0 %v3830, 64
    %v3838 = vpop.permute.xlu0 %3837
    %v3840 = vmul.f32 %v3829, %v3838
    %3842 = vrot.lane.b32.xlu0 %v3840, 32
    %v3843 = vpop.permute.xlu0 %3842
    %v3845 = vadd.f32 %v3835, %v3843
    %v3846 = vtanh.pop %v3845
    %3848 = vrot.lane.b32.xlu0 %v3846, 64
    %v3849 = vpop.permute.xlu0 %3848
    %v3851 = vmul.f32 %v3829, %v3849
    %3853 = vrot.lane.b32.xlu0 %v3845, 96
    %v3854 = vpop.permute.xlu0 %3853
    %3856 = vst.msk [vmem:[%s3399] sm:$0xff] %vm79, %v3854
    %3858 = vrot.lane.b32.xlu0 %v3851, 32
    %v3859 = vpop.permute.xlu0 %3858
    %3861 = vst.msk [vmem:[%s3397] sm:$0xff] %vm79, %v3859
    %3862 = vst.msk [vmem:[%s545] sm:$0xff] %vm79, %v3859
    %v3863 = vld [vmem:[%s3397] sm:$0xff]
    %v3864 = vld [vmem:[%s3399] sm:$0xff]
    %v3865 = vld [vmem:[%s1659] sm:$0xff]
    %v3867 = vsel %vm79, %v3863, 0
    %3869 = vmatprep.subr.mxu0 0.0
    %3870 = vmatpush1.msra.mxu0 %v3393
    %3871 = vmatprep.subr.mxu0 0.0
    %3872 = vmatpush1.msra.mxu0 %v3394
    %3873 = vmatprep.subr.mxu0 0.0
    %3874 = vmatpush1.msra.mxu0 %v3395
    %3875 = vmatprep.subr.mxu0 0.0
    %3876 = vmatpush1.msra.mxu0 %v3396
    %3877 = vmatprep.subr.mxu0 0.0
    %3878 = vmatpush1.msra.mxu0 0.0
    %3879 = vmatprep.subr.mxu0 0.0
    %3880 = vmatpush1.msra.mxu0 0.0
    %3881 = vmatprep.subr.mxu0 0.0
    %3882 = vmatpush1.msra.mxu0 0.0
    %3883 = vmatprep.subr.mxu0 0.0
    %3884 = vmatpush1.msra.mxu0 0.0
    %3885 = vmatprep.subr.mxu0 0.0
    %3886 = vmatpush1.msra.mxu0 0.0
    %3887 = vmatprep.subr.mxu0 0.0
    %3888 = vmatpush1.msra.mxu0 0.0
    %3889 = vmatprep.subr.mxu0 0.0
    %3890 = vmatpush1.msra.mxu0 0.0
    %3891 = vmatprep.subr.mxu0 0.0
    %3892 = vmatpush1.msra.mxu0 0.0
    %3893 = vmatprep.subr.mxu0 0.0
    %3894 = vmatpush1.msra.mxu0 0.0
    %3895 = vmatprep.subr.mxu0 0.0
    %3896 = vmatpush1.msra.mxu0 0.0
    %3897 = vmatprep.subr.mxu0 0.0
    %3898 = vmatpush1.msra.mxu0 0.0
    %3899 = vmatprep.subr.mxu0 0.0
    %3900 = vmatpush1.msra.mxu0 0.0
    %3901 = vmatprep.subr.mxu0 0.0
    %3902 = vmatpush1.msra.mxu0 0.0
    %3903 = vmatprep.subr.mxu0 0.0
    %3904 = vmatpush1.msra.mxu0 0.0
    %3905 = vmatprep.subr.mxu0 0.0
    %3906 = vmatpush1.msra.mxu0 0.0
    %3907 = vmatprep.subr.mxu0 0.0
    %3908 = vmatpush1.msra.mxu0 0.0
    %3909 = vmatprep.subr.mxu0 0.0
    %3910 = vmatpush1.msra.mxu0 0.0
    %3911 = vmatprep.subr.mxu0 0.0
    %3912 = vmatpush1.msra.mxu0 0.0
    %3913 = vmatprep.subr.mxu0 0.0
    %3914 = vmatpush1.msra.mxu0 0.0
    %3915 = vmatprep.subr.mxu0 0.0
    %3916 = vmatpush1.msra.mxu0 0.0
    %3917 = vmatprep.subr.mxu0 0.0
    %3918 = vmatpush1.msra.mxu0 0.0
    %3919 = vmatprep.subr.mxu0 0.0
    %3920 = vmatpush1.msra.mxu0 0.0
    %3921 = vmatprep.subr.mxu0 0.0
    %3922 = vmatpush1.msra.mxu0 0.0
    %3923 = vmatprep.subr.mxu0 0.0
    %3924 = vmatpush1.msra.mxu0 0.0
    %3925 = vmatprep.subr.mxu0 0.0
    %3926 = vmatpush1.msra.mxu0 0.0
    %3927 = vmatprep.subr.mxu0 0.0
    %3928 = vmatpush1.msra.mxu0 0.0
    %3929 = vmatprep.subr.mxu0 0.0
    %3930 = vmatpush1.msra.mxu0 0.0
    %3931 = vmatprep.subr.mxu0 0.0
    %3932 = vmatpush1.msra.mxu0 0.0
    %3933 = vmatprep.mubr.f32.mxu0 0.0
    %3934 = vmatmul.mubr.f32.gmra.mrb[0].mxu0 %v3867
    %v3935 = vpop.f32.mrb[0].mxu0
    %v3936 = vadd.f32 0.0, %v3935
    %v3937 = vpop.f32.mrb[0].mxu0
    %3938 = vdwg.mxu0
    %v3939 = vadd.f32 %v3865, %v3936
    %v3940 = vxor.u32 %v3939, 2147483648
    %v3941 = vmul.f32 %v3940, 1.442695
    %v3942 = vpow.pop %v3941
    %v3943 = vadd.f32 %v3942, 1.0
    %v3944 = vrcp.pop %v3943
    %v3945 = vmul.f32 1.0, %v3944
    %v3946 = vtanh.pop %v3939
    %3948 = vrot.lane.b32.xlu0 %v3864, 32
    %v3949 = vpop.permute.xlu0 %3948
    %v3951 = vmul.f32 %v3945, %v3949
    %3953 = vrot.lane.b32.xlu0 %v3946, 64
    %v3954 = vpop.permute.xlu0 %3953
    %v3956 = vmul.f32 %v3945, %v3954
    %3958 = vrot.lane.b32.xlu0 %v3956, 32
    %v3959 = vpop.permute.xlu0 %3958
    %v3961 = vadd.f32 %v3951, %v3959
    %v3962 = vtanh.pop %v3961
    %3964 = vrot.lane.b32.xlu0 %v3962, 64
    %v3965 = vpop.permute.xlu0 %3964
    %v3967 = vmul.f32 %v3945, %v3965
    %3969 = vrot.lane.b32.xlu0 %v3961, 96
    %v3970 = vpop.permute.xlu0 %3969
    %3972 = vst.msk [vmem:[%s3399] sm:$0xff] %vm79, %v3970
    %3974 = vrot.lane.b32.xlu0 %v3967, 32
    %v3975 = vpop.permute.xlu0 %3974
    %3977 = vst.msk [vmem:[%s3397] sm:$0xff] %vm79, %v3975
    %3978 = vst.msk [vmem:[%s663] sm:$0xff] %vm79, %v3975
    %v3979 = vld [vmem:[%s3397] sm:$0xff]
    %v3980 = vld [vmem:[%s3399] sm:$0xff]
    %v3981 = vld [vmem:[%s1776] sm:$0xff]
    %v3983 = vsel %vm79, %v3979, 0
    %3985 = vmatprep.subr.mxu0 0.0
    %3986 = vmatpush1.msra.mxu0 %v3393
    %3987 = vmatprep.subr.mxu0 0.0
    %3988 = vmatpush1.msra.mxu0 %v3394
    %3989 = vmatprep.subr.mxu0 0.0
    %3990 = vmatpush1.msra.mxu0 %v3395
    %3991 = vmatprep.subr.mxu0 0.0
    %3992 = vmatpush1.msra.mxu0 %v3396
    %3993 = vmatprep.subr.mxu0 0.0
    %3994 = vmatpush1.msra.mxu0 0.0
    %3995 = vmatprep.subr.mxu0 0.0
    %3996 = vmatpush1.msra.mxu0 0.0
    %3997 = vmatprep.subr.mxu0 0.0
    %3998 = vmatpush1.msra.mxu0 0.0
    %3999 = vmatprep.subr.mxu0 0.0
    %4000 = vmatpush1.msra.mxu0 0.0
    %4001 = vmatprep.subr.mxu0 0.0
    %4002 = vmatpush1.msra.mxu0 0.0
    %4003 = vmatprep.subr.mxu0 0.0
    %4004 = vmatpush1.msra.mxu0 0.0
    %4005 = vmatprep.subr.mxu0 0.0
    %4006 = vmatpush1.msra.mxu0 0.0
    %4007 = vmatprep.subr.mxu0 0.0
    %4008 = vmatpush1.msra.mxu0 0.0
    %4009 = vmatprep.subr.mxu0 0.0
    %4010 = vmatpush1.msra.mxu0 0.0
    %4011 = vmatprep.subr.mxu0 0.0
    %4012 = vmatpush1.msra.mxu0 0.0
    %4013 = vmatprep.subr.mxu0 0.0
    %4014 = vmatpush1.msra.mxu0 0.0
    %4015 = vmatprep.subr.mxu0 0.0
    %4016 = vmatpush1.msra.mxu0 0.0
    %4017 = vmatprep.subr.mxu0 0.0
    %4018 = vmatpush1.msra.mxu0 0.0
    %4019 = vmatprep.subr.mxu0 0.0
    %4020 = vmatpush1.msra.mxu0 0.0
    %4021 = vmatprep.subr.mxu0 0.0
    %4022 = vmatpush1.msra.mxu0 0.0
    %4023 = vmatprep.subr.mxu0 0.0
    %4024 = vmatpush1.msra.mxu0 0.0
    %4025 = vmatprep.subr.mxu0 0.0
    %4026 = vmatpush1.msra.mxu0 0.0
    %4027 = vmatprep.subr.mxu0 0.0
    %4028 = vmatpush1.msra.mxu0 0.0
    %4029 = vmatprep.subr.mxu0 0.0
    %4030 = vmatpush1.msra.mxu0 0.0
    %4031 = vmatprep.subr.mxu0 0.0
    %4032 = vmatpush1.msra.mxu0 0.0
    %4033 = vmatprep.subr.mxu0 0.0
    %4034 = vmatpush1.msra.mxu0 0.0
    %4035 = vmatprep.subr.mxu0 0.0
    %4036 = vmatpush1.msra.mxu0 0.0
    %4037 = vmatprep.subr.mxu0 0.0
    %4038 = vmatpush1.msra.mxu0 0.0
    %4039 = vmatprep.subr.mxu0 0.0
    %4040 = vmatpush1.msra.mxu0 0.0
    %4041 = vmatprep.subr.mxu0 0.0
    %4042 = vmatpush1.msra.mxu0 0.0
    %4043 = vmatprep.subr.mxu0 0.0
    %4044 = vmatpush1.msra.mxu0 0.0
    %4045 = vmatprep.subr.mxu0 0.0
    %4046 = vmatpush1.msra.mxu0 0.0
    %4047 = vmatprep.subr.mxu0 0.0
    %4048 = vmatpush1.msra.mxu0 0.0
    %4049 = vmatprep.mubr.f32.mxu0 0.0
    %4050 = vmatmul.mubr.f32.gmra.mrb[0].mxu0 %v3983
    %v4051 = vpop.f32.mrb[0].mxu0
    %v4052 = vadd.f32 0.0, %v4051
    %v4053 = vpop.f32.mrb[0].mxu0
    %4054 = vdwg.mxu0
    %v4055 = vadd.f32 %v3981, %v4052
    %v4056 = vxor.u32 %v4055, 2147483648
    %v4057 = vmul.f32 %v4056, 1.442695
    %v4058 = vpow.pop %v4057
    %v4059 = vadd.f32 %v4058, 1.0
    %v4060 = vrcp.pop %v4059
    %v4061 = vmul.f32 1.0, %v4060
    %v4062 = vtanh.pop %v4055
    %4064 = vrot.lane.b32.xlu0 %v3980, 32
    %v4065 = vpop.permute.xlu0 %4064
    %v4067 = vmul.f32 %v4061, %v4065
    %4069 = vrot.lane.b32.xlu0 %v4062, 64
    %v4070 = vpop.permute.xlu0 %4069
    %v4072 = vmul.f32 %v4061, %v4070
    %4074 = vrot.lane.b32.xlu0 %v4072, 32
    %v4075 = vpop.permute.xlu0 %4074
    %v4077 = vadd.f32 %v4067, %v4075
    %v4078 = vtanh.pop %v4077
    %4080 = vrot.lane.b32.xlu0 %v4078, 64
    %v4081 = vpop.permute.xlu0 %4080
    %v4083 = vmul.f32 %v4061, %v4081
    %4085 = vrot.lane.b32.xlu0 %v4077, 96
    %v4086 = vpop.permute.xlu0 %4085
    %4088 = vst.msk [vmem:[%s3399] sm:$0xff] %vm79, %v4086
    %4090 = vrot.lane.b32.xlu0 %v4083, 32
    %v4091 = vpop.permute.xlu0 %4090
    %4093 = vst.msk [vmem:[%s3397] sm:$0xff] %vm79, %v4091
    %4094 = vst.msk [vmem:[%s781] sm:$0xff] %vm79, %v4091
    %v4095 = vld [vmem:[%s3397] sm:$0xff]
    %v4096 = vld [vmem:[%s3399] sm:$0xff]
    %v4097 = vld [vmem:[%s1893] sm:$0xff]
    %v4099 = vsel %vm79, %v4095, 0
    %4101 = vmatprep.subr.mxu0 0.0
    %4102 = vmatpush1.msra.mxu0 %v3393
    %4103 = vmatprep.subr.mxu0 0.0
    %4104 = vmatpush1.msra.mxu0 %v3394
    %4105 = vmatprep.subr.mxu0 0.0
    %4106 = vmatpush1.msra.mxu0 %v3395
    %4107 = vmatprep.subr.mxu0 0.0
    %4108 = vmatpush1.msra.mxu0 %v3396
    %4109 = vmatprep.subr.mxu0 0.0
    %4110 = vmatpush1.msra.mxu0 0.0
    %4111 = vmatprep.subr.mxu0 0.0
    %4112 = vmatpush1.msra.mxu0 0.0
    %4113 = vmatprep.subr.mxu0 0.0
    %4114 = vmatpush1.msra.mxu0 0.0
    %4115 = vmatprep.subr.mxu0 0.0
    %4116 = vmatpush1.msra.mxu0 0.0
    %4117 = vmatprep.subr.mxu0 0.0
    %4118 = vmatpush1.msra.mxu0 0.0
    %4119 = vmatprep.subr.mxu0 0.0
    %4120 = vmatpush1.msra.mxu0 0.0
    %4121 = vmatprep.subr.mxu0 0.0
    %4122 = vmatpush1.msra.mxu0 0.0
    %4123 = vmatprep.subr.mxu0 0.0
    %4124 = vmatpush1.msra.mxu0 0.0
    %4125 = vmatprep.subr.mxu0 0.0
    %4126 = vmatpush1.msra.mxu0 0.0
    %4127 = vmatprep.subr.mxu0 0.0
    %4128 = vmatpush1.msra.mxu0 0.0
    %4129 = vmatprep.subr.mxu0 0.0
    %4130 = vmatpush1.msra.mxu0 0.0
    %4131 = vmatprep.subr.mxu0 0.0
    %4132 = vmatpush1.msra.mxu0 0.0
    %4133 = vmatprep.subr.mxu0 0.0
    %4134 = vmatpush1.msra.mxu0 0.0
    %4135 = vmatprep.subr.mxu0 0.0
    %4136 = vmatpush1.msra.mxu0 0.0
    %4137 = vmatprep.subr.mxu0 0.0
    %4138 = vmatpush1.msra.mxu0 0.0
    %4139 = vmatprep.subr.mxu0 0.0
    %4140 = vmatpush1.msra.mxu0 0.0
    %4141 = vmatprep.subr.mxu0 0.0
    %4142 = vmatpush1.msra.mxu0 0.0
    %4143 = vmatprep.subr.mxu0 0.0
    %4144 = vmatpush1.msra.mxu0 0.0
    %4145 = vmatprep.subr.mxu0 0.0
    %4146 = vmatpush1.msra.mxu0 0.0
    %4147 = vmatprep.subr.mxu0 0.0
    %4148 = vmatpush1.msra.mxu0 0.0
    %4149 = vmatprep.subr.mxu0 0.0
    %4150 = vmatpush1.msra.mxu0 0.0
    %4151 = vmatprep.subr.mxu0 0.0
    %4152 = vmatpush1.msra.mxu0 0.0
    %4153 = vmatprep.subr.mxu0 0.0
    %4154 = vmatpush1.msra.mxu0 0.0
    %4155 = vmatprep.subr.mxu0 0.0
    %4156 = vmatpush1.msra.mxu0 0.0
    %4157 = vmatprep.subr.mxu0 0.0
    %4158 = vmatpush1.msra.mxu0 0.0
    %4159 = vmatprep.subr.mxu0 0.0
    %4160 = vmatpush1.msra.mxu0 0.0
    %4161 = vmatprep.subr.mxu0 0.0
    %4162 = vmatpush1.msra.mxu0 0.0
    %4163 = vmatprep.subr.mxu0 0.0
    %4164 = vmatpush1.msra.mxu0 0.0
    %4165 = vmatprep.mubr.f32.mxu0 0.0
    %4166 = vmatmul.mubr.f32.gmra.mrb[0].mxu0 %v4099
    %v4167 = vpop.f32.mrb[0].mxu0
    %v4168 = vadd.f32 0.0, %v4167
    %v4169 = vpop.f32.mrb[0].mxu0
    %4170 = vdwg.mxu0
    %v4171 = vadd.f32 %v4097, %v4168
    %v4172 = vxor.u32 %v4171, 2147483648
    %v4173 = vmul.f32 %v4172, 1.442695
    %v4174 = vpow.pop %v4173
    %v4175 = vadd.f32 %v4174, 1.0
    %v4176 = vrcp.pop %v4175
    %v4177 = vmul.f32 1.0, %v4176
    %v4178 = vtanh.pop %v4171
    %4180 = vrot.lane.b32.xlu0 %v4096, 32
    %v4181 = vpop.permute.xlu0 %4180
    %v4183 = vmul.f32 %v4177, %v4181
    %4185 = vrot.lane.b32.xlu0 %v4178, 64
    %v4186 = vpop.permute.xlu0 %4185
    %v4188 = vmul.f32 %v4177, %v4186
    %4190 = vrot.lane.b32.xlu0 %v4188, 32
    %v4191 = vpop.permute.xlu0 %4190
    %v4193 = vadd.f32 %v4183, %v4191
    %v4194 = vtanh.pop %v4193
    %4196 = vrot.lane.b32.xlu0 %v4194, 64
    %v4197 = vpop.permute.xlu0 %4196
    %v4199 = vmul.f32 %v4177, %v4197
    %4201 = vrot.lane.b32.xlu0 %v4193, 96
    %v4202 = vpop.permute.xlu0 %4201
    %4204 = vst.msk [vmem:[%s3399] sm:$0xff] %vm79, %v4202
    %4206 = vrot.lane.b32.xlu0 %v4199, 32
    %v4207 = vpop.permute.xlu0 %4206
    %4209 = vst.msk [vmem:[%s3397] sm:$0xff] %vm79, %v4207
    %4210 = vst.msk [vmem:[%s899] sm:$0xff] %vm79, %v4207
    %v4211 = vld [vmem:[%s3397] sm:$0xff]
    %v4212 = vld [vmem:[%s3399] sm:$0xff]
    %v4213 = vld [vmem:[%s2010] sm:$0xff]
    %v4215 = vsel %vm79, %v4211, 0
    %4217 = vmatprep.subr.mxu0 0.0
    %4218 = vmatpush1.msra.mxu0 %v3393
    %4219 = vmatprep.subr.mxu0 0.0
    %4220 = vmatpush1.msra.mxu0 %v3394
    %4221 = vmatprep.subr.mxu0 0.0
    %4222 = vmatpush1.msra.mxu0 %v3395
    %4223 = vmatprep.subr.mxu0 0.0
    %4224 = vmatpush1.msra.mxu0 %v3396
    %4225 = vmatprep.subr.mxu0 0.0
    %4226 = vmatpush1.msra.mxu0 0.0
    %4227 = vmatprep.subr.mxu0 0.0
    %4228 = vmatpush1.msra.mxu0 0.0
    %4229 = vmatprep.subr.mxu0 0.0
    %4230 = vmatpush1.msra.mxu0 0.0
    %4231 = vmatprep.subr.mxu0 0.0
    %4232 = vmatpush1.msra.mxu0 0.0
    %4233 = vmatprep.subr.mxu0 0.0
    %4234 = vmatpush1.msra.mxu0 0.0
    %4235 = vmatprep.subr.mxu0 0.0
    %4236 = vmatpush1.msra.mxu0 0.0
    %4237 = vmatprep.subr.mxu0 0.0
    %4238 = vmatpush1.msra.mxu0 0.0
    %4239 = vmatprep.subr.mxu0 0.0
    %4240 = vmatpush1.msra.mxu0 0.0
    %4241 = vmatprep.subr.mxu0 0.0
    %4242 = vmatpush1.msra.mxu0 0.0
    %4243 = vmatprep.subr.mxu0 0.0
    %4244 = vmatpush1.msra.mxu0 0.0
    %4245 = vmatprep.subr.mxu0 0.0
    %4246 = vmatpush1.msra.mxu0 0.0
    %4247 = vmatprep.subr.mxu0 0.0
    %4248 = vmatpush1.msra.mxu0 0.0
    %4249 = vmatprep.subr.mxu0 0.0
    %4250 = vmatpush1.msra.mxu0 0.0
    %4251 = vmatprep.subr.mxu0 0.0
    %4252 = vmatpush1.msra.mxu0 0.0
    %4253 = vmatprep.subr.mxu0 0.0
    %4254 = vmatpush1.msra.mxu0 0.0
    %4255 = vmatprep.subr.mxu0 0.0
    %4256 = vmatpush1.msra.mxu0 0.0
    %4257 = vmatprep.subr.mxu0 0.0
    %4258 = vmatpush1.msra.mxu0 0.0
    %4259 = vmatprep.subr.mxu0 0.0
    %4260 = vmatpush1.msra.mxu0 0.0
    %4261 = vmatprep.subr.mxu0 0.0
    %4262 = vmatpush1.msra.mxu0 0.0
    %4263 = vmatprep.subr.mxu0 0.0
    %4264 = vmatpush1.msra.mxu0 0.0
    %4265 = vmatprep.subr.mxu0 0.0
    %4266 = vmatpush1.msra.mxu0 0.0
    %4267 = vmatprep.subr.mxu0 0.0
    %4268 = vmatpush1.msra.mxu0 0.0
    %4269 = vmatprep.subr.mxu0 0.0
    %4270 = vmatpush1.msra.mxu0 0.0
    %4271 = vmatprep.subr.mxu0 0.0
    %4272 = vmatpush1.msra.mxu0 0.0
    %4273 = vmatprep.subr.mxu0 0.0
    %4274 = vmatpush1.msra.mxu0 0.0
    %4275 = vmatprep.subr.mxu0 0.0
    %4276 = vmatpush1.msra.mxu0 0.0
    %4277 = vmatprep.subr.mxu0 0.0
    %4278 = vmatpush1.msra.mxu0 0.0
    %4279 = vmatprep.subr.mxu0 0.0
    %4280 = vmatpush1.msra.mxu0 0.0
    %4281 = vmatprep.mubr.f32.mxu0 0.0
    %4282 = vmatmul.mubr.f32.gmra.mrb[0].mxu0 %v4215
    %v4283 = vpop.f32.mrb[0].mxu0
    %v4284 = vadd.f32 0.0, %v4283
    %v4285 = vpop.f32.mrb[0].mxu0
    %4286 = vdwg.mxu0
    %v4287 = vadd.f32 %v4213, %v4284
    %v4288 = vxor.u32 %v4287, 2147483648
    %v4289 = vmul.f32 %v4288, 1.442695
    %v4290 = vpow.pop %v4289
    %v4291 = vadd.f32 %v4290, 1.0
    %v4292 = vrcp.pop %v4291
    %v4293 = vmul.f32 1.0, %v4292
    %v4294 = vtanh.pop %v4287
    %4296 = vrot.lane.b32.xlu0 %v4212, 32
    %v4297 = vpop.permute.xlu0 %4296
    %v4299 = vmul.f32 %v4293, %v4297
    %4301 = vrot.lane.b32.xlu0 %v4294, 64
    %v4302 = vpop.permute.xlu0 %4301
    %v4304 = vmul.f32 %v4293, %v4302
    %4306 = vrot.lane.b32.xlu0 %v4304, 32
    %v4307 = vpop.permute.xlu0 %4306
    %v4309 = vadd.f32 %v4299, %v4307
    %v4310 = vtanh.pop %v4309
    %4312 = vrot.lane.b32.xlu0 %v4310, 64
    %v4313 = vpop.permute.xlu0 %4312
    %v4315 = vmul.f32 %v4293, %v4313
    %4317 = vrot.lane.b32.xlu0 %v4309, 96
    %v4318 = vpop.permute.xlu0 %4317
    %4320 = vst.msk [vmem:[%s3399] sm:$0xff] %vm79, %v4318
    %4322 = vrot.lane.b32.xlu0 %v4315, 32
    %v4323 = vpop.permute.xlu0 %4322
    %4325 = vst.msk [vmem:[%s3397] sm:$0xff] %vm79, %v4323
    %4326 = vst.msk [vmem:[%s1017] sm:$0xff] %vm79, %v4323
    %v4327 = vld [vmem:[#allocation4] sm:$0xff]
    %v4328 = vld [vmem:[#allocation4 + $0x8] sm:$0xff]
    %v4329 = vld [vmem:[#allocation4 + $0x10] sm:$0xff]
    %v4330 = vld [vmem:[#allocation4 + $0x18] sm:$0xff]
    %v4331 = vld [vmem:[#allocation4 + $0x20] sm:$0xff]
    %v4332 = vld [vmem:[#allocation4 + $0x28] sm:$0xff]
    %v4333 = vld [vmem:[#allocation4 + $0x30] sm:$0xff]
    %v4334 = vld [vmem:[#allocation4 + $0x38] sm:$0xff]
    %4335 = vst.msk [vmem:[#allocation12] sm:$0xff] %vm79, %v4327
    %4336 = vst.msk [vmem:[#allocation12 + $0x8] sm:$0xff] %vm79, %v4328
    %4337 = vst.msk [vmem:[#allocation12 + $0x10] sm:$0xff] %vm79, %v4329
    %4338 = vst.msk [vmem:[#allocation12 + $0x18] sm:$0xff] %vm79, %v4330
    %4339 = vst.msk [vmem:[#allocation12 + $0x20] sm:$0xff] %vm79, %v4331
    %4340 = vst.msk [vmem:[#allocation12 + $0x28] sm:$0xff] %vm79, %v4332
    %4341 = vst.msk [vmem:[#allocation12 + $0x30] sm:$0xff] %vm79, %v4333
    %4342 = vst.msk [vmem:[#allocation12 + $0x38] sm:$0xff] %vm79, %v4334
    // Predicated region
    $region34: #{tpu_custom_call.1} parent=1 // pred_check
      _
    $region35: #{tpu_custom_call.1} parent=1 // pred_check_branch
      %4344 = sbr.rel (0) target = $region37
    $region36: #{tpu_custom_call.1} parent=1 // pred_region
      %s4346 = ssub.s32 1024, 1024
      %4347 = vsyncadd [#allocation8], %s4346
      %s4348 = sshll.u32 [#allocation12], 4
      %s4349 = int_to_ptr.vmem [resolvable:$true] %s4348
      %4354 = dma.vmem_to_hbm [thread:$0]  %s4349, 1024, %s4, [#allocation8], 128, 128, 8
    $region37: #{tpu_custom_call.1} parent=1 // pred_fallthru
      _
    // Predicated region
    $region38: #{tpu_custom_call.1} parent=1 // pred_check
      _
    $region39: #{tpu_custom_call.1} parent=1 // pred_check_branch
      %4356 = sbr.rel (0) target = $region41
    $region40: #{tpu_custom_call.1} parent=1 // pred_region
      %4357 = dma.done [#allocation8], 1024
    $region41: #{tpu_custom_call.1} parent=1 // pred_fallthru
      _
    %4358 = vsyncpa [#allocation7], 1
    %4359 = vsyncpa [#allocation10], 1
    %4360 = vsyncpa [#allocation8], 1

</llo_original>
